<compile_context>
chip_gen: v5e
topology: v5e:2x2
jax: 0.10.0
libtpu: 0.0.40
codegen_flags: <defaults>
</compile_context>

<pallas_src>
import functools
import math

import jax
import jax.numpy as jnp
from jax.experimental import pallas as pl
from jax.experimental.pallas import tpu as pltpu


# ------------------------------ in-kernel helpers ------------------------------

def _fill_padded(pad_ref, x, H, W):
    """Write x into the interior of a (H+2, W+2, C) bf16 scratch; zero only the 1-px halo."""
    C = pad_ref.shape[-1]
    zrow = jnp.zeros((1, W + 2, C), pad_ref.dtype)
    zcol = jnp.zeros((H, 1, C), pad_ref.dtype)
    pad_ref[0:1, :, :] = zrow
    pad_ref[H + 1:H + 2, :, :] = zrow
    pad_ref[1:H + 1, 0:1, :] = zcol
    pad_ref[1:H + 1, W + 1:W + 2, :] = zcol
    pad_ref[1:H + 1, 1:W + 1, :] = x.astype(pad_ref.dtype)


def _conv3x3_acc(xp, w3_ref, H, W, acc):
    """Accumulate a 3x3 'same' conv.

    xp     : (H+2, W+2, Cin) bf16 zero-padded activation (VMEM value)
    w3_ref : (3, 3*Cin, Cout) bf16 -- taps folded into the MXU K dim (dx-major per dy)
    acc    : (H*W, Cout) f32 accumulator
    """
    Cin = xp.shape[-1]
    for dy in range(3):
        rows = xp[dy:dy + H]                                        # (H, W+2, Cin) bf16
        patch = jnp.concatenate(
            [rows[:, dx:dx + W, :] for dx in range(3)], axis=-1)    # (H, W, 3*Cin) bf16
        acc = acc + jnp.dot(patch.reshape(H * W, 3 * Cin), w3_ref[dy],
                            preferred_element_type=jnp.float32)
    return acc


def _conv3x3(xp, w3_ref, b_ref, H, W, relu=True):
    Cout = w3_ref.shape[-1]
    acc = _conv3x3_acc(xp, w3_ref, H, W, jnp.zeros((H * W, Cout), jnp.float32))
    acc = acc + b_ref[...]
    if relu:
        acc = jnp.maximum(acc, 0.0)
    return acc                                                      # (H*W, Cout) f32


def _dual_conv3x3(xpa, xpb, w3a_ref, w3b_ref, b_ref, H, W):
    """conv3x3(cat([a, b], C)) + bias + ReLU, without materializing the concat."""
    Cout = w3a_ref.shape[-1]
    acc = jnp.zeros((H * W, Cout), jnp.float32)
    acc = _conv3x3_acc(xpa, w3a_ref, H, W, acc)
    acc = _conv3x3_acc(xpb, w3b_ref, H, W, acc)
    return jnp.maximum(acc + b_ref[...], 0.0)


# ---------------------------------- kernels ----------------------------------

def _down_pool_kernel(x_ref, w1_ref, b1_ref, w2_ref, b2_ref,
                      skip_ref, pool_ref, pad1, pad2, hscr, *, H, W):
    """conv3x3+ReLU -> conv3x3+ReLU -> {skip, fused 2x2 max-pool}, all in VMEM."""
    _fill_padded(pad1, x_ref[0], H, W)
    y1 = _conv3x3(pad1[...], w1_ref, b1_ref, H, W)                  # (H*W, C2) f32
    c2 = y1.shape[-1]
    _fill_padded(pad2, y1.reshape(H, W, c2), H, W)
    y2 = _conv3x3(pad2[...], w2_ref, b2_ref, H, W)
    skip_ref[0] = y2.reshape(H, W, c2).astype(jnp.bfloat16)
    # 2x2 max-pool: H pairs via leading-dim reshape, W pairs via stride-2 loads (one dense store).
    hm = y2.reshape(H // 2, 2, W, c2)
    hm = jnp.maximum(hm[:, 0], hm[:, 1])                            # (H//2, W, c2) f32
    hscr[...] = hm.reshape((H // 2) * W, c2)
    half = (H // 2) * W // 2
    even = hscr[pl.ds(0, half, 2), :]                               # columns 0,2,4,...
    odd = hscr[pl.ds(1, half, 2), :]                                # columns 1,3,5,...
    pool_ref[0] = jnp.maximum(even, odd).reshape(H // 2, W // 2, c2).astype(jnp.bfloat16)


def _down_last_kernel(x_ref, w1_ref, b1_ref, w2_ref, b2_ref,
                      out_ref, pad1, pad2, *, H, W):
    _fill_padded(pad1, x_ref[0], H, W)
    y1 = _conv3x3(pad1[...], w1_ref, b1_ref, H, W)
    c2 = y1.shape[-1]
    _fill_padded(pad2, y1.reshape(H, W, c2), H, W)
    y2 = _conv3x3(pad2[...], w2_ref, b2_ref, H, W)
    out_ref[0] = y2.reshape(H, W, c2).astype(jnp.bfloat16)


def _up_kernel(u_ref, s_ref, w1u_ref, w1s_ref, b1_ref, w2_ref, b2_ref,
               o_ref, padu, pads, pad2, *, H, W):
    """dual-input conv3x3+ReLU (upsampled + skip) -> conv3x3+ReLU."""
    _fill_padded(padu, u_ref[0], H, W)
    _fill_padded(pads, s_ref[0], H, W)
    y1 = _dual_conv3x3(padu[...], pads[...], w1u_ref, w1s_ref, b1_ref, H, W)
    c2 = y1.shape[-1]
    _fill_padded(pad2, y1.reshape(H, W, c2), H, W)
    y2 = _conv3x3(pad2[...], w2_ref, b2_ref, H, W)
    o_ref[0] = y2.reshape(H, W, c2).astype(jnp.bfloat16)


def _up_final_kernel(u_ref, s_ref, w1u_ref, w1s_ref, b1_ref, w2_ref, b2_ref,
                     wl_ref, bl_ref, prev_ref, o_ref, padu, pads, pad2, *, H, W):
    """Last up level with the fused 1x1 head and residual: out = prev + head(conv2(...))."""
    _fill_padded(padu, u_ref[0], H, W)
    _fill_padded(pads, s_ref[0], H, W)
    y1 = _dual_conv3x3(padu[...], pads[...], w1u_ref, w1s_ref, b1_ref, H, W)
    c2 = y1.shape[-1]
    _fill_padded(pad2, y1.reshape(H, W, c2), H, W)
    y2 = _conv3x3(pad2[...], w2_ref, b2_ref, H, W)                  # (H*W, c2) f32
    head = jnp.dot(y2.astype(jnp.bfloat16), wl_ref[...],
                   preferred_element_type=jnp.float32) + bl_ref[...]
    co = head.shape[-1]
    o_ref[0] = prev_ref[0] + head.reshape(H, W, co)


def _upconv_kernel(x_ref, w0_ref, w1_ref, b_ref, o_ref, *, h, w):
    """ConvTranspose2d(k=2,s=2): two phase matmuls; dy phases written into a packed layout
    whose row-major reshape is the 2x-upsampled NHWC tensor (no transpose needed)."""
    Cin = x_ref.shape[-1]
    x2d = x_ref[0].reshape(h * w, Cin)                              # bf16
    c2 = w0_ref.shape[-1]                                           # 2*Cout, dx-major
    y0 = jnp.dot(x2d, w0_ref[...], preferred_element_type=jnp.float32) + b_ref[...]
    y1 = jnp.dot(x2d, w1_ref[...], preferred_element_type=jnp.float32) + b_ref[...]
    o_ref[0:1, :, 0:1, :, :] = y0.reshape(1, h, 1, w, c2).astype(jnp.bfloat16)
    o_ref[0:1, :, 1:2, :, :] = y1.reshape(1, h, 1, w, c2).astype(jnp.bfloat16)


# ------------------------------ wrappers / glue ------------------------------

def _pack_w3(w_torch):
    """(Cout, Cin, 3, 3) PyTorch conv weight -> (3, 3*Cin, Cout) bf16 (taps in K)."""
    cout, cin = w_torch.shape[0], w_torch.shape[1]
    w = jnp.transpose(w_torch, (2, 3, 1, 0))                        # (dy, dx, Cin, Cout)
    return w.reshape(3, 3 * cin, cout).astype(jnp.bfloat16)


def _row(b):
    return b.reshape(1, -1).astype(jnp.float32)


def _const_spec(shape):
    """Weight/bias block: constant index map; single-buffered (block never changes)."""
    idx = lambda n, _d=len(shape): (0,) * _d
    try:
        return pl.BlockSpec(shape, idx, pipeline_mode=pl.Buffered(1))
    except (TypeError, AttributeError):       # older jax without pipeline_mode
        return pl.BlockSpec(shape, idx)


def _params(*nbytes):
    """dimension_semantics + a vmem limit derived from block/scratch footprints."""
    need = int(sum(nbytes)) + (4 << 20)
    return pltpu.CompilerParams(
        dimension_semantics=("parallel",),
        vmem_limit_bytes=int(min(max(need, 32 << 20), 64 << 20)))


def down_level(x, w1, b1, w2, b2, pool):
    N, H, W, C1 = x.shape
    C2 = w1.shape[0]
    w1p, w2p = _pack_w3(w1), _pack_w3(w2)
    in_specs = [pl.BlockSpec((1, H, W, C1), lambda n: (n, 0, 0, 0)),
                _const_spec((3, 3 * C1, C2)), _const_spec((1, C2)),
                _const_spec((3, 3 * C2, C2)), _const_spec((1, C2))]
    args = (x, w1p, _row(b1), w2p, _row(b2))
    scratch = [pltpu.VMEM((H + 2, W + 2, C1), jnp.bfloat16),
               pltpu.VMEM((H + 2, W + 2, C2), jnp.bfloat16)]
    scratch_b = 2 * (H + 2) * (W + 2) * (C1 + C2)
    w_b = 2 * (w1p.size + w2p.size) + 8 * C2
    blk_b = 2 * (H * W * C1 * 2)
    if pool:
        scratch.append(pltpu.VMEM(((H // 2) * W, C2), jnp.float32))
        scratch_b += (H // 2) * W * C2 * 4
        out_b = 2 * (H * W * C2 * 2 + (H // 2) * (W // 2) * C2 * 2)
        return pl.pallas_call(
            functools.partial(_down_pool_kernel, H=H, W=W),
            out_shape=(jax.ShapeDtypeStruct((N, H, W, C2), jnp.bfloat16),
                       jax.ShapeDtypeStruct((N, H // 2, W // 2, C2), jnp.bfloat16)),
            grid=(N,),
            in_specs=in_specs,
            out_specs=(pl.BlockSpec((1, H, W, C2), lambda n: (n, 0, 0, 0)),
                       pl.BlockSpec((1, H // 2, W // 2, C2), lambda n: (n, 0, 0, 0))),
            scratch_shapes=scratch,
            compiler_params=_params(blk_b, out_b, w_b, scratch_b),
        )(*args)
    out_b = 2 * (H * W * C2 * 2)
    return pl.pallas_call(
        functools.partial(_down_last_kernel, H=H, W=W),
        out_shape=jax.ShapeDtypeStruct((N, H, W, C2), jnp.bfloat16),
        grid=(N,),
        in_specs=in_specs,
        out_specs=pl.BlockSpec((1, H, W, C2), lambda n: (n, 0, 0, 0)),
        scratch_shapes=scratch,
        compiler_params=_params(blk_b, out_b, w_b, scratch_b),
    )(*args)


def up_level(u, skip, w1, b1, w2, b2, last=None):
    """Fused up level; if `last=(wl, bl, prev)` also fuses the 1x1 head + residual."""
    N, H, W, Cu = u.shape
    Cs = skip.shape[-1]
    C2 = w1.shape[0]
    w1u, w1s = _pack_w3(w1[:, :Cu]), _pack_w3(w1[:, Cu:])
    w2p = _pack_w3(w2)
    in_specs = [pl.BlockSpec((1, H, W, Cu), lambda n: (n, 0, 0, 0)),
                pl.BlockSpec((1, H, W, Cs), lambda n: (n, 0, 0, 0)),
                _const_spec((3, 3 * Cu, C2)),
                _const_spec((3, 3 * Cs, C2)),
                _const_spec((1, C2)),
                _const_spec((3, 3 * C2, C2)),
                _const_spec((1, C2))]
    args = [u, skip, w1u, w1s, _row(b1), w2p, _row(b2)]
    scratch = [pltpu.VMEM((H + 2, W + 2, Cu), jnp.bfloat16),
               pltpu.VMEM((H + 2, W + 2, Cs), jnp.bfloat16),
               pltpu.VMEM((H + 2, W + 2, C2), jnp.bfloat16)]
    scratch_b = 2 * (H + 2) * (W + 2) * (Cu + Cs + C2)
    w_b = 2 * (w1u.size + w1s.size + w2p.size) + 8 * C2
    blk_b = 2 * (H * W * (Cu + Cs) * 2)
    if last is None:
        out_b = 2 * H * W * C2 * 2
        return pl.pallas_call(
            functools.partial(_up_kernel, H=H, W=W),
            out_shape=jax.ShapeDtypeStruct((N, H, W, C2), jnp.bfloat16),
            grid=(N,),
            in_specs=in_specs,
            out_specs=pl.BlockSpec((1, H, W, C2), lambda n: (n, 0, 0, 0)),
            scratch_shapes=scratch,
            compiler_params=_params(blk_b, out_b, w_b, scratch_b),
        )(*args)
    wl, bl, prev = last
    Co = wl.shape[0]
    wl2d = jnp.transpose(wl[:, :, 0, 0], (1, 0)).astype(jnp.bfloat16)     # (C2, Co)
    in_specs += [_const_spec((C2, Co)),
                 _const_spec((1, Co)),
                 pl.BlockSpec((1, H, W, Co), lambda n: (n, 0, 0, 0))]
    args += [wl2d, _row(bl), prev]
    out_b = 4 * H * W * Co * 4
    return pl.pallas_call(
        functools.partial(_up_final_kernel, H=H, W=W),
        out_shape=jax.ShapeDtypeStruct((N, H, W, Co), jnp.float32),
        grid=(N,),
        in_specs=in_specs,
        out_specs=pl.BlockSpec((1, H, W, Co), lambda n: (n, 0, 0, 0)),
        scratch_shapes=scratch,
        input_output_aliases={9: 0},        # prev aliases the residual output
        compiler_params=_params(blk_b, out_b, w_b, scratch_b),
    )(*args)


def upconv2x2(x, wt, bt):
    """ConvTranspose2d(k=2, s=2) as a per-batch Pallas kernel.

    Emits (N, h, 2, w, 2*Cout) with dy on dim 2 and dx packed dx-major into the lanes, so the
    public (N, 2h, 2w, Cout) tensor is a pure row-major reshape (no XLA transpose pass)."""
    N, h, w, Cin = x.shape
    Cout = wt.shape[1]
    wp0 = jnp.transpose(wt[:, :, 0, :], (0, 2, 1)).reshape(Cin, 2 * Cout).astype(jnp.bfloat16)
    wp1 = jnp.transpose(wt[:, :, 1, :], (0, 2, 1)).reshape(Cin, 2 * Cout).astype(jnp.bfloat16)
    brow = jnp.tile(bt, 2).reshape(1, 2 * Cout).astype(jnp.float32)
    blk_b = 2 * (h * w * Cin * 2 + 4 * h * w * Cout * 2)
    w_b = 2 * (wp0.size + wp1.size) + 8 * Cout
    out = pl.pallas_call(
        functools.partial(_upconv_kernel, h=h, w=w),
        out_shape=jax.ShapeDtypeStruct((N, h, 2, w, 2 * Cout), jnp.bfloat16),
        grid=(N,),
        in_specs=[pl.BlockSpec((1, h, w, Cin), lambda n: (n, 0, 0, 0)),
                  _const_spec((Cin, 2 * Cout)),
                  _const_spec((Cin, 2 * Cout)),
                  _const_spec((1, 2 * Cout))],
        out_specs=pl.BlockSpec((1, h, 2, w, 2 * Cout), lambda n: (n, 0, 0, 0, 0)),
        compiler_params=_params(blk_b, w_b),
    )(x, wp0, wp1, brow)
    return out.reshape(N, 2 * h, 2 * w, Cout)


# --------------------------- parameters / forward ---------------------------

def _conv_params(key, cin, cout, kh, kw):
    k1, k2 = jax.random.split(key)
    bound = 1.0 / math.sqrt(cin * kh * kw)
    w = jax.random.uniform(k1, (cout, cin, kh, kw), jnp.float32, -bound, bound)
    b = jax.random.uniform(k2, (cout,), jnp.float32, -bound, bound)
    return w, b


def init_params(key, in_channels, out_channels, depth, init_width):
    params = {"down": [], "up": []}
    prev = in_channels
    for i in range(depth):
        cout = init_width * (2 ** i)
        key, k1, k2 = jax.random.split(key, 3)
        params["down"].append((_conv_params(k1, prev, cout, 3, 3),
                               _conv_params(k2, cout, cout, 3, 3)))
        prev = cout
    for i in reversed(range(depth - 1)):
        cout = init_width * (2 ** i)
        key, kt, k1, k2 = jax.random.split(key, 4)
        kt1, kt2 = jax.random.split(kt)
        bound = 1.0 / math.sqrt(cout * 2 * 2)
        wt = jax.random.uniform(kt1, (prev, cout, 2, 2), jnp.float32, -bound, bound)
        bt = jax.random.uniform(kt2, (cout,), jnp.float32, -bound, bound)
        params["up"].append((wt, bt,
                             _conv_params(k1, 2 * cout, cout, 3, 3),
                             _conv_params(k2, cout, cout, 3, 3)))
        prev = cout
    key, kl = jax.random.split(key)
    params["last"] = _conv_params(kl, prev, out_channels, 1, 1)
    return params


def score_residue_forward(params, inp_nchw, prev_nchw):
    assert params["up"], "depth must be >= 2"
    inp = jnp.transpose(inp_nchw, (0, 2, 3, 1))
    prev = jnp.transpose(prev_nchw, (0, 2, 3, 1)).astype(jnp.float32)
    x = jnp.concatenate([inp, prev], axis=-1).astype(jnp.bfloat16)   # cat(dim=1) in NHWC
    skips = []
    depth = len(params["down"])
    for i, ((w1, b1), (w2, b2)) in enumerate(params["down"]):
        if i != depth - 1:
            skip, x = down_level(x, w1, b1, w2, b2, pool=True)
            skips.append(skip)
        else:
            x = down_level(x, w1, b1, w2, b2, pool=False)
    nup = len(params["up"])
    wl, bl = params["last"]
    out = None
    for j, (wt, bt, (w1, b1), (w2, b2)) in enumerate(params["up"]):
        u = upconv2x2(x, wt, bt)
        skip = skips[-j - 1]
        if j != nup - 1:
            x = up_level(u, skip, w1, b1, w2, b2)
        else:
            out = up_level(u, skip, w1, b1, w2, b2, last=(wl, bl, prev))
    return jnp.transpose(out, (0, 3, 1, 2))                          # back to NCHW


# ------------------------------ pure-JAX reference ------------------------------
# Mirrors the kernel's bf16 quantization points so only f32 accumulation order differs.

def _ref_conv3x3(x, w_torch, b):
    xb = x.astype(jnp.bfloat16)
    wb = jnp.transpose(w_torch, (2, 3, 1, 0)).astype(jnp.bfloat16)   # HWIO
    y = jax.lax.conv_general_dilated(
        xb, wb, (1, 1), "SAME",
        dimension_numbers=("NHWC", "HWIO", "NHWC"),
        preferred_element_type=jnp.float32)
    return y + b


def ref_forward(params, inp_nchw, prev_nchw):
    inp = jnp.transpose(inp_nchw, (0, 2, 3, 1))
    prev = jnp.transpose(prev_nchw, (0, 2, 3, 1))
    x = jnp.concatenate([inp, prev], axis=-1)
    skips = []
    depth = len(params["down"])
    for i, ((w1, b1), (w2, b2)) in enumerate(params["down"]):
        x = jax.nn.relu(_ref_conv3x3(x, w1, b1))
        x = jax.nn.relu(_ref_conv3x3(x, w2, b2))
        if i != depth - 1:
            skips.append(x)
            x = jax.lax.reduce_window(x, -jnp.inf, jax.lax.max,
                                      (1, 2, 2, 1), (1, 2, 2, 1), "VALID")
    for j, (wt, bt, (w1, b1), (w2, b2)) in enumerate(params["up"]):
        y = jnp.einsum("nhwi,iojk->nhjwko", x.astype(jnp.bfloat16),
                       wt.astype(jnp.bfloat16),
                       preferred_element_type=jnp.float32)
        n, h, _, w, _, cout = y.shape
        x = y.reshape(n, 2 * h, 2 * w, cout) + bt
        x = jnp.concatenate([x, skips[-j - 1]], axis=-1)
        x = jax.nn.relu(_ref_conv3x3(x, w1, b1))
        x = jax.nn.relu(_ref_conv3x3(x, w2, b2))
    wl, bl = params["last"]
    wl2 = jnp.transpose(wl[:, :, 0, 0], (1, 0)).astype(jnp.bfloat16)
    head = jnp.einsum("nhwc,co->nhwo", x.astype(jnp.bfloat16), wl2,
                      preferred_element_type=jnp.float32) + bl
    return jnp.transpose(prev + head, (0, 3, 1, 2))


# ------------------------------------ main ------------------------------------

if __name__ == "__main__":
    key = jax.random.PRNGKey(0)
    kp, ki, kr = jax.random.split(key, 3)

    N, H, W = 2, 16, 16
    base_in, out_ch = 1, 3              # forwardRes: backbone sees base_in + out_ch channels
    depth, init_width = 2, 8            # small synthetic config (module defaults: 4 / 64)

    params = init_params(kp, base_in + out_ch, out_ch, depth, init_width)
    inp = jax.random.normal(ki, (N, base_in, H, W), jnp.float32)
    prev = jax.random.normal(kr, (N, out_ch, H, W), jnp.float32)

    fwd = jax.jit(functools.partial(score_residue_forward, params))
    out = jax.block_until_ready(fwd(inp, prev))

    ref = jax.block_until_ready(ref_forward(params, inp, prev))
    assert out.shape == (N, out_ch, H, W)
    err = float(jnp.max(jnp.abs(out - ref)))
    # bf16 activations on both sides (casts mirrored); tolerance covers rare 1-ULP bf16 flips.
    assert jnp.allclose(out, ref, atol=2e-2, rtol=2e-2), err
    print("KERNEL_OK")
</pallas_src>

<mosaic_0001>
module attributes {stable_mosaic.version = 11 : i64} {
  func.func @_down_last_kernel(%arg0: i32, %arg1: memref<1x8x8x8xbf16, #tpu.memory_space<vmem>>, %arg2: memref<3x24x16xbf16, #tpu.memory_space<vmem>>, %arg3: memref<1x16xf32, #tpu.memory_space<vmem>>, %arg4: memref<3x48x16xbf16, #tpu.memory_space<vmem>>, %arg5: memref<1x16xf32, #tpu.memory_space<vmem>>, %arg6: memref<1x8x8x16xbf16, #tpu.memory_space<vmem>>, %arg7: memref<10x10x8xbf16, #tpu.memory_space<vmem>>, %arg8: memref<10x10x16xbf16, #tpu.memory_space<vmem>>) attributes {dimension_semantics = [#tpu.dimension_semantics<parallel>], iteration_bounds = array<i64: 2>, scalar_prefetch = 0 : i64, scratch_operands = 2 : i64, tpu.core_type = #tpu.core_type<tc>, window_params = [{transform_indices = @transform_0, window_bounds = array<i64: 1, 8, 8, 8>}, {pipeline_mode = #tpu.pipeline_mode<synchronous>, transform_indices = @transform_1, window_bounds = array<i64: 3, 24, 16>}, {pipeline_mode = #tpu.pipeline_mode<synchronous>, transform_indices = @transform_2, window_bounds = array<i64: 1, 16>}, {pipeline_mode = #tpu.pipeline_mode<synchronous>, transform_indices = @transform_3, window_bounds = array<i64: 3, 48, 16>}, {pipeline_mode = #tpu.pipeline_mode<synchronous>, transform_indices = @transform_4, window_bounds = array<i64: 1, 16>}, {transform_indices = @transform_5, window_bounds = array<i64: 1, 8, 8, 16>}]} {
    %c0 = arith.constant 0 : index
    %c0_0 = arith.constant 0 : index
    %c0_1 = arith.constant 0 : index
    %c0_2 = arith.constant 0 : index
    %0 = vector.load %arg1[%c0, %c0_0, %c0_1, %c0_2] : memref<1x8x8x8xbf16, #tpu.memory_space<vmem>>, vector<1x8x8x8xbf16>
    %1 = vector.shape_cast %0 : vector<1x8x8x8xbf16> to vector<8x8x8xbf16>
    %cst = arith.constant 0.000000e+00 : bf16
    %2 = vector.broadcast %cst : bf16 to vector<1x10x8xbf16>
    %cst_3 = arith.constant 0.000000e+00 : bf16
    %3 = vector.broadcast %cst_3 : bf16 to vector<8x1x8xbf16>
    %c0_4 = arith.constant 0 : index
    %c0_5 = arith.constant 0 : index
    %c0_6 = arith.constant 0 : index
    %4 = vector.load %arg7[%c0_4, %c0_5, %c0_6] : memref<10x10x8xbf16, #tpu.memory_space<vmem>>, vector<1x10x8xbf16>
    tpu.vector_store %arg7[%c0_4, %c0_5, %c0_6], %2 {strides = array<i32>} : memref<10x10x8xbf16, #tpu.memory_space<vmem>>, vector<1x10x8xbf16>,
    %c9 = arith.constant 9 : index
    %c0_7 = arith.constant 0 : index
    %c0_8 = arith.constant 0 : index
    %5 = vector.load %arg7[%c9, %c0_7, %c0_8] : memref<10x10x8xbf16, #tpu.memory_space<vmem>>, vector<1x10x8xbf16>
    tpu.vector_store %arg7[%c9, %c0_7, %c0_8], %2 {strides = array<i32>} : memref<10x10x8xbf16, #tpu.memory_space<vmem>>, vector<1x10x8xbf16>,
    %c1 = arith.constant 1 : index
    %c0_9 = arith.constant 0 : index
    %c0_10 = arith.constant 0 : index
    %6 = vector.load %arg7[%c1, %c0_9, %c0_10] : memref<10x10x8xbf16, #tpu.memory_space<vmem>>, vector<8x1x8xbf16>
    tpu.vector_store %arg7[%c1, %c0_9, %c0_10], %3 {strides = array<i32>} : memref<10x10x8xbf16, #tpu.memory_space<vmem>>, vector<8x1x8xbf16>,
    %c1_11 = arith.constant 1 : index
    %c9_12 = arith.constant 9 : index
    %c0_13 = arith.constant 0 : index
    %7 = vector.load %arg7[%c1_11, %c9_12, %c0_13] : memref<10x10x8xbf16, #tpu.memory_space<vmem>>, vector<8x1x8xbf16>
    tpu.vector_store %arg7[%c1_11, %c9_12, %c0_13], %3 {strides = array<i32>} : memref<10x10x8xbf16, #tpu.memory_space<vmem>>, vector<8x1x8xbf16>,
    %c1_14 = arith.constant 1 : index
    %c1_15 = arith.constant 1 : index
    %c0_16 = arith.constant 0 : index
    %8 = vector.load %arg7[%c1_14, %c1_15, %c0_16] : memref<10x10x8xbf16, #tpu.memory_space<vmem>>, vector<8x8x8xbf16>
    tpu.vector_store %arg7[%c1_14, %c1_15, %c0_16], %1 {strides = array<i32>} : memref<10x10x8xbf16, #tpu.memory_space<vmem>>, vector<8x8x8xbf16>,
    %c0_17 = arith.constant 0 : index
    %c0_18 = arith.constant 0 : index
    %c0_19 = arith.constant 0 : index
    %9 = vector.load %arg7[%c0_17, %c0_18, %c0_19] : memref<10x10x8xbf16, #tpu.memory_space<vmem>>, vector<10x10x8xbf16>
    %cst_20 = arith.constant 0.000000e+00 : f32
    %10 = vector.broadcast %cst_20 : f32 to vector<64x16xf32>
    %11 = vector.extract_strided_slice %9 {offsets = [0, 0, 0], sizes = [8, 10, 8], strides = [1, 1, 1]} : vector<10x10x8xbf16> to vector<8x10x8xbf16>
    %12 = vector.extract_strided_slice %11 {offsets = [0, 0, 0], sizes = [8, 8, 8], strides = [1, 1, 1]} : vector<8x10x8xbf16> to vector<8x8x8xbf16>
    %13 = vector.extract_strided_slice %11 {offsets = [0, 1, 0], sizes = [8, 8, 8], strides = [1, 1, 1]} : vector<8x10x8xbf16> to vector<8x8x8xbf16>
    %14 = vector.extract_strided_slice %11 {offsets = [0, 2, 0], sizes = [8, 8, 8], strides = [1, 1, 1]} : vector<8x10x8xbf16> to vector<8x8x8xbf16>
    %15 = tpu.concatenate %12, %13, %14 in 2 : vector<8x8x8xbf16>, vector<8x8x8xbf16>, vector<8x8x8xbf16> -> vector<8x8x24xbf16>
    %16 = vector.shape_cast %15 : vector<8x8x24xbf16> to vector<64x24xbf16>
    %c0_21 = arith.constant 0 : index
    %c0_22 = arith.constant 0 : index
    %c0_23 = arith.constant 0 : index
    %17 = vector.load %arg2[%c0_21, %c0_22, %c0_23] : memref<3x24x16xbf16, #tpu.memory_space<vmem>>, vector<1x24x16xbf16>
    %18 = vector.shape_cast %17 : vector<1x24x16xbf16> to vector<24x16xbf16>
    %cst_24 = arith.constant dense<0.000000e+00> : vector<64x16xf32>
    %19 = tpu.matmul %16, %18, %cst_24 {dimension_numbers = #tpu.dot_dimension_numbers<[1], [0], [0], [1], [0, 0, 1, 1], [], []>} : vector<64x24xbf16>, vector<24x16xbf16>, vector<64x16xf32> -> vector<64x16xf32>
    %20 = arith.addf %10, %19 : vector<64x16xf32>
    %21 = vector.extract_strided_slice %9 {offsets = [1, 0, 0], sizes = [8, 10, 8], strides = [1, 1, 1]} : vector<10x10x8xbf16> to vector<8x10x8xbf16>
    %22 = vector.extract_strided_slice %21 {offsets = [0, 0, 0], sizes = [8, 8, 8], strides = [1, 1, 1]} : vector<8x10x8xbf16> to vector<8x8x8xbf16>
    %23 = vector.extract_strided_slice %21 {offsets = [0, 1, 0], sizes = [8, 8, 8], strides = [1, 1, 1]} : vector<8x10x8xbf16> to vector<8x8x8xbf16>
    %24 = vector.extract_strided_slice %21 {offsets = [0, 2, 0], sizes = [8, 8, 8], strides = [1, 1, 1]} : vector<8x10x8xbf16> to vector<8x8x8xbf16>
    %25 = tpu.concatenate %22, %23, %24 in 2 : vector<8x8x8xbf16>, vector<8x8x8xbf16>, vector<8x8x8xbf16> -> vector<8x8x24xbf16>
    %26 = vector.shape_cast %25 : vector<8x8x24xbf16> to vector<64x24xbf16>
    %c1_25 = arith.constant 1 : index
    %c0_26 = arith.constant 0 : index
    %c0_27 = arith.constant 0 : index
    %27 = vector.load %arg2[%c1_25, %c0_26, %c0_27] : memref<3x24x16xbf16, #tpu.memory_space<vmem>>, vector<1x24x16xbf16>
    %28 = vector.shape_cast %27 : vector<1x24x16xbf16> to vector<24x16xbf16>
    %cst_28 = arith.constant dense<0.000000e+00> : vector<64x16xf32>
    %29 = tpu.matmul %26, %28, %cst_28 {dimension_numbers = #tpu.dot_dimension_numbers<[1], [0], [0], [1], [0, 0, 1, 1], [], []>} : vector<64x24xbf16>, vector<24x16xbf16>, vector<64x16xf32> -> vector<64x16xf32>
    %30 = arith.addf %20, %29 : vector<64x16xf32>
    %31 = vector.extract_strided_slice %9 {offsets = [2, 0, 0], sizes = [8, 10, 8], strides = [1, 1, 1]} : vector<10x10x8xbf16> to vector<8x10x8xbf16>
    %32 = vector.extract_strided_slice %31 {offsets = [0, 0, 0], sizes = [8, 8, 8], strides = [1, 1, 1]} : vector<8x10x8xbf16> to vector<8x8x8xbf16>
    %33 = vector.extract_strided_slice %31 {offsets = [0, 1, 0], sizes = [8, 8, 8], strides = [1, 1, 1]} : vector<8x10x8xbf16> to vector<8x8x8xbf16>
    %34 = vector.extract_strided_slice %31 {offsets = [0, 2, 0], sizes = [8, 8, 8], strides = [1, 1, 1]} : vector<8x10x8xbf16> to vector<8x8x8xbf16>
    %35 = tpu.concatenate %32, %33, %34 in 2 : vector<8x8x8xbf16>, vector<8x8x8xbf16>, vector<8x8x8xbf16> -> vector<8x8x24xbf16>
    %36 = vector.shape_cast %35 : vector<8x8x24xbf16> to vector<64x24xbf16>
    %c2 = arith.constant 2 : index
    %c0_29 = arith.constant 0 : index
    %c0_30 = arith.constant 0 : index
    %37 = vector.load %arg2[%c2, %c0_29, %c0_30] : memref<3x24x16xbf16, #tpu.memory_space<vmem>>, vector<1x24x16xbf16>
    %38 = vector.shape_cast %37 : vector<1x24x16xbf16> to vector<24x16xbf16>
    %cst_31 = arith.constant dense<0.000000e+00> : vector<64x16xf32>
    %39 = tpu.matmul %36, %38, %cst_31 {dimension_numbers = #tpu.dot_dimension_numbers<[1], [0], [0], [1], [0, 0, 1, 1], [], []>} : vector<64x24xbf16>, vector<24x16xbf16>, vector<64x16xf32> -> vector<64x16xf32>
    %40 = arith.addf %30, %39 : vector<64x16xf32>
    %c0_32 = arith.constant 0 : index
    %c0_33 = arith.constant 0 : index
    %41 = vector.load %arg3[%c0_32, %c0_33] : memref<1x16xf32, #tpu.memory_space<vmem>>, vector<1x16xf32>
    %42 = vector.broadcast %41 : vector<1x16xf32> to vector<64x16xf32>
    %43 = arith.addf %40, %42 : vector<64x16xf32>
    %cst_34 = arith.constant 0.000000e+00 : f32
    %44 = vector.broadcast %cst_34 : f32 to vector<64x16xf32>
    %45 = arith.maximumf %43, %44 : vector<64x16xf32>
    %46 = vector.shape_cast %45 : vector<64x16xf32> to vector<8x8x16xf32>
    %cst_35 = arith.constant 0.000000e+00 : bf16
    %47 = vector.broadcast %cst_35 : bf16 to vector<1x10x16xbf16>
    %cst_36 = arith.constant 0.000000e+00 : bf16
    %48 = vector.broadcast %cst_36 : bf16 to vector<8x1x16xbf16>
    %c0_37 = arith.constant 0 : index
    %c0_38 = arith.constant 0 : index
    %c0_39 = arith.constant 0 : index
    %49 = vector.load %arg8[%c0_37, %c0_38, %c0_39] : memref<10x10x16xbf16, #tpu.memory_space<vmem>>, vector<1x10x16xbf16>
    tpu.vector_store %arg8[%c0_37, %c0_38, %c0_39], %47 {strides = array<i32>} : memref<10x10x16xbf16, #tpu.memory_space<vmem>>, vector<1x10x16xbf16>,
    %c9_40 = arith.constant 9 : index
    %c0_41 = arith.constant 0 : index
    %c0_42 = arith.constant 0 : index
    %50 = vector.load %arg8[%c9_40, %c0_41, %c0_42] : memref<10x10x16xbf16, #tpu.memory_space<vmem>>, vector<1x10x16xbf16>
    tpu.vector_store %arg8[%c9_40, %c0_41, %c0_42], %47 {strides = array<i32>} : memref<10x10x16xbf16, #tpu.memory_space<vmem>>, vector<1x10x16xbf16>,
    %c1_43 = arith.constant 1 : index
    %c0_44 = arith.constant 0 : index
    %c0_45 = arith.constant 0 : index
    %51 = vector.load %arg8[%c1_43, %c0_44, %c0_45] : memref<10x10x16xbf16, #tpu.memory_space<vmem>>, vector<8x1x16xbf16>
    tpu.vector_store %arg8[%c1_43, %c0_44, %c0_45], %48 {strides = array<i32>} : memref<10x10x16xbf16, #tpu.memory_space<vmem>>, vector<8x1x16xbf16>,
    %c1_46 = arith.constant 1 : index
    %c9_47 = arith.constant 9 : index
    %c0_48 = arith.constant 0 : index
    %52 = vector.load %arg8[%c1_46, %c9_47, %c0_48] : memref<10x10x16xbf16, #tpu.memory_space<vmem>>, vector<8x1x16xbf16>
    tpu.vector_store %arg8[%c1_46, %c9_47, %c0_48], %48 {strides = array<i32>} : memref<10x10x16xbf16, #tpu.memory_space<vmem>>, vector<8x1x16xbf16>,
    %53 = arith.truncf %46 : vector<8x8x16xf32> to vector<8x8x16xbf16>
    %c1_49 = arith.constant 1 : index
    %c1_50 = arith.constant 1 : index
    %c0_51 = arith.constant 0 : index
    %54 = vector.load %arg8[%c1_49, %c1_50, %c0_51] : memref<10x10x16xbf16, #tpu.memory_space<vmem>>, vector<8x8x16xbf16>
    tpu.vector_store %arg8[%c1_49, %c1_50, %c0_51], %53 {strides = array<i32>} : memref<10x10x16xbf16, #tpu.memory_space<vmem>>, vector<8x8x16xbf16>,
    %c0_52 = arith.constant 0 : index
    %c0_53 = arith.constant 0 : index
    %c0_54 = arith.constant 0 : index
    %55 = vector.load %arg8[%c0_52, %c0_53, %c0_54] : memref<10x10x16xbf16, #tpu.memory_space<vmem>>, vector<10x10x16xbf16>
    %cst_55 = arith.constant 0.000000e+00 : f32
    %56 = vector.broadcast %cst_55 : f32 to vector<64x16xf32>
    %57 = vector.extract_strided_slice %55 {offsets = [0, 0, 0], sizes = [8, 10, 16], strides = [1, 1, 1]} : vector<10x10x16xbf16> to vector<8x10x16xbf16>
    %58 = vector.extract_strided_slice %57 {offsets = [0, 0, 0], sizes = [8, 8, 16], strides = [1, 1, 1]} : vector<8x10x16xbf16> to vector<8x8x16xbf16>
    %59 = vector.extract_strided_slice %57 {offsets = [0, 1, 0], sizes = [8, 8, 16], strides = [1, 1, 1]} : vector<8x10x16xbf16> to vector<8x8x16xbf16>
    %60 = vector.extract_strided_slice %57 {offsets = [0, 2, 0], sizes = [8, 8, 16], strides = [1, 1, 1]} : vector<8x10x16xbf16> to vector<8x8x16xbf16>
    %61 = tpu.concatenate %58, %59, %60 in 2 : vector<8x8x16xbf16>, vector<8x8x16xbf16>, vector<8x8x16xbf16> -> vector<8x8x48xbf16>
    %62 = vector.shape_cast %61 : vector<8x8x48xbf16> to vector<64x48xbf16>
    %c0_56 = arith.constant 0 : index
    %c0_57 = arith.constant 0 : index
    %c0_58 = arith.constant 0 : index
    %63 = vector.load %arg4[%c0_56, %c0_57, %c0_58] : memref<3x48x16xbf16, #tpu.memory_space<vmem>>, vector<1x48x16xbf16>
    %64 = vector.shape_cast %63 : vector<1x48x16xbf16> to vector<48x16xbf16>
    %cst_59 = arith.constant dense<0.000000e+00> : vector<64x16xf32>
    %65 = tpu.matmul %62, %64, %cst_59 {dimension_numbers = #tpu.dot_dimension_numbers<[1], [0], [0], [1], [0, 0, 1, 1], [], []>} : vector<64x48xbf16>, vector<48x16xbf16>, vector<64x16xf32> -> vector<64x16xf32>
    %66 = arith.addf %56, %65 : vector<64x16xf32>
    %67 = vector.extract_strided_slice %55 {offsets = [1, 0, 0], sizes = [8, 10, 16], strides = [1, 1, 1]} : vector<10x10x16xbf16> to vector<8x10x16xbf16>
    %68 = vector.extract_strided_slice %67 {offsets = [0, 0, 0], sizes = [8, 8, 16], strides = [1, 1, 1]} : vector<8x10x16xbf16> to vector<8x8x16xbf16>
    %69 = vector.extract_strided_slice %67 {offsets = [0, 1, 0], sizes = [8, 8, 16], strides = [1, 1, 1]} : vector<8x10x16xbf16> to vector<8x8x16xbf16>
    %70 = vector.extract_strided_slice %67 {offsets = [0, 2, 0], sizes = [8, 8, 16], strides = [1, 1, 1]} : vector<8x10x16xbf16> to vector<8x8x16xbf16>
    %71 = tpu.concatenate %68, %69, %70 in 2 : vector<8x8x16xbf16>, vector<8x8x16xbf16>, vector<8x8x16xbf16> -> vector<8x8x48xbf16>
    %72 = vector.shape_cast %71 : vector<8x8x48xbf16> to vector<64x48xbf16>
    %c1_60 = arith.constant 1 : index
    %c0_61 = arith.constant 0 : index
    %c0_62 = arith.constant 0 : index
    %73 = vector.load %arg4[%c1_60, %c0_61, %c0_62] : memref<3x48x16xbf16, #tpu.memory_space<vmem>>, vector<1x48x16xbf16>
    %74 = vector.shape_cast %73 : vector<1x48x16xbf16> to vector<48x16xbf16>
    %cst_63 = arith.constant dense<0.000000e+00> : vector<64x16xf32>
    %75 = tpu.matmul %72, %74, %cst_63 {dimension_numbers = #tpu.dot_dimension_numbers<[1], [0], [0], [1], [0, 0, 1, 1], [], []>} : vector<64x48xbf16>, vector<48x16xbf16>, vector<64x16xf32> -> vector<64x16xf32>
    %76 = arith.addf %66, %75 : vector<64x16xf32>
    %77 = vector.extract_strided_slice %55 {offsets = [2, 0, 0], sizes = [8, 10, 16], strides = [1, 1, 1]} : vector<10x10x16xbf16> to vector<8x10x16xbf16>
    %78 = vector.extract_strided_slice %77 {offsets = [0, 0, 0], sizes = [8, 8, 16], strides = [1, 1, 1]} : vector<8x10x16xbf16> to vector<8x8x16xbf16>
    %79 = vector.extract_strided_slice %77 {offsets = [0, 1, 0], sizes = [8, 8, 16], strides = [1, 1, 1]} : vector<8x10x16xbf16> to vector<8x8x16xbf16>
    %80 = vector.extract_strided_slice %77 {offsets = [0, 2, 0], sizes = [8, 8, 16], strides = [1, 1, 1]} : vector<8x10x16xbf16> to vector<8x8x16xbf16>
    %81 = tpu.concatenate %78, %79, %80 in 2 : vector<8x8x16xbf16>, vector<8x8x16xbf16>, vector<8x8x16xbf16> -> vector<8x8x48xbf16>
    %82 = vector.shape_cast %81 : vector<8x8x48xbf16> to vector<64x48xbf16>
    %c2_64 = arith.constant 2 : index
    %c0_65 = arith.constant 0 : index
    %c0_66 = arith.constant 0 : index
    %83 = vector.load %arg4[%c2_64, %c0_65, %c0_66] : memref<3x48x16xbf16, #tpu.memory_space<vmem>>, vector<1x48x16xbf16>
    %84 = vector.shape_cast %83 : vector<1x48x16xbf16> to vector<48x16xbf16>
    %cst_67 = arith.constant dense<0.000000e+00> : vector<64x16xf32>
    %85 = tpu.matmul %82, %84, %cst_67 {dimension_numbers = #tpu.dot_dimension_numbers<[1], [0], [0], [1], [0, 0, 1, 1], [], []>} : vector<64x48xbf16>, vector<48x16xbf16>, vector<64x16xf32> -> vector<64x16xf32>
    %86 = arith.addf %76, %85 : vector<64x16xf32>
    %c0_68 = arith.constant 0 : index
    %c0_69 = arith.constant 0 : index
    %87 = vector.load %arg5[%c0_68, %c0_69] : memref<1x16xf32, #tpu.memory_space<vmem>>, vector<1x16xf32>
    %88 = vector.broadcast %87 : vector<1x16xf32> to vector<64x16xf32>
    %89 = arith.addf %86, %88 : vector<64x16xf32>
    %cst_70 = arith.constant 0.000000e+00 : f32
    %90 = vector.broadcast %cst_70 : f32 to vector<64x16xf32>
    %91 = arith.maximumf %89, %90 : vector<64x16xf32>
    %92 = vector.shape_cast %91 : vector<64x16xf32> to vector<8x8x16xf32>
    %93 = arith.truncf %92 : vector<8x8x16xf32> to vector<8x8x16xbf16>
    %c0_71 = arith.constant 0 : index
    %c0_72 = arith.constant 0 : index
    %c0_73 = arith.constant 0 : index
    %c0_74 = arith.constant 0 : index
    %94 = vector.load %arg6[%c0_71, %c0_72, %c0_73, %c0_74] : memref<1x8x8x16xbf16, #tpu.memory_space<vmem>>, vector<1x8x8x16xbf16>
    %95 = vector.shape_cast %94 : vector<1x8x8x16xbf16> to vector<8x8x16xbf16>
    %96 = vector.shape_cast %93 : vector<8x8x16xbf16> to vector<1x8x8x16xbf16>
    tpu.vector_store %arg6[%c0_71, %c0_72, %c0_73, %c0_74], %96 {strides = array<i32>} : memref<1x8x8x16xbf16, #tpu.memory_space<vmem>>, vector<1x8x8x16xbf16>,
    return
  }
  func.func @transform_0(%arg0: i32) -> (i32, i32, i32, i32) {
    %c0_i32 = arith.constant 0 : i32
    %c0_i32_0 = arith.constant 0 : i32
    %c0_i32_1 = arith.constant 0 : i32
    %c0_i32_2 = arith.constant 0 : i32
    return %arg0, %c0_i32, %c0_i32_0, %c0_i32_1 : i32, i32, i32, i32
  }
  func.func @transform_1(%arg0: i32) -> (i32, i32, i32) {
    %c0_i32 = arith.constant 0 : i32
    %c0_i32_0 = arith.constant 0 : i32
    %c0_i32_1 = arith.constant 0 : i32
    %c0_i32_2 = arith.constant 0 : i32
    return %c0_i32, %c0_i32_0, %c0_i32_1 : i32, i32, i32
  }
  func.func @transform_2(%arg0: i32) -> (i32, i32) {
    %c0_i32 = arith.constant 0 : i32
    %c0_i32_0 = arith.constant 0 : i32
    %c0_i32_1 = arith.constant 0 : i32
    return %c0_i32, %c0_i32_0 : i32, i32
  }
  func.func @transform_3(%arg0: i32) -> (i32, i32, i32) {
    %c0_i32 = arith.constant 0 : i32
    %c0_i32_0 = arith.constant 0 : i32
    %c0_i32_1 = arith.constant 0 : i32
    %c0_i32_2 = arith.constant 0 : i32
    return %c0_i32, %c0_i32_0, %c0_i32_1 : i32, i32, i32
  }
  func.func @transform_4(%arg0: i32) -> (i32, i32) {
    %c0_i32 = arith.constant 0 : i32
    %c0_i32_0 = arith.constant 0 : i32
    %c0_i32_1 = arith.constant 0 : i32
    return %c0_i32, %c0_i32_0 : i32, i32
  }
  func.func @transform_5(%arg0: i32) -> (i32, i32, i32, i32) {
    %c0_i32 = arith.constant 0 : i32
    %c0_i32_0 = arith.constant 0 : i32
    %c0_i32_1 = arith.constant 0 : i32
    %c0_i32_2 = arith.constant 0 : i32
    return %arg0, %c0_i32, %c0_i32_0, %c0_i32_1 : i32, i32, i32, i32
  }
}

module attributes {stable_mosaic.version = 11 : i64} {
  func.func @_down_pool_kernel(%arg0: i32, %arg1: memref<1x16x16x4xbf16, #tpu.memory_space<vmem>>, %arg2: memref<3x12x8xbf16, #tpu.memory_space<vmem>>, %arg3: memref<1x8xf32, #tpu.memory_space<vmem>>, %arg4: memref<3x24x8xbf16, #tpu.memory_space<vmem>>, %arg5: memref<1x8xf32, #tpu.memory_space<vmem>>, %arg6: memref<1x16x16x8xbf16, #tpu.memory_space<vmem>>, %arg7: memref<1x8x8x8xbf16, #tpu.memory_space<vmem>>, %arg8: memref<18x18x4xbf16, #tpu.memory_space<vmem>>, %arg9: memref<18x18x8xbf16, #tpu.memory_space<vmem>>, %arg10: memref<128x8xf32, #tpu.memory_space<vmem>>) attributes {dimension_semantics = [#tpu.dimension_semantics<parallel>], iteration_bounds = array<i64: 2>, scalar_prefetch = 0 : i64, scratch_operands = 3 : i64, tpu.core_type = #tpu.core_type<tc>, window_params = [{transform_indices = @transform_0, window_bounds = array<i64: 1, 16, 16, 4>}, {pipeline_mode = #tpu.pipeline_mode<synchronous>, transform_indices = @transform_1, window_bounds = array<i64: 3, 12, 8>}, {pipeline_mode = #tpu.pipeline_mode<synchronous>, transform_indices = @transform_2, window_bounds = array<i64: 1, 8>}, {pipeline_mode = #tpu.pipeline_mode<synchronous>, transform_indices = @transform_3, window_bounds = array<i64: 3, 24, 8>}, {pipeline_mode = #tpu.pipeline_mode<synchronous>, transform_indices = @transform_4, window_bounds = array<i64: 1, 8>}, {transform_indices = @transform_5, window_bounds = array<i64: 1, 16, 16, 8>}, {transform_indices = @transform_6, window_bounds = array<i64: 1, 8, 8, 8>}]} {
    %c0 = arith.constant 0 : index
    %c0_0 = arith.constant 0 : index
    %c0_1 = arith.constant 0 : index
    %c0_2 = arith.constant 0 : index
    %0 = vector.load %arg1[%c0, %c0_0, %c0_1, %c0_2] : memref<1x16x16x4xbf16, #tpu.memory_space<vmem>>, vector<1x16x16x4xbf16>
    %1 = vector.shape_cast %0 : vector<1x16x16x4xbf16> to vector<16x16x4xbf16>
    %cst = arith.constant 0.000000e+00 : bf16
    %2 = vector.broadcast %cst : bf16 to vector<1x18x4xbf16>
    %cst_3 = arith.constant 0.000000e+00 : bf16
    %3 = vector.broadcast %cst_3 : bf16 to vector<16x1x4xbf16>
    %c0_4 = arith.constant 0 : index
    %c0_5 = arith.constant 0 : index
    %c0_6 = arith.constant 0 : index
    %4 = vector.load %arg8[%c0_4, %c0_5, %c0_6] : memref<18x18x4xbf16, #tpu.memory_space<vmem>>, vector<1x18x4xbf16>
    tpu.vector_store %arg8[%c0_4, %c0_5, %c0_6], %2 {strides = array<i32>} : memref<18x18x4xbf16, #tpu.memory_space<vmem>>, vector<1x18x4xbf16>,
    %c17 = arith.constant 17 : index
    %c0_7 = arith.constant 0 : index
    %c0_8 = arith.constant 0 : index
    %5 = vector.load %arg8[%c17, %c0_7, %c0_8] : memref<18x18x4xbf16, #tpu.memory_space<vmem>>, vector<1x18x4xbf16>
    tpu.vector_store %arg8[%c17, %c0_7, %c0_8], %2 {strides = array<i32>} : memref<18x18x4xbf16, #tpu.memory_space<vmem>>, vector<1x18x4xbf16>,
    %c1 = arith.constant 1 : index
    %c0_9 = arith.constant 0 : index
    %c0_10 = arith.constant 0 : index
    %6 = vector.load %arg8[%c1, %c0_9, %c0_10] : memref<18x18x4xbf16, #tpu.memory_space<vmem>>, vector<16x1x4xbf16>
    tpu.vector_store %arg8[%c1, %c0_9, %c0_10], %3 {strides = array<i32>} : memref<18x18x4xbf16, #tpu.memory_space<vmem>>, vector<16x1x4xbf16>,
    %c1_11 = arith.constant 1 : index
    %c17_12 = arith.constant 17 : index
    %c0_13 = arith.constant 0 : index
    %7 = vector.load %arg8[%c1_11, %c17_12, %c0_13] : memref<18x18x4xbf16, #tpu.memory_space<vmem>>, vector<16x1x4xbf16>
    tpu.vector_store %arg8[%c1_11, %c17_12, %c0_13], %3 {strides = array<i32>} : memref<18x18x4xbf16, #tpu.memory_space<vmem>>, vector<16x1x4xbf16>,
    %c1_14 = arith.constant 1 : index
    %c1_15 = arith.constant 1 : index
    %c0_16 = arith.constant 0 : index
    %8 = vector.load %arg8[%c1_14, %c1_15, %c0_16] : memref<18x18x4xbf16, #tpu.memory_space<vmem>>, vector<16x16x4xbf16>
    tpu.vector_store %arg8[%c1_14, %c1_15, %c0_16], %1 {strides = array<i32>} : memref<18x18x4xbf16, #tpu.memory_space<vmem>>, vector<16x16x4xbf16>,
    %c0_17 = arith.constant 0 : index
    %c0_18 = arith.constant 0 : index
    %c0_19 = arith.constant 0 : index
    %9 = vector.load %arg8[%c0_17, %c0_18, %c0_19] : memref<18x18x4xbf16, #tpu.memory_space<vmem>>, vector<18x18x4xbf16>
    %cst_20 = arith.constant 0.000000e+00 : f32
    %10 = vector.broadcast %cst_20 : f32 to vector<256x8xf32>
    %11 = vector.extract_strided_slice %9 {offsets = [0, 0, 0], sizes = [16, 18, 4], strides = [1, 1, 1]} : vector<18x18x4xbf16> to vector<16x18x4xbf16>
    %12 = vector.extract_strided_slice %11 {offsets = [0, 0, 0], sizes = [16, 16, 4], strides = [1, 1, 1]} : vector<16x18x4xbf16> to vector<16x16x4xbf16>
    %13 = vector.extract_strided_slice %11 {offsets = [0, 1, 0], sizes = [16, 16, 4], strides = [1, 1, 1]} : vector<16x18x4xbf16> to vector<16x16x4xbf16>
    %14 = vector.extract_strided_slice %11 {offsets = [0, 2, 0], sizes = [16, 16, 4], strides = [1, 1, 1]} : vector<16x18x4xbf16> to vector<16x16x4xbf16>
    %15 = tpu.concatenate %12, %13, %14 in 2 : vector<16x16x4xbf16>, vector<16x16x4xbf16>, vector<16x16x4xbf16> -> vector<16x16x12xbf16>
    %16 = vector.shape_cast %15 : vector<16x16x12xbf16> to vector<256x12xbf16>
    %c0_21 = arith.constant 0 : index
    %c0_22 = arith.constant 0 : index
    %c0_23 = arith.constant 0 : index
    %17 = vector.load %arg2[%c0_21, %c0_22, %c0_23] : memref<3x12x8xbf16, #tpu.memory_space<vmem>>, vector<1x12x8xbf16>
    %18 = vector.shape_cast %17 : vector<1x12x8xbf16> to vector<12x8xbf16>
    %cst_24 = arith.constant dense<0.000000e+00> : vector<256x8xf32>
    %19 = tpu.matmul %16, %18, %cst_24 {dimension_numbers = #tpu.dot_dimension_numbers<[1], [0], [0], [1], [0, 0, 1, 1], [], []>} : vector<256x12xbf16>, vector<12x8xbf16>, vector<256x8xf32> -> vector<256x8xf32>
    %20 = arith.addf %10, %19 : vector<256x8xf32>
    %21 = vector.extract_strided_slice %9 {offsets = [1, 0, 0], sizes = [16, 18, 4], strides = [1, 1, 1]} : vector<18x18x4xbf16> to vector<16x18x4xbf16>
    %22 = vector.extract_strided_slice %21 {offsets = [0, 0, 0], sizes = [16, 16, 4], strides = [1, 1, 1]} : vector<16x18x4xbf16> to vector<16x16x4xbf16>
    %23 = vector.extract_strided_slice %21 {offsets = [0, 1, 0], sizes = [16, 16, 4], strides = [1, 1, 1]} : vector<16x18x4xbf16> to vector<16x16x4xbf16>
    %24 = vector.extract_strided_slice %21 {offsets = [0, 2, 0], sizes = [16, 16, 4], strides = [1, 1, 1]} : vector<16x18x4xbf16> to vector<16x16x4xbf16>
    %25 = tpu.concatenate %22, %23, %24 in 2 : vector<16x16x4xbf16>, vector<16x16x4xbf16>, vector<16x16x4xbf16> -> vector<16x16x12xbf16>
    %26 = vector.shape_cast %25 : vector<16x16x12xbf16> to vector<256x12xbf16>
    %c1_25 = arith.constant 1 : index
    %c0_26 = arith.constant 0 : index
    %c0_27 = arith.constant 0 : index
    %27 = vector.load %arg2[%c1_25, %c0_26, %c0_27] : memref<3x12x8xbf16, #tpu.memory_space<vmem>>, vector<1x12x8xbf16>
    %28 = vector.shape_cast %27 : vector<1x12x8xbf16> to vector<12x8xbf16>
    %cst_28 = arith.constant dense<0.000000e+00> : vector<256x8xf32>
    %29 = tpu.matmul %26, %28, %cst_28 {dimension_numbers = #tpu.dot_dimension_numbers<[1], [0], [0], [1], [0, 0, 1, 1], [], []>} : vector<256x12xbf16>, vector<12x8xbf16>, vector<256x8xf32> -> vector<256x8xf32>
    %30 = arith.addf %20, %29 : vector<256x8xf32>
    %31 = vector.extract_strided_slice %9 {offsets = [2, 0, 0], sizes = [16, 18, 4], strides = [1, 1, 1]} : vector<18x18x4xbf16> to vector<16x18x4xbf16>
    %32 = vector.extract_strided_slice %31 {offsets = [0, 0, 0], sizes = [16, 16, 4], strides = [1, 1, 1]} : vector<16x18x4xbf16> to vector<16x16x4xbf16>
    %33 = vector.extract_strided_slice %31 {offsets = [0, 1, 0], sizes = [16, 16, 4], strides = [1, 1, 1]} : vector<16x18x4xbf16> to vector<16x16x4xbf16>
    %34 = vector.extract_strided_slice %31 {offsets = [0, 2, 0], sizes = [16, 16, 4], strides = [1, 1, 1]} : vector<16x18x4xbf16> to vector<16x16x4xbf16>
    %35 = tpu.concatenate %32, %33, %34 in 2 : vector<16x16x4xbf16>, vector<16x16x4xbf16>, vector<16x16x4xbf16> -> vector<16x16x12xbf16>
    %36 = vector.shape_cast %35 : vector<16x16x12xbf16> to vector<256x12xbf16>
    %c2 = arith.constant 2 : index
    %c0_29 = arith.constant 0 : index
    %c0_30 = arith.constant 0 : index
    %37 = vector.load %arg2[%c2, %c0_29, %c0_30] : memref<3x12x8xbf16, #tpu.memory_space<vmem>>, vector<1x12x8xbf16>
    %38 = vector.shape_cast %37 : vector<1x12x8xbf16> to vector<12x8xbf16>
    %cst_31 = arith.constant dense<0.000000e+00> : vector<256x8xf32>
    %39 = tpu.matmul %36, %38, %cst_31 {dimension_numbers = #tpu.dot_dimension_numbers<[1], [0], [0], [1], [0, 0, 1, 1], [], []>} : vector<256x12xbf16>, vector<12x8xbf16>, vector<256x8xf32> -> vector<256x8xf32>
    %40 = arith.addf %30, %39 : vector<256x8xf32>
    %c0_32 = arith.constant 0 : index
    %c0_33 = arith.constant 0 : index
    %41 = vector.load %arg3[%c0_32, %c0_33] : memref<1x8xf32, #tpu.memory_space<vmem>>, vector<1x8xf32>
    %42 = vector.broadcast %41 : vector<1x8xf32> to vector<256x8xf32>
    %43 = arith.addf %40, %42 : vector<256x8xf32>
    %cst_34 = arith.constant 0.000000e+00 : f32
    %44 = vector.broadcast %cst_34 : f32 to vector<256x8xf32>
    %45 = arith.maximumf %43, %44 : vector<256x8xf32>
    %46 = vector.shape_cast %45 : vector<256x8xf32> to vector<16x16x8xf32>
    %cst_35 = arith.constant 0.000000e+00 : bf16
    %47 = vector.broadcast %cst_35 : bf16 to vector<1x18x8xbf16>
    %cst_36 = arith.constant 0.000000e+00 : bf16
    %48 = vector.broadcast %cst_36 : bf16 to vector<16x1x8xbf16>
    %c0_37 = arith.constant 0 : index
    %c0_38 = arith.constant 0 : index
    %c0_39 = arith.constant 0 : index
    %49 = vector.load %arg9[%c0_37, %c0_38, %c0_39] : memref<18x18x8xbf16, #tpu.memory_space<vmem>>, vector<1x18x8xbf16>
    tpu.vector_store %arg9[%c0_37, %c0_38, %c0_39], %47 {strides = array<i32>} : memref<18x18x8xbf16, #tpu.memory_space<vmem>>, vector<1x18x8xbf16>,
    %c17_40 = arith.constant 17 : index
    %c0_41 = arith.constant 0 : index
    %c0_42 = arith.constant 0 : index
    %50 = vector.load %arg9[%c17_40, %c0_41, %c0_42] : memref<18x18x8xbf16, #tpu.memory_space<vmem>>, vector<1x18x8xbf16>
    tpu.vector_store %arg9[%c17_40, %c0_41, %c0_42], %47 {strides = array<i32>} : memref<18x18x8xbf16, #tpu.memory_space<vmem>>, vector<1x18x8xbf16>,
    %c1_43 = arith.constant 1 : index
    %c0_44 = arith.constant 0 : index
    %c0_45 = arith.constant 0 : index
    %51 = vector.load %arg9[%c1_43, %c0_44, %c0_45] : memref<18x18x8xbf16, #tpu.memory_space<vmem>>, vector<16x1x8xbf16>
    tpu.vector_store %arg9[%c1_43, %c0_44, %c0_45], %48 {strides = array<i32>} : memref<18x18x8xbf16, #tpu.memory_space<vmem>>, vector<16x1x8xbf16>,
    %c1_46 = arith.constant 1 : index
    %c17_47 = arith.constant 17 : index
    %c0_48 = arith.constant 0 : index
    %52 = vector.load %arg9[%c1_46, %c17_47, %c0_48] : memref<18x18x8xbf16, #tpu.memory_space<vmem>>, vector<16x1x8xbf16>
    tpu.vector_store %arg9[%c1_46, %c17_47, %c0_48], %48 {strides = array<i32>} : memref<18x18x8xbf16, #tpu.memory_space<vmem>>, vector<16x1x8xbf16>,
    %53 = arith.truncf %46 : vector<16x16x8xf32> to vector<16x16x8xbf16>
    %c1_49 = arith.constant 1 : index
    %c1_50 = arith.constant 1 : index
    %c0_51 = arith.constant 0 : index
    %54 = vector.load %arg9[%c1_49, %c1_50, %c0_51] : memref<18x18x8xbf16, #tpu.memory_space<vmem>>, vector<16x16x8xbf16>
    tpu.vector_store %arg9[%c1_49, %c1_50, %c0_51], %53 {strides = array<i32>} : memref<18x18x8xbf16, #tpu.memory_space<vmem>>, vector<16x16x8xbf16>,
    %c0_52 = arith.constant 0 : index
    %c0_53 = arith.constant 0 : index
    %c0_54 = arith.constant 0 : index
    %55 = vector.load %arg9[%c0_52, %c0_53, %c0_54] : memref<18x18x8xbf16, #tpu.memory_space<vmem>>, vector<18x18x8xbf16>
    %cst_55 = arith.constant 0.000000e+00 : f32
    %56 = vector.broadcast %cst_55 : f32 to vector<256x8xf32>
    %57 = vector.extract_strided_slice %55 {offsets = [0, 0, 0], sizes = [16, 18, 8], strides = [1, 1, 1]} : vector<18x18x8xbf16> to vector<16x18x8xbf16>
    %58 = vector.extract_strided_slice %57 {offsets = [0, 0, 0], sizes = [16, 16, 8], strides = [1, 1, 1]} : vector<16x18x8xbf16> to vector<16x16x8xbf16>
    %59 = vector.extract_strided_slice %57 {offsets = [0, 1, 0], sizes = [16, 16, 8], strides = [1, 1, 1]} : vector<16x18x8xbf16> to vector<16x16x8xbf16>
    %60 = vector.extract_strided_slice %57 {offsets = [0, 2, 0], sizes = [16, 16, 8], strides = [1, 1, 1]} : vector<16x18x8xbf16> to vector<16x16x8xbf16>
    %61 = tpu.concatenate %58, %59, %60 in 2 : vector<16x16x8xbf16>, vector<16x16x8xbf16>, vector<16x16x8xbf16> -> vector<16x16x24xbf16>
    %62 = vector.shape_cast %61 : vector<16x16x24xbf16> to vector<256x24xbf16>
    %c0_56 = arith.constant 0 : index
    %c0_57 = arith.constant 0 : index
    %c0_58 = arith.constant 0 : index
    %63 = vector.load %arg4[%c0_56, %c0_57, %c0_58] : memref<3x24x8xbf16, #tpu.memory_space<vmem>>, vector<1x24x8xbf16>
    %64 = vector.shape_cast %63 : vector<1x24x8xbf16> to vector<24x8xbf16>
    %cst_59 = arith.constant dense<0.000000e+00> : vector<256x8xf32>
    %65 = tpu.matmul %62, %64, %cst_59 {dimension_numbers = #tpu.dot_dimension_numbers<[1], [0], [0], [1], [0, 0, 1, 1], [], []>} : vector<256x24xbf16>, vector<24x8xbf16>, vector<256x8xf32> -> vector<256x8xf32>
    %66 = arith.addf %56, %65 : vector<256x8xf32>
    %67 = vector.extract_strided_slice %55 {offsets = [1, 0, 0], sizes = [16, 18, 8], strides = [1, 1, 1]} : vector<18x18x8xbf16> to vector<16x18x8xbf16>
    %68 = vector.extract_strided_slice %67 {offsets = [0, 0, 0], sizes = [16, 16, 8], strides = [1, 1, 1]} : vector<16x18x8xbf16> to vector<16x16x8xbf16>
    %69 = vector.extract_strided_slice %67 {offsets = [0, 1, 0], sizes = [16, 16, 8], strides = [1, 1, 1]} : vector<16x18x8xbf16> to vector<16x16x8xbf16>
    %70 = vector.extract_strided_slice %67 {offsets = [0, 2, 0], sizes = [16, 16, 8], strides = [1, 1, 1]} : vector<16x18x8xbf16> to vector<16x16x8xbf16>
    %71 = tpu.concatenate %68, %69, %70 in 2 : vector<16x16x8xbf16>, vector<16x16x8xbf16>, vector<16x16x8xbf16> -> vector<16x16x24xbf16>
    %72 = vector.shape_cast %71 : vector<16x16x24xbf16> to vector<256x24xbf16>
    %c1_60 = arith.constant 1 : index
    %c0_61 = arith.constant 0 : index
    %c0_62 = arith.constant 0 : index
    %73 = vector.load %arg4[%c1_60, %c0_61, %c0_62] : memref<3x24x8xbf16, #tpu.memory_space<vmem>>, vector<1x24x8xbf16>
    %74 = vector.shape_cast %73 : vector<1x24x8xbf16> to vector<24x8xbf16>
    %cst_63 = arith.constant dense<0.000000e+00> : vector<256x8xf32>
    %75 = tpu.matmul %72, %74, %cst_63 {dimension_numbers = #tpu.dot_dimension_numbers<[1], [0], [0], [1], [0, 0, 1, 1], [], []>} : vector<256x24xbf16>, vector<24x8xbf16>, vector<256x8xf32> -> vector<256x8xf32>
    %76 = arith.addf %66, %75 : vector<256x8xf32>
    %77 = vector.extract_strided_slice %55 {offsets = [2, 0, 0], sizes = [16, 18, 8], strides = [1, 1, 1]} : vector<18x18x8xbf16> to vector<16x18x8xbf16>
    %78 = vector.extract_strided_slice %77 {offsets = [0, 0, 0], sizes = [16, 16, 8], strides = [1, 1, 1]} : vector<16x18x8xbf16> to vector<16x16x8xbf16>
    %79 = vector.extract_strided_slice %77 {offsets = [0, 1, 0], sizes = [16, 16, 8], strides = [1, 1, 1]} : vector<16x18x8xbf16> to vector<16x16x8xbf16>
    %80 = vector.extract_strided_slice %77 {offsets = [0, 2, 0], sizes = [16, 16, 8], strides = [1, 1, 1]} : vector<16x18x8xbf16> to vector<16x16x8xbf16>
    %81 = tpu.concatenate %78, %79, %80 in 2 : vector<16x16x8xbf16>, vector<16x16x8xbf16>, vector<16x16x8xbf16> -> vector<16x16x24xbf16>
    %82 = vector.shape_cast %81 : vector<16x16x24xbf16> to vector<256x24xbf16>
    %c2_64 = arith.constant 2 : index
    %c0_65 = arith.constant 0 : index
    %c0_66 = arith.constant 0 : index
    %83 = vector.load %arg4[%c2_64, %c0_65, %c0_66] : memref<3x24x8xbf16, #tpu.memory_space<vmem>>, vector<1x24x8xbf16>
    %84 = vector.shape_cast %83 : vector<1x24x8xbf16> to vector<24x8xbf16>
    %cst_67 = arith.constant dense<0.000000e+00> : vector<256x8xf32>
    %85 = tpu.matmul %82, %84, %cst_67 {dimension_numbers = #tpu.dot_dimension_numbers<[1], [0], [0], [1], [0, 0, 1, 1], [], []>} : vector<256x24xbf16>, vector<24x8xbf16>, vector<256x8xf32> -> vector<256x8xf32>
    %86 = arith.addf %76, %85 : vector<256x8xf32>
    %c0_68 = arith.constant 0 : index
    %c0_69 = arith.constant 0 : index
    %87 = vector.load %arg5[%c0_68, %c0_69] : memref<1x8xf32, #tpu.memory_space<vmem>>, vector<1x8xf32>
    %88 = vector.broadcast %87 : vector<1x8xf32> to vector<256x8xf32>
    %89 = arith.addf %86, %88 : vector<256x8xf32>
    %cst_70 = arith.constant 0.000000e+00 : f32
    %90 = vector.broadcast %cst_70 : f32 to vector<256x8xf32>
    %91 = arith.maximumf %89, %90 : vector<256x8xf32>
    %92 = vector.shape_cast %91 : vector<256x8xf32> to vector<16x16x8xf32>
    %93 = arith.truncf %92 : vector<16x16x8xf32> to vector<16x16x8xbf16>
    %c0_71 = arith.constant 0 : index
    %c0_72 = arith.constant 0 : index
    %c0_73 = arith.constant 0 : index
    %c0_74 = arith.constant 0 : index
    %94 = vector.load %arg6[%c0_71, %c0_72, %c0_73, %c0_74] : memref<1x16x16x8xbf16, #tpu.memory_space<vmem>>, vector<1x16x16x8xbf16>
    %95 = vector.shape_cast %94 : vector<1x16x16x8xbf16> to vector<16x16x8xbf16>
    %96 = vector.shape_cast %93 : vector<16x16x8xbf16> to vector<1x16x16x8xbf16>
    tpu.vector_store %arg6[%c0_71, %c0_72, %c0_73, %c0_74], %96 {strides = array<i32>} : memref<1x16x16x8xbf16, #tpu.memory_space<vmem>>, vector<1x16x16x8xbf16>,
    %97 = vector.shape_cast %91 : vector<256x8xf32> to vector<8x2x16x8xf32>
    %98 = vector.extract_strided_slice %97 {offsets = [0, 0, 0, 0], sizes = [8, 1, 16, 8], strides = [1, 1, 1, 1]} : vector<8x2x16x8xf32> to vector<8x1x16x8xf32>
    %99 = vector.shape_cast %98 : vector<8x1x16x8xf32> to vector<8x16x8xf32>
    %100 = vector.extract_strided_slice %97 {offsets = [0, 1, 0, 0], sizes = [8, 1, 16, 8], strides = [1, 1, 1, 1]} : vector<8x2x16x8xf32> to vector<8x1x16x8xf32>
    %101 = vector.shape_cast %100 : vector<8x1x16x8xf32> to vector<8x16x8xf32>
    %102 = arith.maximumf %99, %101 : vector<8x16x8xf32>
    %103 = vector.shape_cast %102 : vector<8x16x8xf32> to vector<128x8xf32>
    %c0_75 = arith.constant 0 : index
    %c0_76 = arith.constant 0 : index
    %104 = vector.load %arg10[%c0_75, %c0_76] : memref<128x8xf32, #tpu.memory_space<vmem>>, vector<128x8xf32>
    tpu.vector_store %arg10[%c0_75, %c0_76], %103 {strides = array<i32>} : memref<128x8xf32, #tpu.memory_space<vmem>>, vector<128x8xf32>,
    %c0_77 = arith.constant 0 : index
    %c0_78 = arith.constant 0 : index
    %105 = tpu.strided_load %arg10[%c0_77, %c0_78] {strides = array<i32: 2, 1>} : memref<128x8xf32, #tpu.memory_space<vmem>>, vector<64x8xf32>
    %c1_79 = arith.constant 1 : index
    %c0_80 = arith.constant 0 : index
    %106 = tpu.strided_load %arg10[%c1_79, %c0_80] {strides = array<i32: 2, 1>} : memref<128x8xf32, #tpu.memory_space<vmem>>, vector<64x8xf32>
    %107 = arith.maximumf %105, %106 : vector<64x8xf32>
    %108 = vector.shape_cast %107 : vector<64x8xf32> to vector<8x8x8xf32>
    %109 = arith.truncf %108 : vector<8x8x8xf32> to vector<8x8x8xbf16>
    %c0_81 = arith.constant 0 : index
    %c0_82 = arith.constant 0 : index
    %c0_83 = arith.constant 0 : index
    %c0_84 = arith.constant 0 : index
    %110 = vector.load %arg7[%c0_81, %c0_82, %c0_83, %c0_84] : memref<1x8x8x8xbf16, #tpu.memory_space<vmem>>, vector<1x8x8x8xbf16>
    %111 = vector.shape_cast %110 : vector<1x8x8x8xbf16> to vector<8x8x8xbf16>
    %112 = vector.shape_cast %109 : vector<8x8x8xbf16> to vector<1x8x8x8xbf16>
    tpu.vector_store %arg7[%c0_81, %c0_82, %c0_83, %c0_84], %112 {strides = array<i32>} : memref<1x8x8x8xbf16, #tpu.memory_space<vmem>>, vector<1x8x8x8xbf16>,
    return
  }
  func.func @transform_0(%arg0: i32) -> (i32, i32, i32, i32) {
    %c0_i32 = arith.constant 0 : i32
    %c0_i32_0 = arith.constant 0 : i32
    %c0_i32_1 = arith.constant 0 : i32
    %c0_i32_2 = arith.constant 0 : i32
    return %arg0, %c0_i32, %c0_i32_0, %c0_i32_1 : i32, i32, i32, i32
  }
  func.func @transform_1(%arg0: i32) -> (i32, i32, i32) {
    %c0_i32 = arith.constant 0 : i32
    %c0_i32_0 = arith.constant 0 : i32
    %c0_i32_1 = arith.constant 0 : i32
    %c0_i32_2 = arith.constant 0 : i32
    return %c0_i32, %c0_i32_0, %c0_i32_1 : i32, i32, i32
  }
  func.func @transform_2(%arg0: i32) -> (i32, i32) {
    %c0_i32 = arith.constant 0 : i32
    %c0_i32_0 = arith.constant 0 : i32
    %c0_i32_1 = arith.constant 0 : i32
    return %c0_i32, %c0_i32_0 : i32, i32
  }
  func.func @transform_3(%arg0: i32) -> (i32, i32, i32) {
    %c0_i32 = arith.constant 0 : i32
    %c0_i32_0 = arith.constant 0 : i32
    %c0_i32_1 = arith.constant 0 : i32
    %c0_i32_2 = arith.constant 0 : i32
    return %c0_i32, %c0_i32_0, %c0_i32_1 : i32, i32, i32
  }
  func.func @transform_4(%arg0: i32) -> (i32, i32) {
    %c0_i32 = arith.constant 0 : i32
    %c0_i32_0 = arith.constant 0 : i32
    %c0_i32_1 = arith.constant 0 : i32
    return %c0_i32, %c0_i32_0 : i32, i32
  }
  func.func @transform_5(%arg0: i32) -> (i32, i32, i32, i32) {
    %c0_i32 = arith.constant 0 : i32
    %c0_i32_0 = arith.constant 0 : i32
    %c0_i32_1 = arith.constant 0 : i32
    %c0_i32_2 = arith.constant 0 : i32
    return %arg0, %c0_i32, %c0_i32_0, %c0_i32_1 : i32, i32, i32, i32
  }
  func.func @transform_6(%arg0: i32) -> (i32, i32, i32, i32) {
    %c0_i32 = arith.constant 0 : i32
    %c0_i32_0 = arith.constant 0 : i32
    %c0_i32_1 = arith.constant 0 : i32
    %c0_i32_2 = arith.constant 0 : i32
    return %arg0, %c0_i32, %c0_i32_0, %c0_i32_1 : i32, i32, i32, i32
  }
}

module attributes {stable_mosaic.version = 11 : i64} {
  func.func @_upconv_kernel(%arg0: i32, %arg1: memref<1x8x8x16xbf16, #tpu.memory_space<vmem>>, %arg2: memref<16x16xbf16, #tpu.memory_space<vmem>>, %arg3: memref<16x16xbf16, #tpu.memory_space<vmem>>, %arg4: memref<1x16xf32, #tpu.memory_space<vmem>>, %arg5: memref<1x8x2x8x16xbf16, #tpu.memory_space<vmem>>) attributes {dimension_semantics = [#tpu.dimension_semantics<parallel>], iteration_bounds = array<i64: 2>, scalar_prefetch = 0 : i64, scratch_operands = 0 : i64, tpu.core_type = #tpu.core_type<tc>, window_params = [{transform_indices = @transform_0, window_bounds = array<i64: 1, 8, 8, 16>}, {pipeline_mode = #tpu.pipeline_mode<synchronous>, transform_indices = @transform_1, window_bounds = array<i64: 16, 16>}, {pipeline_mode = #tpu.pipeline_mode<synchronous>, transform_indices = @transform_2, window_bounds = array<i64: 16, 16>}, {pipeline_mode = #tpu.pipeline_mode<synchronous>, transform_indices = @transform_3, window_bounds = array<i64: 1, 16>}, {transform_indices = @transform_4, window_bounds = array<i64: 1, 8, 2, 8, 16>}]} {
    %c0 = arith.constant 0 : index
    %c0_0 = arith.constant 0 : index
    %c0_1 = arith.constant 0 : index
    %c0_2 = arith.constant 0 : index
    %0 = vector.load %arg1[%c0, %c0_0, %c0_1, %c0_2] : memref<1x8x8x16xbf16, #tpu.memory_space<vmem>>, vector<1x8x8x16xbf16>
    %1 = vector.shape_cast %0 : vector<1x8x8x16xbf16> to vector<8x8x16xbf16>
    %2 = vector.shape_cast %1 : vector<8x8x16xbf16> to vector<64x16xbf16>
    %c0_3 = arith.constant 0 : index
    %c0_4 = arith.constant 0 : index
    %3 = vector.load %arg2[%c0_3, %c0_4] : memref<16x16xbf16, #tpu.memory_space<vmem>>, vector<16x16xbf16>
    %cst = arith.constant dense<0.000000e+00> : vector<64x16xf32>
    %4 = tpu.matmul %2, %3, %cst {dimension_numbers = #tpu.dot_dimension_numbers<[1], [0], [0], [1], [0, 0, 1, 1], [], []>} : vector<64x16xbf16>, vector<16x16xbf16>, vector<64x16xf32> -> vector<64x16xf32>
    %c0_5 = arith.constant 0 : index
    %c0_6 = arith.constant 0 : index
    %5 = vector.load %arg4[%c0_5, %c0_6] : memref<1x16xf32, #tpu.memory_space<vmem>>, vector<1x16xf32>
    %6 = vector.broadcast %5 : vector<1x16xf32> to vector<64x16xf32>
    %7 = arith.addf %4, %6 : vector<64x16xf32>
    %c0_7 = arith.constant 0 : index
    %c0_8 = arith.constant 0 : index
    %8 = vector.load %arg3[%c0_7, %c0_8] : memref<16x16xbf16, #tpu.memory_space<vmem>>, vector<16x16xbf16>
    %cst_9 = arith.constant dense<0.000000e+00> : vector<64x16xf32>
    %9 = tpu.matmul %2, %8, %cst_9 {dimension_numbers = #tpu.dot_dimension_numbers<[1], [0], [0], [1], [0, 0, 1, 1], [], []>} : vector<64x16xbf16>, vector<16x16xbf16>, vector<64x16xf32> -> vector<64x16xf32>
    %c0_10 = arith.constant 0 : index
    %c0_11 = arith.constant 0 : index
    %10 = vector.load %arg4[%c0_10, %c0_11] : memref<1x16xf32, #tpu.memory_space<vmem>>, vector<1x16xf32>
    %11 = vector.broadcast %10 : vector<1x16xf32> to vector<64x16xf32>
    %12 = arith.addf %9, %11 : vector<64x16xf32>
    %13 = vector.shape_cast %7 : vector<64x16xf32> to vector<1x8x1x8x16xf32>
    %14 = arith.truncf %13 : vector<1x8x1x8x16xf32> to vector<1x8x1x8x16xbf16>
    %c0_12 = arith.constant 0 : index
    %c0_13 = arith.constant 0 : index
    %c0_14 = arith.constant 0 : index
    %c0_15 = arith.constant 0 : index
    %c0_16 = arith.constant 0 : index
    %15 = vector.load %arg5[%c0_12, %c0_13, %c0_14, %c0_15, %c0_16] : memref<1x8x2x8x16xbf16, #tpu.memory_space<vmem>>, vector<1x8x1x8x16xbf16>
    tpu.vector_store %arg5[%c0_12, %c0_13, %c0_14, %c0_15, %c0_16], %14 {strides = array<i32>} : memref<1x8x2x8x16xbf16, #tpu.memory_space<vmem>>, vector<1x8x1x8x16xbf16>,
    %16 = vector.shape_cast %12 : vector<64x16xf32> to vector<1x8x1x8x16xf32>
    %17 = arith.truncf %16 : vector<1x8x1x8x16xf32> to vector<1x8x1x8x16xbf16>
    %c0_17 = arith.constant 0 : index
    %c0_18 = arith.constant 0 : index
    %c1 = arith.constant 1 : index
    %c0_19 = arith.constant 0 : index
    %c0_20 = arith.constant 0 : index
    %18 = vector.load %arg5[%c0_17, %c0_18, %c1, %c0_19, %c0_20] : memref<1x8x2x8x16xbf16, #tpu.memory_space<vmem>>, vector<1x8x1x8x16xbf16>
    tpu.vector_store %arg5[%c0_17, %c0_18, %c1, %c0_19, %c0_20], %17 {strides = array<i32>} : memref<1x8x2x8x16xbf16, #tpu.memory_space<vmem>>, vector<1x8x1x8x16xbf16>,
    return
  }
  func.func @transform_0(%arg0: i32) -> (i32, i32, i32, i32) {
    %c0_i32 = arith.constant 0 : i32
    %c0_i32_0 = arith.constant 0 : i32
    %c0_i32_1 = arith.constant 0 : i32
    %c0_i32_2 = arith.constant 0 : i32
    return %arg0, %c0_i32, %c0_i32_0, %c0_i32_1 : i32, i32, i32, i32
  }
  func.func @transform_1(%arg0: i32) -> (i32, i32) {
    %c0_i32 = arith.constant 0 : i32
    %c0_i32_0 = arith.constant 0 : i32
    %c0_i32_1 = arith.constant 0 : i32
    return %c0_i32, %c0_i32_0 : i32, i32
  }
  func.func @transform_2(%arg0: i32) -> (i32, i32) {
    %c0_i32 = arith.constant 0 : i32
    %c0_i32_0 = arith.constant 0 : i32
    %c0_i32_1 = arith.constant 0 : i32
    return %c0_i32, %c0_i32_0 : i32, i32
  }
  func.func @transform_3(%arg0: i32) -> (i32, i32) {
    %c0_i32 = arith.constant 0 : i32
    %c0_i32_0 = arith.constant 0 : i32
    %c0_i32_1 = arith.constant 0 : i32
    return %c0_i32, %c0_i32_0 : i32, i32
  }
  func.func @transform_4(%arg0: i32) -> (i32, i32, i32, i32, i32) {
    %c0_i32 = arith.constant 0 : i32
    %c0_i32_0 = arith.constant 0 : i32
    %c0_i32_1 = arith.constant 0 : i32
    %c0_i32_2 = arith.constant 0 : i32
    %c0_i32_3 = arith.constant 0 : i32
    return %arg0, %c0_i32, %c0_i32_0, %c0_i32_1, %c0_i32_2 : i32, i32, i32, i32, i32
  }
}

module attributes {stable_mosaic.version = 11 : i64} {
  func.func @_up_final_kernel(%arg0: i32, %arg1: memref<1x16x16x8xbf16, #tpu.memory_space<vmem>>, %arg2: memref<1x16x16x8xbf16, #tpu.memory_space<vmem>>, %arg3: memref<3x24x8xbf16, #tpu.memory_space<vmem>>, %arg4: memref<3x24x8xbf16, #tpu.memory_space<vmem>>, %arg5: memref<1x8xf32, #tpu.memory_space<vmem>>, %arg6: memref<3x24x8xbf16, #tpu.memory_space<vmem>>, %arg7: memref<1x8xf32, #tpu.memory_space<vmem>>, %arg8: memref<8x3xbf16, #tpu.memory_space<vmem>>, %arg9: memref<1x3xf32, #tpu.memory_space<vmem>>, %arg10: memref<1x16x16x3xf32, #tpu.memory_space<vmem>>, %arg11: memref<1x16x16x3xf32, #tpu.memory_space<vmem>>, %arg12: memref<18x18x8xbf16, #tpu.memory_space<vmem>>, %arg13: memref<18x18x8xbf16, #tpu.memory_space<vmem>>, %arg14: memref<18x18x8xbf16, #tpu.memory_space<vmem>>) attributes {dimension_semantics = [#tpu.dimension_semantics<parallel>], iteration_bounds = array<i64: 2>, scalar_prefetch = 0 : i64, scratch_operands = 3 : i64, tpu.core_type = #tpu.core_type<tc>, window_params = [{transform_indices = @transform_0, window_bounds = array<i64: 1, 16, 16, 8>}, {transform_indices = @transform_1, window_bounds = array<i64: 1, 16, 16, 8>}, {pipeline_mode = #tpu.pipeline_mode<synchronous>, transform_indices = @transform_2, window_bounds = array<i64: 3, 24, 8>}, {pipeline_mode = #tpu.pipeline_mode<synchronous>, transform_indices = @transform_3, window_bounds = array<i64: 3, 24, 8>}, {pipeline_mode = #tpu.pipeline_mode<synchronous>, transform_indices = @transform_4, window_bounds = array<i64: 1, 8>}, {pipeline_mode = #tpu.pipeline_mode<synchronous>, transform_indices = @transform_5, window_bounds = array<i64: 3, 24, 8>}, {pipeline_mode = #tpu.pipeline_mode<synchronous>, transform_indices = @transform_6, window_bounds = array<i64: 1, 8>}, {pipeline_mode = #tpu.pipeline_mode<synchronous>, transform_indices = @transform_7, window_bounds = array<i64: 8, 3>}, {pipeline_mode = #tpu.pipeline_mode<synchronous>, transform_indices = @transform_8, window_bounds = array<i64: 1, 3>}, {transform_indices = @transform_9, window_bounds = array<i64: 1, 16, 16, 3>}, {transform_indices = @transform_10, window_bounds = array<i64: 1, 16, 16, 3>}]} {
    %c0 = arith.constant 0 : index
    %c0_0 = arith.constant 0 : index
    %c0_1 = arith.constant 0 : index
    %c0_2 = arith.constant 0 : index
    %0 = vector.load %arg1[%c0, %c0_0, %c0_1, %c0_2] : memref<1x16x16x8xbf16, #tpu.memory_space<vmem>>, vector<1x16x16x8xbf16>
    %1 = vector.shape_cast %0 : vector<1x16x16x8xbf16> to vector<16x16x8xbf16>
    %cst = arith.constant 0.000000e+00 : bf16
    %2 = vector.broadcast %cst : bf16 to vector<1x18x8xbf16>
    %cst_3 = arith.constant 0.000000e+00 : bf16
    %3 = vector.broadcast %cst_3 : bf16 to vector<16x1x8xbf16>
    %c0_4 = arith.constant 0 : index
    %c0_5 = arith.constant 0 : index
    %c0_6 = arith.constant 0 : index
    %4 = vector.load %arg12[%c0_4, %c0_5, %c0_6] : memref<18x18x8xbf16, #tpu.memory_space<vmem>>, vector<1x18x8xbf16>
    tpu.vector_store %arg12[%c0_4, %c0_5, %c0_6], %2 {strides = array<i32>} : memref<18x18x8xbf16, #tpu.memory_space<vmem>>, vector<1x18x8xbf16>,
    %c17 = arith.constant 17 : index
    %c0_7 = arith.constant 0 : index
    %c0_8 = arith.constant 0 : index
    %5 = vector.load %arg12[%c17, %c0_7, %c0_8] : memref<18x18x8xbf16, #tpu.memory_space<vmem>>, vector<1x18x8xbf16>
    tpu.vector_store %arg12[%c17, %c0_7, %c0_8], %2 {strides = array<i32>} : memref<18x18x8xbf16, #tpu.memory_space<vmem>>, vector<1x18x8xbf16>,
    %c1 = arith.constant 1 : index
    %c0_9 = arith.constant 0 : index
    %c0_10 = arith.constant 0 : index
    %6 = vector.load %arg12[%c1, %c0_9, %c0_10] : memref<18x18x8xbf16, #tpu.memory_space<vmem>>, vector<16x1x8xbf16>
    tpu.vector_store %arg12[%c1, %c0_9, %c0_10], %3 {strides = array<i32>} : memref<18x18x8xbf16, #tpu.memory_space<vmem>>, vector<16x1x8xbf16>,
    %c1_11 = arith.constant 1 : index
    %c17_12 = arith.constant 17 : index
    %c0_13 = arith.constant 0 : index
    %7 = vector.load %arg12[%c1_11, %c17_12, %c0_13] : memref<18x18x8xbf16, #tpu.memory_space<vmem>>, vector<16x1x8xbf16>
    tpu.vector_store %arg12[%c1_11, %c17_12, %c0_13], %3 {strides = array<i32>} : memref<18x18x8xbf16, #tpu.memory_space<vmem>>, vector<16x1x8xbf16>,
    %c1_14 = arith.constant 1 : index
    %c1_15 = arith.constant 1 : index
    %c0_16 = arith.constant 0 : index
    %8 = vector.load %arg12[%c1_14, %c1_15, %c0_16] : memref<18x18x8xbf16, #tpu.memory_space<vmem>>, vector<16x16x8xbf16>
    tpu.vector_store %arg12[%c1_14, %c1_15, %c0_16], %1 {strides = array<i32>} : memref<18x18x8xbf16, #tpu.memory_space<vmem>>, vector<16x16x8xbf16>,
    %c0_17 = arith.constant 0 : index
    %c0_18 = arith.constant 0 : index
    %c0_19 = arith.constant 0 : index
    %c0_20 = arith.constant 0 : index
    %9 = vector.load %arg2[%c0_17, %c0_18, %c0_19, %c0_20] : memref<1x16x16x8xbf16, #tpu.memory_space<vmem>>, vector<1x16x16x8xbf16>
    %10 = vector.shape_cast %9 : vector<1x16x16x8xbf16> to vector<16x16x8xbf16>
    %cst_21 = arith.constant 0.000000e+00 : bf16
    %11 = vector.broadcast %cst_21 : bf16 to vector<1x18x8xbf16>
    %cst_22 = arith.constant 0.000000e+00 : bf16
    %12 = vector.broadcast %cst_22 : bf16 to vector<16x1x8xbf16>
    %c0_23 = arith.constant 0 : index
    %c0_24 = arith.constant 0 : index
    %c0_25 = arith.constant 0 : index
    %13 = vector.load %arg13[%c0_23, %c0_24, %c0_25] : memref<18x18x8xbf16, #tpu.memory_space<vmem>>, vector<1x18x8xbf16>
    tpu.vector_store %arg13[%c0_23, %c0_24, %c0_25], %11 {strides = array<i32>} : memref<18x18x8xbf16, #tpu.memory_space<vmem>>, vector<1x18x8xbf16>,
    %c17_26 = arith.constant 17 : index
    %c0_27 = arith.constant 0 : index
    %c0_28 = arith.constant 0 : index
    %14 = vector.load %arg13[%c17_26, %c0_27, %c0_28] : memref<18x18x8xbf16, #tpu.memory_space<vmem>>, vector<1x18x8xbf16>
    tpu.vector_store %arg13[%c17_26, %c0_27, %c0_28], %11 {strides = array<i32>} : memref<18x18x8xbf16, #tpu.memory_space<vmem>>, vector<1x18x8xbf16>,
    %c1_29 = arith.constant 1 : index
    %c0_30 = arith.constant 0 : index
    %c0_31 = arith.constant 0 : index
    %15 = vector.load %arg13[%c1_29, %c0_30, %c0_31] : memref<18x18x8xbf16, #tpu.memory_space<vmem>>, vector<16x1x8xbf16>
    tpu.vector_store %arg13[%c1_29, %c0_30, %c0_31], %12 {strides = array<i32>} : memref<18x18x8xbf16, #tpu.memory_space<vmem>>, vector<16x1x8xbf16>,
    %c1_32 = arith.constant 1 : index
    %c17_33 = arith.constant 17 : index
    %c0_34 = arith.constant 0 : index
    %16 = vector.load %arg13[%c1_32, %c17_33, %c0_34] : memref<18x18x8xbf16, #tpu.memory_space<vmem>>, vector<16x1x8xbf16>
    tpu.vector_store %arg13[%c1_32, %c17_33, %c0_34], %12 {strides = array<i32>} : memref<18x18x8xbf16, #tpu.memory_space<vmem>>, vector<16x1x8xbf16>,
    %c1_35 = arith.constant 1 : index
    %c1_36 = arith.constant 1 : index
    %c0_37 = arith.constant 0 : index
    %17 = vector.load %arg13[%c1_35, %c1_36, %c0_37] : memref<18x18x8xbf16, #tpu.memory_space<vmem>>, vector<16x16x8xbf16>
    tpu.vector_store %arg13[%c1_35, %c1_36, %c0_37], %10 {strides = array<i32>} : memref<18x18x8xbf16, #tpu.memory_space<vmem>>, vector<16x16x8xbf16>,
    %c0_38 = arith.constant 0 : index
    %c0_39 = arith.constant 0 : index
    %c0_40 = arith.constant 0 : index
    %18 = vector.load %arg12[%c0_38, %c0_39, %c0_40] : memref<18x18x8xbf16, #tpu.memory_space<vmem>>, vector<18x18x8xbf16>
    %c0_41 = arith.constant 0 : index
    %c0_42 = arith.constant 0 : index
    %c0_43 = arith.constant 0 : index
    %19 = vector.load %arg13[%c0_41, %c0_42, %c0_43] : memref<18x18x8xbf16, #tpu.memory_space<vmem>>, vector<18x18x8xbf16>
    %cst_44 = arith.constant 0.000000e+00 : f32
    %20 = vector.broadcast %cst_44 : f32 to vector<256x8xf32>
    %21 = vector.extract_strided_slice %18 {offsets = [0, 0, 0], sizes = [16, 18, 8], strides = [1, 1, 1]} : vector<18x18x8xbf16> to vector<16x18x8xbf16>
    %22 = vector.extract_strided_slice %21 {offsets = [0, 0, 0], sizes = [16, 16, 8], strides = [1, 1, 1]} : vector<16x18x8xbf16> to vector<16x16x8xbf16>
    %23 = vector.extract_strided_slice %21 {offsets = [0, 1, 0], sizes = [16, 16, 8], strides = [1, 1, 1]} : vector<16x18x8xbf16> to vector<16x16x8xbf16>
    %24 = vector.extract_strided_slice %21 {offsets = [0, 2, 0], sizes = [16, 16, 8], strides = [1, 1, 1]} : vector<16x18x8xbf16> to vector<16x16x8xbf16>
    %25 = tpu.concatenate %22, %23, %24 in 2 : vector<16x16x8xbf16>, vector<16x16x8xbf16>, vector<16x16x8xbf16> -> vector<16x16x24xbf16>
    %26 = vector.shape_cast %25 : vector<16x16x24xbf16> to vector<256x24xbf16>
    %c0_45 = arith.constant 0 : index
    %c0_46 = arith.constant 0 : index
    %c0_47 = arith.constant 0 : index
    %27 = vector.load %arg3[%c0_45, %c0_46, %c0_47] : memref<3x24x8xbf16, #tpu.memory_space<vmem>>, vector<1x24x8xbf16>
    %28 = vector.shape_cast %27 : vector<1x24x8xbf16> to vector<24x8xbf16>
    %cst_48 = arith.constant dense<0.000000e+00> : vector<256x8xf32>
    %29 = tpu.matmul %26, %28, %cst_48 {dimension_numbers = #tpu.dot_dimension_numbers<[1], [0], [0], [1], [0, 0, 1, 1], [], []>} : vector<256x24xbf16>, vector<24x8xbf16>, vector<256x8xf32> -> vector<256x8xf32>
    %30 = arith.addf %20, %29 : vector<256x8xf32>
    %31 = vector.extract_strided_slice %18 {offsets = [1, 0, 0], sizes = [16, 18, 8], strides = [1, 1, 1]} : vector<18x18x8xbf16> to vector<16x18x8xbf16>
    %32 = vector.extract_strided_slice %31 {offsets = [0, 0, 0], sizes = [16, 16, 8], strides = [1, 1, 1]} : vector<16x18x8xbf16> to vector<16x16x8xbf16>
    %33 = vector.extract_strided_slice %31 {offsets = [0, 1, 0], sizes = [16, 16, 8], strides = [1, 1, 1]} : vector<16x18x8xbf16> to vector<16x16x8xbf16>
    %34 = vector.extract_strided_slice %31 {offsets = [0, 2, 0], sizes = [16, 16, 8], strides = [1, 1, 1]} : vector<16x18x8xbf16> to vector<16x16x8xbf16>
    %35 = tpu.concatenate %32, %33, %34 in 2 : vector<16x16x8xbf16>, vector<16x16x8xbf16>, vector<16x16x8xbf16> -> vector<16x16x24xbf16>
    %36 = vector.shape_cast %35 : vector<16x16x24xbf16> to vector<256x24xbf16>
    %c1_49 = arith.constant 1 : index
    %c0_50 = arith.constant 0 : index
    %c0_51 = arith.constant 0 : index
    %37 = vector.load %arg3[%c1_49, %c0_50, %c0_51] : memref<3x24x8xbf16, #tpu.memory_space<vmem>>, vector<1x24x8xbf16>
    %38 = vector.shape_cast %37 : vector<1x24x8xbf16> to vector<24x8xbf16>
    %cst_52 = arith.constant dense<0.000000e+00> : vector<256x8xf32>
    %39 = tpu.matmul %36, %38, %cst_52 {dimension_numbers = #tpu.dot_dimension_numbers<[1], [0], [0], [1], [0, 0, 1, 1], [], []>} : vector<256x24xbf16>, vector<24x8xbf16>, vector<256x8xf32> -> vector<256x8xf32>
    %40 = arith.addf %30, %39 : vector<256x8xf32>
    %41 = vector.extract_strided_slice %18 {offsets = [2, 0, 0], sizes = [16, 18, 8], strides = [1, 1, 1]} : vector<18x18x8xbf16> to vector<16x18x8xbf16>
    %42 = vector.extract_strided_slice %41 {offsets = [0, 0, 0], sizes = [16, 16, 8], strides = [1, 1, 1]} : vector<16x18x8xbf16> to vector<16x16x8xbf16>
    %43 = vector.extract_strided_slice %41 {offsets = [0, 1, 0], sizes = [16, 16, 8], strides = [1, 1, 1]} : vector<16x18x8xbf16> to vector<16x16x8xbf16>
    %44 = vector.extract_strided_slice %41 {offsets = [0, 2, 0], sizes = [16, 16, 8], strides = [1, 1, 1]} : vector<16x18x8xbf16> to vector<16x16x8xbf16>
    %45 = tpu.concatenate %42, %43, %44 in 2 : vector<16x16x8xbf16>, vector<16x16x8xbf16>, vector<16x16x8xbf16> -> vector<16x16x24xbf16>
    %46 = vector.shape_cast %45 : vector<16x16x24xbf16> to vector<256x24xbf16>
    %c2 = arith.constant 2 : index
    %c0_53 = arith.constant 0 : index
    %c0_54 = arith.constant 0 : index
    %47 = vector.load %arg3[%c2, %c0_53, %c0_54] : memref<3x24x8xbf16, #tpu.memory_space<vmem>>, vector<1x24x8xbf16>
    %48 = vector.shape_cast %47 : vector<1x24x8xbf16> to vector<24x8xbf16>
    %cst_55 = arith.constant dense<0.000000e+00> : vector<256x8xf32>
    %49 = tpu.matmul %46, %48, %cst_55 {dimension_numbers = #tpu.dot_dimension_numbers<[1], [0], [0], [1], [0, 0, 1, 1], [], []>} : vector<256x24xbf16>, vector<24x8xbf16>, vector<256x8xf32> -> vector<256x8xf32>
    %50 = arith.addf %40, %49 : vector<256x8xf32>
    %51 = vector.extract_strided_slice %19 {offsets = [0, 0, 0], sizes = [16, 18, 8], strides = [1, 1, 1]} : vector<18x18x8xbf16> to vector<16x18x8xbf16>
    %52 = vector.extract_strided_slice %51 {offsets = [0, 0, 0], sizes = [16, 16, 8], strides = [1, 1, 1]} : vector<16x18x8xbf16> to vector<16x16x8xbf16>
    %53 = vector.extract_strided_slice %51 {offsets = [0, 1, 0], sizes = [16, 16, 8], strides = [1, 1, 1]} : vector<16x18x8xbf16> to vector<16x16x8xbf16>
    %54 = vector.extract_strided_slice %51 {offsets = [0, 2, 0], sizes = [16, 16, 8], strides = [1, 1, 1]} : vector<16x18x8xbf16> to vector<16x16x8xbf16>
    %55 = tpu.concatenate %52, %53, %54 in 2 : vector<16x16x8xbf16>, vector<16x16x8xbf16>, vector<16x16x8xbf16> -> vector<16x16x24xbf16>
    %56 = vector.shape_cast %55 : vector<16x16x24xbf16> to vector<256x24xbf16>
    %c0_56 = arith.constant 0 : index
    %c0_57 = arith.constant 0 : index
    %c0_58 = arith.constant 0 : index
    %57 = vector.load %arg4[%c0_56, %c0_57, %c0_58] : memref<3x24x8xbf16, #tpu.memory_space<vmem>>, vector<1x24x8xbf16>
    %58 = vector.shape_cast %57 : vector<1x24x8xbf16> to vector<24x8xbf16>
    %cst_59 = arith.constant dense<0.000000e+00> : vector<256x8xf32>
    %59 = tpu.matmul %56, %58, %cst_59 {dimension_numbers = #tpu.dot_dimension_numbers<[1], [0], [0], [1], [0, 0, 1, 1], [], []>} : vector<256x24xbf16>, vector<24x8xbf16>, vector<256x8xf32> -> vector<256x8xf32>
    %60 = arith.addf %50, %59 : vector<256x8xf32>
    %61 = vector.extract_strided_slice %19 {offsets = [1, 0, 0], sizes = [16, 18, 8], strides = [1, 1, 1]} : vector<18x18x8xbf16> to vector<16x18x8xbf16>
    %62 = vector.extract_strided_slice %61 {offsets = [0, 0, 0], sizes = [16, 16, 8], strides = [1, 1, 1]} : vector<16x18x8xbf16> to vector<16x16x8xbf16>
    %63 = vector.extract_strided_slice %61 {offsets = [0, 1, 0], sizes = [16, 16, 8], strides = [1, 1, 1]} : vector<16x18x8xbf16> to vector<16x16x8xbf16>
    %64 = vector.extract_strided_slice %61 {offsets = [0, 2, 0], sizes = [16, 16, 8], strides = [1, 1, 1]} : vector<16x18x8xbf16> to vector<16x16x8xbf16>
    %65 = tpu.concatenate %62, %63, %64 in 2 : vector<16x16x8xbf16>, vector<16x16x8xbf16>, vector<16x16x8xbf16> -> vector<16x16x24xbf16>
    %66 = vector.shape_cast %65 : vector<16x16x24xbf16> to vector<256x24xbf16>
    %c1_60 = arith.constant 1 : index
    %c0_61 = arith.constant 0 : index
    %c0_62 = arith.constant 0 : index
    %67 = vector.load %arg4[%c1_60, %c0_61, %c0_62] : memref<3x24x8xbf16, #tpu.memory_space<vmem>>, vector<1x24x8xbf16>
    %68 = vector.shape_cast %67 : vector<1x24x8xbf16> to vector<24x8xbf16>
    %cst_63 = arith.constant dense<0.000000e+00> : vector<256x8xf32>
    %69 = tpu.matmul %66, %68, %cst_63 {dimension_numbers = #tpu.dot_dimension_numbers<[1], [0], [0], [1], [0, 0, 1, 1], [], []>} : vector<256x24xbf16>, vector<24x8xbf16>, vector<256x8xf32> -> vector<256x8xf32>
    %70 = arith.addf %60, %69 : vector<256x8xf32>
    %71 = vector.extract_strided_slice %19 {offsets = [2, 0, 0], sizes = [16, 18, 8], strides = [1, 1, 1]} : vector<18x18x8xbf16> to vector<16x18x8xbf16>
    %72 = vector.extract_strided_slice %71 {offsets = [0, 0, 0], sizes = [16, 16, 8], strides = [1, 1, 1]} : vector<16x18x8xbf16> to vector<16x16x8xbf16>
    %73 = vector.extract_strided_slice %71 {offsets = [0, 1, 0], sizes = [16, 16, 8], strides = [1, 1, 1]} : vector<16x18x8xbf16> to vector<16x16x8xbf16>
    %74 = vector.extract_strided_slice %71 {offsets = [0, 2, 0], sizes = [16, 16, 8], strides = [1, 1, 1]} : vector<16x18x8xbf16> to vector<16x16x8xbf16>
    %75 = tpu.concatenate %72, %73, %74 in 2 : vector<16x16x8xbf16>, vector<16x16x8xbf16>, vector<16x16x8xbf16> -> vector<16x16x24xbf16>
    %76 = vector.shape_cast %75 : vector<16x16x24xbf16> to vector<256x24xbf16>
    %c2_64 = arith.constant 2 : index
    %c0_65 = arith.constant 0 : index
    %c0_66 = arith.constant 0 : index
    %77 = vector.load %arg4[%c2_64, %c0_65, %c0_66] : memref<3x24x8xbf16, #tpu.memory_space<vmem>>, vector<1x24x8xbf16>
    %78 = vector.shape_cast %77 : vector<1x24x8xbf16> to vector<24x8xbf16>
    %cst_67 = arith.constant dense<0.000000e+00> : vector<256x8xf32>
    %79 = tpu.matmul %76, %78, %cst_67 {dimension_numbers = #tpu.dot_dimension_numbers<[1], [0], [0], [1], [0, 0, 1, 1], [], []>} : vector<256x24xbf16>, vector<24x8xbf16>, vector<256x8xf32> -> vector<256x8xf32>
    %80 = arith.addf %70, %79 : vector<256x8xf32>
    %c0_68 = arith.constant 0 : index
    %c0_69 = arith.constant 0 : index
    %81 = vector.load %arg5[%c0_68, %c0_69] : memref<1x8xf32, #tpu.memory_space<vmem>>, vector<1x8xf32>
    %82 = vector.broadcast %81 : vector<1x8xf32> to vector<256x8xf32>
    %83 = arith.addf %80, %82 : vector<256x8xf32>
    %cst_70 = arith.constant 0.000000e+00 : f32
    %84 = vector.broadcast %cst_70 : f32 to vector<256x8xf32>
    %85 = arith.maximumf %83, %84 : vector<256x8xf32>
    %86 = vector.shape_cast %85 : vector<256x8xf32> to vector<16x16x8xf32>
    %cst_71 = arith.constant 0.000000e+00 : bf16
    %87 = vector.broadcast %cst_71 : bf16 to vector<1x18x8xbf16>
    %cst_72 = arith.constant 0.000000e+00 : bf16
    %88 = vector.broadcast %cst_72 : bf16 to vector<16x1x8xbf16>
    %c0_73 = arith.constant 0 : index
    %c0_74 = arith.constant 0 : index
    %c0_75 = arith.constant 0 : index
    %89 = vector.load %arg14[%c0_73, %c0_74, %c0_75] : memref<18x18x8xbf16, #tpu.memory_space<vmem>>, vector<1x18x8xbf16>
    tpu.vector_store %arg14[%c0_73, %c0_74, %c0_75], %87 {strides = array<i32>} : memref<18x18x8xbf16, #tpu.memory_space<vmem>>, vector<1x18x8xbf16>,
    %c17_76 = arith.constant 17 : index
    %c0_77 = arith.constant 0 : index
    %c0_78 = arith.constant 0 : index
    %90 = vector.load %arg14[%c17_76, %c0_77, %c0_78] : memref<18x18x8xbf16, #tpu.memory_space<vmem>>, vector<1x18x8xbf16>
    tpu.vector_store %arg14[%c17_76, %c0_77, %c0_78], %87 {strides = array<i32>} : memref<18x18x8xbf16, #tpu.memory_space<vmem>>, vector<1x18x8xbf16>,
    %c1_79 = arith.constant 1 : index
    %c0_80 = arith.constant 0 : index
    %c0_81 = arith.constant 0 : index
    %91 = vector.load %arg14[%c1_79, %c0_80, %c0_81] : memref<18x18x8xbf16, #tpu.memory_space<vmem>>, vector<16x1x8xbf16>
    tpu.vector_store %arg14[%c1_79, %c0_80, %c0_81], %88 {strides = array<i32>} : memref<18x18x8xbf16, #tpu.memory_space<vmem>>, vector<16x1x8xbf16>,
    %c1_82 = arith.constant 1 : index
    %c17_83 = arith.constant 17 : index
    %c0_84 = arith.constant 0 : index
    %92 = vector.load %arg14[%c1_82, %c17_83, %c0_84] : memref<18x18x8xbf16, #tpu.memory_space<vmem>>, vector<16x1x8xbf16>
    tpu.vector_store %arg14[%c1_82, %c17_83, %c0_84], %88 {strides = array<i32>} : memref<18x18x8xbf16, #tpu.memory_space<vmem>>, vector<16x1x8xbf16>,
    %93 = arith.truncf %86 : vector<16x16x8xf32> to vector<16x16x8xbf16>
    %c1_85 = arith.constant 1 : index
    %c1_86 = arith.constant 1 : index
    %c0_87 = arith.constant 0 : index
    %94 = vector.load %arg14[%c1_85, %c1_86, %c0_87] : memref<18x18x8xbf16, #tpu.memory_space<vmem>>, vector<16x16x8xbf16>
    tpu.vector_store %arg14[%c1_85, %c1_86, %c0_87], %93 {strides = array<i32>} : memref<18x18x8xbf16, #tpu.memory_space<vmem>>, vector<16x16x8xbf16>,
    %c0_88 = arith.constant 0 : index
    %c0_89 = arith.constant 0 : index
    %c0_90 = arith.constant 0 : index
    %95 = vector.load %arg14[%c0_88, %c0_89, %c0_90] : memref<18x18x8xbf16, #tpu.memory_space<vmem>>, vector<18x18x8xbf16>
    %cst_91 = arith.constant 0.000000e+00 : f32
    %96 = vector.broadcast %cst_91 : f32 to vector<256x8xf32>
    %97 = vector.extract_strided_slice %95 {offsets = [0, 0, 0], sizes = [16, 18, 8], strides = [1, 1, 1]} : vector<18x18x8xbf16> to vector<16x18x8xbf16>
    %98 = vector.extract_strided_slice %97 {offsets = [0, 0, 0], sizes = [16, 16, 8], strides = [1, 1, 1]} : vector<16x18x8xbf16> to vector<16x16x8xbf16>
    %99 = vector.extract_strided_slice %97 {offsets = [0, 1, 0], sizes = [16, 16, 8], strides = [1, 1, 1]} : vector<16x18x8xbf16> to vector<16x16x8xbf16>
    %100 = vector.extract_strided_slice %97 {offsets = [0, 2, 0], sizes = [16, 16, 8], strides = [1, 1, 1]} : vector<16x18x8xbf16> to vector<16x16x8xbf16>
    %101 = tpu.concatenate %98, %99, %100 in 2 : vector<16x16x8xbf16>, vector<16x16x8xbf16>, vector<16x16x8xbf16> -> vector<16x16x24xbf16>
    %102 = vector.shape_cast %101 : vector<16x16x24xbf16> to vector<256x24xbf16>
    %c0_92 = arith.constant 0 : index
    %c0_93 = arith.constant 0 : index
    %c0_94 = arith.constant 0 : index
    %103 = vector.load %arg6[%c0_92, %c0_93, %c0_94] : memref<3x24x8xbf16, #tpu.memory_space<vmem>>, vector<1x24x8xbf16>
    %104 = vector.shape_cast %103 : vector<1x24x8xbf16> to vector<24x8xbf16>
    %cst_95 = arith.constant dense<0.000000e+00> : vector<256x8xf32>
    %105 = tpu.matmul %102, %104, %cst_95 {dimension_numbers = #tpu.dot_dimension_numbers<[1], [0], [0], [1], [0, 0, 1, 1], [], []>} : vector<256x24xbf16>, vector<24x8xbf16>, vector<256x8xf32> -> vector<256x8xf32>
    %106 = arith.addf %96, %105 : vector<256x8xf32>
    %107 = vector.extract_strided_slice %95 {offsets = [1, 0, 0], sizes = [16, 18, 8], strides = [1, 1, 1]} : vector<18x18x8xbf16> to vector<16x18x8xbf16>
    %108 = vector.extract_strided_slice %107 {offsets = [0, 0, 0], sizes = [16, 16, 8], strides = [1, 1, 1]} : vector<16x18x8xbf16> to vector<16x16x8xbf16>
    %109 = vector.extract_strided_slice %107 {offsets = [0, 1, 0], sizes = [16, 16, 8], strides = [1, 1, 1]} : vector<16x18x8xbf16> to vector<16x16x8xbf16>
    %110 = vector.extract_strided_slice %107 {offsets = [0, 2, 0], sizes = [16, 16, 8], strides = [1, 1, 1]} : vector<16x18x8xbf16> to vector<16x16x8xbf16>
    %111 = tpu.concatenate %108, %109, %110 in 2 : vector<16x16x8xbf16>, vector<16x16x8xbf16>, vector<16x16x8xbf16> -> vector<16x16x24xbf16>
    %112 = vector.shape_cast %111 : vector<16x16x24xbf16> to vector<256x24xbf16>
    %c1_96 = arith.constant 1 : index
    %c0_97 = arith.constant 0 : index
    %c0_98 = arith.constant 0 : index
    %113 = vector.load %arg6[%c1_96, %c0_97, %c0_98] : memref<3x24x8xbf16, #tpu.memory_space<vmem>>, vector<1x24x8xbf16>
    %114 = vector.shape_cast %113 : vector<1x24x8xbf16> to vector<24x8xbf16>
    %cst_99 = arith.constant dense<0.000000e+00> : vector<256x8xf32>
    %115 = tpu.matmul %112, %114, %cst_99 {dimension_numbers = #tpu.dot_dimension_numbers<[1], [0], [0], [1], [0, 0, 1, 1], [], []>} : vector<256x24xbf16>, vector<24x8xbf16>, vector<256x8xf32> -> vector<256x8xf32>
    %116 = arith.addf %106, %115 : vector<256x8xf32>
    %117 = vector.extract_strided_slice %95 {offsets = [2, 0, 0], sizes = [16, 18, 8], strides = [1, 1, 1]} : vector<18x18x8xbf16> to vector<16x18x8xbf16>
    %118 = vector.extract_strided_slice %117 {offsets = [0, 0, 0], sizes = [16, 16, 8], strides = [1, 1, 1]} : vector<16x18x8xbf16> to vector<16x16x8xbf16>
    %119 = vector.extract_strided_slice %117 {offsets = [0, 1, 0], sizes = [16, 16, 8], strides = [1, 1, 1]} : vector<16x18x8xbf16> to vector<16x16x8xbf16>
    %120 = vector.extract_strided_slice %117 {offsets = [0, 2, 0], sizes = [16, 16, 8], strides = [1, 1, 1]} : vector<16x18x8xbf16> to vector<16x16x8xbf16>
    %121 = tpu.concatenate %118, %119, %120 in 2 : vector<16x16x8xbf16>, vector<16x16x8xbf16>, vector<16x16x8xbf16> -> vector<16x16x24xbf16>
    %122 = vector.shape_cast %121 : vector<16x16x24xbf16> to vector<256x24xbf16>
    %c2_100 = arith.constant 2 : index
    %c0_101 = arith.constant 0 : index
    %c0_102 = arith.constant 0 : index
    %123 = vector.load %arg6[%c2_100, %c0_101, %c0_102] : memref<3x24x8xbf16, #tpu.memory_space<vmem>>, vector<1x24x8xbf16>
    %124 = vector.shape_cast %123 : vector<1x24x8xbf16> to vector<24x8xbf16>
    %cst_103 = arith.constant dense<0.000000e+00> : vector<256x8xf32>
    %125 = tpu.matmul %122, %124, %cst_103 {dimension_numbers = #tpu.dot_dimension_numbers<[1], [0], [0], [1], [0, 0, 1, 1], [], []>} : vector<256x24xbf16>, vector<24x8xbf16>, vector<256x8xf32> -> vector<256x8xf32>
    %126 = arith.addf %116, %125 : vector<256x8xf32>
    %c0_104 = arith.constant 0 : index
    %c0_105 = arith.constant 0 : index
    %127 = vector.load %arg7[%c0_104, %c0_105] : memref<1x8xf32, #tpu.memory_space<vmem>>, vector<1x8xf32>
    %128 = vector.broadcast %127 : vector<1x8xf32> to vector<256x8xf32>
    %129 = arith.addf %126, %128 : vector<256x8xf32>
    %cst_106 = arith.constant 0.000000e+00 : f32
    %130 = vector.broadcast %cst_106 : f32 to vector<256x8xf32>
    %131 = arith.maximumf %129, %130 : vector<256x8xf32>
    %132 = arith.truncf %131 : vector<256x8xf32> to vector<256x8xbf16>
    %c0_107 = arith.constant 0 : index
    %c0_108 = arith.constant 0 : index
    %133 = vector.load %arg8[%c0_107, %c0_108] : memref<8x3xbf16, #tpu.memory_space<vmem>>, vector<8x3xbf16>
    %cst_109 = arith.constant dense<0.000000e+00> : vector<256x3xf32>
    %134 = tpu.matmul %132, %133, %cst_109 {dimension_numbers = #tpu.dot_dimension_numbers<[1], [0], [0], [1], [0, 0, 1, 1], [], []>} : vector<256x8xbf16>, vector<8x3xbf16>, vector<256x3xf32> -> vector<256x3xf32>
    %c0_110 = arith.constant 0 : index
    %c0_111 = arith.constant 0 : index
    %135 = vector.load %arg9[%c0_110, %c0_111] : memref<1x3xf32, #tpu.memory_space<vmem>>, vector<1x3xf32>
    %136 = vector.broadcast %135 : vector<1x3xf32> to vector<256x3xf32>
    %137 = arith.addf %134, %136 : vector<256x3xf32>
    %c0_112 = arith.constant 0 : index
    %c0_113 = arith.constant 0 : index
    %c0_114 = arith.constant 0 : index
    %c0_115 = arith.constant 0 : index
    %138 = vector.load %arg10[%c0_112, %c0_113, %c0_114, %c0_115] : memref<1x16x16x3xf32, #tpu.memory_space<vmem>>, vector<1x16x16x3xf32>
    %139 = vector.shape_cast %138 : vector<1x16x16x3xf32> to vector<16x16x3xf32>
    %140 = vector.shape_cast %137 : vector<256x3xf32> to vector<16x16x3xf32>
    %141 = arith.addf %139, %140 : vector<16x16x3xf32>
    %c0_116 = arith.constant 0 : index
    %c0_117 = arith.constant 0 : index
    %c0_118 = arith.constant 0 : index
    %c0_119 = arith.constant 0 : index
    %142 = vector.load %arg11[%c0_116, %c0_117, %c0_118, %c0_119] : memref<1x16x16x3xf32, #tpu.memory_space<vmem>>, vector<1x16x16x3xf32>
    %143 = vector.shape_cast %142 : vector<1x16x16x3xf32> to vector<16x16x3xf32>
    %144 = vector.shape_cast %141 : vector<16x16x3xf32> to vector<1x16x16x3xf32>
    tpu.vector_store %arg11[%c0_116, %c0_117, %c0_118, %c0_119], %144 {strides = array<i32>} : memref<1x16x16x3xf32, #tpu.memory_space<vmem>>, vector<1x16x16x3xf32>,
    return
  }
  func.func @transform_0(%arg0: i32) -> (i32, i32, i32, i32) {
    %c0_i32 = arith.constant 0 : i32
    %c0_i32_0 = arith.constant 0 : i32
    %c0_i32_1 = arith.constant 0 : i32
    %c0_i32_2 = arith.constant 0 : i32
    return %arg0, %c0_i32, %c0_i32_0, %c0_i32_1 : i32, i32, i32, i32
  }
  func.func @transform_1(%arg0: i32) -> (i32, i32, i32, i32) {
    %c0_i32 = arith.constant 0 : i32
    %c0_i32_0 = arith.constant 0 : i32
    %c0_i32_1 = arith.constant 0 : i32
    %c0_i32_2 = arith.constant 0 : i32
    return %arg0, %c0_i32, %c0_i32_0, %c0_i32_1 : i32, i32, i32, i32
  }
  func.func @transform_2(%arg0: i32) -> (i32, i32, i32) {
    %c0_i32 = arith.constant 0 : i32
    %c0_i32_0 = arith.constant 0 : i32
    %c0_i32_1 = arith.constant 0 : i32
    %c0_i32_2 = arith.constant 0 : i32
    return %c0_i32, %c0_i32_0, %c0_i32_1 : i32, i32, i32
  }
  func.func @transform_3(%arg0: i32) -> (i32, i32, i32) {
    %c0_i32 = arith.constant 0 : i32
    %c0_i32_0 = arith.constant 0 : i32
    %c0_i32_1 = arith.constant 0 : i32
    %c0_i32_2 = arith.constant 0 : i32
    return %c0_i32, %c0_i32_0, %c0_i32_1 : i32, i32, i32
  }
  func.func @transform_4(%arg0: i32) -> (i32, i32) {
    %c0_i32 = arith.constant 0 : i32
    %c0_i32_0 = arith.constant 0 : i32
    %c0_i32_1 = arith.constant 0 : i32
    return %c0_i32, %c0_i32_0 : i32, i32
  }
  func.func @transform_5(%arg0: i32) -> (i32, i32, i32) {
    %c0_i32 = arith.constant 0 : i32
    %c0_i32_0 = arith.constant 0 : i32
    %c0_i32_1 = arith.constant 0 : i32
    %c0_i32_2 = arith.constant 0 : i32
    return %c0_i32, %c0_i32_0, %c0_i32_1 : i32, i32, i32
  }
  func.func @transform_6(%arg0: i32) -> (i32, i32) {
    %c0_i32 = arith.constant 0 : i32
    %c0_i32_0 = arith.constant 0 : i32
    %c0_i32_1 = arith.constant 0 : i32
    return %c0_i32, %c0_i32_0 : i32, i32
  }
  func.func @transform_7(%arg0: i32) -> (i32, i32) {
    %c0_i32 = arith.constant 0 : i32
    %c0_i32_0 = arith.constant 0 : i32
    %c0_i32_1 = arith.constant 0 : i32
    return %c0_i32, %c0_i32_0 : i32, i32
  }
  func.func @transform_8(%arg0: i32) -> (i32, i32) {
    %c0_i32 = arith.constant 0 : i32
    %c0_i32_0 = arith.constant 0 : i32
    %c0_i32_1 = arith.constant 0 : i32
    return %c0_i32, %c0_i32_0 : i32, i32
  }
  func.func @transform_9(%arg0: i32) -> (i32, i32, i32, i32) {
    %c0_i32 = arith.constant 0 : i32
    %c0_i32_0 = arith.constant 0 : i32
    %c0_i32_1 = arith.constant 0 : i32
    %c0_i32_2 = arith.constant 0 : i32
    return %arg0, %c0_i32, %c0_i32_0, %c0_i32_1 : i32, i32, i32, i32
  }
  func.func @transform_10(%arg0: i32) -> (i32, i32, i32, i32) {
    %c0_i32 = arith.constant 0 : i32
    %c0_i32_0 = arith.constant 0 : i32
    %c0_i32_1 = arith.constant 0 : i32
    %c0_i32_2 = arith.constant 0 : i32
    return %arg0, %c0_i32, %c0_i32_0, %c0_i32_1 : i32, i32, i32, i32
  }
}

</mosaic_0001>

<llo_original>
// kernel: tile.7
$region0: #{tile.7}
  %s0 = inlined_call_operand.vmem [shape: f32[2,8], index: 0, kind: input, shape index: {}]
  %s1 = inlined_call_operand.vmem [shape: f32[1,16], index: 1, kind: output, shape index: {}]
  $region1: #{tile.7} parent=0
    #allocation0 [shape = 'u8[4096]{0}', space=vmem, size = 0x1000, scoped, tag = 'scoped mem for output reshape']
    #allocation1 [shape = 'u8[4096]{0}', space=vmem, size = 0x1000, scoped, tag = 'scoped mem for input reshape']
    %s3 = ssub.s32 4, 1
    %v4 = vld [vmem:[%s0] sm:%s3]
    %5 = vst [vmem:[#allocation1] sm:%s3] %v4
    %v6 = vld [vmem:[#allocation1] sm:$0x1]
    %vm7 = vcmask 64512
    %8 = vst.msk [vmem:[#allocation0] sm:$0x1] %vm7, %v6
    %s9 = scalar_lea.vmem [#allocation1], 1
    %v10 = vld [vmem:[%s9] sm:$0x1]
    %11 = vrot.lane.b32.xlu0 %v10, 8
    %v12 = vpop.permute.xlu0 %11
    %vm13 = vcmask 130112
    %14 = vst.msk [vmem:[#allocation0] sm:$0x1] %vm13, %v12
    %s16 = ssub.s32 2, 1
    %v17 = vld [vmem:[#allocation0] sm:%s16]
    %s19 = ssub.s32 2, 1
    %20 = vst [vmem:[%s1] sm:%s19] %v17

// kernel: tile.6
$region0: #{tile.6}
  #allocation0 [shape = 's32[1]{0}', space=sflag, size = 0x4, scoped, tag = 'scoped memory for tile.6']
  %s0 = inlined_call_operand.vmem [shape: f32[8], index: 0, kind: input, shape index: {}]
  %s1 = inlined_call_operand.vmem [shape: f32[2,8], index: 1, kind: output, shape index: {}]
  // Predicated region
  $region2: #{tile.6} parent=0 // pred_check
    _
  $region3: #{tile.6} parent=0 // pred_check_branch
    %3 = sbr.rel (0) target = $region5
  $region4: #{tile.6} parent=0 // pred_region
    _
  $region5: #{tile.6} parent=0 // pred_fallthru
    _
  %v4 = vld [vmem:[%s0] ss:$0 sm:$0xff]
  %5 = vst [vmem:[%s1] sm:$0x3] %v4

// kernel: score_residue_forward.6
$region0: #{score_residue_forward.6}
  #allocation0 [shape = 'u32[]', space=smem, size = 0x4, offset = 0x4, fixed_abs, tag = 'smem constant byte address 0x4 - core index']
  #allocation1 [shape = 'u32[72,128]{1,0:T(1,128)}', space=vmem, size = 0x9000, scoped, tag = 'internal scratch']
  %s0 = inlined_call_operand.vmem [shape: bf16[2,8,8,16], index: 0, kind: input, shape index: {}]
  %s1 = inlined_call_operand.vmem [shape: bf16[16,16], index: 1, kind: input, shape index: {}]
  %s2 = inlined_call_operand.vmem [shape: bf16[16,16], index: 2, kind: input, shape index: {}]
  %s3 = inlined_call_operand.vmem [shape: f32[1,16], index: 3, kind: input, shape index: {}]
  %s4 = inlined_call_operand.vmem [shape: bf16[2,8,2,8,16], index: 4, kind: output, shape index: {}]
  %s5 = sld [smem:[#allocation0]]
  $region49: #{score_residue_forward.6} parent=0
    _
  %s7 = ssub.s32 1, %s5
  %s8 = scalar_select 0, %s7, %s5
  loop: start=0, step=1, limit=4
  $region2: #{score_residue_forward.6} parent=0 // loop_pre_header
    _
  $region3: #{score_residue_forward.6} parent=0 // loop_header
    %s10 = sphi 0, %s14
    %p11 = scmp.ge.s32.totalorder %s10, 4
    %s20 = sphi 0, %s22
    %s23 = sphi 0, %s20
    %s24 = sphi 0, %s23
    %s40 = sphi 0, %s24
    %s44 = sphi 0, %s44
    %s46 = sphi 0, %s44
    %s47 = sphi 0, %s46
    %s61 = sphi 0, %s47
    %s65 = sphi 0, %s65
    %s67 = sphi 0, %s65
    %s68 = sphi 0, %s67
    %s82 = sphi 0, %s68
    %s86 = sphi 0, %s86
    %s88 = sphi 0, %s86
    %s89 = sphi 0, %s88
    %s103 = sphi 0, %s89
    %s109 = sphi 0, %s111
    %s112 = sphi 0, %s109
    %s113 = sphi 0, %s112
    %s129 = sphi 0, %s113
  $region4: #{score_residue_forward.6} parent=0 // loop_header_branch
    %13 = sbr.rel (%p11) target = $region8
  $region5: #{score_residue_forward.6} parent=0 // loop_body
    %s15 = ssub.s32 %s10, 1
    %s16 = ssub.s32 %s10, 2
    %s17 = sadd.s32 %s10, 1
    %s18 = ssub.s32 %s10, %s17
    %p19 = scmp.eq.s32.totalorder %s18, 0
    %s21 = sadd.s32 %s20, 1
    %s22 = scalar_select %p19, %s20, %s21
    %p25 = pneg %p19
    %p26 = scmp.eq.s32.totalorder %s10, 1
    %p27 = por %p25, %p26
    %p28 = scmp.ne.s32.totalorder %s20, %s23
    %p29 = scmp.eq.s32.totalorder %s10, 0
    %p30 = por %p28, %p29
    %p31 = scmp.ne.s32.totalorder %s20, %s23
    %p32 = scmp.eq.s32.totalorder %s15, 1
    %p33 = por %p31, %p32
    %p34 = scmp.ne.s32.totalorder %s23, %s24
    %p35 = scmp.eq.s32.totalorder %s15, 0
    %p36 = por %p34, %p35
    %p37 = scmp.ne.s32.totalorder %s23, %s24
    %p38 = scmp.eq.s32.totalorder %s16, 1
    %p39 = por %p37, %p38
    %p41 = scmp.ne.s32.totalorder %s24, %s40
    %p42 = scmp.eq.s32.totalorder %s16, 0
    %p43 = por %p41, %p42
    %s45 = sadd.s32 %s44, 1
    %p48 = scmp.eq.s32.totalorder %s10, 1
    %p49 = scmp.ne.s32.totalorder %s44, %s46
    %p50 = scmp.eq.s32.totalorder %s10, 0
    %p51 = por %p49, %p50
    %p52 = scmp.ne.s32.totalorder %s44, %s46
    %p53 = scmp.eq.s32.totalorder %s15, 1
    %p54 = por %p52, %p53
    %p55 = scmp.ne.s32.totalorder %s46, %s47
    %p56 = scmp.eq.s32.totalorder %s15, 0
    %p57 = por %p55, %p56
    %p58 = scmp.ne.s32.totalorder %s46, %s47
    %p59 = scmp.eq.s32.totalorder %s16, 1
    %p60 = por %p58, %p59
    %p62 = scmp.ne.s32.totalorder %s47, %s61
    %p63 = scmp.eq.s32.totalorder %s16, 0
    %p64 = por %p62, %p63
    %s66 = sadd.s32 %s65, 1
    %p69 = scmp.eq.s32.totalorder %s10, 1
    %p70 = scmp.ne.s32.totalorder %s65, %s67
    %p71 = scmp.eq.s32.totalorder %s10, 0
    %p72 = por %p70, %p71
    %p73 = scmp.ne.s32.totalorder %s65, %s67
    %p74 = scmp.eq.s32.totalorder %s15, 1
    %p75 = por %p73, %p74
    %p76 = scmp.ne.s32.totalorder %s67, %s68
    %p77 = scmp.eq.s32.totalorder %s15, 0
    %p78 = por %p76, %p77
    %p79 = scmp.ne.s32.totalorder %s67, %s68
    %p80 = scmp.eq.s32.totalorder %s16, 1
    %p81 = por %p79, %p80
    %p83 = scmp.ne.s32.totalorder %s68, %s82
    %p84 = scmp.eq.s32.totalorder %s16, 0
    %p85 = por %p83, %p84
    %s87 = sadd.s32 %s86, 1
    %p90 = scmp.eq.s32.totalorder %s10, 1
    %p91 = scmp.ne.s32.totalorder %s86, %s88
    %p92 = scmp.eq.s32.totalorder %s10, 0
    %p93 = por %p91, %p92
    %p94 = scmp.ne.s32.totalorder %s86, %s88
    %p95 = scmp.eq.s32.totalorder %s15, 1
    %p96 = por %p94, %p95
    %p97 = scmp.ne.s32.totalorder %s88, %s89
    %p98 = scmp.eq.s32.totalorder %s15, 0
    %p99 = por %p97, %p98
    %p100 = scmp.ne.s32.totalorder %s88, %s89
    %p101 = scmp.eq.s32.totalorder %s16, 1
    %p102 = por %p100, %p101
    %p104 = scmp.ne.s32.totalorder %s89, %s103
    %p105 = scmp.eq.s32.totalorder %s16, 0
    %p106 = por %p104, %p105
    %s107 = ssub.s32 %s10, %s17
    %p108 = scmp.eq.s32.totalorder %s107, 0
    %s110 = sadd.s32 %s109, 1
    %s111 = scalar_select %p108, %s109, %s110
    %p114 = pneg %p108
    %p115 = scmp.eq.s32.totalorder %s10, 1
    %p116 = por %p114, %p115
    %p117 = scmp.ne.s32.totalorder %s109, %s112
    %p118 = scmp.eq.s32.totalorder %s10, 0
    %p119 = por %p117, %p118
    %p120 = scmp.ne.s32.totalorder %s109, %s112
    %p121 = scmp.eq.s32.totalorder %s15, 1
    %p122 = por %p120, %p121
    %p123 = scmp.ne.s32.totalorder %s112, %s113
    %p124 = scmp.eq.s32.totalorder %s15, 0
    %p125 = por %p123, %p124
    %p126 = scmp.ne.s32.totalorder %s112, %s113
    %p127 = scmp.eq.s32.totalorder %s16, 1
    %p128 = por %p126, %p127
    %p130 = scmp.ne.s32.totalorder %s113, %s129
    %p131 = scmp.eq.s32.totalorder %s16, 0
    %p132 = por %p130, %p131
    %p133 = scmp.le.s32.totalorder 1, %s10
    %p134 = scmp.lt.s32.totalorder %s10, 3
    %p135 = pnand %p133, %p134
    %p136 = pneg %p135
    // Predicated region
    $region9: #{score_residue_forward.6} parent=5 // pred_check
      _
    $region10: #{score_residue_forward.6} parent=5 // pred_check_branch
      %138 = sbr.rel (%p135) target = $region12
    $region11: #{score_residue_forward.6} parent=5 // pred_region
      %s139 = ssub.s32 %s10, 1
      // Predicated region
      $region13: #{score_residue_forward.6} parent=11 // pred_check
        %p140 = pneg %p57
      $region14: #{score_residue_forward.6} parent=11 // pred_check_branch
        %142 = sbr.rel (%p140) target = $region16
      $region15: #{score_residue_forward.6} parent=11 // pred_region
        _
      $region16: #{score_residue_forward.6} parent=11 // pred_fallthru
        _
      // Predicated region
      $region17: #{score_residue_forward.6} parent=11 // pred_check
        %p143 = pneg %p78
      $region18: #{score_residue_forward.6} parent=11 // pred_check_branch
        %145 = sbr.rel (%p143) target = $region20
      $region19: #{score_residue_forward.6} parent=11 // pred_region
        _
      $region20: #{score_residue_forward.6} parent=11 // pred_fallthru
        _
      // Predicated region
      $region21: #{score_residue_forward.6} parent=11 // pred_check
        %p146 = pneg %p99
      $region22: #{score_residue_forward.6} parent=11 // pred_check_branch
        %148 = sbr.rel (%p146) target = $region24
      $region23: #{score_residue_forward.6} parent=11 // pred_region
        _
      $region24: #{score_residue_forward.6} parent=11 // pred_fallthru
        _
    $region12: #{score_residue_forward.6} parent=5 // pred_fallthru
      _
    %p149 = scmp.lt.s32.totalorder %s10, 2
    // Predicated region
    $region25: #{score_residue_forward.6} parent=5 // pred_check
      %p150 = pneg %p149
    $region26: #{score_residue_forward.6} parent=5 // pred_check_branch
      %152 = sbr.rel (%p150) target = $region28
    $region27: #{score_residue_forward.6} parent=5 // pred_region
      // Predicated region
      $region29: #{score_residue_forward.6} parent=27 // pred_check
        %p153 = pneg %p30
      $region30: #{score_residue_forward.6} parent=27 // pred_check_branch
        %155 = sbr.rel (%p153) target = $region32
      $region31: #{score_residue_forward.6} parent=27 // pred_region
        %p156 = scmp.lt.s32.totalorder %s10, 1
        %s157 = scalar_select %p156, %s10, 1
        %s158 = smul.addr %s157, 8
        %s159 = smul.addr %s158, 4
        %s160 = scalar_lea.vmem %s0, %s159
      $region32: #{score_residue_forward.6} parent=27 // pred_fallthru
        _
    $region28: #{score_residue_forward.6} parent=5 // pred_fallthru
      _
    %p161 = scmp.le.s32.totalorder 1, %s10
    %p162 = scmp.lt.s32.totalorder %s10, 3
    %p163 = pnand %p161, %p162
    %p164 = pneg %p163
    // Predicated region
    $region33: #{score_residue_forward.6} parent=5 // pred_check
      _
    $region34: #{score_residue_forward.6} parent=5 // pred_check_branch
      %166 = sbr.rel (%p163) target = $region36
    $region35: #{score_residue_forward.6} parent=5 // pred_region
      %s167 = ssub.s32 %s10, 1
      %p168 = scmp.lt.s32.totalorder %s15, 1
      %s169 = scalar_select %p168, %s15, 1
      %s170 = smul.addr %s169, 8
      %s171 = smul.addr %s170, 4
      %s172 = scalar_lea.vmem %s0, %s171
      %p173 = pneg %p36
      %p174 = pneg %p33
      %p175 = pneg %p57
      %p176 = pneg %p54
      %p177 = pneg %p78
      %p178 = pneg %p75
      %p179 = pneg %p99
      %p180 = pneg %p96
      %p181 = pneg %p125
      %p182 = pneg %p122
      %p183 = scmp.lt.s32.totalorder %s15, 1
      %s184 = scalar_select %p183, %s15, 1
      %s185 = smul.addr %s184, 16
      %s186 = smul.addr %s185, 4
      %s187 = scalar_lea.vmem %s4, %s186
      %p188 = scmp.lt.s32.totalorder %s15, 1
      %s189 = scalar_select %p188, %s15, 1
      %s190 = smul.addr %s189, 8
      %s191 = smul.addr %s190, 4
      %s192 = scalar_lea.vmem %s0, %s191
      %p193 = scmp.lt.s32.totalorder %s15, 1
      %s194 = scalar_select %p193, %s15, 1
      %s195 = smul.addr %s194, 16
      %s196 = smul.addr %s195, 4
      %s197 = scalar_lea.vmem %s4, %s196
      %v199 = vld [vmem:[%s192] sm:$0xf]
      %v200 = vld [vmem:[%s192 + $0x4] sm:$0xf]
      %v201 = vld [vmem:[%s192 + $0x8] sm:$0xf]
      %v202 = vld [vmem:[%s192 + $0xc] sm:$0xf]
      %v203 = vld [vmem:[%s192 + $0x10] sm:$0xf]
      %v204 = vld [vmem:[%s192 + $0x14] sm:$0xf]
      %v205 = vld [vmem:[%s192 + $0x18] sm:$0xf]
      %v206 = vld [vmem:[%s192 + $0x1c] sm:$0xf]
      %v207 = vld [vmem:[%s1] sm:$0xf]
      %v208 = vld [vmem:[%s1 + $0x4] sm:$0xf]
      %v209 = vld [vmem:[%s3] sm:$0x1]
      %v211 = vperm.slane %v209, 0
      %v221 = vunpack.c.l.b16 %v199
      %v222 = vunpack.c.l.b16 %v200
      %v223 = vunpack.c.l.b16 %v201
      %v224 = vunpack.c.l.b16 %v202
      %v225 = vunpack.c.l.b16 %v203
      %v226 = vunpack.c.l.b16 %v204
      %v227 = vunpack.c.l.b16 %v205
      %v228 = vunpack.c.l.b16 %v206
      %v229 = vpack.c.b16 %v222, %v221
      %v230 = vpack.c.b16 %v224, %v223
      %v231 = vpack.c.b16 %v226, %v225
      %v232 = vpack.c.b16 %v228, %v227
      %v235 = vunpack.c.l.b16 %v207
      %v236 = vunpack.c.l.b16 %v208
      %v237 = vpack.c.b16 %v236, %v235
      %vm239 = vcmask 130048
      %v241 = vsel %vm239, %v229, 0
      %v244 = vsel %vm239, %v230, 0
      %v247 = vsel %vm239, %v231, 0
      %v250 = vsel %vm239, %v232, 0
      %252 = vmatpush.bf16.msra.mxu0 0
      %253 = vmatpush.bf16.msra.mxu0 0
      %254 = vmatpush.bf16.msra.mxu0 0
      %255 = vmatpush.bf16.msra.mxu0 0
      %256 = vmatpush.bf16.msra.mxu0 0
      %257 = vmatpush.bf16.msra.mxu0 0
      %258 = vmatpush.bf16.msra.mxu0 0
      %259 = vmatpush.bf16.msra.mxu0 %v237
      %260 = vmatmul.bf16.gmra.mxu0 %v241
      %v261 = vpop.f32.mrf.mxu0
      %v262 = vadd.f32 %v211, %v261
      %v263 = vpop.f32.mrf.mxu0
      %v264 = vadd.f32 %v211, %v263
      %265 = vmatmul.bf16.gmra.mxu0 %v244
      %v266 = vpop.f32.mrf.mxu0
      %v267 = vadd.f32 %v211, %v266
      %v268 = vpop.f32.mrf.mxu0
      %v269 = vadd.f32 %v211, %v268
      %270 = vmatmul.bf16.gmra.mxu0 %v247
      %v271 = vpop.f32.mrf.mxu0
      %v272 = vadd.f32 %v211, %v271
      %v273 = vpop.f32.mrf.mxu0
      %v274 = vadd.f32 %v211, %v273
      %275 = vmatmul.bf16.gmra.mxu0 %v250
      %v276 = vpop.f32.mrf.mxu0
      %v277 = vadd.f32 %v211, %v276
      %v278 = vpop.f32.mrf.mxu0
      %v279 = vadd.f32 %v211, %v278
      %280 = vdwg.mxu0
      %v281 = vld [vmem:[%s2] sm:$0xf]
      %v282 = vld [vmem:[%s2 + $0x4] sm:$0xf]
      %v285 = vunpack.c.l.b16 %v281
      %v286 = vunpack.c.l.b16 %v282
      %v287 = vpack.c.b16 %v286, %v285
      %289 = vmatpush.bf16.msra.mxu0 0
      %290 = vmatpush.bf16.msra.mxu0 0
      %291 = vmatpush.bf16.msra.mxu0 0
      %292 = vmatpush.bf16.msra.mxu0 0
      %293 = vmatpush.bf16.msra.mxu0 0
      %294 = vmatpush.bf16.msra.mxu0 0
      %295 = vmatpush.bf16.msra.mxu0 0
      %296 = vmatpush.bf16.msra.mxu0 %v287
      %297 = vmatmul.bf16.gmra.mxu0 %v241
      %v298 = vpop.f32.mrf.mxu0
      %v299 = vadd.f32 %v211, %v298
      %v300 = vpop.f32.mrf.mxu0
      %v301 = vadd.f32 %v211, %v300
      %302 = vmatmul.bf16.gmra.mxu0 %v244
      %v303 = vpop.f32.mrf.mxu0
      %v304 = vadd.f32 %v211, %v303
      %v305 = vpop.f32.mrf.mxu0
      %v306 = vadd.f32 %v211, %v305
      %307 = vmatmul.bf16.gmra.mxu0 %v247
      %v308 = vpop.f32.mrf.mxu0
      %v309 = vadd.f32 %v211, %v308
      %v310 = vpop.f32.mrf.mxu0
      %v311 = vadd.f32 %v211, %v310
      %312 = vmatmul.bf16.gmra.mxu0 %v250
      %v313 = vpop.f32.mrf.mxu0
      %v314 = vadd.f32 %v211, %v313
      %v315 = vpop.f32.mrf.mxu0
      %v316 = vadd.f32 %v211, %v315
      %317 = vdwg.mxu0
      %v318 = vpack.c.bf16 %v262, %v262
      %v319 = vpack.c.bf16 %v264, %v264
      %v320 = vpack.c.bf16 %v267, %v267
      %v321 = vpack.c.bf16 %v269, %v269
      %v322 = vpack.c.bf16 %v272, %v272
      %v323 = vpack.c.bf16 %v274, %v274
      %v324 = vpack.c.bf16 %v277, %v277
      %v325 = vpack.c.bf16 %v279, %v279
      %vm326 = vcmask 125952
      %327 = vst.msk [vmem:[%s197] sm:$0xf] %vm326, %v318
      %328 = vst.msk [vmem:[%s197 + $0x8] sm:$0xf] %vm326, %v319
      %329 = vst.msk [vmem:[%s197 + $0x10] sm:$0xf] %vm326, %v320
      %330 = vst.msk [vmem:[%s197 + $0x18] sm:$0xf] %vm326, %v321
      %331 = vst.msk [vmem:[%s197 + $0x20] sm:$0xf] %vm326, %v322
      %332 = vst.msk [vmem:[%s197 + $0x28] sm:$0xf] %vm326, %v323
      %333 = vst.msk [vmem:[%s197 + $0x30] sm:$0xf] %vm326, %v324
      %334 = vst.msk [vmem:[%s197 + $0x38] sm:$0xf] %vm326, %v325
      %v335 = vpack.c.bf16 %v299, %v299
      %v336 = vpack.c.bf16 %v301, %v301
      %v337 = vpack.c.bf16 %v304, %v304
      %v338 = vpack.c.bf16 %v306, %v306
      %v339 = vpack.c.bf16 %v309, %v309
      %v340 = vpack.c.bf16 %v311, %v311
      %v341 = vpack.c.bf16 %v314, %v314
      %v342 = vpack.c.bf16 %v316, %v316
      %s343 = scalar_lea.vmem %s197, 4
      %344 = vst.msk [vmem:[%s343] sm:$0xf] %vm326, %v335
      %345 = vst.msk [vmem:[%s343 + $0x8] sm:$0xf] %vm326, %v336
      %346 = vst.msk [vmem:[%s343 + $0x10] sm:$0xf] %vm326, %v337
      %347 = vst.msk [vmem:[%s343 + $0x18] sm:$0xf] %vm326, %v338
      %348 = vst.msk [vmem:[%s343 + $0x20] sm:$0xf] %vm326, %v339
      %349 = vst.msk [vmem:[%s343 + $0x28] sm:$0xf] %vm326, %v340
      %350 = vst.msk [vmem:[%s343 + $0x30] sm:$0xf] %vm326, %v341
      %351 = vst.msk [vmem:[%s343 + $0x38] sm:$0xf] %vm326, %v342
      %p352 = scmp.lt.s32.totalorder %s15, 1
      %s353 = scalar_select %p352, %s15, 1
      %s354 = smul.addr %s353, 16
      %s355 = smul.addr %s354, 4
      %s356 = scalar_lea.vmem %s4, %s355
      // Predicated region
      $region37: #{score_residue_forward.6} parent=35 // pred_check
        %p357 = pneg %p122
      $region38: #{score_residue_forward.6} parent=35 // pred_check_branch
        %359 = sbr.rel (%p357) target = $region40
      $region39: #{score_residue_forward.6} parent=35 // pred_region
        _
      $region40: #{score_residue_forward.6} parent=35 // pred_fallthru
        _
    $region36: #{score_residue_forward.6} parent=5 // pred_fallthru
      _
    %p360 = scmp.le.s32.totalorder 2, %s10
    // Predicated region
    $region41: #{score_residue_forward.6} parent=5 // pred_check
      %p361 = pneg %p360
    $region42: #{score_residue_forward.6} parent=5 // pred_check_branch
      %363 = sbr.rel (%p361) target = $region44
    $region43: #{score_residue_forward.6} parent=5 // pred_region
      %s364 = ssub.s32 %s10, 2
      // Predicated region
      $region45: #{score_residue_forward.6} parent=43 // pred_check
        %p365 = pneg %p128
      $region46: #{score_residue_forward.6} parent=43 // pred_check_branch
        %367 = sbr.rel (%p365) target = $region48
      $region47: #{score_residue_forward.6} parent=43 // pred_region
        %p368 = scmp.lt.s32.totalorder %s16, 1
        %s369 = scalar_select %p368, %s16, 1
        %s370 = smul.addr %s369, 16
        %s371 = smul.addr %s370, 4
        %s372 = scalar_lea.vmem %s4, %s371
      $region48: #{score_residue_forward.6} parent=43 // pred_fallthru
        _
    $region44: #{score_residue_forward.6} parent=5 // pred_fallthru
      _
  $region6: #{score_residue_forward.6} parent=0 // loop_footer
    %s14 = sadd.s32 1, %s10
  $region7: #{score_residue_forward.6} parent=0 // loop_footer_branch
    %9 = sbr.rel target = $region3
  $region8: #{score_residue_forward.6} parent=0 // loop_exit
    _

// kernel: score_residue_forward.5
$region0: #{score_residue_forward.5}
  #allocation0 [shape = 'u32[]', space=smem, size = 0x4, offset = 0x4, fixed_abs, tag = 'smem constant byte address 0x4 - core index']
  #allocation1 [shape = 'u32[72,128]{1,0:T(1,128)}', space=vmem, size = 0x9000, scoped, tag = 'internal scratch']
  #allocation2 [shape = 'bf16[10,10,8]{2,1,0:T(8,128)(2,1)}', space=vmem, size = 0xa000, scoped, tag = 'scratch operand']
  #allocation3 [shape = 'bf16[10,10,16]{2,1,0:T(8,128)(2,1)}', space=vmem, size = 0xa000, scoped, tag = 'scratch operand']
  %s0 = inlined_call_operand.vmem [shape: bf16[2,8,8,8], index: 0, kind: input, shape index: {}]
  %s1 = inlined_call_operand.vmem [shape: bf16[3,24,16], index: 1, kind: input, shape index: {}]
  %s2 = inlined_call_operand.vmem [shape: f32[1,16], index: 2, kind: input, shape index: {}]
  %s3 = inlined_call_operand.vmem [shape: bf16[3,48,16], index: 3, kind: input, shape index: {}]
  %s4 = inlined_call_operand.vmem [shape: f32[1,16], index: 4, kind: input, shape index: {}]
  %s5 = inlined_call_operand.vmem [shape: bf16[2,8,8,16], index: 5, kind: output, shape index: {}]
  %s6 = sld [smem:[#allocation0]]
  $region53: #{score_residue_forward.5} parent=0
    _
  %s8 = ssub.s32 1, %s6
  %s9 = scalar_select 0, %s8, %s6
  loop: start=0, step=1, limit=4
  $region2: #{score_residue_forward.5} parent=0 // loop_pre_header
    _
  $region3: #{score_residue_forward.5} parent=0 // loop_header
    %s11 = sphi 0, %s15
    %p12 = scmp.ge.s32.totalorder %s11, 4
    %s21 = sphi 0, %s23
    %s24 = sphi 0, %s21
    %s25 = sphi 0, %s24
    %s41 = sphi 0, %s25
    %s45 = sphi 0, %s45
    %s47 = sphi 0, %s45
    %s48 = sphi 0, %s47
    %s62 = sphi 0, %s48
    %s66 = sphi 0, %s66
    %s68 = sphi 0, %s66
    %s69 = sphi 0, %s68
    %s83 = sphi 0, %s69
    %s87 = sphi 0, %s87
    %s89 = sphi 0, %s87
    %s90 = sphi 0, %s89
    %s104 = sphi 0, %s90
    %s108 = sphi 0, %s108
    %s110 = sphi 0, %s108
    %s111 = sphi 0, %s110
    %s125 = sphi 0, %s111
    %s131 = sphi 0, %s133
    %s134 = sphi 0, %s131
    %s135 = sphi 0, %s134
    %s151 = sphi 0, %s135
  $region4: #{score_residue_forward.5} parent=0 // loop_header_branch
    %14 = sbr.rel (%p12) target = $region8
  $region5: #{score_residue_forward.5} parent=0 // loop_body
    %s16 = ssub.s32 %s11, 1
    %s17 = ssub.s32 %s11, 2
    %s18 = sadd.s32 %s11, 1
    %s19 = ssub.s32 %s11, %s18
    %p20 = scmp.eq.s32.totalorder %s19, 0
    %s22 = sadd.s32 %s21, 1
    %s23 = scalar_select %p20, %s21, %s22
    %p26 = pneg %p20
    %p27 = scmp.eq.s32.totalorder %s11, 1
    %p28 = por %p26, %p27
    %p29 = scmp.ne.s32.totalorder %s21, %s24
    %p30 = scmp.eq.s32.totalorder %s11, 0
    %p31 = por %p29, %p30
    %p32 = scmp.ne.s32.totalorder %s21, %s24
    %p33 = scmp.eq.s32.totalorder %s16, 1
    %p34 = por %p32, %p33
    %p35 = scmp.ne.s32.totalorder %s24, %s25
    %p36 = scmp.eq.s32.totalorder %s16, 0
    %p37 = por %p35, %p36
    %p38 = scmp.ne.s32.totalorder %s24, %s25
    %p39 = scmp.eq.s32.totalorder %s17, 1
    %p40 = por %p38, %p39
    %p42 = scmp.ne.s32.totalorder %s25, %s41
    %p43 = scmp.eq.s32.totalorder %s17, 0
    %p44 = por %p42, %p43
    %s46 = sadd.s32 %s45, 1
    %p49 = scmp.eq.s32.totalorder %s11, 1
    %p50 = scmp.ne.s32.totalorder %s45, %s47
    %p51 = scmp.eq.s32.totalorder %s11, 0
    %p52 = por %p50, %p51
    %p53 = scmp.ne.s32.totalorder %s45, %s47
    %p54 = scmp.eq.s32.totalorder %s16, 1
    %p55 = por %p53, %p54
    %p56 = scmp.ne.s32.totalorder %s47, %s48
    %p57 = scmp.eq.s32.totalorder %s16, 0
    %p58 = por %p56, %p57
    %p59 = scmp.ne.s32.totalorder %s47, %s48
    %p60 = scmp.eq.s32.totalorder %s17, 1
    %p61 = por %p59, %p60
    %p63 = scmp.ne.s32.totalorder %s48, %s62
    %p64 = scmp.eq.s32.totalorder %s17, 0
    %p65 = por %p63, %p64
    %s67 = sadd.s32 %s66, 1
    %p70 = scmp.eq.s32.totalorder %s11, 1
    %p71 = scmp.ne.s32.totalorder %s66, %s68
    %p72 = scmp.eq.s32.totalorder %s11, 0
    %p73 = por %p71, %p72
    %p74 = scmp.ne.s32.totalorder %s66, %s68
    %p75 = scmp.eq.s32.totalorder %s16, 1
    %p76 = por %p74, %p75
    %p77 = scmp.ne.s32.totalorder %s68, %s69
    %p78 = scmp.eq.s32.totalorder %s16, 0
    %p79 = por %p77, %p78
    %p80 = scmp.ne.s32.totalorder %s68, %s69
    %p81 = scmp.eq.s32.totalorder %s17, 1
    %p82 = por %p80, %p81
    %p84 = scmp.ne.s32.totalorder %s69, %s83
    %p85 = scmp.eq.s32.totalorder %s17, 0
    %p86 = por %p84, %p85
    %s88 = sadd.s32 %s87, 1
    %p91 = scmp.eq.s32.totalorder %s11, 1
    %p92 = scmp.ne.s32.totalorder %s87, %s89
    %p93 = scmp.eq.s32.totalorder %s11, 0
    %p94 = por %p92, %p93
    %p95 = scmp.ne.s32.totalorder %s87, %s89
    %p96 = scmp.eq.s32.totalorder %s16, 1
    %p97 = por %p95, %p96
    %p98 = scmp.ne.s32.totalorder %s89, %s90
    %p99 = scmp.eq.s32.totalorder %s16, 0
    %p100 = por %p98, %p99
    %p101 = scmp.ne.s32.totalorder %s89, %s90
    %p102 = scmp.eq.s32.totalorder %s17, 1
    %p103 = por %p101, %p102
    %p105 = scmp.ne.s32.totalorder %s90, %s104
    %p106 = scmp.eq.s32.totalorder %s17, 0
    %p107 = por %p105, %p106
    %s109 = sadd.s32 %s108, 1
    %p112 = scmp.eq.s32.totalorder %s11, 1
    %p113 = scmp.ne.s32.totalorder %s108, %s110
    %p114 = scmp.eq.s32.totalorder %s11, 0
    %p115 = por %p113, %p114
    %p116 = scmp.ne.s32.totalorder %s108, %s110
    %p117 = scmp.eq.s32.totalorder %s16, 1
    %p118 = por %p116, %p117
    %p119 = scmp.ne.s32.totalorder %s110, %s111
    %p120 = scmp.eq.s32.totalorder %s16, 0
    %p121 = por %p119, %p120
    %p122 = scmp.ne.s32.totalorder %s110, %s111
    %p123 = scmp.eq.s32.totalorder %s17, 1
    %p124 = por %p122, %p123
    %p126 = scmp.ne.s32.totalorder %s111, %s125
    %p127 = scmp.eq.s32.totalorder %s17, 0
    %p128 = por %p126, %p127
    %s129 = ssub.s32 %s11, %s18
    %p130 = scmp.eq.s32.totalorder %s129, 0
    %s132 = sadd.s32 %s131, 1
    %s133 = scalar_select %p130, %s131, %s132
    %p136 = pneg %p130
    %p137 = scmp.eq.s32.totalorder %s11, 1
    %p138 = por %p136, %p137
    %p139 = scmp.ne.s32.totalorder %s131, %s134
    %p140 = scmp.eq.s32.totalorder %s11, 0
    %p141 = por %p139, %p140
    %p142 = scmp.ne.s32.totalorder %s131, %s134
    %p143 = scmp.eq.s32.totalorder %s16, 1
    %p144 = por %p142, %p143
    %p145 = scmp.ne.s32.totalorder %s134, %s135
    %p146 = scmp.eq.s32.totalorder %s16, 0
    %p147 = por %p145, %p146
    %p148 = scmp.ne.s32.totalorder %s134, %s135
    %p149 = scmp.eq.s32.totalorder %s17, 1
    %p150 = por %p148, %p149
    %p152 = scmp.ne.s32.totalorder %s135, %s151
    %p153 = scmp.eq.s32.totalorder %s17, 0
    %p154 = por %p152, %p153
    %p155 = scmp.le.s32.totalorder 1, %s11
    %p156 = scmp.lt.s32.totalorder %s11, 3
    %p157 = pnand %p155, %p156
    %p158 = pneg %p157
    // Predicated region
    $region9: #{score_residue_forward.5} parent=5 // pred_check
      _
    $region10: #{score_residue_forward.5} parent=5 // pred_check_branch
      %160 = sbr.rel (%p157) target = $region12
    $region11: #{score_residue_forward.5} parent=5 // pred_region
      %s161 = ssub.s32 %s11, 1
      // Predicated region
      $region13: #{score_residue_forward.5} parent=11 // pred_check
        %p162 = pneg %p58
      $region14: #{score_residue_forward.5} parent=11 // pred_check_branch
        %164 = sbr.rel (%p162) target = $region16
      $region15: #{score_residue_forward.5} parent=11 // pred_region
        _
      $region16: #{score_residue_forward.5} parent=11 // pred_fallthru
        _
      // Predicated region
      $region17: #{score_residue_forward.5} parent=11 // pred_check
        %p165 = pneg %p79
      $region18: #{score_residue_forward.5} parent=11 // pred_check_branch
        %167 = sbr.rel (%p165) target = $region20
      $region19: #{score_residue_forward.5} parent=11 // pred_region
        _
      $region20: #{score_residue_forward.5} parent=11 // pred_fallthru
        _
      // Predicated region
      $region21: #{score_residue_forward.5} parent=11 // pred_check
        %p168 = pneg %p100
      $region22: #{score_residue_forward.5} parent=11 // pred_check_branch
        %170 = sbr.rel (%p168) target = $region24
      $region23: #{score_residue_forward.5} parent=11 // pred_region
        _
      $region24: #{score_residue_forward.5} parent=11 // pred_fallthru
        _
      // Predicated region
      $region25: #{score_residue_forward.5} parent=11 // pred_check
        %p171 = pneg %p121
      $region26: #{score_residue_forward.5} parent=11 // pred_check_branch
        %173 = sbr.rel (%p171) target = $region28
      $region27: #{score_residue_forward.5} parent=11 // pred_region
        _
      $region28: #{score_residue_forward.5} parent=11 // pred_fallthru
        _
    $region12: #{score_residue_forward.5} parent=5 // pred_fallthru
      _
    %p174 = scmp.lt.s32.totalorder %s11, 2
    // Predicated region
    $region29: #{score_residue_forward.5} parent=5 // pred_check
      %p175 = pneg %p174
    $region30: #{score_residue_forward.5} parent=5 // pred_check_branch
      %177 = sbr.rel (%p175) target = $region32
    $region31: #{score_residue_forward.5} parent=5 // pred_region
      // Predicated region
      $region33: #{score_residue_forward.5} parent=31 // pred_check
        %p178 = pneg %p31
      $region34: #{score_residue_forward.5} parent=31 // pred_check_branch
        %180 = sbr.rel (%p178) target = $region36
      $region35: #{score_residue_forward.5} parent=31 // pred_region
        %p181 = scmp.lt.s32.totalorder %s11, 1
        %s182 = scalar_select %p181, %s11, 1
        %s183 = smul.addr %s182, 8
        %s184 = smul.addr %s183, 4
        %s185 = scalar_lea.vmem %s0, %s184
      $region36: #{score_residue_forward.5} parent=31 // pred_fallthru
        _
    $region32: #{score_residue_forward.5} parent=5 // pred_fallthru
      _
    %p186 = scmp.le.s32.totalorder 1, %s11
    %p187 = scmp.lt.s32.totalorder %s11, 3
    %p188 = pnand %p186, %p187
    %p189 = pneg %p188
    // Predicated region
    $region37: #{score_residue_forward.5} parent=5 // pred_check
      _
    $region38: #{score_residue_forward.5} parent=5 // pred_check_branch
      %191 = sbr.rel (%p188) target = $region40
    $region39: #{score_residue_forward.5} parent=5 // pred_region
      %s192 = ssub.s32 %s11, 1
      %p193 = scmp.lt.s32.totalorder %s16, 1
      %s194 = scalar_select %p193, %s16, 1
      %s195 = smul.addr %s194, 8
      %s196 = smul.addr %s195, 4
      %s197 = scalar_lea.vmem %s0, %s196
      %p198 = pneg %p37
      %p199 = pneg %p34
      %p200 = pneg %p58
      %p201 = pneg %p55
      %p202 = pneg %p79
      %p203 = pneg %p76
      %p204 = pneg %p100
      %p205 = pneg %p97
      %p206 = pneg %p121
      %p207 = pneg %p118
      %p208 = pneg %p147
      %p209 = pneg %p144
      %p210 = scmp.lt.s32.totalorder %s16, 1
      %s211 = scalar_select %p210, %s16, 1
      %s212 = smul.addr %s211, 8
      %s213 = smul.addr %s212, 4
      %s214 = scalar_lea.vmem %s5, %s213
      %p215 = scmp.lt.s32.totalorder %s16, 1
      %s216 = scalar_select %p215, %s16, 1
      %s217 = smul.addr %s216, 8
      %s218 = smul.addr %s217, 4
      %s219 = scalar_lea.vmem %s0, %s218
      %p220 = scmp.lt.s32.totalorder %s16, 1
      %s221 = scalar_select %p220, %s16, 1
      %s222 = smul.addr %s221, 8
      %s223 = smul.addr %s222, 4
      %s224 = scalar_lea.vmem %s5, %s223
      %v226 = vld [vmem:[%s219] sm:$0xf]
      %v227 = vld [vmem:[%s219 + $0x4] sm:$0xf]
      %v228 = vld [vmem:[%s219 + $0x8] sm:$0xf]
      %v229 = vld [vmem:[%s219 + $0xc] sm:$0xf]
      %v230 = vld [vmem:[%s219 + $0x10] sm:$0xf]
      %v231 = vld [vmem:[%s219 + $0x14] sm:$0xf]
      %v232 = vld [vmem:[%s219 + $0x18] sm:$0xf]
      %v233 = vld [vmem:[%s219 + $0x1c] sm:$0xf]
      %vm234 = vcmask 60416
      %235 = vst.msk [vmem:[#allocation2] sm:$0xf] %vm234, 0
      %vm236 = vcmask 57344
      %237 = vst.msk [vmem:[#allocation2 + $0x4] sm:$0x1] %vm236, 0
      %s238 = scalar_lea.vmem [#allocation2], 72
      %239 = vst.msk [vmem:[%s238] sm:$0xf] %vm234, 0
      %240 = vst.msk [vmem:[%s238 + $0x4] sm:$0x1] %vm236, 0
      %s241 = scalar_lea.vmem [#allocation2], 8
      %vm242 = vcmask 57344
      %vm243 = vsmask.f32 256
      %vm244 = vmand %vm242, %vm243
      %v245 = vld [vmem:[%s241] sm:$0x1]
      %v246 = vsel %vm244, 0, %v245
      %247 = vst [vmem:[%s241] sm:$0x1] %v246
      %v248 = vld [vmem:[%s241 + $0x8] sm:$0x1]
      %v249 = vsel %vm244, 0, %v248
      %250 = vst [vmem:[%s241 + $0x8] sm:$0x1] %v249
      %v251 = vld [vmem:[%s241 + $0x10] sm:$0x1]
      %v252 = vsel %vm244, 0, %v251
      %253 = vst [vmem:[%s241 + $0x10] sm:$0x1] %v252
      %v254 = vld [vmem:[%s241 + $0x18] sm:$0x1]
      %v255 = vsel %vm244, 0, %v254
      %256 = vst [vmem:[%s241 + $0x18] sm:$0x1] %v255
      %v257 = vld [vmem:[%s241 + $0x20] sm:$0x1]
      %v258 = vsel %vm244, 0, %v257
      %259 = vst [vmem:[%s241 + $0x20] sm:$0x1] %v258
      %v260 = vld [vmem:[%s241 + $0x28] sm:$0x1]
      %v261 = vsel %vm244, 0, %v260
      %262 = vst [vmem:[%s241 + $0x28] sm:$0x1] %v261
      %v263 = vld [vmem:[%s241 + $0x30] sm:$0x1]
      %v264 = vsel %vm244, 0, %v263
      %265 = vst [vmem:[%s241 + $0x30] sm:$0x1] %v264
      %v266 = vld [vmem:[%s241 + $0x38] sm:$0x1]
      %v267 = vsel %vm244, 0, %v266
      %268 = vst [vmem:[%s241 + $0x38] sm:$0x1] %v267
      %vm269 = vsmask.f32 7938
      %vm270 = vmand %vm242, %vm269
      %v271 = vld [vmem:[%s241 + $0x4] sm:$0x1]
      %v272 = vsel %vm270, 0, %v271
      %273 = vst [vmem:[%s241 + $0x4] sm:$0x1] %v272
      %v274 = vld [vmem:[%s241 + $0xc] sm:$0x1]
      %v275 = vsel %vm270, 0, %v274
      %276 = vst [vmem:[%s241 + $0xc] sm:$0x1] %v275
      %v277 = vld [vmem:[%s241 + $0x14] sm:$0x1]
      %v278 = vsel %vm270, 0, %v277
      %279 = vst [vmem:[%s241 + $0x14] sm:$0x1] %v278
      %v280 = vld [vmem:[%s241 + $0x1c] sm:$0x1]
      %v281 = vsel %vm270, 0, %v280
      %282 = vst [vmem:[%s241 + $0x1c] sm:$0x1] %v281
      %v283 = vld [vmem:[%s241 + $0x24] sm:$0x1]
      %v284 = vsel %vm270, 0, %v283
      %285 = vst [vmem:[%s241 + $0x24] sm:$0x1] %v284
      %v286 = vld [vmem:[%s241 + $0x2c] sm:$0x1]
      %v287 = vsel %vm270, 0, %v286
      %288 = vst [vmem:[%s241 + $0x2c] sm:$0x1] %v287
      %v289 = vld [vmem:[%s241 + $0x34] sm:$0x1]
      %v290 = vsel %vm270, 0, %v289
      %291 = vst [vmem:[%s241 + $0x34] sm:$0x1] %v290
      %v292 = vld [vmem:[%s241 + $0x3c] sm:$0x1]
      %v293 = vsel %vm270, 0, %v292
      %294 = vst [vmem:[%s241 + $0x3c] sm:$0x1] %v293
      %v296 = vshrl.u32 %v226, 16
      %v298 = vrot.slane %v296, 7
      %v299 = vshll.u32 %v226, 16
      %v301 = vor.u32 %v298, %v299
      %v302 = vrot.slane %v298, 4
      %v304 = vshrl.u32 %v227, 16
      %v306 = vrot.slane %v304, 7
      %v307 = vshll.u32 %v227, 16
      %v309 = vor.u32 %v306, %v307
      %v310 = vrot.slane %v306, 4
      %v312 = vshrl.u32 %v228, 16
      %v314 = vrot.slane %v312, 7
      %v315 = vshll.u32 %v228, 16
      %v317 = vor.u32 %v314, %v315
      %v318 = vrot.slane %v314, 4
      %v320 = vshrl.u32 %v229, 16
      %v322 = vrot.slane %v320, 7
      %v323 = vshll.u32 %v229, 16
      %v325 = vor.u32 %v322, %v323
      %v326 = vrot.slane %v322, 4
      %v328 = vshrl.u32 %v230, 16
      %v330 = vrot.slane %v328, 7
      %v331 = vshll.u32 %v230, 16
      %v333 = vor.u32 %v330, %v331
      %v334 = vrot.slane %v330, 4
      %v336 = vshrl.u32 %v231, 16
      %v338 = vrot.slane %v336, 7
      %v339 = vshll.u32 %v231, 16
      %v341 = vor.u32 %v338, %v339
      %v342 = vrot.slane %v338, 4
      %v344 = vshrl.u32 %v232, 16
      %v346 = vrot.slane %v344, 7
      %v347 = vshll.u32 %v232, 16
      %v349 = vor.u32 %v346, %v347
      %v350 = vrot.slane %v346, 4
      %v352 = vshrl.u32 %v233, 16
      %v354 = vrot.slane %v352, 7
      %v355 = vshll.u32 %v233, 16
      %v357 = vor.u32 %v354, %v355
      %v358 = vrot.slane %v354, 4
      %vm375 = vcmask 60416
      %vm376 = vmand %vm375, %vm269
      %v377 = vld [vmem:[%s241] sm:$0xf]
      %v378 = vsel %vm376, %v301, %v377
      %379 = vst [vmem:[%s241] sm:$0xf] %v378
      %v380 = vld [vmem:[%s241 + $0x4] sm:$0x1]
      %v381 = vsel %vm244, %v302, %v380
      %382 = vst [vmem:[%s241 + $0x4] sm:$0x1] %v381
      %v383 = vld [vmem:[%s241 + $0x8] sm:$0xf]
      %v384 = vsel %vm376, %v309, %v383
      %385 = vst [vmem:[%s241 + $0x8] sm:$0xf] %v384
      %v386 = vld [vmem:[%s241 + $0xc] sm:$0x1]
      %v387 = vsel %vm244, %v310, %v386
      %388 = vst [vmem:[%s241 + $0xc] sm:$0x1] %v387
      %v389 = vld [vmem:[%s241 + $0x10] sm:$0xf]
      %v390 = vsel %vm376, %v317, %v389
      %391 = vst [vmem:[%s241 + $0x10] sm:$0xf] %v390
      %v392 = vld [vmem:[%s241 + $0x14] sm:$0x1]
      %v393 = vsel %vm244, %v318, %v392
      %394 = vst [vmem:[%s241 + $0x14] sm:$0x1] %v393
      %v395 = vld [vmem:[%s241 + $0x18] sm:$0xf]
      %v396 = vsel %vm376, %v325, %v395
      %397 = vst [vmem:[%s241 + $0x18] sm:$0xf] %v396
      %v398 = vld [vmem:[%s241 + $0x1c] sm:$0x1]
      %v399 = vsel %vm244, %v326, %v398
      %400 = vst [vmem:[%s241 + $0x1c] sm:$0x1] %v399
      %v401 = vld [vmem:[%s241 + $0x20] sm:$0xf]
      %v402 = vsel %vm376, %v333, %v401
      %403 = vst [vmem:[%s241 + $0x20] sm:$0xf] %v402
      %v404 = vld [vmem:[%s241 + $0x24] sm:$0x1]
      %v405 = vsel %vm244, %v334, %v404
      %406 = vst [vmem:[%s241 + $0x24] sm:$0x1] %v405
      %v407 = vld [vmem:[%s241 + $0x28] sm:$0xf]
      %v408 = vsel %vm376, %v341, %v407
      %409 = vst [vmem:[%s241 + $0x28] sm:$0xf] %v408
      %v410 = vld [vmem:[%s241 + $0x2c] sm:$0x1]
      %v411 = vsel %vm244, %v342, %v410
      %412 = vst [vmem:[%s241 + $0x2c] sm:$0x1] %v411
      %v413 = vld [vmem:[%s241 + $0x30] sm:$0xf]
      %v414 = vsel %vm376, %v349, %v413
      %415 = vst [vmem:[%s241 + $0x30] sm:$0xf] %v414
      %v416 = vld [vmem:[%s241 + $0x34] sm:$0x1]
      %v417 = vsel %vm244, %v350, %v416
      %418 = vst [vmem:[%s241 + $0x34] sm:$0x1] %v417
      %v419 = vld [vmem:[%s241 + $0x38] sm:$0xf]
      %v420 = vsel %vm376, %v357, %v419
      %421 = vst [vmem:[%s241 + $0x38] sm:$0xf] %v420
      %v422 = vld [vmem:[%s241 + $0x3c] sm:$0x1]
      %v423 = vsel %vm244, %v358, %v422
      %424 = vst [vmem:[%s241 + $0x3c] sm:$0x1] %v423
      %v425 = vld [vmem:[#allocation2] sm:$0xf]
      %v426 = vld [vmem:[#allocation2 + $0x4] sm:$0x1]
      %v427 = vld [vmem:[#allocation2 + $0x8] sm:$0xf]
      %v428 = vld [vmem:[#allocation2 + $0xc] sm:$0x1]
      %v429 = vld [vmem:[#allocation2 + $0x10] sm:$0xf]
      %v430 = vld [vmem:[#allocation2 + $0x14] sm:$0x1]
      %v431 = vld [vmem:[#allocation2 + $0x18] sm:$0xf]
      %v432 = vld [vmem:[#allocation2 + $0x1c] sm:$0x1]
      %v433 = vld [vmem:[#allocation2 + $0x20] sm:$0xf]
      %v434 = vld [vmem:[#allocation2 + $0x24] sm:$0x1]
      %v435 = vld [vmem:[#allocation2 + $0x28] sm:$0xf]
      %v436 = vld [vmem:[#allocation2 + $0x2c] sm:$0x1]
      %v437 = vld [vmem:[#allocation2 + $0x30] sm:$0xf]
      %v438 = vld [vmem:[#allocation2 + $0x34] sm:$0x1]
      %v439 = vld [vmem:[#allocation2 + $0x38] sm:$0xf]
      %v440 = vld [vmem:[#allocation2 + $0x3c] sm:$0x1]
      %v441 = vld [vmem:[#allocation2 + $0x40] sm:$0xf]
      %v442 = vld [vmem:[#allocation2 + $0x44] sm:$0x1]
      %v443 = vld [vmem:[#allocation2 + $0x48] sm:$0xf]
      %v444 = vld [vmem:[#allocation2 + $0x4c] sm:$0x1]
      %v461 = vunpack.c.l.b16 %v425
      %v462 = vunpack.c.l.b16 %v426
      %v463 = vunpack.c.l.b16 %v427
      %v464 = vunpack.c.l.b16 %v428
      %v465 = vunpack.c.l.b16 %v429
      %v466 = vunpack.c.l.b16 %v430
      %v467 = vunpack.c.l.b16 %v431
      %v468 = vunpack.c.l.b16 %v432
      %v469 = vunpack.c.l.b16 %v433
      %v470 = vunpack.c.l.b16 %v434
      %v471 = vunpack.c.l.b16 %v435
      %v472 = vunpack.c.l.b16 %v436
      %v473 = vunpack.c.l.b16 %v437
      %v474 = vunpack.c.l.b16 %v438
      %v475 = vunpack.c.l.b16 %v439
      %v476 = vunpack.c.l.b16 %v440
      %v477 = vpack.c.b16 %v462, %v461
      %v478 = vpack.c.b16 %v464, %v463
      %v479 = vpack.c.b16 %v466, %v465
      %v480 = vpack.c.b16 %v468, %v467
      %v481 = vpack.c.b16 %v470, %v469
      %v482 = vpack.c.b16 %v472, %v471
      %v483 = vpack.c.b16 %v474, %v473
      %v484 = vpack.c.b16 %v476, %v475
      %v486 = vshrl.u32 %v477, 16
      %v488 = vshll.u32 %v477, 16
      %v490 = vrot.slane %v488, 1
      %v491 = vor.u32 %v486, %v490
      %v493 = vshrl.u32 %v478, 16
      %v495 = vshll.u32 %v478, 16
      %v497 = vrot.slane %v495, 1
      %v498 = vor.u32 %v493, %v497
      %v500 = vshrl.u32 %v479, 16
      %v502 = vshll.u32 %v479, 16
      %v504 = vrot.slane %v502, 1
      %v505 = vor.u32 %v500, %v504
      %v507 = vshrl.u32 %v480, 16
      %v509 = vshll.u32 %v480, 16
      %v511 = vrot.slane %v509, 1
      %v512 = vor.u32 %v507, %v511
      %v514 = vshrl.u32 %v481, 16
      %v516 = vshll.u32 %v481, 16
      %v518 = vrot.slane %v516, 1
      %v519 = vor.u32 %v514, %v518
      %v521 = vshrl.u32 %v482, 16
      %v523 = vshll.u32 %v482, 16
      %v525 = vrot.slane %v523, 1
      %v526 = vor.u32 %v521, %v525
      %v528 = vshrl.u32 %v483, 16
      %v530 = vshll.u32 %v483, 16
      %v532 = vrot.slane %v530, 1
      %v533 = vor.u32 %v528, %v532
      %v535 = vshrl.u32 %v484, 16
      %v537 = vshll.u32 %v484, 16
      %v539 = vrot.slane %v537, 1
      %v540 = vor.u32 %v535, %v539
      %541 = vrot.lane.b32.xlu0 %v491, 8
      %v542 = vpop.permute.xlu0 %541
      %543 = vrot.lane.b32.xlu0 %v498, 8
      %v544 = vpop.permute.xlu0 %543
      %545 = vrot.lane.b32.xlu0 %v505, 8
      %v546 = vpop.permute.xlu0 %545
      %547 = vrot.lane.b32.xlu0 %v512, 8
      %v548 = vpop.permute.xlu0 %547
      %549 = vrot.lane.b32.xlu0 %v519, 8
      %v550 = vpop.permute.xlu0 %549
      %551 = vrot.lane.b32.xlu0 %v526, 8
      %v552 = vpop.permute.xlu0 %551
      %553 = vrot.lane.b32.xlu0 %v533, 8
      %v554 = vpop.permute.xlu0 %553
      %555 = vrot.lane.b32.xlu0 %v540, 8
      %v556 = vpop.permute.xlu0 %555
      %v557 = vrot.slane %v477, 1
      %v558 = vrot.slane %v478, 1
      %v559 = vrot.slane %v479, 1
      %v560 = vrot.slane %v480, 1
      %v561 = vrot.slane %v481, 1
      %v562 = vrot.slane %v482, 1
      %v563 = vrot.slane %v483, 1
      %v564 = vrot.slane %v484, 1
      %565 = vrot.lane.b32.xlu0 %v557, 16
      %v566 = vpop.permute.xlu0 %565
      %567 = vrot.lane.b32.xlu0 %v558, 16
      %v568 = vpop.permute.xlu0 %567
      %569 = vrot.lane.b32.xlu0 %v559, 16
      %v570 = vpop.permute.xlu0 %569
      %571 = vrot.lane.b32.xlu0 %v560, 16
      %v572 = vpop.permute.xlu0 %571
      %573 = vrot.lane.b32.xlu0 %v561, 16
      %v574 = vpop.permute.xlu0 %573
      %575 = vrot.lane.b32.xlu0 %v562, 16
      %v576 = vpop.permute.xlu0 %575
      %577 = vrot.lane.b32.xlu0 %v563, 16
      %v578 = vpop.permute.xlu0 %577
      %579 = vrot.lane.b32.xlu0 %v564, 16
      %v580 = vpop.permute.xlu0 %579
      %vm581 = vcmask 64512
      %v584 = vsel %vm581, %v425, %v542
      %v587 = vsel %vm581, %v427, %v544
      %v590 = vsel %vm581, %v429, %v546
      %v593 = vsel %vm581, %v431, %v548
      %v596 = vsel %vm581, %v433, %v550
      %v599 = vsel %vm581, %v435, %v552
      %v602 = vsel %vm581, %v437, %v554
      %v605 = vsel %vm581, %v439, %v556
      %vm606 = vcmask 130048
      %v608 = vsel %vm606, %v584, %v566
      %v610 = vsel %vm606, %v587, %v568
      %v612 = vsel %vm606, %v590, %v570
      %v614 = vsel %vm606, %v593, %v572
      %v616 = vsel %vm606, %v596, %v574
      %v618 = vsel %vm606, %v599, %v576
      %v620 = vsel %vm606, %v602, %v578
      %v622 = vsel %vm606, %v605, %v580
      %v623 = vld [vmem:[%s1] sm:$0xf]
      %v624 = vld [vmem:[%s1 + $0x4] sm:$0xf]
      %v625 = vld [vmem:[%s1 + $0x8] sm:$0xf]
      %v628 = vunpack.c.l.b16 %v441
      %v629 = vunpack.c.l.b16 %v442
      %v630 = vpack.c.b16 %v629, %v628
      %v632 = vshrl.u32 %v630, 16
      %v634 = vshll.u32 %v630, 16
      %v636 = vrot.slane %v634, 1
      %v637 = vor.u32 %v632, %v636
      %638 = vrot.lane.b32.xlu0 %v637, 8
      %v639 = vpop.permute.xlu0 %638
      %v640 = vrot.slane %v630, 1
      %641 = vrot.lane.b32.xlu0 %v640, 16
      %v642 = vpop.permute.xlu0 %641
      %v645 = vsel %vm581, %v441, %v639
      %v647 = vsel %vm606, %v645, %v642
      %s648 = scalar_lea.vmem %s1, 12
      %v649 = vld [vmem:[%s648] sm:$0xf]
      %v650 = vld [vmem:[%s648 + $0x4] sm:$0xf]
      %v651 = vld [vmem:[%s648 + $0x8] sm:$0xf]
      %v660 = vunpack.c.l.b16 %v610
      %v661 = vunpack.c.l.b16 %v612
      %v662 = vunpack.c.l.b16 %v614
      %v663 = vunpack.c.l.b16 %v616
      %v664 = vunpack.c.l.b16 %v618
      %v665 = vunpack.c.l.b16 %v620
      %v666 = vunpack.c.l.b16 %v622
      %v667 = vunpack.c.l.b16 %v647
      %v668 = vpack.c.b16 %v661, %v660
      %v669 = vpack.c.b16 %v663, %v662
      %v670 = vpack.c.b16 %v665, %v664
      %v671 = vpack.c.b16 %v667, %v666
      %v675 = vunpack.c.l.b16 %v649
      %v676 = vunpack.c.l.b16 %v650
      %v677 = vunpack.c.l.b16 %v651
      %v678 = vpack.c.b16 %v676, %v675
      %v679 = vpack.c.b16 %v677, %v677
      %vm681 = vcmask 195584
      %v683 = vsel %vm681, %v668, 0
      %v686 = vsel %vm681, %v669, 0
      %v689 = vsel %vm681, %v670, 0
      %v692 = vsel %vm681, %v671, 0
      %vm694 = vcmask 1043456
      %v696 = vsel %vm694, %v679, 0
      %698 = vmatpush.bf16.msra.mxu0 0
      %699 = vmatpush.bf16.msra.mxu0 0
      %700 = vmatpush.bf16.msra.mxu0 0
      %701 = vmatpush.bf16.msra.mxu0 0
      %702 = vmatpush.bf16.msra.mxu0 0
      %703 = vmatpush.bf16.msra.mxu0 0
      %704 = vmatpush.bf16.msra.mxu0 %v696
      %705 = vmatpush.bf16.msra.mxu0 %v678
      %706 = vmatmul.bf16.gmra.mxu0 %v683
      %v707 = vpop.f32.mrf.mxu0
      %v708 = vadd.f32 0.0, %v707
      %v709 = vpop.f32.mrf.mxu0
      %v710 = vadd.f32 0.0, %v709
      %711 = vmatmul.bf16.gmra.mxu0 %v686
      %v712 = vpop.f32.mrf.mxu0
      %v713 = vadd.f32 0.0, %v712
      %v714 = vpop.f32.mrf.mxu0
      %v715 = vadd.f32 0.0, %v714
      %716 = vmatmul.bf16.gmra.mxu0 %v689
      %v717 = vpop.f32.mrf.mxu0
      %v718 = vadd.f32 0.0, %v717
      %v719 = vpop.f32.mrf.mxu0
      %v720 = vadd.f32 0.0, %v719
      %721 = vmatmul.bf16.gmra.mxu0 %v692
      %v722 = vpop.f32.mrf.mxu0
      %v723 = vadd.f32 0.0, %v722
      %v724 = vpop.f32.mrf.mxu0
      %v725 = vadd.f32 0.0, %v724
      %726 = vdwg.mxu0
      %v728 = vunpack.c.l.b16 %v608
      %v729 = vpack.c.b16 %v660, %v728
      %v730 = vpack.c.b16 %v662, %v661
      %v731 = vpack.c.b16 %v664, %v663
      %v732 = vpack.c.b16 %v666, %v665
      %v736 = vunpack.c.l.b16 %v623
      %v737 = vunpack.c.l.b16 %v624
      %v738 = vunpack.c.l.b16 %v625
      %v739 = vpack.c.b16 %v737, %v736
      %v740 = vpack.c.b16 %v738, %v738
      %v743 = vsel %vm681, %v729, 0
      %v746 = vsel %vm681, %v730, 0
      %v749 = vsel %vm681, %v731, 0
      %v752 = vsel %vm681, %v732, 0
      %v755 = vsel %vm694, %v740, 0
      %757 = vmatpush.bf16.msra.mxu0 0
      %758 = vmatpush.bf16.msra.mxu0 0
      %759 = vmatpush.bf16.msra.mxu0 0
      %760 = vmatpush.bf16.msra.mxu0 0
      %761 = vmatpush.bf16.msra.mxu0 0
      %762 = vmatpush.bf16.msra.mxu0 0
      %763 = vmatpush.bf16.msra.mxu0 %v755
      %764 = vmatpush.bf16.msra.mxu0 %v739
      %765 = vmatmul.bf16.gmra.mxu0 %v743
      %v766 = vpop.f32.mrf.mxu0
      %v767 = vadd.f32 %v708, %v766
      %v768 = vpop.f32.mrf.mxu0
      %v769 = vadd.f32 %v710, %v768
      %770 = vmatmul.bf16.gmra.mxu0 %v746
      %v771 = vpop.f32.mrf.mxu0
      %v772 = vadd.f32 %v713, %v771
      %v773 = vpop.f32.mrf.mxu0
      %v774 = vadd.f32 %v715, %v773
      %775 = vmatmul.bf16.gmra.mxu0 %v749
      %v776 = vpop.f32.mrf.mxu0
      %v777 = vadd.f32 %v718, %v776
      %v778 = vpop.f32.mrf.mxu0
      %v779 = vadd.f32 %v720, %v778
      %780 = vmatmul.bf16.gmra.mxu0 %v752
      %v781 = vpop.f32.mrf.mxu0
      %v782 = vadd.f32 %v723, %v781
      %v783 = vpop.f32.mrf.mxu0
      %v784 = vadd.f32 %v725, %v783
      %785 = vdwg.mxu0
      %v788 = vunpack.c.l.b16 %v443
      %v789 = vunpack.c.l.b16 %v444
      %v790 = vpack.c.b16 %v789, %v788
      %v792 = vshrl.u32 %v790, 16
      %v794 = vshll.u32 %v790, 16
      %v796 = vrot.slane %v794, 1
      %v797 = vor.u32 %v792, %v796
      %798 = vrot.lane.b32.xlu0 %v797, 8
      %v799 = vpop.permute.xlu0 %798
      %v800 = vrot.slane %v790, 1
      %801 = vrot.lane.b32.xlu0 %v800, 16
      %v802 = vpop.permute.xlu0 %801
      %v805 = vsel %vm581, %v443, %v799
      %v807 = vsel %vm606, %v805, %v802
      %s808 = scalar_lea.vmem %s1, 24
      %v809 = vld [vmem:[%s808] sm:$0xf]
      %v810 = vld [vmem:[%s808 + $0x4] sm:$0xf]
      %v811 = vld [vmem:[%s808 + $0x8] sm:$0xf]
      %v813 = vunpack.c.l.b16 %v807
      %v814 = vpack.c.b16 %v813, %v667
      %v818 = vunpack.c.l.b16 %v809
      %v819 = vunpack.c.l.b16 %v810
      %v820 = vunpack.c.l.b16 %v811
      %v821 = vpack.c.b16 %v819, %v818
      %v822 = vpack.c.b16 %v820, %v820
      %v825 = vsel %vm681, %v814, 0
      %v828 = vsel %vm694, %v822, 0
      %830 = vmatpush.bf16.msra.mxu0 0
      %831 = vmatpush.bf16.msra.mxu0 0
      %832 = vmatpush.bf16.msra.mxu0 0
      %833 = vmatpush.bf16.msra.mxu0 0
      %834 = vmatpush.bf16.msra.mxu0 0
      %835 = vmatpush.bf16.msra.mxu0 0
      %836 = vmatpush.bf16.msra.mxu0 %v828
      %837 = vmatpush.bf16.msra.mxu0 %v821
      %838 = vmatmul.bf16.gmra.mxu0 %v746
      %v839 = vpop.f32.mrf.mxu0
      %v840 = vadd.f32 0.0, %v839
      %v841 = vpop.f32.mrf.mxu0
      %v842 = vadd.f32 0.0, %v841
      %843 = vmatmul.bf16.gmra.mxu0 %v749
      %v844 = vpop.f32.mrf.mxu0
      %v845 = vadd.f32 0.0, %v844
      %v846 = vpop.f32.mrf.mxu0
      %v847 = vadd.f32 0.0, %v846
      %848 = vmatmul.bf16.gmra.mxu0 %v752
      %v849 = vpop.f32.mrf.mxu0
      %v850 = vadd.f32 0.0, %v849
      %v851 = vpop.f32.mrf.mxu0
      %v852 = vadd.f32 0.0, %v851
      %853 = vmatmul.bf16.gmra.mxu0 %v825
      %v854 = vpop.f32.mrf.mxu0
      %v855 = vadd.f32 0.0, %v854
      %v856 = vpop.f32.mrf.mxu0
      %v857 = vadd.f32 0.0, %v856
      %858 = vdwg.mxu0
      %v859 = vadd.f32 %v767, %v840
      %v860 = vadd.f32 %v769, %v842
      %v861 = vadd.f32 %v772, %v845
      %v862 = vadd.f32 %v774, %v847
      %v863 = vadd.f32 %v777, %v850
      %v864 = vadd.f32 %v779, %v852
      %v865 = vadd.f32 %v782, %v855
      %v866 = vadd.f32 %v784, %v857
      %v867 = vld [vmem:[%s2] sm:$0x1]
      %v869 = vperm.slane %v867, 0
      %v871 = vadd.f32 %v859, %v869
      %v872 = vadd.f32 %v860, %v869
      %v873 = vadd.f32 %v861, %v869
      %v874 = vadd.f32 %v862, %v869
      %v875 = vadd.f32 %v863, %v869
      %v876 = vadd.f32 %v864, %v869
      %v877 = vadd.f32 %v865, %v869
      %v878 = vadd.f32 %v866, %v869
      %v879 = vmax.f32 %v871, 0.0
      %v880 = vmax.f32 %v872, 0.0
      %v881 = vmax.f32 %v873, 0.0
      %v882 = vmax.f32 %v874, 0.0
      %v883 = vmax.f32 %v875, 0.0
      %v884 = vmax.f32 %v876, 0.0
      %v885 = vmax.f32 %v877, 0.0
      %v886 = vmax.f32 %v878, 0.0
      %vm887 = vcmask 125952
      %888 = vst.msk [vmem:[#allocation3] sm:$0xf] %vm887, 0
      %vm889 = vcmask 122880
      %890 = vst.msk [vmem:[#allocation3 + $0x4] sm:$0x1] %vm889, 0
      %s891 = scalar_lea.vmem [#allocation3], 72
      %892 = vst.msk [vmem:[%s891] sm:$0xf] %vm887, 0
      %893 = vst.msk [vmem:[%s891 + $0x4] sm:$0x1] %vm889, 0
      %s894 = scalar_lea.vmem [#allocation3], 8
      %vm895 = vcmask 122880
      %vm896 = vmand %vm895, %vm243
      %v897 = vld [vmem:[%s894] sm:$0x1]
      %v898 = vsel %vm896, 0, %v897
      %899 = vst [vmem:[%s894] sm:$0x1] %v898
      %v900 = vld [vmem:[%s894 + $0x8] sm:$0x1]
      %v901 = vsel %vm896, 0, %v900
      %902 = vst [vmem:[%s894 + $0x8] sm:$0x1] %v901
      %v903 = vld [vmem:[%s894 + $0x10] sm:$0x1]
      %v904 = vsel %vm896, 0, %v903
      %905 = vst [vmem:[%s894 + $0x10] sm:$0x1] %v904
      %v906 = vld [vmem:[%s894 + $0x18] sm:$0x1]
      %v907 = vsel %vm896, 0, %v906
      %908 = vst [vmem:[%s894 + $0x18] sm:$0x1] %v907
      %v909 = vld [vmem:[%s894 + $0x20] sm:$0x1]
      %v910 = vsel %vm896, 0, %v909
      %911 = vst [vmem:[%s894 + $0x20] sm:$0x1] %v910
      %v912 = vld [vmem:[%s894 + $0x28] sm:$0x1]
      %v913 = vsel %vm896, 0, %v912
      %914 = vst [vmem:[%s894 + $0x28] sm:$0x1] %v913
      %v915 = vld [vmem:[%s894 + $0x30] sm:$0x1]
      %v916 = vsel %vm896, 0, %v915
      %917 = vst [vmem:[%s894 + $0x30] sm:$0x1] %v916
      %v918 = vld [vmem:[%s894 + $0x38] sm:$0x1]
      %v919 = vsel %vm896, 0, %v918
      %920 = vst [vmem:[%s894 + $0x38] sm:$0x1] %v919
      %vm921 = vmand %vm895, %vm269
      %v922 = vld [vmem:[%s894 + $0x4] sm:$0x1]
      %v923 = vsel %vm921, 0, %v922
      %924 = vst [vmem:[%s894 + $0x4] sm:$0x1] %v923
      %v925 = vld [vmem:[%s894 + $0xc] sm:$0x1]
      %v926 = vsel %vm921, 0, %v925
      %927 = vst [vmem:[%s894 + $0xc] sm:$0x1] %v926
      %v928 = vld [vmem:[%s894 + $0x14] sm:$0x1]
      %v929 = vsel %vm921, 0, %v928
      %930 = vst [vmem:[%s894 + $0x14] sm:$0x1] %v929
      %v931 = vld [vmem:[%s894 + $0x1c] sm:$0x1]
      %v932 = vsel %vm921, 0, %v931
      %933 = vst [vmem:[%s894 + $0x1c] sm:$0x1] %v932
      %v934 = vld [vmem:[%s894 + $0x24] sm:$0x1]
      %v935 = vsel %vm921, 0, %v934
      %936 = vst [vmem:[%s894 + $0x24] sm:$0x1] %v935
      %v937 = vld [vmem:[%s894 + $0x2c] sm:$0x1]
      %v938 = vsel %vm921, 0, %v937
      %939 = vst [vmem:[%s894 + $0x2c] sm:$0x1] %v938
      %v940 = vld [vmem:[%s894 + $0x34] sm:$0x1]
      %v941 = vsel %vm921, 0, %v940
      %942 = vst [vmem:[%s894 + $0x34] sm:$0x1] %v941
      %v943 = vld [vmem:[%s894 + $0x3c] sm:$0x1]
      %v944 = vsel %vm921, 0, %v943
      %945 = vst [vmem:[%s894 + $0x3c] sm:$0x1] %v944
      %v946 = vpack.c.bf16 %v879, %v879
      %v947 = vpack.c.bf16 %v880, %v880
      %v948 = vpack.c.bf16 %v881, %v881
      %v949 = vpack.c.bf16 %v882, %v882
      %v950 = vpack.c.bf16 %v883, %v883
      %v951 = vpack.c.bf16 %v884, %v884
      %v952 = vpack.c.bf16 %v885, %v885
      %v953 = vpack.c.bf16 %v886, %v886
      %v955 = vshrl.u32 %v946, 16
      %v957 = vrot.slane %v955, 7
      %v958 = vshll.u32 %v946, 16
      %v960 = vor.u32 %v957, %v958
      %v961 = vrot.slane %v957, 4
      %v963 = vshrl.u32 %v947, 16
      %v965 = vrot.slane %v963, 7
      %v966 = vshll.u32 %v947, 16
      %v968 = vor.u32 %v965, %v966
      %v969 = vrot.slane %v965, 4
      %v971 = vshrl.u32 %v948, 16
      %v973 = vrot.slane %v971, 7
      %v974 = vshll.u32 %v948, 16
      %v976 = vor.u32 %v973, %v974
      %v977 = vrot.slane %v973, 4
      %v979 = vshrl.u32 %v949, 16
      %v981 = vrot.slane %v979, 7
      %v982 = vshll.u32 %v949, 16
      %v984 = vor.u32 %v981, %v982
      %v985 = vrot.slane %v981, 4
      %v987 = vshrl.u32 %v950, 16
      %v989 = vrot.slane %v987, 7
      %v990 = vshll.u32 %v950, 16
      %v992 = vor.u32 %v989, %v990
      %v993 = vrot.slane %v989, 4
      %v995 = vshrl.u32 %v951, 16
      %v997 = vrot.slane %v995, 7
      %v998 = vshll.u32 %v951, 16
      %v1000 = vor.u32 %v997, %v998
      %v1001 = vrot.slane %v997, 4
      %v1003 = vshrl.u32 %v952, 16
      %v1005 = vrot.slane %v1003, 7
      %v1006 = vshll.u32 %v952, 16
      %v1008 = vor.u32 %v1005, %v1006
      %v1009 = vrot.slane %v1005, 4
      %v1011 = vshrl.u32 %v953, 16
      %v1013 = vrot.slane %v1011, 7
      %v1014 = vshll.u32 %v953, 16
      %v1016 = vor.u32 %v1013, %v1014
      %v1017 = vrot.slane %v1013, 4
      %vm1034 = vcmask 125952
      %vm1035 = vmand %vm1034, %vm269
      %v1036 = vld [vmem:[%s894] sm:$0xf]
      %v1037 = vsel %vm1035, %v960, %v1036
      %1038 = vst [vmem:[%s894] sm:$0xf] %v1037
      %v1039 = vld [vmem:[%s894 + $0x4] sm:$0x1]
      %v1040 = vsel %vm896, %v961, %v1039
      %1041 = vst [vmem:[%s894 + $0x4] sm:$0x1] %v1040
      %v1042 = vld [vmem:[%s894 + $0x8] sm:$0xf]
      %v1043 = vsel %vm1035, %v968, %v1042
      %1044 = vst [vmem:[%s894 + $0x8] sm:$0xf] %v1043
      %v1045 = vld [vmem:[%s894 + $0xc] sm:$0x1]
      %v1046 = vsel %vm896, %v969, %v1045
      %1047 = vst [vmem:[%s894 + $0xc] sm:$0x1] %v1046
      %v1048 = vld [vmem:[%s894 + $0x10] sm:$0xf]
      %v1049 = vsel %vm1035, %v976, %v1048
      %1050 = vst [vmem:[%s894 + $0x10] sm:$0xf] %v1049
      %v1051 = vld [vmem:[%s894 + $0x14] sm:$0x1]
      %v1052 = vsel %vm896, %v977, %v1051
      %1053 = vst [vmem:[%s894 + $0x14] sm:$0x1] %v1052
      %v1054 = vld [vmem:[%s894 + $0x18] sm:$0xf]
      %v1055 = vsel %vm1035, %v984, %v1054
      %1056 = vst [vmem:[%s894 + $0x18] sm:$0xf] %v1055
      %v1057 = vld [vmem:[%s894 + $0x1c] sm:$0x1]
      %v1058 = vsel %vm896, %v985, %v1057
      %1059 = vst [vmem:[%s894 + $0x1c] sm:$0x1] %v1058
      %v1060 = vld [vmem:[%s894 + $0x20] sm:$0xf]
      %v1061 = vsel %vm1035, %v992, %v1060
      %1062 = vst [vmem:[%s894 + $0x20] sm:$0xf] %v1061
      %v1063 = vld [vmem:[%s894 + $0x24] sm:$0x1]
      %v1064 = vsel %vm896, %v993, %v1063
      %1065 = vst [vmem:[%s894 + $0x24] sm:$0x1] %v1064
      %v1066 = vld [vmem:[%s894 + $0x28] sm:$0xf]
      %v1067 = vsel %vm1035, %v1000, %v1066
      %1068 = vst [vmem:[%s894 + $0x28] sm:$0xf] %v1067
      %v1069 = vld [vmem:[%s894 + $0x2c] sm:$0x1]
      %v1070 = vsel %vm896, %v1001, %v1069
      %1071 = vst [vmem:[%s894 + $0x2c] sm:$0x1] %v1070
      %v1072 = vld [vmem:[%s894 + $0x30] sm:$0xf]
      %v1073 = vsel %vm1035, %v1008, %v1072
      %1074 = vst [vmem:[%s894 + $0x30] sm:$0xf] %v1073
      %v1075 = vld [vmem:[%s894 + $0x34] sm:$0x1]
      %v1076 = vsel %vm896, %v1009, %v1075
      %1077 = vst [vmem:[%s894 + $0x34] sm:$0x1] %v1076
      %v1078 = vld [vmem:[%s894 + $0x38] sm:$0xf]
      %v1079 = vsel %vm1035, %v1016, %v1078
      %1080 = vst [vmem:[%s894 + $0x38] sm:$0xf] %v1079
      %v1081 = vld [vmem:[%s894 + $0x3c] sm:$0x1]
      %v1082 = vsel %vm896, %v1017, %v1081
      %1083 = vst [vmem:[%s894 + $0x3c] sm:$0x1] %v1082
      %v1084 = vld [vmem:[#allocation3] sm:$0xf]
      %v1085 = vld [vmem:[#allocation3 + $0x4] sm:$0x1]
      %v1086 = vld [vmem:[#allocation3 + $0x8] sm:$0xf]
      %v1087 = vld [vmem:[#allocation3 + $0xc] sm:$0x1]
      %v1088 = vld [vmem:[#allocation3 + $0x10] sm:$0xf]
      %v1089 = vld [vmem:[#allocation3 + $0x14] sm:$0x1]
      %v1090 = vld [vmem:[#allocation3 + $0x18] sm:$0xf]
      %v1091 = vld [vmem:[#allocation3 + $0x1c] sm:$0x1]
      %v1092 = vld [vmem:[#allocation3 + $0x20] sm:$0xf]
      %v1093 = vld [vmem:[#allocation3 + $0x24] sm:$0x1]
      %v1094 = vld [vmem:[#allocation3 + $0x28] sm:$0xf]
      %v1095 = vld [vmem:[#allocation3 + $0x2c] sm:$0x1]
      %v1096 = vld [vmem:[#allocation3 + $0x30] sm:$0xf]
      %v1097 = vld [vmem:[#allocation3 + $0x34] sm:$0x1]
      %v1098 = vld [vmem:[#allocation3 + $0x38] sm:$0xf]
      %v1099 = vld [vmem:[#allocation3 + $0x3c] sm:$0x1]
      %v1100 = vld [vmem:[#allocation3 + $0x40] sm:$0xf]
      %v1101 = vld [vmem:[#allocation3 + $0x44] sm:$0x1]
      %v1102 = vld [vmem:[#allocation3 + $0x48] sm:$0xf]
      %v1103 = vld [vmem:[#allocation3 + $0x4c] sm:$0x1]
      %v1120 = vunpack.c.l.b16 %v1084
      %v1121 = vunpack.c.l.b16 %v1085
      %v1122 = vunpack.c.l.b16 %v1086
      %v1123 = vunpack.c.l.b16 %v1087
      %v1124 = vunpack.c.l.b16 %v1088
      %v1125 = vunpack.c.l.b16 %v1089
      %v1126 = vunpack.c.l.b16 %v1090
      %v1127 = vunpack.c.l.b16 %v1091
      %v1128 = vunpack.c.l.b16 %v1092
      %v1129 = vunpack.c.l.b16 %v1093
      %v1130 = vunpack.c.l.b16 %v1094
      %v1131 = vunpack.c.l.b16 %v1095
      %v1132 = vunpack.c.l.b16 %v1096
      %v1133 = vunpack.c.l.b16 %v1097
      %v1134 = vunpack.c.l.b16 %v1098
      %v1135 = vunpack.c.l.b16 %v1099
      %v1136 = vpack.c.b16 %v1121, %v1120
      %v1137 = vpack.c.b16 %v1123, %v1122
      %v1138 = vpack.c.b16 %v1125, %v1124
      %v1139 = vpack.c.b16 %v1127, %v1126
      %v1140 = vpack.c.b16 %v1129, %v1128
      %v1141 = vpack.c.b16 %v1131, %v1130
      %v1142 = vpack.c.b16 %v1133, %v1132
      %v1143 = vpack.c.b16 %v1135, %v1134
      %v1145 = vshrl.u32 %v1136, 16
      %v1147 = vshll.u32 %v1136, 16
      %v1149 = vrot.slane %v1147, 1
      %v1150 = vor.u32 %v1145, %v1149
      %v1152 = vshrl.u32 %v1137, 16
      %v1154 = vshll.u32 %v1137, 16
      %v1156 = vrot.slane %v1154, 1
      %v1157 = vor.u32 %v1152, %v1156
      %v1159 = vshrl.u32 %v1138, 16
      %v1161 = vshll.u32 %v1138, 16
      %v1163 = vrot.slane %v1161, 1
      %v1164 = vor.u32 %v1159, %v1163
      %v1166 = vshrl.u32 %v1139, 16
      %v1168 = vshll.u32 %v1139, 16
      %v1170 = vrot.slane %v1168, 1
      %v1171 = vor.u32 %v1166, %v1170
      %v1173 = vshrl.u32 %v1140, 16
      %v1175 = vshll.u32 %v1140, 16
      %v1177 = vrot.slane %v1175, 1
      %v1178 = vor.u32 %v1173, %v1177
      %v1180 = vshrl.u32 %v1141, 16
      %v1182 = vshll.u32 %v1141, 16
      %v1184 = vrot.slane %v1182, 1
      %v1185 = vor.u32 %v1180, %v1184
      %v1187 = vshrl.u32 %v1142, 16
      %v1189 = vshll.u32 %v1142, 16
      %v1191 = vrot.slane %v1189, 1
      %v1192 = vor.u32 %v1187, %v1191
      %v1194 = vshrl.u32 %v1143, 16
      %v1196 = vshll.u32 %v1143, 16
      %v1198 = vrot.slane %v1196, 1
      %v1199 = vor.u32 %v1194, %v1198
      %1200 = vrot.lane.b32.xlu0 %v1150, 16
      %v1201 = vpop.permute.xlu0 %1200
      %1202 = vrot.lane.b32.xlu0 %v1157, 16
      %v1203 = vpop.permute.xlu0 %1202
      %1204 = vrot.lane.b32.xlu0 %v1164, 16
      %v1205 = vpop.permute.xlu0 %1204
      %1206 = vrot.lane.b32.xlu0 %v1171, 16
      %v1207 = vpop.permute.xlu0 %1206
      %1208 = vrot.lane.b32.xlu0 %v1178, 16
      %v1209 = vpop.permute.xlu0 %1208
      %1210 = vrot.lane.b32.xlu0 %v1185, 16
      %v1211 = vpop.permute.xlu0 %1210
      %1212 = vrot.lane.b32.xlu0 %v1192, 16
      %v1213 = vpop.permute.xlu0 %1212
      %1214 = vrot.lane.b32.xlu0 %v1199, 16
      %v1215 = vpop.permute.xlu0 %1214
      %v1216 = vrot.slane %v1136, 1
      %v1217 = vrot.slane %v1137, 1
      %v1218 = vrot.slane %v1138, 1
      %v1219 = vrot.slane %v1139, 1
      %v1220 = vrot.slane %v1140, 1
      %v1221 = vrot.slane %v1141, 1
      %v1222 = vrot.slane %v1142, 1
      %v1223 = vrot.slane %v1143, 1
      %1224 = vrot.lane.b32.xlu0 %v1216, 32
      %v1225 = vpop.permute.xlu0 %1224
      %1226 = vrot.lane.b32.xlu0 %v1217, 32
      %v1227 = vpop.permute.xlu0 %1226
      %1228 = vrot.lane.b32.xlu0 %v1218, 32
      %v1229 = vpop.permute.xlu0 %1228
      %1230 = vrot.lane.b32.xlu0 %v1219, 32
      %v1231 = vpop.permute.xlu0 %1230
      %1232 = vrot.lane.b32.xlu0 %v1220, 32
      %v1233 = vpop.permute.xlu0 %1232
      %1234 = vrot.lane.b32.xlu0 %v1221, 32
      %v1235 = vpop.permute.xlu0 %1234
      %1236 = vrot.lane.b32.xlu0 %v1222, 32
      %v1237 = vpop.permute.xlu0 %1236
      %1238 = vrot.lane.b32.xlu0 %v1223, 32
      %v1239 = vpop.permute.xlu0 %1238
      %v1242 = vsel %vm606, %v1084, %v1201
      %v1245 = vsel %vm606, %v1086, %v1203
      %v1248 = vsel %vm606, %v1088, %v1205
      %v1251 = vsel %vm606, %v1090, %v1207
      %v1254 = vsel %vm606, %v1092, %v1209
      %v1257 = vsel %vm606, %v1094, %v1211
      %v1260 = vsel %vm606, %v1096, %v1213
      %v1263 = vsel %vm606, %v1098, %v1215
      %vm1264 = vcmask 261120
      %v1266 = vsel %vm1264, %v1242, %v1225
      %v1268 = vsel %vm1264, %v1245, %v1227
      %v1270 = vsel %vm1264, %v1248, %v1229
      %v1272 = vsel %vm1264, %v1251, %v1231
      %v1274 = vsel %vm1264, %v1254, %v1233
      %v1276 = vsel %vm1264, %v1257, %v1235
      %v1278 = vsel %vm1264, %v1260, %v1237
      %v1280 = vsel %vm1264, %v1263, %v1239
      %v1281 = vld [vmem:[%s3] sm:$0xf]
      %v1282 = vld [vmem:[%s3 + $0x4] sm:$0xf]
      %v1283 = vld [vmem:[%s3 + $0x8] sm:$0xf]
      %v1284 = vld [vmem:[%s3 + $0xc] sm:$0xf]
      %v1285 = vld [vmem:[%s3 + $0x10] sm:$0xf]
      %v1286 = vld [vmem:[%s3 + $0x14] sm:$0xf]
      %v1289 = vunpack.c.l.b16 %v1100
      %v1290 = vunpack.c.l.b16 %v1101
      %v1291 = vpack.c.b16 %v1290, %v1289
      %v1293 = vshrl.u32 %v1291, 16
      %v1295 = vshll.u32 %v1291, 16
      %v1297 = vrot.slane %v1295, 1
      %v1298 = vor.u32 %v1293, %v1297
      %1299 = vrot.lane.b32.xlu0 %v1298, 16
      %v1300 = vpop.permute.xlu0 %1299
      %v1301 = vrot.slane %v1291, 1
      %1302 = vrot.lane.b32.xlu0 %v1301, 32
      %v1303 = vpop.permute.xlu0 %1302
      %v1306 = vsel %vm606, %v1100, %v1300
      %v1308 = vsel %vm1264, %v1306, %v1303
      %s1309 = scalar_lea.vmem %s3, 24
      %v1310 = vld [vmem:[%s1309] sm:$0xf]
      %v1311 = vld [vmem:[%s1309 + $0x4] sm:$0xf]
      %v1312 = vld [vmem:[%s1309 + $0x8] sm:$0xf]
      %v1313 = vld [vmem:[%s1309 + $0xc] sm:$0xf]
      %v1314 = vld [vmem:[%s1309 + $0x10] sm:$0xf]
      %v1315 = vld [vmem:[%s1309 + $0x14] sm:$0xf]
      %v1324 = vunpack.c.l.b16 %v1268
      %v1325 = vunpack.c.l.b16 %v1270
      %v1326 = vunpack.c.l.b16 %v1272
      %v1327 = vunpack.c.l.b16 %v1274
      %v1328 = vunpack.c.l.b16 %v1276
      %v1329 = vunpack.c.l.b16 %v1278
      %v1330 = vunpack.c.l.b16 %v1280
      %v1331 = vunpack.c.l.b16 %v1308
      %v1332 = vpack.c.b16 %v1325, %v1324
      %v1333 = vpack.c.b16 %v1327, %v1326
      %v1334 = vpack.c.b16 %v1329, %v1328
      %v1335 = vpack.c.b16 %v1331, %v1330
      %v1342 = vunpack.c.l.b16 %v1310
      %v1343 = vunpack.c.l.b16 %v1311
      %v1344 = vunpack.c.l.b16 %v1312
      %v1345 = vunpack.c.l.b16 %v1313
      %v1346 = vunpack.c.l.b16 %v1314
      %v1347 = vunpack.c.l.b16 %v1315
      %v1348 = vpack.c.b16 %v1343, %v1342
      %v1349 = vpack.c.b16 %v1345, %v1344
      %v1350 = vpack.c.b16 %v1347, %v1346
      %vm1354 = vcmask 392192
      %v1356 = vsel %vm1354, %v1332, 0
      %v1359 = vsel %vm1354, %v1333, 0
      %v1362 = vsel %vm1354, %v1334, 0
      %v1365 = vsel %vm1354, %v1335, 0
      %1367 = vmatpush.bf16.msra.mxu0 0
      %1368 = vmatpush.bf16.msra.mxu0 0
      %1369 = vmatpush.bf16.msra.mxu0 0
      %1370 = vmatpush.bf16.msra.mxu0 0
      %1371 = vmatpush.bf16.msra.mxu0 0
      %1372 = vmatpush.bf16.msra.mxu0 %v1350
      %1373 = vmatpush.bf16.msra.mxu0 %v1349
      %1374 = vmatpush.bf16.msra.mxu0 %v1348
      %1375 = vmatmul.bf16.gmra.mxu0 %v1356
      %v1376 = vpop.f32.mrf.mxu0
      %v1377 = vadd.f32 0.0, %v1376
      %v1378 = vpop.f32.mrf.mxu0
      %v1379 = vadd.f32 0.0, %v1378
      %1380 = vmatmul.bf16.gmra.mxu0 %v1359
      %v1381 = vpop.f32.mrf.mxu0
      %v1382 = vadd.f32 0.0, %v1381
      %v1383 = vpop.f32.mrf.mxu0
      %v1384 = vadd.f32 0.0, %v1383
      %1385 = vmatmul.bf16.gmra.mxu0 %v1362
      %v1386 = vpop.f32.mrf.mxu0
      %v1387 = vadd.f32 0.0, %v1386
      %v1388 = vpop.f32.mrf.mxu0
      %v1389 = vadd.f32 0.0, %v1388
      %1390 = vmatmul.bf16.gmra.mxu0 %v1365
      %v1391 = vpop.f32.mrf.mxu0
      %v1392 = vadd.f32 0.0, %v1391
      %v1393 = vpop.f32.mrf.mxu0
      %v1394 = vadd.f32 0.0, %v1393
      %1395 = vdwg.mxu0
      %v1397 = vunpack.c.l.b16 %v1266
      %v1398 = vpack.c.b16 %v1324, %v1397
      %v1399 = vpack.c.b16 %v1326, %v1325
      %v1400 = vpack.c.b16 %v1328, %v1327
      %v1401 = vpack.c.b16 %v1330, %v1329
      %v1408 = vunpack.c.l.b16 %v1281
      %v1409 = vunpack.c.l.b16 %v1282
      %v1410 = vunpack.c.l.b16 %v1283
      %v1411 = vunpack.c.l.b16 %v1284
      %v1412 = vunpack.c.l.b16 %v1285
      %v1413 = vunpack.c.l.b16 %v1286
      %v1414 = vpack.c.b16 %v1409, %v1408
      %v1415 = vpack.c.b16 %v1411, %v1410
      %v1416 = vpack.c.b16 %v1413, %v1412
      %v1421 = vsel %vm1354, %v1398, 0
      %v1424 = vsel %vm1354, %v1399, 0
      %v1427 = vsel %vm1354, %v1400, 0
      %v1430 = vsel %vm1354, %v1401, 0
      %1432 = vmatpush.bf16.msra.mxu0 0
      %1433 = vmatpush.bf16.msra.mxu0 0
      %1434 = vmatpush.bf16.msra.mxu0 0
      %1435 = vmatpush.bf16.msra.mxu0 0
      %1436 = vmatpush.bf16.msra.mxu0 0
      %1437 = vmatpush.bf16.msra.mxu0 %v1416
      %1438 = vmatpush.bf16.msra.mxu0 %v1415
      %1439 = vmatpush.bf16.msra.mxu0 %v1414
      %1440 = vmatmul.bf16.gmra.mxu0 %v1421
      %v1441 = vpop.f32.mrf.mxu0
      %v1442 = vadd.f32 %v1377, %v1441
      %v1443 = vpop.f32.mrf.mxu0
      %v1444 = vadd.f32 %v1379, %v1443
      %1445 = vmatmul.bf16.gmra.mxu0 %v1424
      %v1446 = vpop.f32.mrf.mxu0
      %v1447 = vadd.f32 %v1382, %v1446
      %v1448 = vpop.f32.mrf.mxu0
      %v1449 = vadd.f32 %v1384, %v1448
      %1450 = vmatmul.bf16.gmra.mxu0 %v1427
      %v1451 = vpop.f32.mrf.mxu0
      %v1452 = vadd.f32 %v1387, %v1451
      %v1453 = vpop.f32.mrf.mxu0
      %v1454 = vadd.f32 %v1389, %v1453
      %1455 = vmatmul.bf16.gmra.mxu0 %v1430
      %v1456 = vpop.f32.mrf.mxu0
      %v1457 = vadd.f32 %v1392, %v1456
      %v1458 = vpop.f32.mrf.mxu0
      %v1459 = vadd.f32 %v1394, %v1458
      %1460 = vdwg.mxu0
      %v1463 = vunpack.c.l.b16 %v1102
      %v1464 = vunpack.c.l.b16 %v1103
      %v1465 = vpack.c.b16 %v1464, %v1463
      %v1467 = vshrl.u32 %v1465, 16
      %v1469 = vshll.u32 %v1465, 16
      %v1471 = vrot.slane %v1469, 1
      %v1472 = vor.u32 %v1467, %v1471
      %1473 = vrot.lane.b32.xlu0 %v1472, 16
      %v1474 = vpop.permute.xlu0 %1473
      %v1475 = vrot.slane %v1465, 1
      %1476 = vrot.lane.b32.xlu0 %v1475, 32
      %v1477 = vpop.permute.xlu0 %1476
      %v1480 = vsel %vm606, %v1102, %v1474
      %v1482 = vsel %vm1264, %v1480, %v1477
      %s1483 = scalar_lea.vmem %s3, 48
      %v1484 = vld [vmem:[%s1483] sm:$0xf]
      %v1485 = vld [vmem:[%s1483 + $0x4] sm:$0xf]
      %v1486 = vld [vmem:[%s1483 + $0x8] sm:$0xf]
      %v1487 = vld [vmem:[%s1483 + $0xc] sm:$0xf]
      %v1488 = vld [vmem:[%s1483 + $0x10] sm:$0xf]
      %v1489 = vld [vmem:[%s1483 + $0x14] sm:$0xf]
      %v1491 = vunpack.c.l.b16 %v1482
      %v1492 = vpack.c.b16 %v1491, %v1331
      %v1499 = vunpack.c.l.b16 %v1484
      %v1500 = vunpack.c.l.b16 %v1485
      %v1501 = vunpack.c.l.b16 %v1486
      %v1502 = vunpack.c.l.b16 %v1487
      %v1503 = vunpack.c.l.b16 %v1488
      %v1504 = vunpack.c.l.b16 %v1489
      %v1505 = vpack.c.b16 %v1500, %v1499
      %v1506 = vpack.c.b16 %v1502, %v1501
      %v1507 = vpack.c.b16 %v1504, %v1503
      %v1512 = vsel %vm1354, %v1492, 0
      %1514 = vmatpush.bf16.msra.mxu0 0
      %1515 = vmatpush.bf16.msra.mxu0 0
      %1516 = vmatpush.bf16.msra.mxu0 0
      %1517 = vmatpush.bf16.msra.mxu0 0
      %1518 = vmatpush.bf16.msra.mxu0 0
      %1519 = vmatpush.bf16.msra.mxu0 %v1507
      %1520 = vmatpush.bf16.msra.mxu0 %v1506
      %1521 = vmatpush.bf16.msra.mxu0 %v1505
      %1522 = vmatmul.bf16.gmra.mxu0 %v1424
      %v1523 = vpop.f32.mrf.mxu0
      %v1524 = vadd.f32 0.0, %v1523
      %v1525 = vpop.f32.mrf.mxu0
      %v1526 = vadd.f32 0.0, %v1525
      %1527 = vmatmul.bf16.gmra.mxu0 %v1427
      %v1528 = vpop.f32.mrf.mxu0
      %v1529 = vadd.f32 0.0, %v1528
      %v1530 = vpop.f32.mrf.mxu0
      %v1531 = vadd.f32 0.0, %v1530
      %1532 = vmatmul.bf16.gmra.mxu0 %v1430
      %v1533 = vpop.f32.mrf.mxu0
      %v1534 = vadd.f32 0.0, %v1533
      %v1535 = vpop.f32.mrf.mxu0
      %v1536 = vadd.f32 0.0, %v1535
      %1537 = vmatmul.bf16.gmra.mxu0 %v1512
      %v1538 = vpop.f32.mrf.mxu0
      %v1539 = vadd.f32 0.0, %v1538
      %v1540 = vpop.f32.mrf.mxu0
      %v1541 = vadd.f32 0.0, %v1540
      %1542 = vdwg.mxu0
      %v1543 = vadd.f32 %v1442, %v1524
      %v1544 = vadd.f32 %v1444, %v1526
      %v1545 = vadd.f32 %v1447, %v1529
      %v1546 = vadd.f32 %v1449, %v1531
      %v1547 = vadd.f32 %v1452, %v1534
      %v1548 = vadd.f32 %v1454, %v1536
      %v1549 = vadd.f32 %v1457, %v1539
      %v1550 = vadd.f32 %v1459, %v1541
      %v1551 = vld [vmem:[%s4] sm:$0x1]
      %v1553 = vperm.slane %v1551, 0
      %v1555 = vadd.f32 %v1543, %v1553
      %v1556 = vadd.f32 %v1544, %v1553
      %v1557 = vadd.f32 %v1545, %v1553
      %v1558 = vadd.f32 %v1546, %v1553
      %v1559 = vadd.f32 %v1547, %v1553
      %v1560 = vadd.f32 %v1548, %v1553
      %v1561 = vadd.f32 %v1549, %v1553
      %v1562 = vadd.f32 %v1550, %v1553
      %v1563 = vmax.f32 %v1555, 0.0
      %v1564 = vmax.f32 %v1556, 0.0
      %v1565 = vmax.f32 %v1557, 0.0
      %v1566 = vmax.f32 %v1558, 0.0
      %v1567 = vmax.f32 %v1559, 0.0
      %v1568 = vmax.f32 %v1560, 0.0
      %v1569 = vmax.f32 %v1561, 0.0
      %v1570 = vmax.f32 %v1562, 0.0
      %v1571 = vpack.c.bf16 %v1563, %v1563
      %v1572 = vpack.c.bf16 %v1564, %v1564
      %v1573 = vpack.c.bf16 %v1565, %v1565
      %v1574 = vpack.c.bf16 %v1566, %v1566
      %v1575 = vpack.c.bf16 %v1567, %v1567
      %v1576 = vpack.c.bf16 %v1568, %v1568
      %v1577 = vpack.c.bf16 %v1569, %v1569
      %v1578 = vpack.c.bf16 %v1570, %v1570
      %1579 = vst.msk [vmem:[%s224] sm:$0xf] %vm887, %v1571
      %1580 = vst.msk [vmem:[%s224 + $0x4] sm:$0xf] %vm887, %v1572
      %1581 = vst.msk [vmem:[%s224 + $0x8] sm:$0xf] %vm887, %v1573
      %1582 = vst.msk [vmem:[%s224 + $0xc] sm:$0xf] %vm887, %v1574
      %1583 = vst.msk [vmem:[%s224 + $0x10] sm:$0xf] %vm887, %v1575
      %1584 = vst.msk [vmem:[%s224 + $0x14] sm:$0xf] %vm887, %v1576
      %1585 = vst.msk [vmem:[%s224 + $0x18] sm:$0xf] %vm887, %v1577
      %1586 = vst.msk [vmem:[%s224 + $0x1c] sm:$0xf] %vm887, %v1578
      %p1587 = scmp.lt.s32.totalorder %s16, 1
      %s1588 = scalar_select %p1587, %s16, 1
      %s1589 = smul.addr %s1588, 8
      %s1590 = smul.addr %s1589, 4
      %s1591 = scalar_lea.vmem %s5, %s1590
      // Predicated region
      $region41: #{score_residue_forward.5} parent=39 // pred_check
        %p1592 = pneg %p144
      $region42: #{score_residue_forward.5} parent=39 // pred_check_branch
        %1594 = sbr.rel (%p1592) target = $region44
      $region43: #{score_residue_forward.5} parent=39 // pred_region
        _
      $region44: #{score_residue_forward.5} parent=39 // pred_fallthru
        _
    $region40: #{score_residue_forward.5} parent=5 // pred_fallthru
      _
    %p1595 = scmp.le.s32.totalorder 2, %s11
    // Predicated region
    $region45: #{score_residue_forward.5} parent=5 // pred_check
      %p1596 = pneg %p1595
    $region46: #{score_residue_forward.5} parent=5 // pred_check_branch
      %1598 = sbr.rel (%p1596) target = $region48
    $region47: #{score_residue_forward.5} parent=5 // pred_region
      %s1599 = ssub.s32 %s11, 2
      // Predicated region
      $region49: #{score_residue_forward.5} parent=47 // pred_check
        %p1600 = pneg %p150
      $region50: #{score_residue_forward.5} parent=47 // pred_check_branch
        %1602 = sbr.rel (%p1600) target = $region52
      $region51: #{score_residue_forward.5} parent=47 // pred_region
        %p1603 = scmp.lt.s32.totalorder %s17, 1
        %s1604 = scalar_select %p1603, %s17, 1
        %s1605 = smul.addr %s1604, 8
        %s1606 = smul.addr %s1605, 4
        %s1607 = scalar_lea.vmem %s5, %s1606
      $region52: #{score_residue_forward.5} parent=47 // pred_fallthru
        _
    $region48: #{score_residue_forward.5} parent=5 // pred_fallthru
      _
  $region6: #{score_residue_forward.5} parent=0 // loop_footer
    %s15 = sadd.s32 1, %s11
  $region7: #{score_residue_forward.5} parent=0 // loop_footer_branch
    %10 = sbr.rel target = $region3
  $region8: #{score_residue_forward.5} parent=0 // loop_exit
    _

// kernel: score_residue_forward.4
$region0: #{score_residue_forward.4}
  #allocation0 [shape = 'u32[]', space=smem, size = 0x4, offset = 0x4, fixed_abs, tag = 'smem constant byte address 0x4 - core index']
  #allocation1 [shape = 'u32[72,128]{1,0:T(1,128)}', space=vmem, size = 0x9000, scoped, tag = 'internal scratch']
  #allocation2 [shape = 'bf16[18,18,4]{2,1,0:T(8,128)(2,1)}', space=vmem, size = 0x1b000, scoped, tag = 'scratch operand']
  #allocation3 [shape = 'bf16[18,18,8]{2,1,0:T(8,128)(2,1)}', space=vmem, size = 0x1b000, scoped, tag = 'scratch operand']
  #allocation4 [shape = 'f32[128,8]{1,0:T(8,128)}', space=vmem, size = 0x10000, scoped, tag = 'scratch operand']
  %s0 = inlined_call_operand.vmem [shape: bf16[2,16,16,4], index: 0, kind: input, shape index: {}]
  %s1 = inlined_call_operand.vmem [shape: bf16[3,12,8], index: 1, kind: input, shape index: {}]
  %s2 = inlined_call_operand.vmem [shape: f32[1,8], index: 2, kind: input, shape index: {}]
  %s3 = inlined_call_operand.vmem [shape: bf16[3,24,8], index: 3, kind: input, shape index: {}]
  %s4 = inlined_call_operand.vmem [shape: f32[1,8], index: 4, kind: input, shape index: {}]
  %s5 = inlined_call_operand.vmem [shape: bf16[2,16,16,8], index: 5, kind: output, shape index: {0}]
  %s6 = inlined_call_operand.vmem [shape: bf16[2,8,8,8], index: 6, kind: output, shape index: {1}]
  %7 = xla_tuple %s5, %s6
  %s8 = sld [smem:[#allocation0]]
  $region61: #{score_residue_forward.4} parent=0
    _
  %s10 = ssub.s32 1, %s8
  %s11 = scalar_select 0, %s10, %s8
  loop: start=0, step=1, limit=4
  $region2: #{score_residue_forward.4} parent=0 // loop_pre_header
    _
  $region3: #{score_residue_forward.4} parent=0 // loop_header
    %s13 = sphi 0, %s17
    %p14 = scmp.ge.s32.totalorder %s13, 4
    %s23 = sphi 0, %s25
    %s26 = sphi 0, %s23
    %s27 = sphi 0, %s26
    %s43 = sphi 0, %s27
    %s47 = sphi 0, %s47
    %s49 = sphi 0, %s47
    %s50 = sphi 0, %s49
    %s64 = sphi 0, %s50
    %s68 = sphi 0, %s68
    %s70 = sphi 0, %s68
    %s71 = sphi 0, %s70
    %s85 = sphi 0, %s71
    %s89 = sphi 0, %s89
    %s91 = sphi 0, %s89
    %s92 = sphi 0, %s91
    %s106 = sphi 0, %s92
    %s110 = sphi 0, %s110
    %s112 = sphi 0, %s110
    %s113 = sphi 0, %s112
    %s127 = sphi 0, %s113
    %s133 = sphi 0, %s135
    %s136 = sphi 0, %s133
    %s137 = sphi 0, %s136
    %s153 = sphi 0, %s137
    %s159 = sphi 0, %s161
    %s162 = sphi 0, %s159
    %s163 = sphi 0, %s162
    %s179 = sphi 0, %s163
  $region4: #{score_residue_forward.4} parent=0 // loop_header_branch
    %16 = sbr.rel (%p14) target = $region8
  $region5: #{score_residue_forward.4} parent=0 // loop_body
    %s18 = ssub.s32 %s13, 1
    %s19 = ssub.s32 %s13, 2
    %s20 = sadd.s32 %s13, 1
    %s21 = ssub.s32 %s13, %s20
    %p22 = scmp.eq.s32.totalorder %s21, 0
    %s24 = sadd.s32 %s23, 1
    %s25 = scalar_select %p22, %s23, %s24
    %p28 = pneg %p22
    %p29 = scmp.eq.s32.totalorder %s13, 1
    %p30 = por %p28, %p29
    %p31 = scmp.ne.s32.totalorder %s23, %s26
    %p32 = scmp.eq.s32.totalorder %s13, 0
    %p33 = por %p31, %p32
    %p34 = scmp.ne.s32.totalorder %s23, %s26
    %p35 = scmp.eq.s32.totalorder %s18, 1
    %p36 = por %p34, %p35
    %p37 = scmp.ne.s32.totalorder %s26, %s27
    %p38 = scmp.eq.s32.totalorder %s18, 0
    %p39 = por %p37, %p38
    %p40 = scmp.ne.s32.totalorder %s26, %s27
    %p41 = scmp.eq.s32.totalorder %s19, 1
    %p42 = por %p40, %p41
    %p44 = scmp.ne.s32.totalorder %s27, %s43
    %p45 = scmp.eq.s32.totalorder %s19, 0
    %p46 = por %p44, %p45
    %s48 = sadd.s32 %s47, 1
    %p51 = scmp.eq.s32.totalorder %s13, 1
    %p52 = scmp.ne.s32.totalorder %s47, %s49
    %p53 = scmp.eq.s32.totalorder %s13, 0
    %p54 = por %p52, %p53
    %p55 = scmp.ne.s32.totalorder %s47, %s49
    %p56 = scmp.eq.s32.totalorder %s18, 1
    %p57 = por %p55, %p56
    %p58 = scmp.ne.s32.totalorder %s49, %s50
    %p59 = scmp.eq.s32.totalorder %s18, 0
    %p60 = por %p58, %p59
    %p61 = scmp.ne.s32.totalorder %s49, %s50
    %p62 = scmp.eq.s32.totalorder %s19, 1
    %p63 = por %p61, %p62
    %p65 = scmp.ne.s32.totalorder %s50, %s64
    %p66 = scmp.eq.s32.totalorder %s19, 0
    %p67 = por %p65, %p66
    %s69 = sadd.s32 %s68, 1
    %p72 = scmp.eq.s32.totalorder %s13, 1
    %p73 = scmp.ne.s32.totalorder %s68, %s70
    %p74 = scmp.eq.s32.totalorder %s13, 0
    %p75 = por %p73, %p74
    %p76 = scmp.ne.s32.totalorder %s68, %s70
    %p77 = scmp.eq.s32.totalorder %s18, 1
    %p78 = por %p76, %p77
    %p79 = scmp.ne.s32.totalorder %s70, %s71
    %p80 = scmp.eq.s32.totalorder %s18, 0
    %p81 = por %p79, %p80
    %p82 = scmp.ne.s32.totalorder %s70, %s71
    %p83 = scmp.eq.s32.totalorder %s19, 1
    %p84 = por %p82, %p83
    %p86 = scmp.ne.s32.totalorder %s71, %s85
    %p87 = scmp.eq.s32.totalorder %s19, 0
    %p88 = por %p86, %p87
    %s90 = sadd.s32 %s89, 1
    %p93 = scmp.eq.s32.totalorder %s13, 1
    %p94 = scmp.ne.s32.totalorder %s89, %s91
    %p95 = scmp.eq.s32.totalorder %s13, 0
    %p96 = por %p94, %p95
    %p97 = scmp.ne.s32.totalorder %s89, %s91
    %p98 = scmp.eq.s32.totalorder %s18, 1
    %p99 = por %p97, %p98
    %p100 = scmp.ne.s32.totalorder %s91, %s92
    %p101 = scmp.eq.s32.totalorder %s18, 0
    %p102 = por %p100, %p101
    %p103 = scmp.ne.s32.totalorder %s91, %s92
    %p104 = scmp.eq.s32.totalorder %s19, 1
    %p105 = por %p103, %p104
    %p107 = scmp.ne.s32.totalorder %s92, %s106
    %p108 = scmp.eq.s32.totalorder %s19, 0
    %p109 = por %p107, %p108
    %s111 = sadd.s32 %s110, 1
    %p114 = scmp.eq.s32.totalorder %s13, 1
    %p115 = scmp.ne.s32.totalorder %s110, %s112
    %p116 = scmp.eq.s32.totalorder %s13, 0
    %p117 = por %p115, %p116
    %p118 = scmp.ne.s32.totalorder %s110, %s112
    %p119 = scmp.eq.s32.totalorder %s18, 1
    %p120 = por %p118, %p119
    %p121 = scmp.ne.s32.totalorder %s112, %s113
    %p122 = scmp.eq.s32.totalorder %s18, 0
    %p123 = por %p121, %p122
    %p124 = scmp.ne.s32.totalorder %s112, %s113
    %p125 = scmp.eq.s32.totalorder %s19, 1
    %p126 = por %p124, %p125
    %p128 = scmp.ne.s32.totalorder %s113, %s127
    %p129 = scmp.eq.s32.totalorder %s19, 0
    %p130 = por %p128, %p129
    %s131 = ssub.s32 %s13, %s20
    %p132 = scmp.eq.s32.totalorder %s131, 0
    %s134 = sadd.s32 %s133, 1
    %s135 = scalar_select %p132, %s133, %s134
    %p138 = pneg %p132
    %p139 = scmp.eq.s32.totalorder %s13, 1
    %p140 = por %p138, %p139
    %p141 = scmp.ne.s32.totalorder %s133, %s136
    %p142 = scmp.eq.s32.totalorder %s13, 0
    %p143 = por %p141, %p142
    %p144 = scmp.ne.s32.totalorder %s133, %s136
    %p145 = scmp.eq.s32.totalorder %s18, 1
    %p146 = por %p144, %p145
    %p147 = scmp.ne.s32.totalorder %s136, %s137
    %p148 = scmp.eq.s32.totalorder %s18, 0
    %p149 = por %p147, %p148
    %p150 = scmp.ne.s32.totalorder %s136, %s137
    %p151 = scmp.eq.s32.totalorder %s19, 1
    %p152 = por %p150, %p151
    %p154 = scmp.ne.s32.totalorder %s137, %s153
    %p155 = scmp.eq.s32.totalorder %s19, 0
    %p156 = por %p154, %p155
    %s157 = ssub.s32 %s13, %s20
    %p158 = scmp.eq.s32.totalorder %s157, 0
    %s160 = sadd.s32 %s159, 1
    %s161 = scalar_select %p158, %s159, %s160
    %p164 = pneg %p158
    %p165 = scmp.eq.s32.totalorder %s13, 1
    %p166 = por %p164, %p165
    %p167 = scmp.ne.s32.totalorder %s159, %s162
    %p168 = scmp.eq.s32.totalorder %s13, 0
    %p169 = por %p167, %p168
    %p170 = scmp.ne.s32.totalorder %s159, %s162
    %p171 = scmp.eq.s32.totalorder %s18, 1
    %p172 = por %p170, %p171
    %p173 = scmp.ne.s32.totalorder %s162, %s163
    %p174 = scmp.eq.s32.totalorder %s18, 0
    %p175 = por %p173, %p174
    %p176 = scmp.ne.s32.totalorder %s162, %s163
    %p177 = scmp.eq.s32.totalorder %s19, 1
    %p178 = por %p176, %p177
    %p180 = scmp.ne.s32.totalorder %s163, %s179
    %p181 = scmp.eq.s32.totalorder %s19, 0
    %p182 = por %p180, %p181
    %p183 = scmp.le.s32.totalorder 1, %s13
    %p184 = scmp.lt.s32.totalorder %s13, 3
    %p185 = pnand %p183, %p184
    %p186 = pneg %p185
    // Predicated region
    $region9: #{score_residue_forward.4} parent=5 // pred_check
      _
    $region10: #{score_residue_forward.4} parent=5 // pred_check_branch
      %188 = sbr.rel (%p185) target = $region12
    $region11: #{score_residue_forward.4} parent=5 // pred_region
      %s189 = ssub.s32 %s13, 1
      // Predicated region
      $region13: #{score_residue_forward.4} parent=11 // pred_check
        %p190 = pneg %p60
      $region14: #{score_residue_forward.4} parent=11 // pred_check_branch
        %192 = sbr.rel (%p190) target = $region16
      $region15: #{score_residue_forward.4} parent=11 // pred_region
        _
      $region16: #{score_residue_forward.4} parent=11 // pred_fallthru
        _
      // Predicated region
      $region17: #{score_residue_forward.4} parent=11 // pred_check
        %p193 = pneg %p81
      $region18: #{score_residue_forward.4} parent=11 // pred_check_branch
        %195 = sbr.rel (%p193) target = $region20
      $region19: #{score_residue_forward.4} parent=11 // pred_region
        _
      $region20: #{score_residue_forward.4} parent=11 // pred_fallthru
        _
      // Predicated region
      $region21: #{score_residue_forward.4} parent=11 // pred_check
        %p196 = pneg %p102
      $region22: #{score_residue_forward.4} parent=11 // pred_check_branch
        %198 = sbr.rel (%p196) target = $region24
      $region23: #{score_residue_forward.4} parent=11 // pred_region
        _
      $region24: #{score_residue_forward.4} parent=11 // pred_fallthru
        _
      // Predicated region
      $region25: #{score_residue_forward.4} parent=11 // pred_check
        %p199 = pneg %p123
      $region26: #{score_residue_forward.4} parent=11 // pred_check_branch
        %201 = sbr.rel (%p199) target = $region28
      $region27: #{score_residue_forward.4} parent=11 // pred_region
        _
      $region28: #{score_residue_forward.4} parent=11 // pred_fallthru
        _
    $region12: #{score_residue_forward.4} parent=5 // pred_fallthru
      _
    %p202 = scmp.lt.s32.totalorder %s13, 2
    // Predicated region
    $region29: #{score_residue_forward.4} parent=5 // pred_check
      %p203 = pneg %p202
    $region30: #{score_residue_forward.4} parent=5 // pred_check_branch
      %205 = sbr.rel (%p203) target = $region32
    $region31: #{score_residue_forward.4} parent=5 // pred_region
      // Predicated region
      $region33: #{score_residue_forward.4} parent=31 // pred_check
        %p206 = pneg %p33
      $region34: #{score_residue_forward.4} parent=31 // pred_check_branch
        %208 = sbr.rel (%p206) target = $region36
      $region35: #{score_residue_forward.4} parent=31 // pred_region
        %p209 = scmp.lt.s32.totalorder %s13, 1
        %s210 = scalar_select %p209, %s13, 1
        %s211 = smul.addr %s210, 32
        %s212 = smul.addr %s211, 4
        %s213 = scalar_lea.vmem %s0, %s212
      $region36: #{score_residue_forward.4} parent=31 // pred_fallthru
        _
    $region32: #{score_residue_forward.4} parent=5 // pred_fallthru
      _
    %p214 = scmp.le.s32.totalorder 1, %s13
    %p215 = scmp.lt.s32.totalorder %s13, 3
    %p216 = pnand %p214, %p215
    %p217 = pneg %p216
    // Predicated region
    $region37: #{score_residue_forward.4} parent=5 // pred_check
      _
    $region38: #{score_residue_forward.4} parent=5 // pred_check_branch
      %219 = sbr.rel (%p216) target = $region40
    $region39: #{score_residue_forward.4} parent=5 // pred_region
      %s220 = ssub.s32 %s13, 1
      %p221 = scmp.lt.s32.totalorder %s18, 1
      %s222 = scalar_select %p221, %s18, 1
      %s223 = smul.addr %s222, 32
      %s224 = smul.addr %s223, 4
      %s225 = scalar_lea.vmem %s0, %s224
      %p226 = pneg %p39
      %p227 = pneg %p36
      %p228 = pneg %p60
      %p229 = pneg %p57
      %p230 = pneg %p81
      %p231 = pneg %p78
      %p232 = pneg %p102
      %p233 = pneg %p99
      %p234 = pneg %p123
      %p235 = pneg %p120
      %p236 = pneg %p149
      %p237 = pneg %p146
      %p238 = scmp.lt.s32.totalorder %s18, 1
      %s239 = scalar_select %p238, %s18, 1
      %s240 = smul.addr %s239, 32
      %s241 = smul.addr %s240, 4
      %s242 = scalar_lea.vmem %s5, %s241
      %p243 = pneg %p175
      %p244 = pneg %p172
      %p245 = scmp.lt.s32.totalorder %s18, 1
      %s246 = scalar_select %p245, %s18, 1
      %s247 = smul.addr %s246, 8
      %s248 = smul.addr %s247, 4
      %s249 = scalar_lea.vmem %s6, %s248
      %p250 = scmp.lt.s32.totalorder %s18, 1
      %s251 = scalar_select %p250, %s18, 1
      %s252 = smul.addr %s251, 32
      %s253 = smul.addr %s252, 4
      %s254 = scalar_lea.vmem %s0, %s253
      %p255 = scmp.lt.s32.totalorder %s18, 1
      %s256 = scalar_select %p255, %s18, 1
      %s257 = smul.addr %s256, 32
      %s258 = smul.addr %s257, 4
      %s259 = scalar_lea.vmem %s5, %s258
      %p260 = scmp.lt.s32.totalorder %s18, 1
      %s261 = scalar_select %p260, %s18, 1
      %s262 = smul.addr %s261, 8
      %s263 = smul.addr %s262, 4
      %s264 = scalar_lea.vmem %s6, %s263
      %v266 = vld [vmem:[%s254] sm:$0xf]
      %v267 = vld [vmem:[%s254 + $0x4] sm:$0xf]
      %v268 = vld [vmem:[%s254 + $0x8] sm:$0xf]
      %v269 = vld [vmem:[%s254 + $0xc] sm:$0xf]
      %v270 = vld [vmem:[%s254 + $0x10] sm:$0xf]
      %v271 = vld [vmem:[%s254 + $0x14] sm:$0xf]
      %v272 = vld [vmem:[%s254 + $0x18] sm:$0xf]
      %v273 = vld [vmem:[%s254 + $0x1c] sm:$0xf]
      %v274 = vld [vmem:[%s254 + $0x20] sm:$0xf]
      %v275 = vld [vmem:[%s254 + $0x24] sm:$0xf]
      %v276 = vld [vmem:[%s254 + $0x28] sm:$0xf]
      %v277 = vld [vmem:[%s254 + $0x2c] sm:$0xf]
      %v278 = vld [vmem:[%s254 + $0x30] sm:$0xf]
      %v279 = vld [vmem:[%s254 + $0x34] sm:$0xf]
      %v280 = vld [vmem:[%s254 + $0x38] sm:$0xf]
      %v281 = vld [vmem:[%s254 + $0x3c] sm:$0xf]
      %v282 = vld [vmem:[%s254 + $0x40] sm:$0xf]
      %v283 = vld [vmem:[%s254 + $0x44] sm:$0xf]
      %v284 = vld [vmem:[%s254 + $0x48] sm:$0xf]
      %v285 = vld [vmem:[%s254 + $0x4c] sm:$0xf]
      %v286 = vld [vmem:[%s254 + $0x50] sm:$0xf]
      %v287 = vld [vmem:[%s254 + $0x54] sm:$0xf]
      %v288 = vld [vmem:[%s254 + $0x58] sm:$0xf]
      %v289 = vld [vmem:[%s254 + $0x5c] sm:$0xf]
      %v290 = vld [vmem:[%s254 + $0x60] sm:$0xf]
      %v291 = vld [vmem:[%s254 + $0x64] sm:$0xf]
      %v292 = vld [vmem:[%s254 + $0x68] sm:$0xf]
      %v293 = vld [vmem:[%s254 + $0x6c] sm:$0xf]
      %v294 = vld [vmem:[%s254 + $0x70] sm:$0xf]
      %v295 = vld [vmem:[%s254 + $0x74] sm:$0xf]
      %v296 = vld [vmem:[%s254 + $0x78] sm:$0xf]
      %v297 = vld [vmem:[%s254 + $0x7c] sm:$0xf]
      %vm298 = vcmask 27648
      %299 = vst.msk [vmem:[#allocation2] sm:$0xf] %vm298, 0
      %300 = vst.msk [vmem:[#allocation2 + $0x4] sm:$0xf] %vm298, 0
      %vm301 = vcmask 24576
      %302 = vst.msk [vmem:[#allocation2 + $0x8] sm:$0x1] %vm301, 0
      %s303 = scalar_lea.vmem [#allocation2], 204
      %304 = vst.msk [vmem:[%s303] sm:$0xf] %vm298, 0
      %305 = vst.msk [vmem:[%s303 + $0x4] sm:$0xf] %vm298, 0
      %306 = vst.msk [vmem:[%s303 + $0x8] sm:$0x1] %vm301, 0
      %s307 = scalar_lea.vmem [#allocation2], 12
      %vm308 = vcmask 24576
      %vm309 = vsmask.f32 256
      %vm310 = vmand %vm308, %vm309
      %v311 = vld [vmem:[%s307] sm:$0x1]
      %v312 = vsel %vm310, 0, %v311
      %313 = vst [vmem:[%s307] sm:$0x1] %v312
      %v314 = vld [vmem:[%s307 + $0xc] sm:$0x1]
      %v315 = vsel %vm310, 0, %v314
      %316 = vst [vmem:[%s307 + $0xc] sm:$0x1] %v315
      %v317 = vld [vmem:[%s307 + $0x18] sm:$0x1]
      %v318 = vsel %vm310, 0, %v317
      %319 = vst [vmem:[%s307 + $0x18] sm:$0x1] %v318
      %v320 = vld [vmem:[%s307 + $0x24] sm:$0x1]
      %v321 = vsel %vm310, 0, %v320
      %322 = vst [vmem:[%s307 + $0x24] sm:$0x1] %v321
      %v323 = vld [vmem:[%s307 + $0x30] sm:$0x1]
      %v324 = vsel %vm310, 0, %v323
      %325 = vst [vmem:[%s307 + $0x30] sm:$0x1] %v324
      %v326 = vld [vmem:[%s307 + $0x3c] sm:$0x1]
      %v327 = vsel %vm310, 0, %v326
      %328 = vst [vmem:[%s307 + $0x3c] sm:$0x1] %v327
      %v329 = vld [vmem:[%s307 + $0x48] sm:$0x1]
      %v330 = vsel %vm310, 0, %v329
      %331 = vst [vmem:[%s307 + $0x48] sm:$0x1] %v330
      %v332 = vld [vmem:[%s307 + $0x54] sm:$0x1]
      %v333 = vsel %vm310, 0, %v332
      %334 = vst [vmem:[%s307 + $0x54] sm:$0x1] %v333
      %v335 = vld [vmem:[%s307 + $0x60] sm:$0x1]
      %v336 = vsel %vm310, 0, %v335
      %337 = vst [vmem:[%s307 + $0x60] sm:$0x1] %v336
      %v338 = vld [vmem:[%s307 + $0x6c] sm:$0x1]
      %v339 = vsel %vm310, 0, %v338
      %340 = vst [vmem:[%s307 + $0x6c] sm:$0x1] %v339
      %v341 = vld [vmem:[%s307 + $0x78] sm:$0x1]
      %v342 = vsel %vm310, 0, %v341
      %343 = vst [vmem:[%s307 + $0x78] sm:$0x1] %v342
      %v344 = vld [vmem:[%s307 + $0x84] sm:$0x1]
      %v345 = vsel %vm310, 0, %v344
      %346 = vst [vmem:[%s307 + $0x84] sm:$0x1] %v345
      %v347 = vld [vmem:[%s307 + $0x90] sm:$0x1]
      %v348 = vsel %vm310, 0, %v347
      %349 = vst [vmem:[%s307 + $0x90] sm:$0x1] %v348
      %v350 = vld [vmem:[%s307 + $0x9c] sm:$0x1]
      %v351 = vsel %vm310, 0, %v350
      %352 = vst [vmem:[%s307 + $0x9c] sm:$0x1] %v351
      %v353 = vld [vmem:[%s307 + $0xa8] sm:$0x1]
      %v354 = vsel %vm310, 0, %v353
      %355 = vst [vmem:[%s307 + $0xa8] sm:$0x1] %v354
      %v356 = vld [vmem:[%s307 + $0xb4] sm:$0x1]
      %v357 = vsel %vm310, 0, %v356
      %358 = vst [vmem:[%s307 + $0xb4] sm:$0x1] %v357
      %vm359 = vsmask.f32 7938
      %vm360 = vmand %vm308, %vm359
      %v361 = vld [vmem:[%s307 + $0x8] sm:$0x1]
      %v362 = vsel %vm360, 0, %v361
      %363 = vst [vmem:[%s307 + $0x8] sm:$0x1] %v362
      %v364 = vld [vmem:[%s307 + $0x14] sm:$0x1]
      %v365 = vsel %vm360, 0, %v364
      %366 = vst [vmem:[%s307 + $0x14] sm:$0x1] %v365
      %v367 = vld [vmem:[%s307 + $0x20] sm:$0x1]
      %v368 = vsel %vm360, 0, %v367
      %369 = vst [vmem:[%s307 + $0x20] sm:$0x1] %v368
      %v370 = vld [vmem:[%s307 + $0x2c] sm:$0x1]
      %v371 = vsel %vm360, 0, %v370
      %372 = vst [vmem:[%s307 + $0x2c] sm:$0x1] %v371
      %v373 = vld [vmem:[%s307 + $0x38] sm:$0x1]
      %v374 = vsel %vm360, 0, %v373
      %375 = vst [vmem:[%s307 + $0x38] sm:$0x1] %v374
      %v376 = vld [vmem:[%s307 + $0x44] sm:$0x1]
      %v377 = vsel %vm360, 0, %v376
      %378 = vst [vmem:[%s307 + $0x44] sm:$0x1] %v377
      %v379 = vld [vmem:[%s307 + $0x50] sm:$0x1]
      %v380 = vsel %vm360, 0, %v379
      %381 = vst [vmem:[%s307 + $0x50] sm:$0x1] %v380
      %v382 = vld [vmem:[%s307 + $0x5c] sm:$0x1]
      %v383 = vsel %vm360, 0, %v382
      %384 = vst [vmem:[%s307 + $0x5c] sm:$0x1] %v383
      %v385 = vld [vmem:[%s307 + $0x68] sm:$0x1]
      %v386 = vsel %vm360, 0, %v385
      %387 = vst [vmem:[%s307 + $0x68] sm:$0x1] %v386
      %v388 = vld [vmem:[%s307 + $0x74] sm:$0x1]
      %v389 = vsel %vm360, 0, %v388
      %390 = vst [vmem:[%s307 + $0x74] sm:$0x1] %v389
      %v391 = vld [vmem:[%s307 + $0x80] sm:$0x1]
      %v392 = vsel %vm360, 0, %v391
      %393 = vst [vmem:[%s307 + $0x80] sm:$0x1] %v392
      %v394 = vld [vmem:[%s307 + $0x8c] sm:$0x1]
      %v395 = vsel %vm360, 0, %v394
      %396 = vst [vmem:[%s307 + $0x8c] sm:$0x1] %v395
      %v397 = vld [vmem:[%s307 + $0x98] sm:$0x1]
      %v398 = vsel %vm360, 0, %v397
      %399 = vst [vmem:[%s307 + $0x98] sm:$0x1] %v398
      %v400 = vld [vmem:[%s307 + $0xa4] sm:$0x1]
      %v401 = vsel %vm360, 0, %v400
      %402 = vst [vmem:[%s307 + $0xa4] sm:$0x1] %v401
      %v403 = vld [vmem:[%s307 + $0xb0] sm:$0x1]
      %v404 = vsel %vm360, 0, %v403
      %405 = vst [vmem:[%s307 + $0xb0] sm:$0x1] %v404
      %v406 = vld [vmem:[%s307 + $0xbc] sm:$0x1]
      %v407 = vsel %vm360, 0, %v406
      %408 = vst [vmem:[%s307 + $0xbc] sm:$0x1] %v407
      %vm409 = vsmask.f32 4368
      %vm410 = vmor %vm309, %vm409
      %v412 = vshrl.u32 %v266, 16
      %v414 = vrot.slane %v412, 7
      %v415 = vshll.u32 %v266, 16
      %v417 = vor.u32 %v414, %v415
      %v418 = vrot.slane %v414, 4
      %v420 = vshrl.u32 %v267, 16
      %v422 = vrot.slane %v420, 7
      %v423 = vshll.u32 %v267, 16
      %v425 = vor.u32 %v422, %v423
      %v426 = vsel %vm410, %v418, %v425
      %v427 = vrot.slane %v422, 4
      %v429 = vshrl.u32 %v268, 16
      %v431 = vrot.slane %v429, 7
      %v432 = vshll.u32 %v268, 16
      %v434 = vor.u32 %v431, %v432
      %v435 = vrot.slane %v431, 4
      %v437 = vshrl.u32 %v269, 16
      %v439 = vrot.slane %v437, 7
      %v440 = vshll.u32 %v269, 16
      %v442 = vor.u32 %v439, %v440
      %v443 = vsel %vm410, %v435, %v442
      %v444 = vrot.slane %v439, 4
      %v446 = vshrl.u32 %v270, 16
      %v448 = vrot.slane %v446, 7
      %v449 = vshll.u32 %v270, 16
      %v451 = vor.u32 %v448, %v449
      %v452 = vrot.slane %v448, 4
      %v454 = vshrl.u32 %v271, 16
      %v456 = vrot.slane %v454, 7
      %v457 = vshll.u32 %v271, 16
      %v459 = vor.u32 %v456, %v457
      %v460 = vsel %vm410, %v452, %v459
      %v461 = vrot.slane %v456, 4
      %v463 = vshrl.u32 %v272, 16
      %v465 = vrot.slane %v463, 7
      %v466 = vshll.u32 %v272, 16
      %v468 = vor.u32 %v465, %v466
      %v469 = vrot.slane %v465, 4
      %v471 = vshrl.u32 %v273, 16
      %v473 = vrot.slane %v471, 7
      %v474 = vshll.u32 %v273, 16
      %v476 = vor.u32 %v473, %v474
      %v477 = vsel %vm410, %v469, %v476
      %v478 = vrot.slane %v473, 4
      %v480 = vshrl.u32 %v274, 16
      %v482 = vrot.slane %v480, 7
      %v483 = vshll.u32 %v274, 16
      %v485 = vor.u32 %v482, %v483
      %v486 = vrot.slane %v482, 4
      %v488 = vshrl.u32 %v275, 16
      %v490 = vrot.slane %v488, 7
      %v491 = vshll.u32 %v275, 16
      %v493 = vor.u32 %v490, %v491
      %v494 = vsel %vm410, %v486, %v493
      %v495 = vrot.slane %v490, 4
      %v497 = vshrl.u32 %v276, 16
      %v499 = vrot.slane %v497, 7
      %v500 = vshll.u32 %v276, 16
      %v502 = vor.u32 %v499, %v500
      %v503 = vrot.slane %v499, 4
      %v505 = vshrl.u32 %v277, 16
      %v507 = vrot.slane %v505, 7
      %v508 = vshll.u32 %v277, 16
      %v510 = vor.u32 %v507, %v508
      %v511 = vsel %vm410, %v503, %v510
      %v512 = vrot.slane %v507, 4
      %v514 = vshrl.u32 %v278, 16
      %v516 = vrot.slane %v514, 7
      %v517 = vshll.u32 %v278, 16
      %v519 = vor.u32 %v516, %v517
      %v520 = vrot.slane %v516, 4
      %v522 = vshrl.u32 %v279, 16
      %v524 = vrot.slane %v522, 7
      %v525 = vshll.u32 %v279, 16
      %v527 = vor.u32 %v524, %v525
      %v528 = vsel %vm410, %v520, %v527
      %v529 = vrot.slane %v524, 4
      %v531 = vshrl.u32 %v280, 16
      %v533 = vrot.slane %v531, 7
      %v534 = vshll.u32 %v280, 16
      %v536 = vor.u32 %v533, %v534
      %v537 = vrot.slane %v533, 4
      %v539 = vshrl.u32 %v281, 16
      %v541 = vrot.slane %v539, 7
      %v542 = vshll.u32 %v281, 16
      %v544 = vor.u32 %v541, %v542
      %v545 = vsel %vm410, %v537, %v544
      %v546 = vrot.slane %v541, 4
      %v548 = vshrl.u32 %v282, 16
      %v550 = vrot.slane %v548, 7
      %v551 = vshll.u32 %v282, 16
      %v553 = vor.u32 %v550, %v551
      %v554 = vrot.slane %v550, 4
      %v556 = vshrl.u32 %v283, 16
      %v558 = vrot.slane %v556, 7
      %v559 = vshll.u32 %v283, 16
      %v561 = vor.u32 %v558, %v559
      %v562 = vsel %vm410, %v554, %v561
      %v563 = vrot.slane %v558, 4
      %v565 = vshrl.u32 %v284, 16
      %v567 = vrot.slane %v565, 7
      %v568 = vshll.u32 %v284, 16
      %v570 = vor.u32 %v567, %v568
      %v571 = vrot.slane %v567, 4
      %v573 = vshrl.u32 %v285, 16
      %v575 = vrot.slane %v573, 7
      %v576 = vshll.u32 %v285, 16
      %v578 = vor.u32 %v575, %v576
      %v579 = vsel %vm410, %v571, %v578
      %v580 = vrot.slane %v575, 4
      %v582 = vshrl.u32 %v286, 16
      %v584 = vrot.slane %v582, 7
      %v585 = vshll.u32 %v286, 16
      %v587 = vor.u32 %v584, %v585
      %v588 = vrot.slane %v584, 4
      %v590 = vshrl.u32 %v287, 16
      %v592 = vrot.slane %v590, 7
      %v593 = vshll.u32 %v287, 16
      %v595 = vor.u32 %v592, %v593
      %v596 = vsel %vm410, %v588, %v595
      %v597 = vrot.slane %v592, 4
      %v599 = vshrl.u32 %v288, 16
      %v601 = vrot.slane %v599, 7
      %v602 = vshll.u32 %v288, 16
      %v604 = vor.u32 %v601, %v602
      %v605 = vrot.slane %v601, 4
      %v607 = vshrl.u32 %v289, 16
      %v609 = vrot.slane %v607, 7
      %v610 = vshll.u32 %v289, 16
      %v612 = vor.u32 %v609, %v610
      %v613 = vsel %vm410, %v605, %v612
      %v614 = vrot.slane %v609, 4
      %v616 = vshrl.u32 %v290, 16
      %v618 = vrot.slane %v616, 7
      %v619 = vshll.u32 %v290, 16
      %v621 = vor.u32 %v618, %v619
      %v622 = vrot.slane %v618, 4
      %v624 = vshrl.u32 %v291, 16
      %v626 = vrot.slane %v624, 7
      %v627 = vshll.u32 %v291, 16
      %v629 = vor.u32 %v626, %v627
      %v630 = vsel %vm410, %v622, %v629
      %v631 = vrot.slane %v626, 4
      %v633 = vshrl.u32 %v292, 16
      %v635 = vrot.slane %v633, 7
      %v636 = vshll.u32 %v292, 16
      %v638 = vor.u32 %v635, %v636
      %v639 = vrot.slane %v635, 4
      %v641 = vshrl.u32 %v293, 16
      %v643 = vrot.slane %v641, 7
      %v644 = vshll.u32 %v293, 16
      %v646 = vor.u32 %v643, %v644
      %v647 = vsel %vm410, %v639, %v646
      %v648 = vrot.slane %v643, 4
      %v650 = vshrl.u32 %v294, 16
      %v652 = vrot.slane %v650, 7
      %v653 = vshll.u32 %v294, 16
      %v655 = vor.u32 %v652, %v653
      %v656 = vrot.slane %v652, 4
      %v658 = vshrl.u32 %v295, 16
      %v660 = vrot.slane %v658, 7
      %v661 = vshll.u32 %v295, 16
      %v663 = vor.u32 %v660, %v661
      %v664 = vsel %vm410, %v656, %v663
      %v665 = vrot.slane %v660, 4
      %v667 = vshrl.u32 %v296, 16
      %v669 = vrot.slane %v667, 7
      %v670 = vshll.u32 %v296, 16
      %v672 = vor.u32 %v669, %v670
      %v673 = vrot.slane %v669, 4
      %v675 = vshrl.u32 %v297, 16
      %v677 = vrot.slane %v675, 7
      %v678 = vshll.u32 %v297, 16
      %v680 = vor.u32 %v677, %v678
      %v681 = vsel %vm410, %v673, %v680
      %v682 = vrot.slane %v677, 4
      %vm731 = vcmask 27648
      %vm732 = vmand %vm731, %vm359
      %v733 = vld [vmem:[%s307] sm:$0xf]
      %v734 = vsel %vm732, %v417, %v733
      %735 = vst [vmem:[%s307] sm:$0xf] %v734
      %736 = vst.msk [vmem:[%s307 + $0x4] sm:$0xf] %vm298, %v426
      %v737 = vld [vmem:[%s307 + $0x8] sm:$0x1]
      %v738 = vsel %vm310, %v427, %v737
      %739 = vst [vmem:[%s307 + $0x8] sm:$0x1] %v738
      %v740 = vld [vmem:[%s307 + $0xc] sm:$0xf]
      %v741 = vsel %vm732, %v434, %v740
      %742 = vst [vmem:[%s307 + $0xc] sm:$0xf] %v741
      %743 = vst.msk [vmem:[%s307 + $0x10] sm:$0xf] %vm298, %v443
      %v744 = vld [vmem:[%s307 + $0x14] sm:$0x1]
      %v745 = vsel %vm310, %v444, %v744
      %746 = vst [vmem:[%s307 + $0x14] sm:$0x1] %v745
      %v747 = vld [vmem:[%s307 + $0x18] sm:$0xf]
      %v748 = vsel %vm732, %v451, %v747
      %749 = vst [vmem:[%s307 + $0x18] sm:$0xf] %v748
      %750 = vst.msk [vmem:[%s307 + $0x1c] sm:$0xf] %vm298, %v460
      %v751 = vld [vmem:[%s307 + $0x20] sm:$0x1]
      %v752 = vsel %vm310, %v461, %v751
      %753 = vst [vmem:[%s307 + $0x20] sm:$0x1] %v752
      %v754 = vld [vmem:[%s307 + $0x24] sm:$0xf]
      %v755 = vsel %vm732, %v468, %v754
      %756 = vst [vmem:[%s307 + $0x24] sm:$0xf] %v755
      %757 = vst.msk [vmem:[%s307 + $0x28] sm:$0xf] %vm298, %v477
      %v758 = vld [vmem:[%s307 + $0x2c] sm:$0x1]
      %v759 = vsel %vm310, %v478, %v758
      %760 = vst [vmem:[%s307 + $0x2c] sm:$0x1] %v759
      %v761 = vld [vmem:[%s307 + $0x30] sm:$0xf]
      %v762 = vsel %vm732, %v485, %v761
      %763 = vst [vmem:[%s307 + $0x30] sm:$0xf] %v762
      %764 = vst.msk [vmem:[%s307 + $0x34] sm:$0xf] %vm298, %v494
      %v765 = vld [vmem:[%s307 + $0x38] sm:$0x1]
      %v766 = vsel %vm310, %v495, %v765
      %767 = vst [vmem:[%s307 + $0x38] sm:$0x1] %v766
      %v768 = vld [vmem:[%s307 + $0x3c] sm:$0xf]
      %v769 = vsel %vm732, %v502, %v768
      %770 = vst [vmem:[%s307 + $0x3c] sm:$0xf] %v769
      %771 = vst.msk [vmem:[%s307 + $0x40] sm:$0xf] %vm298, %v511
      %v772 = vld [vmem:[%s307 + $0x44] sm:$0x1]
      %v773 = vsel %vm310, %v512, %v772
      %774 = vst [vmem:[%s307 + $0x44] sm:$0x1] %v773
      %v775 = vld [vmem:[%s307 + $0x48] sm:$0xf]
      %v776 = vsel %vm732, %v519, %v775
      %777 = vst [vmem:[%s307 + $0x48] sm:$0xf] %v776
      %778 = vst.msk [vmem:[%s307 + $0x4c] sm:$0xf] %vm298, %v528
      %v779 = vld [vmem:[%s307 + $0x50] sm:$0x1]
      %v780 = vsel %vm310, %v529, %v779
      %781 = vst [vmem:[%s307 + $0x50] sm:$0x1] %v780
      %v782 = vld [vmem:[%s307 + $0x54] sm:$0xf]
      %v783 = vsel %vm732, %v536, %v782
      %784 = vst [vmem:[%s307 + $0x54] sm:$0xf] %v783
      %785 = vst.msk [vmem:[%s307 + $0x58] sm:$0xf] %vm298, %v545
      %v786 = vld [vmem:[%s307 + $0x5c] sm:$0x1]
      %v787 = vsel %vm310, %v546, %v786
      %788 = vst [vmem:[%s307 + $0x5c] sm:$0x1] %v787
      %v789 = vld [vmem:[%s307 + $0x60] sm:$0xf]
      %v790 = vsel %vm732, %v553, %v789
      %791 = vst [vmem:[%s307 + $0x60] sm:$0xf] %v790
      %792 = vst.msk [vmem:[%s307 + $0x64] sm:$0xf] %vm298, %v562
      %v793 = vld [vmem:[%s307 + $0x68] sm:$0x1]
      %v794 = vsel %vm310, %v563, %v793
      %795 = vst [vmem:[%s307 + $0x68] sm:$0x1] %v794
      %v796 = vld [vmem:[%s307 + $0x6c] sm:$0xf]
      %v797 = vsel %vm732, %v570, %v796
      %798 = vst [vmem:[%s307 + $0x6c] sm:$0xf] %v797
      %799 = vst.msk [vmem:[%s307 + $0x70] sm:$0xf] %vm298, %v579
      %v800 = vld [vmem:[%s307 + $0x74] sm:$0x1]
      %v801 = vsel %vm310, %v580, %v800
      %802 = vst [vmem:[%s307 + $0x74] sm:$0x1] %v801
      %v803 = vld [vmem:[%s307 + $0x78] sm:$0xf]
      %v804 = vsel %vm732, %v587, %v803
      %805 = vst [vmem:[%s307 + $0x78] sm:$0xf] %v804
      %806 = vst.msk [vmem:[%s307 + $0x7c] sm:$0xf] %vm298, %v596
      %v807 = vld [vmem:[%s307 + $0x80] sm:$0x1]
      %v808 = vsel %vm310, %v597, %v807
      %809 = vst [vmem:[%s307 + $0x80] sm:$0x1] %v808
      %v810 = vld [vmem:[%s307 + $0x84] sm:$0xf]
      %v811 = vsel %vm732, %v604, %v810
      %812 = vst [vmem:[%s307 + $0x84] sm:$0xf] %v811
      %813 = vst.msk [vmem:[%s307 + $0x88] sm:$0xf] %vm298, %v613
      %v814 = vld [vmem:[%s307 + $0x8c] sm:$0x1]
      %v815 = vsel %vm310, %v614, %v814
      %816 = vst [vmem:[%s307 + $0x8c] sm:$0x1] %v815
      %v817 = vld [vmem:[%s307 + $0x90] sm:$0xf]
      %v818 = vsel %vm732, %v621, %v817
      %819 = vst [vmem:[%s307 + $0x90] sm:$0xf] %v818
      %820 = vst.msk [vmem:[%s307 + $0x94] sm:$0xf] %vm298, %v630
      %v821 = vld [vmem:[%s307 + $0x98] sm:$0x1]
      %v822 = vsel %vm310, %v631, %v821
      %823 = vst [vmem:[%s307 + $0x98] sm:$0x1] %v822
      %v824 = vld [vmem:[%s307 + $0x9c] sm:$0xf]
      %v825 = vsel %vm732, %v638, %v824
      %826 = vst [vmem:[%s307 + $0x9c] sm:$0xf] %v825
      %827 = vst.msk [vmem:[%s307 + $0xa0] sm:$0xf] %vm298, %v647
      %v828 = vld [vmem:[%s307 + $0xa4] sm:$0x1]
      %v829 = vsel %vm310, %v648, %v828
      %830 = vst [vmem:[%s307 + $0xa4] sm:$0x1] %v829
      %v831 = vld [vmem:[%s307 + $0xa8] sm:$0xf]
      %v832 = vsel %vm732, %v655, %v831
      %833 = vst [vmem:[%s307 + $0xa8] sm:$0xf] %v832
      %834 = vst.msk [vmem:[%s307 + $0xac] sm:$0xf] %vm298, %v664
      %v835 = vld [vmem:[%s307 + $0xb0] sm:$0x1]
      %v836 = vsel %vm310, %v665, %v835
      %837 = vst [vmem:[%s307 + $0xb0] sm:$0x1] %v836
      %v838 = vld [vmem:[%s307 + $0xb4] sm:$0xf]
      %v839 = vsel %vm732, %v672, %v838
      %840 = vst [vmem:[%s307 + $0xb4] sm:$0xf] %v839
      %841 = vst.msk [vmem:[%s307 + $0xb8] sm:$0xf] %vm298, %v681
      %v842 = vld [vmem:[%s307 + $0xbc] sm:$0x1]
      %v843 = vsel %vm310, %v682, %v842
      %844 = vst [vmem:[%s307 + $0xbc] sm:$0x1] %v843
      %v845 = vld [vmem:[#allocation2] sm:$0xf]
      %v846 = vld [vmem:[#allocation2 + $0x4] sm:$0xf]
      %v847 = vld [vmem:[#allocation2 + $0x8] sm:$0x1]
      %v848 = vld [vmem:[#allocation2 + $0xc] sm:$0xf]
      %v849 = vld [vmem:[#allocation2 + $0x10] sm:$0xf]
      %v850 = vld [vmem:[#allocation2 + $0x14] sm:$0x1]
      %v851 = vld [vmem:[#allocation2 + $0x18] sm:$0xf]
      %v852 = vld [vmem:[#allocation2 + $0x1c] sm:$0xf]
      %v853 = vld [vmem:[#allocation2 + $0x20] sm:$0x1]
      %v854 = vld [vmem:[#allocation2 + $0x24] sm:$0xf]
      %v855 = vld [vmem:[#allocation2 + $0x28] sm:$0xf]
      %v856 = vld [vmem:[#allocation2 + $0x2c] sm:$0x1]
      %v857 = vld [vmem:[#allocation2 + $0x30] sm:$0xf]
      %v858 = vld [vmem:[#allocation2 + $0x34] sm:$0xf]
      %v859 = vld [vmem:[#allocation2 + $0x38] sm:$0x1]
      %v860 = vld [vmem:[#allocation2 + $0x3c] sm:$0xf]
      %v861 = vld [vmem:[#allocation2 + $0x40] sm:$0xf]
      %v862 = vld [vmem:[#allocation2 + $0x44] sm:$0x1]
      %v863 = vld [vmem:[#allocation2 + $0x48] sm:$0xf]
      %v864 = vld [vmem:[#allocation2 + $0x4c] sm:$0xf]
      %v865 = vld [vmem:[#allocation2 + $0x50] sm:$0x1]
      %v866 = vld [vmem:[#allocation2 + $0x54] sm:$0xf]
      %v867 = vld [vmem:[#allocation2 + $0x58] sm:$0xf]
      %v868 = vld [vmem:[#allocation2 + $0x5c] sm:$0x1]
      %v869 = vld [vmem:[#allocation2 + $0x60] sm:$0xf]
      %v870 = vld [vmem:[#allocation2 + $0x64] sm:$0xf]
      %v871 = vld [vmem:[#allocation2 + $0x68] sm:$0x1]
      %v872 = vld [vmem:[#allocation2 + $0x6c] sm:$0xf]
      %v873 = vld [vmem:[#allocation2 + $0x70] sm:$0xf]
      %v874 = vld [vmem:[#allocation2 + $0x74] sm:$0x1]
      %v875 = vld [vmem:[#allocation2 + $0x78] sm:$0xf]
      %v876 = vld [vmem:[#allocation2 + $0x7c] sm:$0xf]
      %v877 = vld [vmem:[#allocation2 + $0x80] sm:$0x1]
      %v878 = vld [vmem:[#allocation2 + $0x84] sm:$0xf]
      %v879 = vld [vmem:[#allocation2 + $0x88] sm:$0xf]
      %v880 = vld [vmem:[#allocation2 + $0x8c] sm:$0x1]
      %v881 = vld [vmem:[#allocation2 + $0x90] sm:$0xf]
      %v882 = vld [vmem:[#allocation2 + $0x94] sm:$0xf]
      %v883 = vld [vmem:[#allocation2 + $0x98] sm:$0x1]
      %v884 = vld [vmem:[#allocation2 + $0x9c] sm:$0xf]
      %v885 = vld [vmem:[#allocation2 + $0xa0] sm:$0xf]
      %v886 = vld [vmem:[#allocation2 + $0xa4] sm:$0x1]
      %v887 = vld [vmem:[#allocation2 + $0xa8] sm:$0xf]
      %v888 = vld [vmem:[#allocation2 + $0xac] sm:$0xf]
      %v889 = vld [vmem:[#allocation2 + $0xb0] sm:$0x1]
      %v890 = vld [vmem:[#allocation2 + $0xb4] sm:$0xf]
      %v891 = vld [vmem:[#allocation2 + $0xb8] sm:$0xf]
      %v892 = vld [vmem:[#allocation2 + $0xbc] sm:$0x1]
      %v893 = vld [vmem:[#allocation2 + $0xc0] sm:$0xf]
      %v894 = vld [vmem:[#allocation2 + $0xc4] sm:$0xf]
      %v895 = vld [vmem:[#allocation2 + $0xc8] sm:$0x1]
      %v896 = vld [vmem:[#allocation2 + $0xcc] sm:$0xf]
      %v897 = vld [vmem:[#allocation2 + $0xd0] sm:$0xf]
      %v898 = vld [vmem:[#allocation2 + $0xd4] sm:$0x1]
      %v931 = vunpack.c.l.b16 %v845
      %v932 = vunpack.c.l.b16 %v846
      %v933 = vunpack.c.l.b16 %v848
      %v934 = vunpack.c.l.b16 %v849
      %v935 = vunpack.c.l.b16 %v851
      %v936 = vunpack.c.l.b16 %v852
      %v937 = vunpack.c.l.b16 %v854
      %v938 = vunpack.c.l.b16 %v855
      %v939 = vunpack.c.l.b16 %v857
      %v940 = vunpack.c.l.b16 %v858
      %v941 = vunpack.c.l.b16 %v860
      %v942 = vunpack.c.l.b16 %v861
      %v943 = vunpack.c.l.b16 %v863
      %v944 = vunpack.c.l.b16 %v864
      %v945 = vunpack.c.l.b16 %v866
      %v946 = vunpack.c.l.b16 %v867
      %v947 = vunpack.c.l.b16 %v869
      %v948 = vunpack.c.l.b16 %v870
      %v949 = vunpack.c.l.b16 %v872
      %v950 = vunpack.c.l.b16 %v873
      %v951 = vunpack.c.l.b16 %v875
      %v952 = vunpack.c.l.b16 %v876
      %v953 = vunpack.c.l.b16 %v878
      %v954 = vunpack.c.l.b16 %v879
      %v955 = vunpack.c.l.b16 %v881
      %v956 = vunpack.c.l.b16 %v882
      %v957 = vunpack.c.l.b16 %v884
      %v958 = vunpack.c.l.b16 %v885
      %v959 = vunpack.c.l.b16 %v887
      %v960 = vunpack.c.l.b16 %v888
      %v961 = vunpack.c.l.b16 %v890
      %v962 = vunpack.c.l.b16 %v891
      %v963 = vpack.c.b16 %v932, %v931
      %v964 = vpack.c.b16 %v934, %v933
      %v965 = vpack.c.b16 %v936, %v935
      %v966 = vpack.c.b16 %v938, %v937
      %v967 = vpack.c.b16 %v940, %v939
      %v968 = vpack.c.b16 %v942, %v941
      %v969 = vpack.c.b16 %v944, %v943
      %v970 = vpack.c.b16 %v946, %v945
      %v971 = vpack.c.b16 %v948, %v947
      %v972 = vpack.c.b16 %v950, %v949
      %v973 = vpack.c.b16 %v952, %v951
      %v974 = vpack.c.b16 %v954, %v953
      %v975 = vpack.c.b16 %v956, %v955
      %v976 = vpack.c.b16 %v958, %v957
      %v977 = vpack.c.b16 %v960, %v959
      %v978 = vpack.c.b16 %v962, %v961
      %v995 = vunpack.c.l.b16 %v847
      %v996 = vunpack.c.l.b16 %v850
      %v997 = vunpack.c.l.b16 %v853
      %v998 = vunpack.c.l.b16 %v856
      %v999 = vunpack.c.l.b16 %v859
      %v1000 = vunpack.c.l.b16 %v862
      %v1001 = vunpack.c.l.b16 %v865
      %v1002 = vunpack.c.l.b16 %v868
      %v1003 = vunpack.c.l.b16 %v871
      %v1004 = vunpack.c.l.b16 %v874
      %v1005 = vunpack.c.l.b16 %v877
      %v1006 = vunpack.c.l.b16 %v880
      %v1007 = vunpack.c.l.b16 %v883
      %v1008 = vunpack.c.l.b16 %v886
      %v1009 = vunpack.c.l.b16 %v889
      %v1010 = vunpack.c.l.b16 %v892
      %v1011 = vpack.c.b16 %v995, %v995
      %v1012 = vpack.c.b16 %v996, %v996
      %v1013 = vpack.c.b16 %v997, %v997
      %v1014 = vpack.c.b16 %v998, %v998
      %v1015 = vpack.c.b16 %v999, %v999
      %v1016 = vpack.c.b16 %v1000, %v1000
      %v1017 = vpack.c.b16 %v1001, %v1001
      %v1018 = vpack.c.b16 %v1002, %v1002
      %v1019 = vpack.c.b16 %v1003, %v1003
      %v1020 = vpack.c.b16 %v1004, %v1004
      %v1021 = vpack.c.b16 %v1005, %v1005
      %v1022 = vpack.c.b16 %v1006, %v1006
      %v1023 = vpack.c.b16 %v1007, %v1007
      %v1024 = vpack.c.b16 %v1008, %v1008
      %v1025 = vpack.c.b16 %v1009, %v1009
      %v1026 = vpack.c.b16 %v1010, %v1010
      %vm1027 = vsmask.f32 7424
      %v1029 = vshrl.u32 %v963, 16
      %v1031 = vshll.u32 %v963, 16
      %v1033 = vrot.slane %v1031, 1
      %v1034 = vor.u32 %v1029, %v1033
      %v1036 = vshll.u32 %v1011, 16
      %v1038 = vrot.slane %v1036, 1
      %v1039 = vsel %vm1027, %v1034, %v1038
      %v1041 = vshrl.u32 %v964, 16
      %v1043 = vshll.u32 %v964, 16
      %v1045 = vrot.slane %v1043, 1
      %v1046 = vor.u32 %v1041, %v1045
      %v1048 = vshll.u32 %v1012, 16
      %v1050 = vrot.slane %v1048, 1
      %v1051 = vsel %vm1027, %v1046, %v1050
      %v1053 = vshrl.u32 %v965, 16
      %v1055 = vshll.u32 %v965, 16
      %v1057 = vrot.slane %v1055, 1
      %v1058 = vor.u32 %v1053, %v1057
      %v1060 = vshll.u32 %v1013, 16
      %v1062 = vrot.slane %v1060, 1
      %v1063 = vsel %vm1027, %v1058, %v1062
      %v1065 = vshrl.u32 %v966, 16
      %v1067 = vshll.u32 %v966, 16
      %v1069 = vrot.slane %v1067, 1
      %v1070 = vor.u32 %v1065, %v1069
      %v1072 = vshll.u32 %v1014, 16
      %v1074 = vrot.slane %v1072, 1
      %v1075 = vsel %vm1027, %v1070, %v1074
      %v1077 = vshrl.u32 %v967, 16
      %v1079 = vshll.u32 %v967, 16
      %v1081 = vrot.slane %v1079, 1
      %v1082 = vor.u32 %v1077, %v1081
      %v1084 = vshll.u32 %v1015, 16
      %v1086 = vrot.slane %v1084, 1
      %v1087 = vsel %vm1027, %v1082, %v1086
      %v1089 = vshrl.u32 %v968, 16
      %v1091 = vshll.u32 %v968, 16
      %v1093 = vrot.slane %v1091, 1
      %v1094 = vor.u32 %v1089, %v1093
      %v1096 = vshll.u32 %v1016, 16
      %v1098 = vrot.slane %v1096, 1
      %v1099 = vsel %vm1027, %v1094, %v1098
      %v1101 = vshrl.u32 %v969, 16
      %v1103 = vshll.u32 %v969, 16
      %v1105 = vrot.slane %v1103, 1
      %v1106 = vor.u32 %v1101, %v1105
      %v1108 = vshll.u32 %v1017, 16
      %v1110 = vrot.slane %v1108, 1
      %v1111 = vsel %vm1027, %v1106, %v1110
      %v1113 = vshrl.u32 %v970, 16
      %v1115 = vshll.u32 %v970, 16
      %v1117 = vrot.slane %v1115, 1
      %v1118 = vor.u32 %v1113, %v1117
      %v1120 = vshll.u32 %v1018, 16
      %v1122 = vrot.slane %v1120, 1
      %v1123 = vsel %vm1027, %v1118, %v1122
      %v1125 = vshrl.u32 %v971, 16
      %v1127 = vshll.u32 %v971, 16
      %v1129 = vrot.slane %v1127, 1
      %v1130 = vor.u32 %v1125, %v1129
      %v1132 = vshll.u32 %v1019, 16
      %v1134 = vrot.slane %v1132, 1
      %v1135 = vsel %vm1027, %v1130, %v1134
      %v1137 = vshrl.u32 %v972, 16
      %v1139 = vshll.u32 %v972, 16
      %v1141 = vrot.slane %v1139, 1
      %v1142 = vor.u32 %v1137, %v1141
      %v1144 = vshll.u32 %v1020, 16
      %v1146 = vrot.slane %v1144, 1
      %v1147 = vsel %vm1027, %v1142, %v1146
      %v1149 = vshrl.u32 %v973, 16
      %v1151 = vshll.u32 %v973, 16
      %v1153 = vrot.slane %v1151, 1
      %v1154 = vor.u32 %v1149, %v1153
      %v1156 = vshll.u32 %v1021, 16
      %v1158 = vrot.slane %v1156, 1
      %v1159 = vsel %vm1027, %v1154, %v1158
      %v1161 = vshrl.u32 %v974, 16
      %v1163 = vshll.u32 %v974, 16
      %v1165 = vrot.slane %v1163, 1
      %v1166 = vor.u32 %v1161, %v1165
      %v1168 = vshll.u32 %v1022, 16
      %v1170 = vrot.slane %v1168, 1
      %v1171 = vsel %vm1027, %v1166, %v1170
      %v1173 = vshrl.u32 %v975, 16
      %v1175 = vshll.u32 %v975, 16
      %v1177 = vrot.slane %v1175, 1
      %v1178 = vor.u32 %v1173, %v1177
      %v1180 = vshll.u32 %v1023, 16
      %v1182 = vrot.slane %v1180, 1
      %v1183 = vsel %vm1027, %v1178, %v1182
      %v1185 = vshrl.u32 %v976, 16
      %v1187 = vshll.u32 %v976, 16
      %v1189 = vrot.slane %v1187, 1
      %v1190 = vor.u32 %v1185, %v1189
      %v1192 = vshll.u32 %v1024, 16
      %v1194 = vrot.slane %v1192, 1
      %v1195 = vsel %vm1027, %v1190, %v1194
      %v1197 = vshrl.u32 %v977, 16
      %v1199 = vshll.u32 %v977, 16
      %v1201 = vrot.slane %v1199, 1
      %v1202 = vor.u32 %v1197, %v1201
      %v1204 = vshll.u32 %v1025, 16
      %v1206 = vrot.slane %v1204, 1
      %v1207 = vsel %vm1027, %v1202, %v1206
      %v1209 = vshrl.u32 %v978, 16
      %v1211 = vshll.u32 %v978, 16
      %v1213 = vrot.slane %v1211, 1
      %v1214 = vor.u32 %v1209, %v1213
      %v1216 = vshll.u32 %v1026, 16
      %v1218 = vrot.slane %v1216, 1
      %v1219 = vsel %vm1027, %v1214, %v1218
      %1220 = vrot.lane.b32.xlu0 %v1039, 4
      %v1221 = vpop.permute.xlu0 %1220
      %1222 = vrot.lane.b32.xlu0 %v1051, 4
      %v1223 = vpop.permute.xlu0 %1222
      %1224 = vrot.lane.b32.xlu0 %v1063, 4
      %v1225 = vpop.permute.xlu0 %1224
      %1226 = vrot.lane.b32.xlu0 %v1075, 4
      %v1227 = vpop.permute.xlu0 %1226
      %1228 = vrot.lane.b32.xlu0 %v1087, 4
      %v1229 = vpop.permute.xlu0 %1228
      %1230 = vrot.lane.b32.xlu0 %v1099, 4
      %v1231 = vpop.permute.xlu0 %1230
      %1232 = vrot.lane.b32.xlu0 %v1111, 4
      %v1233 = vpop.permute.xlu0 %1232
      %1234 = vrot.lane.b32.xlu0 %v1123, 4
      %v1235 = vpop.permute.xlu0 %1234
      %1236 = vrot.lane.b32.xlu0 %v1135, 4
      %v1237 = vpop.permute.xlu0 %1236
      %1238 = vrot.lane.b32.xlu0 %v1147, 4
      %v1239 = vpop.permute.xlu0 %1238
      %1240 = vrot.lane.b32.xlu0 %v1159, 4
      %v1241 = vpop.permute.xlu0 %1240
      %1242 = vrot.lane.b32.xlu0 %v1171, 4
      %v1243 = vpop.permute.xlu0 %1242
      %1244 = vrot.lane.b32.xlu0 %v1183, 4
      %v1245 = vpop.permute.xlu0 %1244
      %1246 = vrot.lane.b32.xlu0 %v1195, 4
      %v1247 = vpop.permute.xlu0 %1246
      %1248 = vrot.lane.b32.xlu0 %v1207, 4
      %v1249 = vpop.permute.xlu0 %1248
      %1250 = vrot.lane.b32.xlu0 %v1219, 4
      %v1251 = vpop.permute.xlu0 %1250
      %vm1252 = vcmask 1046528
      %v1253 = vrot.slane %v963, 1
      %v1254 = vrot.slane %v1011, 1
      %v1255 = vsel %vm1252, %v1253, %v1254
      %v1256 = vrot.slane %v964, 1
      %v1257 = vrot.slane %v1012, 1
      %v1258 = vsel %vm1252, %v1256, %v1257
      %v1259 = vrot.slane %v965, 1
      %v1260 = vrot.slane %v1013, 1
      %v1261 = vsel %vm1252, %v1259, %v1260
      %v1262 = vrot.slane %v966, 1
      %v1263 = vrot.slane %v1014, 1
      %v1264 = vsel %vm1252, %v1262, %v1263
      %v1265 = vrot.slane %v967, 1
      %v1266 = vrot.slane %v1015, 1
      %v1267 = vsel %vm1252, %v1265, %v1266
      %v1268 = vrot.slane %v968, 1
      %v1269 = vrot.slane %v1016, 1
      %v1270 = vsel %vm1252, %v1268, %v1269
      %v1271 = vrot.slane %v969, 1
      %v1272 = vrot.slane %v1017, 1
      %v1273 = vsel %vm1252, %v1271, %v1272
      %v1274 = vrot.slane %v970, 1
      %v1275 = vrot.slane %v1018, 1
      %v1276 = vsel %vm1252, %v1274, %v1275
      %v1277 = vrot.slane %v971, 1
      %v1278 = vrot.slane %v1019, 1
      %v1279 = vsel %vm1252, %v1277, %v1278
      %v1280 = vrot.slane %v972, 1
      %v1281 = vrot.slane %v1020, 1
      %v1282 = vsel %vm1252, %v1280, %v1281
      %v1283 = vrot.slane %v973, 1
      %v1284 = vrot.slane %v1021, 1
      %v1285 = vsel %vm1252, %v1283, %v1284
      %v1286 = vrot.slane %v974, 1
      %v1287 = vrot.slane %v1022, 1
      %v1288 = vsel %vm1252, %v1286, %v1287
      %v1289 = vrot.slane %v975, 1
      %v1290 = vrot.slane %v1023, 1
      %v1291 = vsel %vm1252, %v1289, %v1290
      %v1292 = vrot.slane %v976, 1
      %v1293 = vrot.slane %v1024, 1
      %v1294 = vsel %vm1252, %v1292, %v1293
      %v1295 = vrot.slane %v977, 1
      %v1296 = vrot.slane %v1025, 1
      %v1297 = vsel %vm1252, %v1295, %v1296
      %v1298 = vrot.slane %v978, 1
      %v1299 = vrot.slane %v1026, 1
      %v1300 = vsel %vm1252, %v1298, %v1299
      %1301 = vrot.lane.b32.xlu0 %v1255, 8
      %v1302 = vpop.permute.xlu0 %1301
      %1303 = vrot.lane.b32.xlu0 %v1258, 8
      %v1304 = vpop.permute.xlu0 %1303
      %1305 = vrot.lane.b32.xlu0 %v1261, 8
      %v1306 = vpop.permute.xlu0 %1305
      %1307 = vrot.lane.b32.xlu0 %v1264, 8
      %v1308 = vpop.permute.xlu0 %1307
      %1309 = vrot.lane.b32.xlu0 %v1267, 8
      %v1310 = vpop.permute.xlu0 %1309
      %1311 = vrot.lane.b32.xlu0 %v1270, 8
      %v1312 = vpop.permute.xlu0 %1311
      %1313 = vrot.lane.b32.xlu0 %v1273, 8
      %v1314 = vpop.permute.xlu0 %1313
      %1315 = vrot.lane.b32.xlu0 %v1276, 8
      %v1316 = vpop.permute.xlu0 %1315
      %1317 = vrot.lane.b32.xlu0 %v1279, 8
      %v1318 = vpop.permute.xlu0 %1317
      %1319 = vrot.lane.b32.xlu0 %v1282, 8
      %v1320 = vpop.permute.xlu0 %1319
      %1321 = vrot.lane.b32.xlu0 %v1285, 8
      %v1322 = vpop.permute.xlu0 %1321
      %1323 = vrot.lane.b32.xlu0 %v1288, 8
      %v1324 = vpop.permute.xlu0 %1323
      %1325 = vrot.lane.b32.xlu0 %v1291, 8
      %v1326 = vpop.permute.xlu0 %1325
      %1327 = vrot.lane.b32.xlu0 %v1294, 8
      %v1328 = vpop.permute.xlu0 %1327
      %1329 = vrot.lane.b32.xlu0 %v1297, 8
      %v1330 = vpop.permute.xlu0 %1329
      %1331 = vrot.lane.b32.xlu0 %v1300, 8
      %v1332 = vpop.permute.xlu0 %1331
      %vm1333 = vcmask 31744
      %v1335 = vsel %vm1333, %v963, %v1221
      %v1337 = vsel %vm1333, %v964, %v1223
      %v1339 = vsel %vm1333, %v965, %v1225
      %v1341 = vsel %vm1333, %v966, %v1227
      %v1343 = vsel %vm1333, %v967, %v1229
      %v1345 = vsel %vm1333, %v968, %v1231
      %v1347 = vsel %vm1333, %v969, %v1233
      %v1349 = vsel %vm1333, %v970, %v1235
      %v1351 = vsel %vm1333, %v971, %v1237
      %v1353 = vsel %vm1333, %v972, %v1239
      %v1355 = vsel %vm1333, %v973, %v1241
      %v1357 = vsel %vm1333, %v974, %v1243
      %v1359 = vsel %vm1333, %v975, %v1245
      %v1361 = vsel %vm1333, %v976, %v1247
      %v1363 = vsel %vm1333, %v977, %v1249
      %v1365 = vsel %vm1333, %v978, %v1251
      %vm1366 = vcmask 64512
      %v1368 = vsel %vm1366, %v1335, %v1302
      %v1370 = vsel %vm1366, %v1337, %v1304
      %v1372 = vsel %vm1366, %v1339, %v1306
      %v1374 = vsel %vm1366, %v1341, %v1308
      %v1376 = vsel %vm1366, %v1343, %v1310
      %v1378 = vsel %vm1366, %v1345, %v1312
      %v1380 = vsel %vm1366, %v1347, %v1314
      %v1382 = vsel %vm1366, %v1349, %v1316
      %v1384 = vsel %vm1366, %v1351, %v1318
      %v1386 = vsel %vm1366, %v1353, %v1320
      %v1388 = vsel %vm1366, %v1355, %v1322
      %v1390 = vsel %vm1366, %v1357, %v1324
      %v1392 = vsel %vm1366, %v1359, %v1326
      %v1394 = vsel %vm1366, %v1361, %v1328
      %v1396 = vsel %vm1366, %v1363, %v1330
      %v1398 = vsel %vm1366, %v1365, %v1332
      %v1399 = vld [vmem:[%s1] sm:$0xf]
      %v1400 = vld [vmem:[%s1 + $0x4] sm:$0x3]
      %v1403 = vunpack.c.l.b16 %v893
      %v1404 = vunpack.c.l.b16 %v894
      %v1405 = vpack.c.b16 %v1404, %v1403
      %v1407 = vunpack.c.l.b16 %v895
      %v1408 = vpack.c.b16 %v1407, %v1407
      %v1410 = vshrl.u32 %v1405, 16
      %v1412 = vshll.u32 %v1405, 16
      %v1414 = vrot.slane %v1412, 1
      %v1415 = vor.u32 %v1410, %v1414
      %v1417 = vshll.u32 %v1408, 16
      %v1419 = vrot.slane %v1417, 1
      %v1420 = vsel %vm1027, %v1415, %v1419
      %1421 = vrot.lane.b32.xlu0 %v1420, 4
      %v1422 = vpop.permute.xlu0 %1421
      %v1423 = vrot.slane %v1405, 1
      %v1424 = vrot.slane %v1408, 1
      %v1425 = vsel %vm1252, %v1423, %v1424
      %1426 = vrot.lane.b32.xlu0 %v1425, 8
      %v1427 = vpop.permute.xlu0 %1426
      %v1429 = vsel %vm1333, %v1405, %v1422
      %v1431 = vsel %vm1366, %v1429, %v1427
      %s1432 = scalar_lea.vmem %s1, 8
      %v1433 = vld [vmem:[%s1432] sm:$0xf]
      %v1434 = vld [vmem:[%s1432 + $0x4] sm:$0x3]
      %v1437 = vunpack.c.l.b16 %v1433
      %v1438 = vunpack.c.l.b16 %v1434
      %v1439 = vpack.c.b16 %v1438, %v1437
      %vm1440 = vcmask 97280
      %v1441 = vsel %vm1440, %v1370, 0
      %v1443 = vsel %vm1440, %v1372, 0
      %v1445 = vsel %vm1440, %v1374, 0
      %v1447 = vsel %vm1440, %v1376, 0
      %v1449 = vsel %vm1440, %v1378, 0
      %v1451 = vsel %vm1440, %v1380, 0
      %v1453 = vsel %vm1440, %v1382, 0
      %v1455 = vsel %vm1440, %v1384, 0
      %v1457 = vsel %vm1440, %v1386, 0
      %v1459 = vsel %vm1440, %v1388, 0
      %v1461 = vsel %vm1440, %v1390, 0
      %v1463 = vsel %vm1440, %v1392, 0
      %v1465 = vsel %vm1440, %v1394, 0
      %v1467 = vsel %vm1440, %v1396, 0
      %v1469 = vsel %vm1440, %v1398, 0
      %v1471 = vsel %vm1440, %v1431, 0
      %vm1473 = vcmask 1045504
      %v1475 = vsel %vm1473, %v1439, 0
      %1477 = vmatpush.bf16.msra.mxu0 0
      %1478 = vmatpush.bf16.msra.mxu0 0
      %1479 = vmatpush.bf16.msra.mxu0 0
      %1480 = vmatpush.bf16.msra.mxu0 0
      %1481 = vmatpush.bf16.msra.mxu0 0
      %1482 = vmatpush.bf16.msra.mxu0 0
      %1483 = vmatpush.bf16.msra.mxu0 0
      %1484 = vmatpush.bf16.msra.mxu0 %v1475
      %1485 = vmatmul.bf16.gmra.mxu0 %v1441
      %v1486 = vpop.f32.mrf.mxu0
      %v1487 = vadd.f32 0.0, %v1486
      %v1488 = vpop.f32.mrf.mxu0
      %v1489 = vadd.f32 0.0, %v1488
      %1490 = vmatmul.bf16.gmra.mxu0 %v1443
      %v1491 = vpop.f32.mrf.mxu0
      %v1492 = vadd.f32 0.0, %v1491
      %v1493 = vpop.f32.mrf.mxu0
      %v1494 = vadd.f32 0.0, %v1493
      %1495 = vmatmul.bf16.gmra.mxu0 %v1445
      %v1496 = vpop.f32.mrf.mxu0
      %v1497 = vadd.f32 0.0, %v1496
      %v1498 = vpop.f32.mrf.mxu0
      %v1499 = vadd.f32 0.0, %v1498
      %1500 = vmatmul.bf16.gmra.mxu0 %v1447
      %v1501 = vpop.f32.mrf.mxu0
      %v1502 = vadd.f32 0.0, %v1501
      %v1503 = vpop.f32.mrf.mxu0
      %v1504 = vadd.f32 0.0, %v1503
      %1505 = vmatmul.bf16.gmra.mxu0 %v1449
      %v1506 = vpop.f32.mrf.mxu0
      %v1507 = vadd.f32 0.0, %v1506
      %v1508 = vpop.f32.mrf.mxu0
      %v1509 = vadd.f32 0.0, %v1508
      %1510 = vmatmul.bf16.gmra.mxu0 %v1451
      %v1511 = vpop.f32.mrf.mxu0
      %v1512 = vadd.f32 0.0, %v1511
      %v1513 = vpop.f32.mrf.mxu0
      %v1514 = vadd.f32 0.0, %v1513
      %1515 = vmatmul.bf16.gmra.mxu0 %v1453
      %v1516 = vpop.f32.mrf.mxu0
      %v1517 = vadd.f32 0.0, %v1516
      %v1518 = vpop.f32.mrf.mxu0
      %v1519 = vadd.f32 0.0, %v1518
      %1520 = vmatmul.bf16.gmra.mxu0 %v1455
      %v1521 = vpop.f32.mrf.mxu0
      %v1522 = vadd.f32 0.0, %v1521
      %v1523 = vpop.f32.mrf.mxu0
      %v1524 = vadd.f32 0.0, %v1523
      %1525 = vmatmul.bf16.gmra.mxu0 %v1457
      %v1526 = vpop.f32.mrf.mxu0
      %v1527 = vadd.f32 0.0, %v1526
      %v1528 = vpop.f32.mrf.mxu0
      %v1529 = vadd.f32 0.0, %v1528
      %1530 = vmatmul.bf16.gmra.mxu0 %v1459
      %v1531 = vpop.f32.mrf.mxu0
      %v1532 = vadd.f32 0.0, %v1531
      %v1533 = vpop.f32.mrf.mxu0
      %v1534 = vadd.f32 0.0, %v1533
      %1535 = vmatmul.bf16.gmra.mxu0 %v1461
      %v1536 = vpop.f32.mrf.mxu0
      %v1537 = vadd.f32 0.0, %v1536
      %v1538 = vpop.f32.mrf.mxu0
      %v1539 = vadd.f32 0.0, %v1538
      %1540 = vmatmul.bf16.gmra.mxu0 %v1463
      %v1541 = vpop.f32.mrf.mxu0
      %v1542 = vadd.f32 0.0, %v1541
      %v1543 = vpop.f32.mrf.mxu0
      %v1544 = vadd.f32 0.0, %v1543
      %1545 = vmatmul.bf16.gmra.mxu0 %v1465
      %v1546 = vpop.f32.mrf.mxu0
      %v1547 = vadd.f32 0.0, %v1546
      %v1548 = vpop.f32.mrf.mxu0
      %v1549 = vadd.f32 0.0, %v1548
      %1550 = vmatmul.bf16.gmra.mxu0 %v1467
      %v1551 = vpop.f32.mrf.mxu0
      %v1552 = vadd.f32 0.0, %v1551
      %v1553 = vpop.f32.mrf.mxu0
      %v1554 = vadd.f32 0.0, %v1553
      %1555 = vmatmul.bf16.gmra.mxu0 %v1469
      %v1556 = vpop.f32.mrf.mxu0
      %v1557 = vadd.f32 0.0, %v1556
      %v1558 = vpop.f32.mrf.mxu0
      %v1559 = vadd.f32 0.0, %v1558
      %1560 = vmatmul.bf16.gmra.mxu0 %v1471
      %v1561 = vpop.f32.mrf.mxu0
      %v1562 = vadd.f32 0.0, %v1561
      %v1563 = vpop.f32.mrf.mxu0
      %v1564 = vadd.f32 0.0, %v1563
      %1565 = vdwg.mxu0
      %v1568 = vunpack.c.l.b16 %v1399
      %v1569 = vunpack.c.l.b16 %v1400
      %v1570 = vpack.c.b16 %v1569, %v1568
      %v1571 = vsel %vm1440, %v1368, 0
      %v1574 = vsel %vm1473, %v1570, 0
      %1576 = vmatpush.bf16.msra.mxu0 0
      %1577 = vmatpush.bf16.msra.mxu0 0
      %1578 = vmatpush.bf16.msra.mxu0 0
      %1579 = vmatpush.bf16.msra.mxu0 0
      %1580 = vmatpush.bf16.msra.mxu0 0
      %1581 = vmatpush.bf16.msra.mxu0 0
      %1582 = vmatpush.bf16.msra.mxu0 0
      %1583 = vmatpush.bf16.msra.mxu0 %v1574
      %1584 = vmatmul.bf16.gmra.mxu0 %v1571
      %v1585 = vpop.f32.mrf.mxu0
      %v1586 = vadd.f32 %v1487, %v1585
      %v1587 = vpop.f32.mrf.mxu0
      %v1588 = vadd.f32 %v1489, %v1587
      %1589 = vmatmul.bf16.gmra.mxu0 %v1441
      %v1590 = vpop.f32.mrf.mxu0
      %v1591 = vadd.f32 %v1492, %v1590
      %v1592 = vpop.f32.mrf.mxu0
      %v1593 = vadd.f32 %v1494, %v1592
      %1594 = vmatmul.bf16.gmra.mxu0 %v1443
      %v1595 = vpop.f32.mrf.mxu0
      %v1596 = vadd.f32 %v1497, %v1595
      %v1597 = vpop.f32.mrf.mxu0
      %v1598 = vadd.f32 %v1499, %v1597
      %1599 = vmatmul.bf16.gmra.mxu0 %v1445
      %v1600 = vpop.f32.mrf.mxu0
      %v1601 = vadd.f32 %v1502, %v1600
      %v1602 = vpop.f32.mrf.mxu0
      %v1603 = vadd.f32 %v1504, %v1602
      %1604 = vmatmul.bf16.gmra.mxu0 %v1447
      %v1605 = vpop.f32.mrf.mxu0
      %v1606 = vadd.f32 %v1507, %v1605
      %v1607 = vpop.f32.mrf.mxu0
      %v1608 = vadd.f32 %v1509, %v1607
      %1609 = vmatmul.bf16.gmra.mxu0 %v1449
      %v1610 = vpop.f32.mrf.mxu0
      %v1611 = vadd.f32 %v1512, %v1610
      %v1612 = vpop.f32.mrf.mxu0
      %v1613 = vadd.f32 %v1514, %v1612
      %1614 = vmatmul.bf16.gmra.mxu0 %v1451
      %v1615 = vpop.f32.mrf.mxu0
      %v1616 = vadd.f32 %v1517, %v1615
      %v1617 = vpop.f32.mrf.mxu0
      %v1618 = vadd.f32 %v1519, %v1617
      %1619 = vmatmul.bf16.gmra.mxu0 %v1453
      %v1620 = vpop.f32.mrf.mxu0
      %v1621 = vadd.f32 %v1522, %v1620
      %v1622 = vpop.f32.mrf.mxu0
      %v1623 = vadd.f32 %v1524, %v1622
      %1624 = vmatmul.bf16.gmra.mxu0 %v1455
      %v1625 = vpop.f32.mrf.mxu0
      %v1626 = vadd.f32 %v1527, %v1625
      %v1627 = vpop.f32.mrf.mxu0
      %v1628 = vadd.f32 %v1529, %v1627
      %1629 = vmatmul.bf16.gmra.mxu0 %v1457
      %v1630 = vpop.f32.mrf.mxu0
      %v1631 = vadd.f32 %v1532, %v1630
      %v1632 = vpop.f32.mrf.mxu0
      %v1633 = vadd.f32 %v1534, %v1632
      %1634 = vmatmul.bf16.gmra.mxu0 %v1459
      %v1635 = vpop.f32.mrf.mxu0
      %v1636 = vadd.f32 %v1537, %v1635
      %v1637 = vpop.f32.mrf.mxu0
      %v1638 = vadd.f32 %v1539, %v1637
      %1639 = vmatmul.bf16.gmra.mxu0 %v1461
      %v1640 = vpop.f32.mrf.mxu0
      %v1641 = vadd.f32 %v1542, %v1640
      %v1642 = vpop.f32.mrf.mxu0
      %v1643 = vadd.f32 %v1544, %v1642
      %1644 = vmatmul.bf16.gmra.mxu0 %v1463
      %v1645 = vpop.f32.mrf.mxu0
      %v1646 = vadd.f32 %v1547, %v1645
      %v1647 = vpop.f32.mrf.mxu0
      %v1648 = vadd.f32 %v1549, %v1647
      %1649 = vmatmul.bf16.gmra.mxu0 %v1465
      %v1650 = vpop.f32.mrf.mxu0
      %v1651 = vadd.f32 %v1552, %v1650
      %v1652 = vpop.f32.mrf.mxu0
      %v1653 = vadd.f32 %v1554, %v1652
      %1654 = vmatmul.bf16.gmra.mxu0 %v1467
      %v1655 = vpop.f32.mrf.mxu0
      %v1656 = vadd.f32 %v1557, %v1655
      %v1657 = vpop.f32.mrf.mxu0
      %v1658 = vadd.f32 %v1559, %v1657
      %1659 = vmatmul.bf16.gmra.mxu0 %v1469
      %v1660 = vpop.f32.mrf.mxu0
      %v1661 = vadd.f32 %v1562, %v1660
      %v1662 = vpop.f32.mrf.mxu0
      %v1663 = vadd.f32 %v1564, %v1662
      %1664 = vdwg.mxu0
      %v1667 = vunpack.c.l.b16 %v896
      %v1668 = vunpack.c.l.b16 %v897
      %v1669 = vpack.c.b16 %v1668, %v1667
      %v1671 = vunpack.c.l.b16 %v898
      %v1672 = vpack.c.b16 %v1671, %v1671
      %v1674 = vshrl.u32 %v1669, 16
      %v1676 = vshll.u32 %v1669, 16
      %v1678 = vrot.slane %v1676, 1
      %v1679 = vor.u32 %v1674, %v1678
      %v1681 = vshll.u32 %v1672, 16
      %v1683 = vrot.slane %v1681, 1
      %v1684 = vsel %vm1027, %v1679, %v1683
      %1685 = vrot.lane.b32.xlu0 %v1684, 4
      %v1686 = vpop.permute.xlu0 %1685
      %v1687 = vrot.slane %v1669, 1
      %v1688 = vrot.slane %v1672, 1
      %v1689 = vsel %vm1252, %v1687, %v1688
      %1690 = vrot.lane.b32.xlu0 %v1689, 8
      %v1691 = vpop.permute.xlu0 %1690
      %v1693 = vsel %vm1333, %v1669, %v1686
      %v1695 = vsel %vm1366, %v1693, %v1691
      %s1696 = scalar_lea.vmem %s1, 16
      %v1697 = vld [vmem:[%s1696] sm:$0xf]
      %v1698 = vld [vmem:[%s1696 + $0x4] sm:$0x3]
      %v1701 = vunpack.c.l.b16 %v1697
      %v1702 = vunpack.c.l.b16 %v1698
      %v1703 = vpack.c.b16 %v1702, %v1701
      %v1704 = vsel %vm1440, %v1695, 0
      %v1707 = vsel %vm1473, %v1703, 0
      %1709 = vmatpush.bf16.msra.mxu0 0
      %1710 = vmatpush.bf16.msra.mxu0 0
      %1711 = vmatpush.bf16.msra.mxu0 0
      %1712 = vmatpush.bf16.msra.mxu0 0
      %1713 = vmatpush.bf16.msra.mxu0 0
      %1714 = vmatpush.bf16.msra.mxu0 0
      %1715 = vmatpush.bf16.msra.mxu0 0
      %1716 = vmatpush.bf16.msra.mxu0 %v1707
      %1717 = vmatmul.bf16.gmra.mxu0 %v1443
      %v1718 = vpop.f32.mrf.mxu0
      %v1719 = vadd.f32 0.0, %v1718
      %v1720 = vpop.f32.mrf.mxu0
      %v1721 = vadd.f32 0.0, %v1720
      %1722 = vmatmul.bf16.gmra.mxu0 %v1445
      %v1723 = vpop.f32.mrf.mxu0
      %v1724 = vadd.f32 0.0, %v1723
      %v1725 = vpop.f32.mrf.mxu0
      %v1726 = vadd.f32 0.0, %v1725
      %1727 = vmatmul.bf16.gmra.mxu0 %v1447
      %v1728 = vpop.f32.mrf.mxu0
      %v1729 = vadd.f32 0.0, %v1728
      %v1730 = vpop.f32.mrf.mxu0
      %v1731 = vadd.f32 0.0, %v1730
      %1732 = vmatmul.bf16.gmra.mxu0 %v1449
      %v1733 = vpop.f32.mrf.mxu0
      %v1734 = vadd.f32 0.0, %v1733
      %v1735 = vpop.f32.mrf.mxu0
      %v1736 = vadd.f32 0.0, %v1735
      %1737 = vmatmul.bf16.gmra.mxu0 %v1451
      %v1738 = vpop.f32.mrf.mxu0
      %v1739 = vadd.f32 0.0, %v1738
      %v1740 = vpop.f32.mrf.mxu0
      %v1741 = vadd.f32 0.0, %v1740
      %1742 = vmatmul.bf16.gmra.mxu0 %v1453
      %v1743 = vpop.f32.mrf.mxu0
      %v1744 = vadd.f32 0.0, %v1743
      %v1745 = vpop.f32.mrf.mxu0
      %v1746 = vadd.f32 0.0, %v1745
      %1747 = vmatmul.bf16.gmra.mxu0 %v1455
      %v1748 = vpop.f32.mrf.mxu0
      %v1749 = vadd.f32 0.0, %v1748
      %v1750 = vpop.f32.mrf.mxu0
      %v1751 = vadd.f32 0.0, %v1750
      %1752 = vmatmul.bf16.gmra.mxu0 %v1457
      %v1753 = vpop.f32.mrf.mxu0
      %v1754 = vadd.f32 0.0, %v1753
      %v1755 = vpop.f32.mrf.mxu0
      %v1756 = vadd.f32 0.0, %v1755
      %1757 = vmatmul.bf16.gmra.mxu0 %v1459
      %v1758 = vpop.f32.mrf.mxu0
      %v1759 = vadd.f32 0.0, %v1758
      %v1760 = vpop.f32.mrf.mxu0
      %v1761 = vadd.f32 0.0, %v1760
      %1762 = vmatmul.bf16.gmra.mxu0 %v1461
      %v1763 = vpop.f32.mrf.mxu0
      %v1764 = vadd.f32 0.0, %v1763
      %v1765 = vpop.f32.mrf.mxu0
      %v1766 = vadd.f32 0.0, %v1765
      %1767 = vmatmul.bf16.gmra.mxu0 %v1463
      %v1768 = vpop.f32.mrf.mxu0
      %v1769 = vadd.f32 0.0, %v1768
      %v1770 = vpop.f32.mrf.mxu0
      %v1771 = vadd.f32 0.0, %v1770
      %1772 = vmatmul.bf16.gmra.mxu0 %v1465
      %v1773 = vpop.f32.mrf.mxu0
      %v1774 = vadd.f32 0.0, %v1773
      %v1775 = vpop.f32.mrf.mxu0
      %v1776 = vadd.f32 0.0, %v1775
      %1777 = vmatmul.bf16.gmra.mxu0 %v1467
      %v1778 = vpop.f32.mrf.mxu0
      %v1779 = vadd.f32 0.0, %v1778
      %v1780 = vpop.f32.mrf.mxu0
      %v1781 = vadd.f32 0.0, %v1780
      %1782 = vmatmul.bf16.gmra.mxu0 %v1469
      %v1783 = vpop.f32.mrf.mxu0
      %v1784 = vadd.f32 0.0, %v1783
      %v1785 = vpop.f32.mrf.mxu0
      %v1786 = vadd.f32 0.0, %v1785
      %1787 = vmatmul.bf16.gmra.mxu0 %v1471
      %v1788 = vpop.f32.mrf.mxu0
      %v1789 = vadd.f32 0.0, %v1788
      %v1790 = vpop.f32.mrf.mxu0
      %v1791 = vadd.f32 0.0, %v1790
      %1792 = vmatmul.bf16.gmra.mxu0 %v1704
      %v1793 = vpop.f32.mrf.mxu0
      %v1794 = vadd.f32 0.0, %v1793
      %v1795 = vpop.f32.mrf.mxu0
      %v1796 = vadd.f32 0.0, %v1795
      %1797 = vdwg.mxu0
      %v1798 = vadd.f32 %v1586, %v1719
      %v1799 = vadd.f32 %v1588, %v1721
      %v1800 = vadd.f32 %v1591, %v1724
      %v1801 = vadd.f32 %v1593, %v1726
      %v1802 = vadd.f32 %v1596, %v1729
      %v1803 = vadd.f32 %v1598, %v1731
      %v1804 = vadd.f32 %v1601, %v1734
      %v1805 = vadd.f32 %v1603, %v1736
      %v1806 = vadd.f32 %v1606, %v1739
      %v1807 = vadd.f32 %v1608, %v1741
      %v1808 = vadd.f32 %v1611, %v1744
      %v1809 = vadd.f32 %v1613, %v1746
      %v1810 = vadd.f32 %v1616, %v1749
      %v1811 = vadd.f32 %v1618, %v1751
      %v1812 = vadd.f32 %v1621, %v1754
      %v1813 = vadd.f32 %v1623, %v1756
      %v1814 = vadd.f32 %v1626, %v1759
      %v1815 = vadd.f32 %v1628, %v1761
      %v1816 = vadd.f32 %v1631, %v1764
      %v1817 = vadd.f32 %v1633, %v1766
      %v1818 = vadd.f32 %v1636, %v1769
      %v1819 = vadd.f32 %v1638, %v1771
      %v1820 = vadd.f32 %v1641, %v1774
      %v1821 = vadd.f32 %v1643, %v1776
      %v1822 = vadd.f32 %v1646, %v1779
      %v1823 = vadd.f32 %v1648, %v1781
      %v1824 = vadd.f32 %v1651, %v1784
      %v1825 = vadd.f32 %v1653, %v1786
      %v1826 = vadd.f32 %v1656, %v1789
      %v1827 = vadd.f32 %v1658, %v1791
      %v1828 = vadd.f32 %v1661, %v1794
      %v1829 = vadd.f32 %v1663, %v1796
      %v1830 = vld [vmem:[%s2] sm:$0x1]
      %v1832 = vperm.slane %v1830, 0
      %v1834 = vadd.f32 %v1798, %v1832
      %v1835 = vadd.f32 %v1799, %v1832
      %v1836 = vadd.f32 %v1800, %v1832
      %v1837 = vadd.f32 %v1801, %v1832
      %v1838 = vadd.f32 %v1802, %v1832
      %v1839 = vadd.f32 %v1803, %v1832
      %v1840 = vadd.f32 %v1804, %v1832
      %v1841 = vadd.f32 %v1805, %v1832
      %v1842 = vadd.f32 %v1806, %v1832
      %v1843 = vadd.f32 %v1807, %v1832
      %v1844 = vadd.f32 %v1808, %v1832
      %v1845 = vadd.f32 %v1809, %v1832
      %v1846 = vadd.f32 %v1810, %v1832
      %v1847 = vadd.f32 %v1811, %v1832
      %v1848 = vadd.f32 %v1812, %v1832
      %v1849 = vadd.f32 %v1813, %v1832
      %v1850 = vadd.f32 %v1814, %v1832
      %v1851 = vadd.f32 %v1815, %v1832
      %v1852 = vadd.f32 %v1816, %v1832
      %v1853 = vadd.f32 %v1817, %v1832
      %v1854 = vadd.f32 %v1818, %v1832
      %v1855 = vadd.f32 %v1819, %v1832
      %v1856 = vadd.f32 %v1820, %v1832
      %v1857 = vadd.f32 %v1821, %v1832
      %v1858 = vadd.f32 %v1822, %v1832
      %v1859 = vadd.f32 %v1823, %v1832
      %v1860 = vadd.f32 %v1824, %v1832
      %v1861 = vadd.f32 %v1825, %v1832
      %v1862 = vadd.f32 %v1826, %v1832
      %v1863 = vadd.f32 %v1827, %v1832
      %v1864 = vadd.f32 %v1828, %v1832
      %v1865 = vadd.f32 %v1829, %v1832
      %v1866 = vmax.f32 %v1834, 0.0
      %v1867 = vmax.f32 %v1835, 0.0
      %v1868 = vmax.f32 %v1836, 0.0
      %v1869 = vmax.f32 %v1837, 0.0
      %v1870 = vmax.f32 %v1838, 0.0
      %v1871 = vmax.f32 %v1839, 0.0
      %v1872 = vmax.f32 %v1840, 0.0
      %v1873 = vmax.f32 %v1841, 0.0
      %v1874 = vmax.f32 %v1842, 0.0
      %v1875 = vmax.f32 %v1843, 0.0
      %v1876 = vmax.f32 %v1844, 0.0
      %v1877 = vmax.f32 %v1845, 0.0
      %v1878 = vmax.f32 %v1846, 0.0
      %v1879 = vmax.f32 %v1847, 0.0
      %v1880 = vmax.f32 %v1848, 0.0
      %v1881 = vmax.f32 %v1849, 0.0
      %v1882 = vmax.f32 %v1850, 0.0
      %v1883 = vmax.f32 %v1851, 0.0
      %v1884 = vmax.f32 %v1852, 0.0
      %v1885 = vmax.f32 %v1853, 0.0
      %v1886 = vmax.f32 %v1854, 0.0
      %v1887 = vmax.f32 %v1855, 0.0
      %v1888 = vmax.f32 %v1856, 0.0
      %v1889 = vmax.f32 %v1857, 0.0
      %v1890 = vmax.f32 %v1858, 0.0
      %v1891 = vmax.f32 %v1859, 0.0
      %v1892 = vmax.f32 %v1860, 0.0
      %v1893 = vmax.f32 %v1861, 0.0
      %v1894 = vmax.f32 %v1862, 0.0
      %v1895 = vmax.f32 %v1863, 0.0
      %v1896 = vmax.f32 %v1864, 0.0
      %v1897 = vmax.f32 %v1865, 0.0
      %vm1898 = vcmask 60416
      %1899 = vst.msk [vmem:[#allocation3] sm:$0xf] %vm1898, 0
      %1900 = vst.msk [vmem:[#allocation3 + $0x4] sm:$0xf] %vm1898, 0
      %vm1901 = vcmask 57344
      %1902 = vst.msk [vmem:[#allocation3 + $0x8] sm:$0x1] %vm1901, 0
      %s1903 = scalar_lea.vmem [#allocation3], 204
      %1904 = vst.msk [vmem:[%s1903] sm:$0xf] %vm1898, 0
      %1905 = vst.msk [vmem:[%s1903 + $0x4] sm:$0xf] %vm1898, 0
      %1906 = vst.msk [vmem:[%s1903 + $0x8] sm:$0x1] %vm1901, 0
      %s1907 = scalar_lea.vmem [#allocation3], 12
      %vm1908 = vcmask 57344
      %vm1909 = vmand %vm1908, %vm309
      %v1910 = vld [vmem:[%s1907] sm:$0x1]
      %v1911 = vsel %vm1909, 0, %v1910
      %1912 = vst [vmem:[%s1907] sm:$0x1] %v1911
      %v1913 = vld [vmem:[%s1907 + $0xc] sm:$0x1]
      %v1914 = vsel %vm1909, 0, %v1913
      %1915 = vst [vmem:[%s1907 + $0xc] sm:$0x1] %v1914
      %v1916 = vld [vmem:[%s1907 + $0x18] sm:$0x1]
      %v1917 = vsel %vm1909, 0, %v1916
      %1918 = vst [vmem:[%s1907 + $0x18] sm:$0x1] %v1917
      %v1919 = vld [vmem:[%s1907 + $0x24] sm:$0x1]
      %v1920 = vsel %vm1909, 0, %v1919
      %1921 = vst [vmem:[%s1907 + $0x24] sm:$0x1] %v1920
      %v1922 = vld [vmem:[%s1907 + $0x30] sm:$0x1]
      %v1923 = vsel %vm1909, 0, %v1922
      %1924 = vst [vmem:[%s1907 + $0x30] sm:$0x1] %v1923
      %v1925 = vld [vmem:[%s1907 + $0x3c] sm:$0x1]
      %v1926 = vsel %vm1909, 0, %v1925
      %1927 = vst [vmem:[%s1907 + $0x3c] sm:$0x1] %v1926
      %v1928 = vld [vmem:[%s1907 + $0x48] sm:$0x1]
      %v1929 = vsel %vm1909, 0, %v1928
      %1930 = vst [vmem:[%s1907 + $0x48] sm:$0x1] %v1929
      %v1931 = vld [vmem:[%s1907 + $0x54] sm:$0x1]
      %v1932 = vsel %vm1909, 0, %v1931
      %1933 = vst [vmem:[%s1907 + $0x54] sm:$0x1] %v1932
      %v1934 = vld [vmem:[%s1907 + $0x60] sm:$0x1]
      %v1935 = vsel %vm1909, 0, %v1934
      %1936 = vst [vmem:[%s1907 + $0x60] sm:$0x1] %v1935
      %v1937 = vld [vmem:[%s1907 + $0x6c] sm:$0x1]
      %v1938 = vsel %vm1909, 0, %v1937
      %1939 = vst [vmem:[%s1907 + $0x6c] sm:$0x1] %v1938
      %v1940 = vld [vmem:[%s1907 + $0x78] sm:$0x1]
      %v1941 = vsel %vm1909, 0, %v1940
      %1942 = vst [vmem:[%s1907 + $0x78] sm:$0x1] %v1941
      %v1943 = vld [vmem:[%s1907 + $0x84] sm:$0x1]
      %v1944 = vsel %vm1909, 0, %v1943
      %1945 = vst [vmem:[%s1907 + $0x84] sm:$0x1] %v1944
      %v1946 = vld [vmem:[%s1907 + $0x90] sm:$0x1]
      %v1947 = vsel %vm1909, 0, %v1946
      %1948 = vst [vmem:[%s1907 + $0x90] sm:$0x1] %v1947
      %v1949 = vld [vmem:[%s1907 + $0x9c] sm:$0x1]
      %v1950 = vsel %vm1909, 0, %v1949
      %1951 = vst [vmem:[%s1907 + $0x9c] sm:$0x1] %v1950
      %v1952 = vld [vmem:[%s1907 + $0xa8] sm:$0x1]
      %v1953 = vsel %vm1909, 0, %v1952
      %1954 = vst [vmem:[%s1907 + $0xa8] sm:$0x1] %v1953
      %v1955 = vld [vmem:[%s1907 + $0xb4] sm:$0x1]
      %v1956 = vsel %vm1909, 0, %v1955
      %1957 = vst [vmem:[%s1907 + $0xb4] sm:$0x1] %v1956
      %vm1958 = vmand %vm1908, %vm359
      %v1959 = vld [vmem:[%s1907 + $0x8] sm:$0x1]
      %v1960 = vsel %vm1958, 0, %v1959
      %1961 = vst [vmem:[%s1907 + $0x8] sm:$0x1] %v1960
      %v1962 = vld [vmem:[%s1907 + $0x14] sm:$0x1]
      %v1963 = vsel %vm1958, 0, %v1962
      %1964 = vst [vmem:[%s1907 + $0x14] sm:$0x1] %v1963
      %v1965 = vld [vmem:[%s1907 + $0x20] sm:$0x1]
      %v1966 = vsel %vm1958, 0, %v1965
      %1967 = vst [vmem:[%s1907 + $0x20] sm:$0x1] %v1966
      %v1968 = vld [vmem:[%s1907 + $0x2c] sm:$0x1]
      %v1969 = vsel %vm1958, 0, %v1968
      %1970 = vst [vmem:[%s1907 + $0x2c] sm:$0x1] %v1969
      %v1971 = vld [vmem:[%s1907 + $0x38] sm:$0x1]
      %v1972 = vsel %vm1958, 0, %v1971
      %1973 = vst [vmem:[%s1907 + $0x38] sm:$0x1] %v1972
      %v1974 = vld [vmem:[%s1907 + $0x44] sm:$0x1]
      %v1975 = vsel %vm1958, 0, %v1974
      %1976 = vst [vmem:[%s1907 + $0x44] sm:$0x1] %v1975
      %v1977 = vld [vmem:[%s1907 + $0x50] sm:$0x1]
      %v1978 = vsel %vm1958, 0, %v1977
      %1979 = vst [vmem:[%s1907 + $0x50] sm:$0x1] %v1978
      %v1980 = vld [vmem:[%s1907 + $0x5c] sm:$0x1]
      %v1981 = vsel %vm1958, 0, %v1980
      %1982 = vst [vmem:[%s1907 + $0x5c] sm:$0x1] %v1981
      %v1983 = vld [vmem:[%s1907 + $0x68] sm:$0x1]
      %v1984 = vsel %vm1958, 0, %v1983
      %1985 = vst [vmem:[%s1907 + $0x68] sm:$0x1] %v1984
      %v1986 = vld [vmem:[%s1907 + $0x74] sm:$0x1]
      %v1987 = vsel %vm1958, 0, %v1986
      %1988 = vst [vmem:[%s1907 + $0x74] sm:$0x1] %v1987
      %v1989 = vld [vmem:[%s1907 + $0x80] sm:$0x1]
      %v1990 = vsel %vm1958, 0, %v1989
      %1991 = vst [vmem:[%s1907 + $0x80] sm:$0x1] %v1990
      %v1992 = vld [vmem:[%s1907 + $0x8c] sm:$0x1]
      %v1993 = vsel %vm1958, 0, %v1992
      %1994 = vst [vmem:[%s1907 + $0x8c] sm:$0x1] %v1993
      %v1995 = vld [vmem:[%s1907 + $0x98] sm:$0x1]
      %v1996 = vsel %vm1958, 0, %v1995
      %1997 = vst [vmem:[%s1907 + $0x98] sm:$0x1] %v1996
      %v1998 = vld [vmem:[%s1907 + $0xa4] sm:$0x1]
      %v1999 = vsel %vm1958, 0, %v1998
      %2000 = vst [vmem:[%s1907 + $0xa4] sm:$0x1] %v1999
      %v2001 = vld [vmem:[%s1907 + $0xb0] sm:$0x1]
      %v2002 = vsel %vm1958, 0, %v2001
      %2003 = vst [vmem:[%s1907 + $0xb0] sm:$0x1] %v2002
      %v2004 = vld [vmem:[%s1907 + $0xbc] sm:$0x1]
      %v2005 = vsel %vm1958, 0, %v2004
      %2006 = vst [vmem:[%s1907 + $0xbc] sm:$0x1] %v2005
      %v2007 = vpack.c.bf16 %v1866, %v1866
      %v2008 = vpack.c.bf16 %v1867, %v1867
      %v2009 = vpack.c.bf16 %v1868, %v1868
      %v2010 = vpack.c.bf16 %v1869, %v1869
      %v2011 = vpack.c.bf16 %v1870, %v1870
      %v2012 = vpack.c.bf16 %v1871, %v1871
      %v2013 = vpack.c.bf16 %v1872, %v1872
      %v2014 = vpack.c.bf16 %v1873, %v1873
      %v2015 = vpack.c.bf16 %v1874, %v1874
      %v2016 = vpack.c.bf16 %v1875, %v1875
      %v2017 = vpack.c.bf16 %v1876, %v1876
      %v2018 = vpack.c.bf16 %v1877, %v1877
      %v2019 = vpack.c.bf16 %v1878, %v1878
      %v2020 = vpack.c.bf16 %v1879, %v1879
      %v2021 = vpack.c.bf16 %v1880, %v1880
      %v2022 = vpack.c.bf16 %v1881, %v1881
      %v2023 = vpack.c.bf16 %v1882, %v1882
      %v2024 = vpack.c.bf16 %v1883, %v1883
      %v2025 = vpack.c.bf16 %v1884, %v1884
      %v2026 = vpack.c.bf16 %v1885, %v1885
      %v2027 = vpack.c.bf16 %v1886, %v1886
      %v2028 = vpack.c.bf16 %v1887, %v1887
      %v2029 = vpack.c.bf16 %v1888, %v1888
      %v2030 = vpack.c.bf16 %v1889, %v1889
      %v2031 = vpack.c.bf16 %v1890, %v1890
      %v2032 = vpack.c.bf16 %v1891, %v1891
      %v2033 = vpack.c.bf16 %v1892, %v1892
      %v2034 = vpack.c.bf16 %v1893, %v1893
      %v2035 = vpack.c.bf16 %v1894, %v1894
      %v2036 = vpack.c.bf16 %v1895, %v1895
      %v2037 = vpack.c.bf16 %v1896, %v1896
      %v2038 = vpack.c.bf16 %v1897, %v1897
      %v2040 = vshrl.u32 %v2007, 16
      %v2042 = vrot.slane %v2040, 7
      %v2043 = vshll.u32 %v2007, 16
      %v2045 = vor.u32 %v2042, %v2043
      %v2046 = vrot.slane %v2042, 4
      %v2048 = vshrl.u32 %v2008, 16
      %v2050 = vrot.slane %v2048, 7
      %v2051 = vshll.u32 %v2008, 16
      %v2053 = vor.u32 %v2050, %v2051
      %v2054 = vsel %vm410, %v2046, %v2053
      %v2055 = vrot.slane %v2050, 4
      %v2057 = vshrl.u32 %v2009, 16
      %v2059 = vrot.slane %v2057, 7
      %v2060 = vshll.u32 %v2009, 16
      %v2062 = vor.u32 %v2059, %v2060
      %v2063 = vrot.slane %v2059, 4
      %v2065 = vshrl.u32 %v2010, 16
      %v2067 = vrot.slane %v2065, 7
      %v2068 = vshll.u32 %v2010, 16
      %v2070 = vor.u32 %v2067, %v2068
      %v2071 = vsel %vm410, %v2063, %v2070
      %v2072 = vrot.slane %v2067, 4
      %v2074 = vshrl.u32 %v2011, 16
      %v2076 = vrot.slane %v2074, 7
      %v2077 = vshll.u32 %v2011, 16
      %v2079 = vor.u32 %v2076, %v2077
      %v2080 = vrot.slane %v2076, 4
      %v2082 = vshrl.u32 %v2012, 16
      %v2084 = vrot.slane %v2082, 7
      %v2085 = vshll.u32 %v2012, 16
      %v2087 = vor.u32 %v2084, %v2085
      %v2088 = vsel %vm410, %v2080, %v2087
      %v2089 = vrot.slane %v2084, 4
      %v2091 = vshrl.u32 %v2013, 16
      %v2093 = vrot.slane %v2091, 7
      %v2094 = vshll.u32 %v2013, 16
      %v2096 = vor.u32 %v2093, %v2094
      %v2097 = vrot.slane %v2093, 4
      %v2099 = vshrl.u32 %v2014, 16
      %v2101 = vrot.slane %v2099, 7
      %v2102 = vshll.u32 %v2014, 16
      %v2104 = vor.u32 %v2101, %v2102
      %v2105 = vsel %vm410, %v2097, %v2104
      %v2106 = vrot.slane %v2101, 4
      %v2108 = vshrl.u32 %v2015, 16
      %v2110 = vrot.slane %v2108, 7
      %v2111 = vshll.u32 %v2015, 16
      %v2113 = vor.u32 %v2110, %v2111
      %v2114 = vrot.slane %v2110, 4
      %v2116 = vshrl.u32 %v2016, 16
      %v2118 = vrot.slane %v2116, 7
      %v2119 = vshll.u32 %v2016, 16
      %v2121 = vor.u32 %v2118, %v2119
      %v2122 = vsel %vm410, %v2114, %v2121
      %v2123 = vrot.slane %v2118, 4
      %v2125 = vshrl.u32 %v2017, 16
      %v2127 = vrot.slane %v2125, 7
      %v2128 = vshll.u32 %v2017, 16
      %v2130 = vor.u32 %v2127, %v2128
      %v2131 = vrot.slane %v2127, 4
      %v2133 = vshrl.u32 %v2018, 16
      %v2135 = vrot.slane %v2133, 7
      %v2136 = vshll.u32 %v2018, 16
      %v2138 = vor.u32 %v2135, %v2136
      %v2139 = vsel %vm410, %v2131, %v2138
      %v2140 = vrot.slane %v2135, 4
      %v2142 = vshrl.u32 %v2019, 16
      %v2144 = vrot.slane %v2142, 7
      %v2145 = vshll.u32 %v2019, 16
      %v2147 = vor.u32 %v2144, %v2145
      %v2148 = vrot.slane %v2144, 4
      %v2150 = vshrl.u32 %v2020, 16
      %v2152 = vrot.slane %v2150, 7
      %v2153 = vshll.u32 %v2020, 16
      %v2155 = vor.u32 %v2152, %v2153
      %v2156 = vsel %vm410, %v2148, %v2155
      %v2157 = vrot.slane %v2152, 4
      %v2159 = vshrl.u32 %v2021, 16
      %v2161 = vrot.slane %v2159, 7
      %v2162 = vshll.u32 %v2021, 16
      %v2164 = vor.u32 %v2161, %v2162
      %v2165 = vrot.slane %v2161, 4
      %v2167 = vshrl.u32 %v2022, 16
      %v2169 = vrot.slane %v2167, 7
      %v2170 = vshll.u32 %v2022, 16
      %v2172 = vor.u32 %v2169, %v2170
      %v2173 = vsel %vm410, %v2165, %v2172
      %v2174 = vrot.slane %v2169, 4
      %v2176 = vshrl.u32 %v2023, 16
      %v2178 = vrot.slane %v2176, 7
      %v2179 = vshll.u32 %v2023, 16
      %v2181 = vor.u32 %v2178, %v2179
      %v2182 = vrot.slane %v2178, 4
      %v2184 = vshrl.u32 %v2024, 16
      %v2186 = vrot.slane %v2184, 7
      %v2187 = vshll.u32 %v2024, 16
      %v2189 = vor.u32 %v2186, %v2187
      %v2190 = vsel %vm410, %v2182, %v2189
      %v2191 = vrot.slane %v2186, 4
      %v2193 = vshrl.u32 %v2025, 16
      %v2195 = vrot.slane %v2193, 7
      %v2196 = vshll.u32 %v2025, 16
      %v2198 = vor.u32 %v2195, %v2196
      %v2199 = vrot.slane %v2195, 4
      %v2201 = vshrl.u32 %v2026, 16
      %v2203 = vrot.slane %v2201, 7
      %v2204 = vshll.u32 %v2026, 16
      %v2206 = vor.u32 %v2203, %v2204
      %v2207 = vsel %vm410, %v2199, %v2206
      %v2208 = vrot.slane %v2203, 4
      %v2210 = vshrl.u32 %v2027, 16
      %v2212 = vrot.slane %v2210, 7
      %v2213 = vshll.u32 %v2027, 16
      %v2215 = vor.u32 %v2212, %v2213
      %v2216 = vrot.slane %v2212, 4
      %v2218 = vshrl.u32 %v2028, 16
      %v2220 = vrot.slane %v2218, 7
      %v2221 = vshll.u32 %v2028, 16
      %v2223 = vor.u32 %v2220, %v2221
      %v2224 = vsel %vm410, %v2216, %v2223
      %v2225 = vrot.slane %v2220, 4
      %v2227 = vshrl.u32 %v2029, 16
      %v2229 = vrot.slane %v2227, 7
      %v2230 = vshll.u32 %v2029, 16
      %v2232 = vor.u32 %v2229, %v2230
      %v2233 = vrot.slane %v2229, 4
      %v2235 = vshrl.u32 %v2030, 16
      %v2237 = vrot.slane %v2235, 7
      %v2238 = vshll.u32 %v2030, 16
      %v2240 = vor.u32 %v2237, %v2238
      %v2241 = vsel %vm410, %v2233, %v2240
      %v2242 = vrot.slane %v2237, 4
      %v2244 = vshrl.u32 %v2031, 16
      %v2246 = vrot.slane %v2244, 7
      %v2247 = vshll.u32 %v2031, 16
      %v2249 = vor.u32 %v2246, %v2247
      %v2250 = vrot.slane %v2246, 4
      %v2252 = vshrl.u32 %v2032, 16
      %v2254 = vrot.slane %v2252, 7
      %v2255 = vshll.u32 %v2032, 16
      %v2257 = vor.u32 %v2254, %v2255
      %v2258 = vsel %vm410, %v2250, %v2257
      %v2259 = vrot.slane %v2254, 4
      %v2261 = vshrl.u32 %v2033, 16
      %v2263 = vrot.slane %v2261, 7
      %v2264 = vshll.u32 %v2033, 16
      %v2266 = vor.u32 %v2263, %v2264
      %v2267 = vrot.slane %v2263, 4
      %v2269 = vshrl.u32 %v2034, 16
      %v2271 = vrot.slane %v2269, 7
      %v2272 = vshll.u32 %v2034, 16
      %v2274 = vor.u32 %v2271, %v2272
      %v2275 = vsel %vm410, %v2267, %v2274
      %v2276 = vrot.slane %v2271, 4
      %v2278 = vshrl.u32 %v2035, 16
      %v2280 = vrot.slane %v2278, 7
      %v2281 = vshll.u32 %v2035, 16
      %v2283 = vor.u32 %v2280, %v2281
      %v2284 = vrot.slane %v2280, 4
      %v2286 = vshrl.u32 %v2036, 16
      %v2288 = vrot.slane %v2286, 7
      %v2289 = vshll.u32 %v2036, 16
      %v2291 = vor.u32 %v2288, %v2289
      %v2292 = vsel %vm410, %v2284, %v2291
      %v2293 = vrot.slane %v2288, 4
      %v2295 = vshrl.u32 %v2037, 16
      %v2297 = vrot.slane %v2295, 7
      %v2298 = vshll.u32 %v2037, 16
      %v2300 = vor.u32 %v2297, %v2298
      %v2301 = vrot.slane %v2297, 4
      %v2303 = vshrl.u32 %v2038, 16
      %v2305 = vrot.slane %v2303, 7
      %v2306 = vshll.u32 %v2038, 16
      %v2308 = vor.u32 %v2305, %v2306
      %v2309 = vsel %vm410, %v2301, %v2308
      %v2310 = vrot.slane %v2305, 4
      %vm2359 = vcmask 60416
      %vm2360 = vmand %vm2359, %vm359
      %v2361 = vld [vmem:[%s1907] sm:$0xf]
      %v2362 = vsel %vm2360, %v2045, %v2361
      %2363 = vst [vmem:[%s1907] sm:$0xf] %v2362
      %2364 = vst.msk [vmem:[%s1907 + $0x4] sm:$0xf] %vm1898, %v2054
      %v2365 = vld [vmem:[%s1907 + $0x8] sm:$0x1]
      %v2366 = vsel %vm1909, %v2055, %v2365
      %2367 = vst [vmem:[%s1907 + $0x8] sm:$0x1] %v2366
      %v2368 = vld [vmem:[%s1907 + $0xc] sm:$0xf]
      %v2369 = vsel %vm2360, %v2062, %v2368
      %2370 = vst [vmem:[%s1907 + $0xc] sm:$0xf] %v2369
      %2371 = vst.msk [vmem:[%s1907 + $0x10] sm:$0xf] %vm1898, %v2071
      %v2372 = vld [vmem:[%s1907 + $0x14] sm:$0x1]
      %v2373 = vsel %vm1909, %v2072, %v2372
      %2374 = vst [vmem:[%s1907 + $0x14] sm:$0x1] %v2373
      %v2375 = vld [vmem:[%s1907 + $0x18] sm:$0xf]
      %v2376 = vsel %vm2360, %v2079, %v2375
      %2377 = vst [vmem:[%s1907 + $0x18] sm:$0xf] %v2376
      %2378 = vst.msk [vmem:[%s1907 + $0x1c] sm:$0xf] %vm1898, %v2088
      %v2379 = vld [vmem:[%s1907 + $0x20] sm:$0x1]
      %v2380 = vsel %vm1909, %v2089, %v2379
      %2381 = vst [vmem:[%s1907 + $0x20] sm:$0x1] %v2380
      %v2382 = vld [vmem:[%s1907 + $0x24] sm:$0xf]
      %v2383 = vsel %vm2360, %v2096, %v2382
      %2384 = vst [vmem:[%s1907 + $0x24] sm:$0xf] %v2383
      %2385 = vst.msk [vmem:[%s1907 + $0x28] sm:$0xf] %vm1898, %v2105
      %v2386 = vld [vmem:[%s1907 + $0x2c] sm:$0x1]
      %v2387 = vsel %vm1909, %v2106, %v2386
      %2388 = vst [vmem:[%s1907 + $0x2c] sm:$0x1] %v2387
      %v2389 = vld [vmem:[%s1907 + $0x30] sm:$0xf]
      %v2390 = vsel %vm2360, %v2113, %v2389
      %2391 = vst [vmem:[%s1907 + $0x30] sm:$0xf] %v2390
      %2392 = vst.msk [vmem:[%s1907 + $0x34] sm:$0xf] %vm1898, %v2122
      %v2393 = vld [vmem:[%s1907 + $0x38] sm:$0x1]
      %v2394 = vsel %vm1909, %v2123, %v2393
      %2395 = vst [vmem:[%s1907 + $0x38] sm:$0x1] %v2394
      %v2396 = vld [vmem:[%s1907 + $0x3c] sm:$0xf]
      %v2397 = vsel %vm2360, %v2130, %v2396
      %2398 = vst [vmem:[%s1907 + $0x3c] sm:$0xf] %v2397
      %2399 = vst.msk [vmem:[%s1907 + $0x40] sm:$0xf] %vm1898, %v2139
      %v2400 = vld [vmem:[%s1907 + $0x44] sm:$0x1]
      %v2401 = vsel %vm1909, %v2140, %v2400
      %2402 = vst [vmem:[%s1907 + $0x44] sm:$0x1] %v2401
      %v2403 = vld [vmem:[%s1907 + $0x48] sm:$0xf]
      %v2404 = vsel %vm2360, %v2147, %v2403
      %2405 = vst [vmem:[%s1907 + $0x48] sm:$0xf] %v2404
      %2406 = vst.msk [vmem:[%s1907 + $0x4c] sm:$0xf] %vm1898, %v2156
      %v2407 = vld [vmem:[%s1907 + $0x50] sm:$0x1]
      %v2408 = vsel %vm1909, %v2157, %v2407
      %2409 = vst [vmem:[%s1907 + $0x50] sm:$0x1] %v2408
      %v2410 = vld [vmem:[%s1907 + $0x54] sm:$0xf]
      %v2411 = vsel %vm2360, %v2164, %v2410
      %2412 = vst [vmem:[%s1907 + $0x54] sm:$0xf] %v2411
      %2413 = vst.msk [vmem:[%s1907 + $0x58] sm:$0xf] %vm1898, %v2173
      %v2414 = vld [vmem:[%s1907 + $0x5c] sm:$0x1]
      %v2415 = vsel %vm1909, %v2174, %v2414
      %2416 = vst [vmem:[%s1907 + $0x5c] sm:$0x1] %v2415
      %v2417 = vld [vmem:[%s1907 + $0x60] sm:$0xf]
      %v2418 = vsel %vm2360, %v2181, %v2417
      %2419 = vst [vmem:[%s1907 + $0x60] sm:$0xf] %v2418
      %2420 = vst.msk [vmem:[%s1907 + $0x64] sm:$0xf] %vm1898, %v2190
      %v2421 = vld [vmem:[%s1907 + $0x68] sm:$0x1]
      %v2422 = vsel %vm1909, %v2191, %v2421
      %2423 = vst [vmem:[%s1907 + $0x68] sm:$0x1] %v2422
      %v2424 = vld [vmem:[%s1907 + $0x6c] sm:$0xf]
      %v2425 = vsel %vm2360, %v2198, %v2424
      %2426 = vst [vmem:[%s1907 + $0x6c] sm:$0xf] %v2425
      %2427 = vst.msk [vmem:[%s1907 + $0x70] sm:$0xf] %vm1898, %v2207
      %v2428 = vld [vmem:[%s1907 + $0x74] sm:$0x1]
      %v2429 = vsel %vm1909, %v2208, %v2428
      %2430 = vst [vmem:[%s1907 + $0x74] sm:$0x1] %v2429
      %v2431 = vld [vmem:[%s1907 + $0x78] sm:$0xf]
      %v2432 = vsel %vm2360, %v2215, %v2431
      %2433 = vst [vmem:[%s1907 + $0x78] sm:$0xf] %v2432
      %2434 = vst.msk [vmem:[%s1907 + $0x7c] sm:$0xf] %vm1898, %v2224
      %v2435 = vld [vmem:[%s1907 + $0x80] sm:$0x1]
      %v2436 = vsel %vm1909, %v2225, %v2435
      %2437 = vst [vmem:[%s1907 + $0x80] sm:$0x1] %v2436
      %v2438 = vld [vmem:[%s1907 + $0x84] sm:$0xf]
      %v2439 = vsel %vm2360, %v2232, %v2438
      %2440 = vst [vmem:[%s1907 + $0x84] sm:$0xf] %v2439
      %2441 = vst.msk [vmem:[%s1907 + $0x88] sm:$0xf] %vm1898, %v2241
      %v2442 = vld [vmem:[%s1907 + $0x8c] sm:$0x1]
      %v2443 = vsel %vm1909, %v2242, %v2442
      %2444 = vst [vmem:[%s1907 + $0x8c] sm:$0x1] %v2443
      %v2445 = vld [vmem:[%s1907 + $0x90] sm:$0xf]
      %v2446 = vsel %vm2360, %v2249, %v2445
      %2447 = vst [vmem:[%s1907 + $0x90] sm:$0xf] %v2446
      %2448 = vst.msk [vmem:[%s1907 + $0x94] sm:$0xf] %vm1898, %v2258
      %v2449 = vld [vmem:[%s1907 + $0x98] sm:$0x1]
      %v2450 = vsel %vm1909, %v2259, %v2449
      %2451 = vst [vmem:[%s1907 + $0x98] sm:$0x1] %v2450
      %v2452 = vld [vmem:[%s1907 + $0x9c] sm:$0xf]
      %v2453 = vsel %vm2360, %v2266, %v2452
      %2454 = vst [vmem:[%s1907 + $0x9c] sm:$0xf] %v2453
      %2455 = vst.msk [vmem:[%s1907 + $0xa0] sm:$0xf] %vm1898, %v2275
      %v2456 = vld [vmem:[%s1907 + $0xa4] sm:$0x1]
      %v2457 = vsel %vm1909, %v2276, %v2456
      %2458 = vst [vmem:[%s1907 + $0xa4] sm:$0x1] %v2457
      %v2459 = vld [vmem:[%s1907 + $0xa8] sm:$0xf]
      %v2460 = vsel %vm2360, %v2283, %v2459
      %2461 = vst [vmem:[%s1907 + $0xa8] sm:$0xf] %v2460
      %2462 = vst.msk [vmem:[%s1907 + $0xac] sm:$0xf] %vm1898, %v2292
      %v2463 = vld [vmem:[%s1907 + $0xb0] sm:$0x1]
      %v2464 = vsel %vm1909, %v2293, %v2463
      %2465 = vst [vmem:[%s1907 + $0xb0] sm:$0x1] %v2464
      %v2466 = vld [vmem:[%s1907 + $0xb4] sm:$0xf]
      %v2467 = vsel %vm2360, %v2300, %v2466
      %2468 = vst [vmem:[%s1907 + $0xb4] sm:$0xf] %v2467
      %2469 = vst.msk [vmem:[%s1907 + $0xb8] sm:$0xf] %vm1898, %v2309
      %v2470 = vld [vmem:[%s1907 + $0xbc] sm:$0x1]
      %v2471 = vsel %vm1909, %v2310, %v2470
      %2472 = vst [vmem:[%s1907 + $0xbc] sm:$0x1] %v2471
      %v2473 = vld [vmem:[#allocation3] sm:$0xf]
      %v2474 = vld [vmem:[#allocation3 + $0x4] sm:$0xf]
      %v2475 = vld [vmem:[#allocation3 + $0x8] sm:$0x1]
      %v2476 = vld [vmem:[#allocation3 + $0xc] sm:$0xf]
      %v2477 = vld [vmem:[#allocation3 + $0x10] sm:$0xf]
      %v2478 = vld [vmem:[#allocation3 + $0x14] sm:$0x1]
      %v2479 = vld [vmem:[#allocation3 + $0x18] sm:$0xf]
      %v2480 = vld [vmem:[#allocation3 + $0x1c] sm:$0xf]
      %v2481 = vld [vmem:[#allocation3 + $0x20] sm:$0x1]
      %v2482 = vld [vmem:[#allocation3 + $0x24] sm:$0xf]
      %v2483 = vld [vmem:[#allocation3 + $0x28] sm:$0xf]
      %v2484 = vld [vmem:[#allocation3 + $0x2c] sm:$0x1]
      %v2485 = vld [vmem:[#allocation3 + $0x30] sm:$0xf]
      %v2486 = vld [vmem:[#allocation3 + $0x34] sm:$0xf]
      %v2487 = vld [vmem:[#allocation3 + $0x38] sm:$0x1]
      %v2488 = vld [vmem:[#allocation3 + $0x3c] sm:$0xf]
      %v2489 = vld [vmem:[#allocation3 + $0x40] sm:$0xf]
      %v2490 = vld [vmem:[#allocation3 + $0x44] sm:$0x1]
      %v2491 = vld [vmem:[#allocation3 + $0x48] sm:$0xf]
      %v2492 = vld [vmem:[#allocation3 + $0x4c] sm:$0xf]
      %v2493 = vld [vmem:[#allocation3 + $0x50] sm:$0x1]
      %v2494 = vld [vmem:[#allocation3 + $0x54] sm:$0xf]
      %v2495 = vld [vmem:[#allocation3 + $0x58] sm:$0xf]
      %v2496 = vld [vmem:[#allocation3 + $0x5c] sm:$0x1]
      %v2497 = vld [vmem:[#allocation3 + $0x60] sm:$0xf]
      %v2498 = vld [vmem:[#allocation3 + $0x64] sm:$0xf]
      %v2499 = vld [vmem:[#allocation3 + $0x68] sm:$0x1]
      %v2500 = vld [vmem:[#allocation3 + $0x6c] sm:$0xf]
      %v2501 = vld [vmem:[#allocation3 + $0x70] sm:$0xf]
      %v2502 = vld [vmem:[#allocation3 + $0x74] sm:$0x1]
      %v2503 = vld [vmem:[#allocation3 + $0x78] sm:$0xf]
      %v2504 = vld [vmem:[#allocation3 + $0x7c] sm:$0xf]
      %v2505 = vld [vmem:[#allocation3 + $0x80] sm:$0x1]
      %v2506 = vld [vmem:[#allocation3 + $0x84] sm:$0xf]
      %v2507 = vld [vmem:[#allocation3 + $0x88] sm:$0xf]
      %v2508 = vld [vmem:[#allocation3 + $0x8c] sm:$0x1]
      %v2509 = vld [vmem:[#allocation3 + $0x90] sm:$0xf]
      %v2510 = vld [vmem:[#allocation3 + $0x94] sm:$0xf]
      %v2511 = vld [vmem:[#allocation3 + $0x98] sm:$0x1]
      %v2512 = vld [vmem:[#allocation3 + $0x9c] sm:$0xf]
      %v2513 = vld [vmem:[#allocation3 + $0xa0] sm:$0xf]
      %v2514 = vld [vmem:[#allocation3 + $0xa4] sm:$0x1]
      %v2515 = vld [vmem:[#allocation3 + $0xa8] sm:$0xf]
      %v2516 = vld [vmem:[#allocation3 + $0xac] sm:$0xf]
      %v2517 = vld [vmem:[#allocation3 + $0xb0] sm:$0x1]
      %v2518 = vld [vmem:[#allocation3 + $0xb4] sm:$0xf]
      %v2519 = vld [vmem:[#allocation3 + $0xb8] sm:$0xf]
      %v2520 = vld [vmem:[#allocation3 + $0xbc] sm:$0x1]
      %v2521 = vld [vmem:[#allocation3 + $0xc0] sm:$0xf]
      %v2522 = vld [vmem:[#allocation3 + $0xc4] sm:$0xf]
      %v2523 = vld [vmem:[#allocation3 + $0xc8] sm:$0x1]
      %v2524 = vld [vmem:[#allocation3 + $0xcc] sm:$0xf]
      %v2525 = vld [vmem:[#allocation3 + $0xd0] sm:$0xf]
      %v2526 = vld [vmem:[#allocation3 + $0xd4] sm:$0x1]
      %v2559 = vunpack.c.l.b16 %v2473
      %v2560 = vunpack.c.l.b16 %v2474
      %v2561 = vunpack.c.l.b16 %v2476
      %v2562 = vunpack.c.l.b16 %v2477
      %v2563 = vunpack.c.l.b16 %v2479
      %v2564 = vunpack.c.l.b16 %v2480
      %v2565 = vunpack.c.l.b16 %v2482
      %v2566 = vunpack.c.l.b16 %v2483
      %v2567 = vunpack.c.l.b16 %v2485
      %v2568 = vunpack.c.l.b16 %v2486
      %v2569 = vunpack.c.l.b16 %v2488
      %v2570 = vunpack.c.l.b16 %v2489
      %v2571 = vunpack.c.l.b16 %v2491
      %v2572 = vunpack.c.l.b16 %v2492
      %v2573 = vunpack.c.l.b16 %v2494
      %v2574 = vunpack.c.l.b16 %v2495
      %v2575 = vunpack.c.l.b16 %v2497
      %v2576 = vunpack.c.l.b16 %v2498
      %v2577 = vunpack.c.l.b16 %v2500
      %v2578 = vunpack.c.l.b16 %v2501
      %v2579 = vunpack.c.l.b16 %v2503
      %v2580 = vunpack.c.l.b16 %v2504
      %v2581 = vunpack.c.l.b16 %v2506
      %v2582 = vunpack.c.l.b16 %v2507
      %v2583 = vunpack.c.l.b16 %v2509
      %v2584 = vunpack.c.l.b16 %v2510
      %v2585 = vunpack.c.l.b16 %v2512
      %v2586 = vunpack.c.l.b16 %v2513
      %v2587 = vunpack.c.l.b16 %v2515
      %v2588 = vunpack.c.l.b16 %v2516
      %v2589 = vunpack.c.l.b16 %v2518
      %v2590 = vunpack.c.l.b16 %v2519
      %v2591 = vpack.c.b16 %v2560, %v2559
      %v2592 = vpack.c.b16 %v2562, %v2561
      %v2593 = vpack.c.b16 %v2564, %v2563
      %v2594 = vpack.c.b16 %v2566, %v2565
      %v2595 = vpack.c.b16 %v2568, %v2567
      %v2596 = vpack.c.b16 %v2570, %v2569
      %v2597 = vpack.c.b16 %v2572, %v2571
      %v2598 = vpack.c.b16 %v2574, %v2573
      %v2599 = vpack.c.b16 %v2576, %v2575
      %v2600 = vpack.c.b16 %v2578, %v2577
      %v2601 = vpack.c.b16 %v2580, %v2579
      %v2602 = vpack.c.b16 %v2582, %v2581
      %v2603 = vpack.c.b16 %v2584, %v2583
      %v2604 = vpack.c.b16 %v2586, %v2585
      %v2605 = vpack.c.b16 %v2588, %v2587
      %v2606 = vpack.c.b16 %v2590, %v2589
      %v2623 = vunpack.c.l.b16 %v2475
      %v2624 = vunpack.c.l.b16 %v2478
      %v2625 = vunpack.c.l.b16 %v2481
      %v2626 = vunpack.c.l.b16 %v2484
      %v2627 = vunpack.c.l.b16 %v2487
      %v2628 = vunpack.c.l.b16 %v2490
      %v2629 = vunpack.c.l.b16 %v2493
      %v2630 = vunpack.c.l.b16 %v2496
      %v2631 = vunpack.c.l.b16 %v2499
      %v2632 = vunpack.c.l.b16 %v2502
      %v2633 = vunpack.c.l.b16 %v2505
      %v2634 = vunpack.c.l.b16 %v2508
      %v2635 = vunpack.c.l.b16 %v2511
      %v2636 = vunpack.c.l.b16 %v2514
      %v2637 = vunpack.c.l.b16 %v2517
      %v2638 = vunpack.c.l.b16 %v2520
      %v2639 = vpack.c.b16 %v2623, %v2623
      %v2640 = vpack.c.b16 %v2624, %v2624
      %v2641 = vpack.c.b16 %v2625, %v2625
      %v2642 = vpack.c.b16 %v2626, %v2626
      %v2643 = vpack.c.b16 %v2627, %v2627
      %v2644 = vpack.c.b16 %v2628, %v2628
      %v2645 = vpack.c.b16 %v2629, %v2629
      %v2646 = vpack.c.b16 %v2630, %v2630
      %v2647 = vpack.c.b16 %v2631, %v2631
      %v2648 = vpack.c.b16 %v2632, %v2632
      %v2649 = vpack.c.b16 %v2633, %v2633
      %v2650 = vpack.c.b16 %v2634, %v2634
      %v2651 = vpack.c.b16 %v2635, %v2635
      %v2652 = vpack.c.b16 %v2636, %v2636
      %v2653 = vpack.c.b16 %v2637, %v2637
      %v2654 = vpack.c.b16 %v2638, %v2638
      %v2656 = vshrl.u32 %v2591, 16
      %v2658 = vshll.u32 %v2591, 16
      %v2660 = vrot.slane %v2658, 1
      %v2661 = vor.u32 %v2656, %v2660
      %v2663 = vshll.u32 %v2639, 16
      %v2665 = vrot.slane %v2663, 1
      %v2666 = vsel %vm1027, %v2661, %v2665
      %v2668 = vshrl.u32 %v2592, 16
      %v2670 = vshll.u32 %v2592, 16
      %v2672 = vrot.slane %v2670, 1
      %v2673 = vor.u32 %v2668, %v2672
      %v2675 = vshll.u32 %v2640, 16
      %v2677 = vrot.slane %v2675, 1
      %v2678 = vsel %vm1027, %v2673, %v2677
      %v2680 = vshrl.u32 %v2593, 16
      %v2682 = vshll.u32 %v2593, 16
      %v2684 = vrot.slane %v2682, 1
      %v2685 = vor.u32 %v2680, %v2684
      %v2687 = vshll.u32 %v2641, 16
      %v2689 = vrot.slane %v2687, 1
      %v2690 = vsel %vm1027, %v2685, %v2689
      %v2692 = vshrl.u32 %v2594, 16
      %v2694 = vshll.u32 %v2594, 16
      %v2696 = vrot.slane %v2694, 1
      %v2697 = vor.u32 %v2692, %v2696
      %v2699 = vshll.u32 %v2642, 16
      %v2701 = vrot.slane %v2699, 1
      %v2702 = vsel %vm1027, %v2697, %v2701
      %v2704 = vshrl.u32 %v2595, 16
      %v2706 = vshll.u32 %v2595, 16
      %v2708 = vrot.slane %v2706, 1
      %v2709 = vor.u32 %v2704, %v2708
      %v2711 = vshll.u32 %v2643, 16
      %v2713 = vrot.slane %v2711, 1
      %v2714 = vsel %vm1027, %v2709, %v2713
      %v2716 = vshrl.u32 %v2596, 16
      %v2718 = vshll.u32 %v2596, 16
      %v2720 = vrot.slane %v2718, 1
      %v2721 = vor.u32 %v2716, %v2720
      %v2723 = vshll.u32 %v2644, 16
      %v2725 = vrot.slane %v2723, 1
      %v2726 = vsel %vm1027, %v2721, %v2725
      %v2728 = vshrl.u32 %v2597, 16
      %v2730 = vshll.u32 %v2597, 16
      %v2732 = vrot.slane %v2730, 1
      %v2733 = vor.u32 %v2728, %v2732
      %v2735 = vshll.u32 %v2645, 16
      %v2737 = vrot.slane %v2735, 1
      %v2738 = vsel %vm1027, %v2733, %v2737
      %v2740 = vshrl.u32 %v2598, 16
      %v2742 = vshll.u32 %v2598, 16
      %v2744 = vrot.slane %v2742, 1
      %v2745 = vor.u32 %v2740, %v2744
      %v2747 = vshll.u32 %v2646, 16
      %v2749 = vrot.slane %v2747, 1
      %v2750 = vsel %vm1027, %v2745, %v2749
      %v2752 = vshrl.u32 %v2599, 16
      %v2754 = vshll.u32 %v2599, 16
      %v2756 = vrot.slane %v2754, 1
      %v2757 = vor.u32 %v2752, %v2756
      %v2759 = vshll.u32 %v2647, 16
      %v2761 = vrot.slane %v2759, 1
      %v2762 = vsel %vm1027, %v2757, %v2761
      %v2764 = vshrl.u32 %v2600, 16
      %v2766 = vshll.u32 %v2600, 16
      %v2768 = vrot.slane %v2766, 1
      %v2769 = vor.u32 %v2764, %v2768
      %v2771 = vshll.u32 %v2648, 16
      %v2773 = vrot.slane %v2771, 1
      %v2774 = vsel %vm1027, %v2769, %v2773
      %v2776 = vshrl.u32 %v2601, 16
      %v2778 = vshll.u32 %v2601, 16
      %v2780 = vrot.slane %v2778, 1
      %v2781 = vor.u32 %v2776, %v2780
      %v2783 = vshll.u32 %v2649, 16
      %v2785 = vrot.slane %v2783, 1
      %v2786 = vsel %vm1027, %v2781, %v2785
      %v2788 = vshrl.u32 %v2602, 16
      %v2790 = vshll.u32 %v2602, 16
      %v2792 = vrot.slane %v2790, 1
      %v2793 = vor.u32 %v2788, %v2792
      %v2795 = vshll.u32 %v2650, 16
      %v2797 = vrot.slane %v2795, 1
      %v2798 = vsel %vm1027, %v2793, %v2797
      %v2800 = vshrl.u32 %v2603, 16
      %v2802 = vshll.u32 %v2603, 16
      %v2804 = vrot.slane %v2802, 1
      %v2805 = vor.u32 %v2800, %v2804
      %v2807 = vshll.u32 %v2651, 16
      %v2809 = vrot.slane %v2807, 1
      %v2810 = vsel %vm1027, %v2805, %v2809
      %v2812 = vshrl.u32 %v2604, 16
      %v2814 = vshll.u32 %v2604, 16
      %v2816 = vrot.slane %v2814, 1
      %v2817 = vor.u32 %v2812, %v2816
      %v2819 = vshll.u32 %v2652, 16
      %v2821 = vrot.slane %v2819, 1
      %v2822 = vsel %vm1027, %v2817, %v2821
      %v2824 = vshrl.u32 %v2605, 16
      %v2826 = vshll.u32 %v2605, 16
      %v2828 = vrot.slane %v2826, 1
      %v2829 = vor.u32 %v2824, %v2828
      %v2831 = vshll.u32 %v2653, 16
      %v2833 = vrot.slane %v2831, 1
      %v2834 = vsel %vm1027, %v2829, %v2833
      %v2836 = vshrl.u32 %v2606, 16
      %v2838 = vshll.u32 %v2606, 16
      %v2840 = vrot.slane %v2838, 1
      %v2841 = vor.u32 %v2836, %v2840
      %v2843 = vshll.u32 %v2654, 16
      %v2845 = vrot.slane %v2843, 1
      %v2846 = vsel %vm1027, %v2841, %v2845
      %2847 = vrot.lane.b32.xlu0 %v2666, 8
      %v2848 = vpop.permute.xlu0 %2847
      %2849 = vrot.lane.b32.xlu0 %v2678, 8
      %v2850 = vpop.permute.xlu0 %2849
      %2851 = vrot.lane.b32.xlu0 %v2690, 8
      %v2852 = vpop.permute.xlu0 %2851
      %2853 = vrot.lane.b32.xlu0 %v2702, 8
      %v2854 = vpop.permute.xlu0 %2853
      %2855 = vrot.lane.b32.xlu0 %v2714, 8
      %v2856 = vpop.permute.xlu0 %2855
      %2857 = vrot.lane.b32.xlu0 %v2726, 8
      %v2858 = vpop.permute.xlu0 %2857
      %2859 = vrot.lane.b32.xlu0 %v2738, 8
      %v2860 = vpop.permute.xlu0 %2859
      %2861 = vrot.lane.b32.xlu0 %v2750, 8
      %v2862 = vpop.permute.xlu0 %2861
      %2863 = vrot.lane.b32.xlu0 %v2762, 8
      %v2864 = vpop.permute.xlu0 %2863
      %2865 = vrot.lane.b32.xlu0 %v2774, 8
      %v2866 = vpop.permute.xlu0 %2865
      %2867 = vrot.lane.b32.xlu0 %v2786, 8
      %v2868 = vpop.permute.xlu0 %2867
      %2869 = vrot.lane.b32.xlu0 %v2798, 8
      %v2870 = vpop.permute.xlu0 %2869
      %2871 = vrot.lane.b32.xlu0 %v2810, 8
      %v2872 = vpop.permute.xlu0 %2871
      %2873 = vrot.lane.b32.xlu0 %v2822, 8
      %v2874 = vpop.permute.xlu0 %2873
      %2875 = vrot.lane.b32.xlu0 %v2834, 8
      %v2876 = vpop.permute.xlu0 %2875
      %2877 = vrot.lane.b32.xlu0 %v2846, 8
      %v2878 = vpop.permute.xlu0 %2877
      %v2879 = vrot.slane %v2591, 1
      %v2880 = vrot.slane %v2639, 1
      %v2881 = vsel %vm1252, %v2879, %v2880
      %v2882 = vrot.slane %v2592, 1
      %v2883 = vrot.slane %v2640, 1
      %v2884 = vsel %vm1252, %v2882, %v2883
      %v2885 = vrot.slane %v2593, 1
      %v2886 = vrot.slane %v2641, 1
      %v2887 = vsel %vm1252, %v2885, %v2886
      %v2888 = vrot.slane %v2594, 1
      %v2889 = vrot.slane %v2642, 1
      %v2890 = vsel %vm1252, %v2888, %v2889
      %v2891 = vrot.slane %v2595, 1
      %v2892 = vrot.slane %v2643, 1
      %v2893 = vsel %vm1252, %v2891, %v2892
      %v2894 = vrot.slane %v2596, 1
      %v2895 = vrot.slane %v2644, 1
      %v2896 = vsel %vm1252, %v2894, %v2895
      %v2897 = vrot.slane %v2597, 1
      %v2898 = vrot.slane %v2645, 1
      %v2899 = vsel %vm1252, %v2897, %v2898
      %v2900 = vrot.slane %v2598, 1
      %v2901 = vrot.slane %v2646, 1
      %v2902 = vsel %vm1252, %v2900, %v2901
      %v2903 = vrot.slane %v2599, 1
      %v2904 = vrot.slane %v2647, 1
      %v2905 = vsel %vm1252, %v2903, %v2904
      %v2906 = vrot.slane %v2600, 1
      %v2907 = vrot.slane %v2648, 1
      %v2908 = vsel %vm1252, %v2906, %v2907
      %v2909 = vrot.slane %v2601, 1
      %v2910 = vrot.slane %v2649, 1
      %v2911 = vsel %vm1252, %v2909, %v2910
      %v2912 = vrot.slane %v2602, 1
      %v2913 = vrot.slane %v2650, 1
      %v2914 = vsel %vm1252, %v2912, %v2913
      %v2915 = vrot.slane %v2603, 1
      %v2916 = vrot.slane %v2651, 1
      %v2917 = vsel %vm1252, %v2915, %v2916
      %v2918 = vrot.slane %v2604, 1
      %v2919 = vrot.slane %v2652, 1
      %v2920 = vsel %vm1252, %v2918, %v2919
      %v2921 = vrot.slane %v2605, 1
      %v2922 = vrot.slane %v2653, 1
      %v2923 = vsel %vm1252, %v2921, %v2922
      %v2924 = vrot.slane %v2606, 1
      %v2925 = vrot.slane %v2654, 1
      %v2926 = vsel %vm1252, %v2924, %v2925
      %2927 = vrot.lane.b32.xlu0 %v2881, 16
      %v2928 = vpop.permute.xlu0 %2927
      %2929 = vrot.lane.b32.xlu0 %v2884, 16
      %v2930 = vpop.permute.xlu0 %2929
      %2931 = vrot.lane.b32.xlu0 %v2887, 16
      %v2932 = vpop.permute.xlu0 %2931
      %2933 = vrot.lane.b32.xlu0 %v2890, 16
      %v2934 = vpop.permute.xlu0 %2933
      %2935 = vrot.lane.b32.xlu0 %v2893, 16
      %v2936 = vpop.permute.xlu0 %2935
      %2937 = vrot.lane.b32.xlu0 %v2896, 16
      %v2938 = vpop.permute.xlu0 %2937
      %2939 = vrot.lane.b32.xlu0 %v2899, 16
      %v2940 = vpop.permute.xlu0 %2939
      %2941 = vrot.lane.b32.xlu0 %v2902, 16
      %v2942 = vpop.permute.xlu0 %2941
      %2943 = vrot.lane.b32.xlu0 %v2905, 16
      %v2944 = vpop.permute.xlu0 %2943
      %2945 = vrot.lane.b32.xlu0 %v2908, 16
      %v2946 = vpop.permute.xlu0 %2945
      %2947 = vrot.lane.b32.xlu0 %v2911, 16
      %v2948 = vpop.permute.xlu0 %2947
      %2949 = vrot.lane.b32.xlu0 %v2914, 16
      %v2950 = vpop.permute.xlu0 %2949
      %2951 = vrot.lane.b32.xlu0 %v2917, 16
      %v2952 = vpop.permute.xlu0 %2951
      %2953 = vrot.lane.b32.xlu0 %v2920, 16
      %v2954 = vpop.permute.xlu0 %2953
      %2955 = vrot.lane.b32.xlu0 %v2923, 16
      %v2956 = vpop.permute.xlu0 %2955
      %2957 = vrot.lane.b32.xlu0 %v2926, 16
      %v2958 = vpop.permute.xlu0 %2957
      %v2960 = vsel %vm1366, %v2591, %v2848
      %v2962 = vsel %vm1366, %v2592, %v2850
      %v2964 = vsel %vm1366, %v2593, %v2852
      %v2966 = vsel %vm1366, %v2594, %v2854
      %v2968 = vsel %vm1366, %v2595, %v2856
      %v2970 = vsel %vm1366, %v2596, %v2858
      %v2972 = vsel %vm1366, %v2597, %v2860
      %v2974 = vsel %vm1366, %v2598, %v2862
      %v2976 = vsel %vm1366, %v2599, %v2864
      %v2978 = vsel %vm1366, %v2600, %v2866
      %v2980 = vsel %vm1366, %v2601, %v2868
      %v2982 = vsel %vm1366, %v2602, %v2870
      %v2984 = vsel %vm1366, %v2603, %v2872
      %v2986 = vsel %vm1366, %v2604, %v2874
      %v2988 = vsel %vm1366, %v2605, %v2876
      %v2990 = vsel %vm1366, %v2606, %v2878
      %vm2991 = vcmask 130048
      %v2993 = vsel %vm2991, %v2960, %v2928
      %v2995 = vsel %vm2991, %v2962, %v2930
      %v2997 = vsel %vm2991, %v2964, %v2932
      %v2999 = vsel %vm2991, %v2966, %v2934
      %v3001 = vsel %vm2991, %v2968, %v2936
      %v3003 = vsel %vm2991, %v2970, %v2938
      %v3005 = vsel %vm2991, %v2972, %v2940
      %v3007 = vsel %vm2991, %v2974, %v2942
      %v3009 = vsel %vm2991, %v2976, %v2944
      %v3011 = vsel %vm2991, %v2978, %v2946
      %v3013 = vsel %vm2991, %v2980, %v2948
      %v3015 = vsel %vm2991, %v2982, %v2950
      %v3017 = vsel %vm2991, %v2984, %v2952
      %v3019 = vsel %vm2991, %v2986, %v2954
      %v3021 = vsel %vm2991, %v2988, %v2956
      %v3023 = vsel %vm2991, %v2990, %v2958
      %v3024 = vld [vmem:[%s3] sm:$0xf]
      %v3025 = vld [vmem:[%s3 + $0x4] sm:$0xf]
      %v3026 = vld [vmem:[%s3 + $0x8] sm:$0xf]
      %v3029 = vunpack.c.l.b16 %v2521
      %v3030 = vunpack.c.l.b16 %v2522
      %v3031 = vpack.c.b16 %v3030, %v3029
      %v3033 = vunpack.c.l.b16 %v2523
      %v3034 = vpack.c.b16 %v3033, %v3033
      %v3036 = vshrl.u32 %v3031, 16
      %v3038 = vshll.u32 %v3031, 16
      %v3040 = vrot.slane %v3038, 1
      %v3041 = vor.u32 %v3036, %v3040
      %v3043 = vshll.u32 %v3034, 16
      %v3045 = vrot.slane %v3043, 1
      %v3046 = vsel %vm1027, %v3041, %v3045
      %3047 = vrot.lane.b32.xlu0 %v3046, 8
      %v3048 = vpop.permute.xlu0 %3047
      %v3049 = vrot.slane %v3031, 1
      %v3050 = vrot.slane %v3034, 1
      %v3051 = vsel %vm1252, %v3049, %v3050
      %3052 = vrot.lane.b32.xlu0 %v3051, 16
      %v3053 = vpop.permute.xlu0 %3052
      %v3055 = vsel %vm1366, %v3031, %v3048
      %v3057 = vsel %vm2991, %v3055, %v3053
      %s3058 = scalar_lea.vmem %s3, 12
      %v3059 = vld [vmem:[%s3058] sm:$0xf]
      %v3060 = vld [vmem:[%s3058 + $0x4] sm:$0xf]
      %v3061 = vld [vmem:[%s3058 + $0x8] sm:$0xf]
      %v3065 = vunpack.c.l.b16 %v3059
      %v3066 = vunpack.c.l.b16 %v3060
      %v3067 = vunpack.c.l.b16 %v3061
      %v3068 = vpack.c.b16 %v3066, %v3065
      %v3069 = vpack.c.b16 %v3067, %v3067
      %vm3071 = vcmask 195584
      %v3072 = vsel %vm3071, %v2995, 0
      %v3074 = vsel %vm3071, %v2997, 0
      %v3076 = vsel %vm3071, %v2999, 0
      %v3078 = vsel %vm3071, %v3001, 0
      %v3080 = vsel %vm3071, %v3003, 0
      %v3082 = vsel %vm3071, %v3005, 0
      %v3084 = vsel %vm3071, %v3007, 0
      %v3086 = vsel %vm3071, %v3009, 0
      %v3088 = vsel %vm3071, %v3011, 0
      %v3090 = vsel %vm3071, %v3013, 0
      %v3092 = vsel %vm3071, %v3015, 0
      %v3094 = vsel %vm3071, %v3017, 0
      %v3096 = vsel %vm3071, %v3019, 0
      %v3098 = vsel %vm3071, %v3021, 0
      %v3100 = vsel %vm3071, %v3023, 0
      %v3102 = vsel %vm3071, %v3057, 0
      %vm3104 = vcmask 1043456
      %v3106 = vsel %vm3104, %v3069, 0
      %3108 = vmatpush.bf16.msra.mxu0 0
      %3109 = vmatpush.bf16.msra.mxu0 0
      %3110 = vmatpush.bf16.msra.mxu0 0
      %3111 = vmatpush.bf16.msra.mxu0 0
      %3112 = vmatpush.bf16.msra.mxu0 0
      %3113 = vmatpush.bf16.msra.mxu0 0
      %3114 = vmatpush.bf16.msra.mxu0 %v3106
      %3115 = vmatpush.bf16.msra.mxu0 %v3068
      %3116 = vmatmul.bf16.gmra.mxu0 %v3072
      %v3117 = vpop.f32.mrf.mxu0
      %v3118 = vadd.f32 0.0, %v3117
      %v3119 = vpop.f32.mrf.mxu0
      %v3120 = vadd.f32 0.0, %v3119
      %3121 = vmatmul.bf16.gmra.mxu0 %v3074
      %v3122 = vpop.f32.mrf.mxu0
      %v3123 = vadd.f32 0.0, %v3122
      %v3124 = vpop.f32.mrf.mxu0
      %v3125 = vadd.f32 0.0, %v3124
      %3126 = vmatmul.bf16.gmra.mxu0 %v3076
      %v3127 = vpop.f32.mrf.mxu0
      %v3128 = vadd.f32 0.0, %v3127
      %v3129 = vpop.f32.mrf.mxu0
      %v3130 = vadd.f32 0.0, %v3129
      %3131 = vmatmul.bf16.gmra.mxu0 %v3078
      %v3132 = vpop.f32.mrf.mxu0
      %v3133 = vadd.f32 0.0, %v3132
      %v3134 = vpop.f32.mrf.mxu0
      %v3135 = vadd.f32 0.0, %v3134
      %3136 = vmatmul.bf16.gmra.mxu0 %v3080
      %v3137 = vpop.f32.mrf.mxu0
      %v3138 = vadd.f32 0.0, %v3137
      %v3139 = vpop.f32.mrf.mxu0
      %v3140 = vadd.f32 0.0, %v3139
      %3141 = vmatmul.bf16.gmra.mxu0 %v3082
      %v3142 = vpop.f32.mrf.mxu0
      %v3143 = vadd.f32 0.0, %v3142
      %v3144 = vpop.f32.mrf.mxu0
      %v3145 = vadd.f32 0.0, %v3144
      %3146 = vmatmul.bf16.gmra.mxu0 %v3084
      %v3147 = vpop.f32.mrf.mxu0
      %v3148 = vadd.f32 0.0, %v3147
      %v3149 = vpop.f32.mrf.mxu0
      %v3150 = vadd.f32 0.0, %v3149
      %3151 = vmatmul.bf16.gmra.mxu0 %v3086
      %v3152 = vpop.f32.mrf.mxu0
      %v3153 = vadd.f32 0.0, %v3152
      %v3154 = vpop.f32.mrf.mxu0
      %v3155 = vadd.f32 0.0, %v3154
      %3156 = vmatmul.bf16.gmra.mxu0 %v3088
      %v3157 = vpop.f32.mrf.mxu0
      %v3158 = vadd.f32 0.0, %v3157
      %v3159 = vpop.f32.mrf.mxu0
      %v3160 = vadd.f32 0.0, %v3159
      %3161 = vmatmul.bf16.gmra.mxu0 %v3090
      %v3162 = vpop.f32.mrf.mxu0
      %v3163 = vadd.f32 0.0, %v3162
      %v3164 = vpop.f32.mrf.mxu0
      %v3165 = vadd.f32 0.0, %v3164
      %3166 = vmatmul.bf16.gmra.mxu0 %v3092
      %v3167 = vpop.f32.mrf.mxu0
      %v3168 = vadd.f32 0.0, %v3167
      %v3169 = vpop.f32.mrf.mxu0
      %v3170 = vadd.f32 0.0, %v3169
      %3171 = vmatmul.bf16.gmra.mxu0 %v3094
      %v3172 = vpop.f32.mrf.mxu0
      %v3173 = vadd.f32 0.0, %v3172
      %v3174 = vpop.f32.mrf.mxu0
      %v3175 = vadd.f32 0.0, %v3174
      %3176 = vmatmul.bf16.gmra.mxu0 %v3096
      %v3177 = vpop.f32.mrf.mxu0
      %v3178 = vadd.f32 0.0, %v3177
      %v3179 = vpop.f32.mrf.mxu0
      %v3180 = vadd.f32 0.0, %v3179
      %3181 = vmatmul.bf16.gmra.mxu0 %v3098
      %v3182 = vpop.f32.mrf.mxu0
      %v3183 = vadd.f32 0.0, %v3182
      %v3184 = vpop.f32.mrf.mxu0
      %v3185 = vadd.f32 0.0, %v3184
      %3186 = vmatmul.bf16.gmra.mxu0 %v3100
      %v3187 = vpop.f32.mrf.mxu0
      %v3188 = vadd.f32 0.0, %v3187
      %v3189 = vpop.f32.mrf.mxu0
      %v3190 = vadd.f32 0.0, %v3189
      %3191 = vmatmul.bf16.gmra.mxu0 %v3102
      %v3192 = vpop.f32.mrf.mxu0
      %v3193 = vadd.f32 0.0, %v3192
      %v3194 = vpop.f32.mrf.mxu0
      %v3195 = vadd.f32 0.0, %v3194
      %3196 = vdwg.mxu0
      %v3200 = vunpack.c.l.b16 %v3024
      %v3201 = vunpack.c.l.b16 %v3025
      %v3202 = vunpack.c.l.b16 %v3026
      %v3203 = vpack.c.b16 %v3201, %v3200
      %v3204 = vpack.c.b16 %v3202, %v3202
      %v3206 = vsel %vm3071, %v2993, 0
      %v3209 = vsel %vm3104, %v3204, 0
      %3211 = vmatpush.bf16.msra.mxu0 0
      %3212 = vmatpush.bf16.msra.mxu0 0
      %3213 = vmatpush.bf16.msra.mxu0 0
      %3214 = vmatpush.bf16.msra.mxu0 0
      %3215 = vmatpush.bf16.msra.mxu0 0
      %3216 = vmatpush.bf16.msra.mxu0 0
      %3217 = vmatpush.bf16.msra.mxu0 %v3209
      %3218 = vmatpush.bf16.msra.mxu0 %v3203
      %3219 = vmatmul.bf16.gmra.mxu0 %v3206
      %v3220 = vpop.f32.mrf.mxu0
      %v3221 = vadd.f32 %v3118, %v3220
      %v3222 = vpop.f32.mrf.mxu0
      %v3223 = vadd.f32 %v3120, %v3222
      %3224 = vmatmul.bf16.gmra.mxu0 %v3072
      %v3225 = vpop.f32.mrf.mxu0
      %v3226 = vadd.f32 %v3123, %v3225
      %v3227 = vpop.f32.mrf.mxu0
      %v3228 = vadd.f32 %v3125, %v3227
      %3229 = vmatmul.bf16.gmra.mxu0 %v3074
      %v3230 = vpop.f32.mrf.mxu0
      %v3231 = vadd.f32 %v3128, %v3230
      %v3232 = vpop.f32.mrf.mxu0
      %v3233 = vadd.f32 %v3130, %v3232
      %3234 = vmatmul.bf16.gmra.mxu0 %v3076
      %v3235 = vpop.f32.mrf.mxu0
      %v3236 = vadd.f32 %v3133, %v3235
      %v3237 = vpop.f32.mrf.mxu0
      %v3238 = vadd.f32 %v3135, %v3237
      %3239 = vmatmul.bf16.gmra.mxu0 %v3078
      %v3240 = vpop.f32.mrf.mxu0
      %v3241 = vadd.f32 %v3138, %v3240
      %v3242 = vpop.f32.mrf.mxu0
      %v3243 = vadd.f32 %v3140, %v3242
      %3244 = vmatmul.bf16.gmra.mxu0 %v3080
      %v3245 = vpop.f32.mrf.mxu0
      %v3246 = vadd.f32 %v3143, %v3245
      %v3247 = vpop.f32.mrf.mxu0
      %v3248 = vadd.f32 %v3145, %v3247
      %3249 = vmatmul.bf16.gmra.mxu0 %v3082
      %v3250 = vpop.f32.mrf.mxu0
      %v3251 = vadd.f32 %v3148, %v3250
      %v3252 = vpop.f32.mrf.mxu0
      %v3253 = vadd.f32 %v3150, %v3252
      %3254 = vmatmul.bf16.gmra.mxu0 %v3084
      %v3255 = vpop.f32.mrf.mxu0
      %v3256 = vadd.f32 %v3153, %v3255
      %v3257 = vpop.f32.mrf.mxu0
      %v3258 = vadd.f32 %v3155, %v3257
      %3259 = vmatmul.bf16.gmra.mxu0 %v3086
      %v3260 = vpop.f32.mrf.mxu0
      %v3261 = vadd.f32 %v3158, %v3260
      %v3262 = vpop.f32.mrf.mxu0
      %v3263 = vadd.f32 %v3160, %v3262
      %3264 = vmatmul.bf16.gmra.mxu0 %v3088
      %v3265 = vpop.f32.mrf.mxu0
      %v3266 = vadd.f32 %v3163, %v3265
      %v3267 = vpop.f32.mrf.mxu0
      %v3268 = vadd.f32 %v3165, %v3267
      %3269 = vmatmul.bf16.gmra.mxu0 %v3090
      %v3270 = vpop.f32.mrf.mxu0
      %v3271 = vadd.f32 %v3168, %v3270
      %v3272 = vpop.f32.mrf.mxu0
      %v3273 = vadd.f32 %v3170, %v3272
      %3274 = vmatmul.bf16.gmra.mxu0 %v3092
      %v3275 = vpop.f32.mrf.mxu0
      %v3276 = vadd.f32 %v3173, %v3275
      %v3277 = vpop.f32.mrf.mxu0
      %v3278 = vadd.f32 %v3175, %v3277
      %3279 = vmatmul.bf16.gmra.mxu0 %v3094
      %v3280 = vpop.f32.mrf.mxu0
      %v3281 = vadd.f32 %v3178, %v3280
      %v3282 = vpop.f32.mrf.mxu0
      %v3283 = vadd.f32 %v3180, %v3282
      %3284 = vmatmul.bf16.gmra.mxu0 %v3096
      %v3285 = vpop.f32.mrf.mxu0
      %v3286 = vadd.f32 %v3183, %v3285
      %v3287 = vpop.f32.mrf.mxu0
      %v3288 = vadd.f32 %v3185, %v3287
      %3289 = vmatmul.bf16.gmra.mxu0 %v3098
      %v3290 = vpop.f32.mrf.mxu0
      %v3291 = vadd.f32 %v3188, %v3290
      %v3292 = vpop.f32.mrf.mxu0
      %v3293 = vadd.f32 %v3190, %v3292
      %3294 = vmatmul.bf16.gmra.mxu0 %v3100
      %v3295 = vpop.f32.mrf.mxu0
      %v3296 = vadd.f32 %v3193, %v3295
      %v3297 = vpop.f32.mrf.mxu0
      %v3298 = vadd.f32 %v3195, %v3297
      %3299 = vdwg.mxu0
      %v3302 = vunpack.c.l.b16 %v2524
      %v3303 = vunpack.c.l.b16 %v2525
      %v3304 = vpack.c.b16 %v3303, %v3302
      %v3306 = vunpack.c.l.b16 %v2526
      %v3307 = vpack.c.b16 %v3306, %v3306
      %v3309 = vshrl.u32 %v3304, 16
      %v3311 = vshll.u32 %v3304, 16
      %v3313 = vrot.slane %v3311, 1
      %v3314 = vor.u32 %v3309, %v3313
      %v3316 = vshll.u32 %v3307, 16
      %v3318 = vrot.slane %v3316, 1
      %v3319 = vsel %vm1027, %v3314, %v3318
      %3320 = vrot.lane.b32.xlu0 %v3319, 8
      %v3321 = vpop.permute.xlu0 %3320
      %v3322 = vrot.slane %v3304, 1
      %v3323 = vrot.slane %v3307, 1
      %v3324 = vsel %vm1252, %v3322, %v3323
      %3325 = vrot.lane.b32.xlu0 %v3324, 16
      %v3326 = vpop.permute.xlu0 %3325
      %v3328 = vsel %vm1366, %v3304, %v3321
      %v3330 = vsel %vm2991, %v3328, %v3326
      %s3331 = scalar_lea.vmem %s3, 24
      %v3332 = vld [vmem:[%s3331] sm:$0xf]
      %v3333 = vld [vmem:[%s3331 + $0x4] sm:$0xf]
      %v3334 = vld [vmem:[%s3331 + $0x8] sm:$0xf]
      %v3338 = vunpack.c.l.b16 %v3332
      %v3339 = vunpack.c.l.b16 %v3333
      %v3340 = vunpack.c.l.b16 %v3334
      %v3341 = vpack.c.b16 %v3339, %v3338
      %v3342 = vpack.c.b16 %v3340, %v3340
      %v3344 = vsel %vm3071, %v3330, 0
      %v3347 = vsel %vm3104, %v3342, 0
      %3349 = vmatpush.bf16.msra.mxu0 0
      %3350 = vmatpush.bf16.msra.mxu0 0
      %3351 = vmatpush.bf16.msra.mxu0 0
      %3352 = vmatpush.bf16.msra.mxu0 0
      %3353 = vmatpush.bf16.msra.mxu0 0
      %3354 = vmatpush.bf16.msra.mxu0 0
      %3355 = vmatpush.bf16.msra.mxu0 %v3347
      %3356 = vmatpush.bf16.msra.mxu0 %v3341
      %3357 = vmatmul.bf16.gmra.mxu0 %v3074
      %v3358 = vpop.f32.mrf.mxu0
      %v3359 = vadd.f32 0.0, %v3358
      %v3360 = vpop.f32.mrf.mxu0
      %v3361 = vadd.f32 0.0, %v3360
      %3362 = vmatmul.bf16.gmra.mxu0 %v3076
      %v3363 = vpop.f32.mrf.mxu0
      %v3364 = vadd.f32 0.0, %v3363
      %v3365 = vpop.f32.mrf.mxu0
      %v3366 = vadd.f32 0.0, %v3365
      %3367 = vmatmul.bf16.gmra.mxu0 %v3078
      %v3368 = vpop.f32.mrf.mxu0
      %v3369 = vadd.f32 0.0, %v3368
      %v3370 = vpop.f32.mrf.mxu0
      %v3371 = vadd.f32 0.0, %v3370
      %3372 = vmatmul.bf16.gmra.mxu0 %v3080
      %v3373 = vpop.f32.mrf.mxu0
      %v3374 = vadd.f32 0.0, %v3373
      %v3375 = vpop.f32.mrf.mxu0
      %v3376 = vadd.f32 0.0, %v3375
      %3377 = vmatmul.bf16.gmra.mxu0 %v3082
      %v3378 = vpop.f32.mrf.mxu0
      %v3379 = vadd.f32 0.0, %v3378
      %v3380 = vpop.f32.mrf.mxu0
      %v3381 = vadd.f32 0.0, %v3380
      %3382 = vmatmul.bf16.gmra.mxu0 %v3084
      %v3383 = vpop.f32.mrf.mxu0
      %v3384 = vadd.f32 0.0, %v3383
      %v3385 = vpop.f32.mrf.mxu0
      %v3386 = vadd.f32 0.0, %v3385
      %3387 = vmatmul.bf16.gmra.mxu0 %v3086
      %v3388 = vpop.f32.mrf.mxu0
      %v3389 = vadd.f32 0.0, %v3388
      %v3390 = vpop.f32.mrf.mxu0
      %v3391 = vadd.f32 0.0, %v3390
      %3392 = vmatmul.bf16.gmra.mxu0 %v3088
      %v3393 = vpop.f32.mrf.mxu0
      %v3394 = vadd.f32 0.0, %v3393
      %v3395 = vpop.f32.mrf.mxu0
      %v3396 = vadd.f32 0.0, %v3395
      %3397 = vmatmul.bf16.gmra.mxu0 %v3090
      %v3398 = vpop.f32.mrf.mxu0
      %v3399 = vadd.f32 0.0, %v3398
      %v3400 = vpop.f32.mrf.mxu0
      %v3401 = vadd.f32 0.0, %v3400
      %3402 = vmatmul.bf16.gmra.mxu0 %v3092
      %v3403 = vpop.f32.mrf.mxu0
      %v3404 = vadd.f32 0.0, %v3403
      %v3405 = vpop.f32.mrf.mxu0
      %v3406 = vadd.f32 0.0, %v3405
      %3407 = vmatmul.bf16.gmra.mxu0 %v3094
      %v3408 = vpop.f32.mrf.mxu0
      %v3409 = vadd.f32 0.0, %v3408
      %v3410 = vpop.f32.mrf.mxu0
      %v3411 = vadd.f32 0.0, %v3410
      %3412 = vmatmul.bf16.gmra.mxu0 %v3096
      %v3413 = vpop.f32.mrf.mxu0
      %v3414 = vadd.f32 0.0, %v3413
      %v3415 = vpop.f32.mrf.mxu0
      %v3416 = vadd.f32 0.0, %v3415
      %3417 = vmatmul.bf16.gmra.mxu0 %v3098
      %v3418 = vpop.f32.mrf.mxu0
      %v3419 = vadd.f32 0.0, %v3418
      %v3420 = vpop.f32.mrf.mxu0
      %v3421 = vadd.f32 0.0, %v3420
      %3422 = vmatmul.bf16.gmra.mxu0 %v3100
      %v3423 = vpop.f32.mrf.mxu0
      %v3424 = vadd.f32 0.0, %v3423
      %v3425 = vpop.f32.mrf.mxu0
      %v3426 = vadd.f32 0.0, %v3425
      %3427 = vmatmul.bf16.gmra.mxu0 %v3102
      %v3428 = vpop.f32.mrf.mxu0
      %v3429 = vadd.f32 0.0, %v3428
      %v3430 = vpop.f32.mrf.mxu0
      %v3431 = vadd.f32 0.0, %v3430
      %3432 = vmatmul.bf16.gmra.mxu0 %v3344
      %v3433 = vpop.f32.mrf.mxu0
      %v3434 = vadd.f32 0.0, %v3433
      %v3435 = vpop.f32.mrf.mxu0
      %v3436 = vadd.f32 0.0, %v3435
      %3437 = vdwg.mxu0
      %v3438 = vadd.f32 %v3221, %v3359
      %v3439 = vadd.f32 %v3223, %v3361
      %v3440 = vadd.f32 %v3226, %v3364
      %v3441 = vadd.f32 %v3228, %v3366
      %v3442 = vadd.f32 %v3231, %v3369
      %v3443 = vadd.f32 %v3233, %v3371
      %v3444 = vadd.f32 %v3236, %v3374
      %v3445 = vadd.f32 %v3238, %v3376
      %v3446 = vadd.f32 %v3241, %v3379
      %v3447 = vadd.f32 %v3243, %v3381
      %v3448 = vadd.f32 %v3246, %v3384
      %v3449 = vadd.f32 %v3248, %v3386
      %v3450 = vadd.f32 %v3251, %v3389
      %v3451 = vadd.f32 %v3253, %v3391
      %v3452 = vadd.f32 %v3256, %v3394
      %v3453 = vadd.f32 %v3258, %v3396
      %v3454 = vadd.f32 %v3261, %v3399
      %v3455 = vadd.f32 %v3263, %v3401
      %v3456 = vadd.f32 %v3266, %v3404
      %v3457 = vadd.f32 %v3268, %v3406
      %v3458 = vadd.f32 %v3271, %v3409
      %v3459 = vadd.f32 %v3273, %v3411
      %v3460 = vadd.f32 %v3276, %v3414
      %v3461 = vadd.f32 %v3278, %v3416
      %v3462 = vadd.f32 %v3281, %v3419
      %v3463 = vadd.f32 %v3283, %v3421
      %v3464 = vadd.f32 %v3286, %v3424
      %v3465 = vadd.f32 %v3288, %v3426
      %v3466 = vadd.f32 %v3291, %v3429
      %v3467 = vadd.f32 %v3293, %v3431
      %v3468 = vadd.f32 %v3296, %v3434
      %v3469 = vadd.f32 %v3298, %v3436
      %v3470 = vld [vmem:[%s4] sm:$0x1]
      %v3472 = vperm.slane %v3470, 0
      %v3474 = vadd.f32 %v3438, %v3472
      %v3475 = vadd.f32 %v3439, %v3472
      %v3476 = vadd.f32 %v3440, %v3472
      %v3477 = vadd.f32 %v3441, %v3472
      %v3478 = vadd.f32 %v3442, %v3472
      %v3479 = vadd.f32 %v3443, %v3472
      %v3480 = vadd.f32 %v3444, %v3472
      %v3481 = vadd.f32 %v3445, %v3472
      %v3482 = vadd.f32 %v3446, %v3472
      %v3483 = vadd.f32 %v3447, %v3472
      %v3484 = vadd.f32 %v3448, %v3472
      %v3485 = vadd.f32 %v3449, %v3472
      %v3486 = vadd.f32 %v3450, %v3472
      %v3487 = vadd.f32 %v3451, %v3472
      %v3488 = vadd.f32 %v3452, %v3472
      %v3489 = vadd.f32 %v3453, %v3472
      %v3490 = vadd.f32 %v3454, %v3472
      %v3491 = vadd.f32 %v3455, %v3472
      %v3492 = vadd.f32 %v3456, %v3472
      %v3493 = vadd.f32 %v3457, %v3472
      %v3494 = vadd.f32 %v3458, %v3472
      %v3495 = vadd.f32 %v3459, %v3472
      %v3496 = vadd.f32 %v3460, %v3472
      %v3497 = vadd.f32 %v3461, %v3472
      %v3498 = vadd.f32 %v3462, %v3472
      %v3499 = vadd.f32 %v3463, %v3472
      %v3500 = vadd.f32 %v3464, %v3472
      %v3501 = vadd.f32 %v3465, %v3472
      %v3502 = vadd.f32 %v3466, %v3472
      %v3503 = vadd.f32 %v3467, %v3472
      %v3504 = vadd.f32 %v3468, %v3472
      %v3505 = vadd.f32 %v3469, %v3472
      %v3506 = vmax.f32 %v3474, 0.0
      %v3507 = vmax.f32 %v3475, 0.0
      %v3508 = vmax.f32 %v3476, 0.0
      %v3509 = vmax.f32 %v3477, 0.0
      %v3510 = vmax.f32 %v3478, 0.0
      %v3511 = vmax.f32 %v3479, 0.0
      %v3512 = vmax.f32 %v3480, 0.0
      %v3513 = vmax.f32 %v3481, 0.0
      %v3514 = vmax.f32 %v3482, 0.0
      %v3515 = vmax.f32 %v3483, 0.0
      %v3516 = vmax.f32 %v3484, 0.0
      %v3517 = vmax.f32 %v3485, 0.0
      %v3518 = vmax.f32 %v3486, 0.0
      %v3519 = vmax.f32 %v3487, 0.0
      %v3520 = vmax.f32 %v3488, 0.0
      %v3521 = vmax.f32 %v3489, 0.0
      %v3522 = vmax.f32 %v3490, 0.0
      %v3523 = vmax.f32 %v3491, 0.0
      %v3524 = vmax.f32 %v3492, 0.0
      %v3525 = vmax.f32 %v3493, 0.0
      %v3526 = vmax.f32 %v3494, 0.0
      %v3527 = vmax.f32 %v3495, 0.0
      %v3528 = vmax.f32 %v3496, 0.0
      %v3529 = vmax.f32 %v3497, 0.0
      %v3530 = vmax.f32 %v3498, 0.0
      %v3531 = vmax.f32 %v3499, 0.0
      %v3532 = vmax.f32 %v3500, 0.0
      %v3533 = vmax.f32 %v3501, 0.0
      %v3534 = vmax.f32 %v3502, 0.0
      %v3535 = vmax.f32 %v3503, 0.0
      %v3536 = vmax.f32 %v3504, 0.0
      %v3537 = vmax.f32 %v3505, 0.0
      %v3538 = vpack.c.bf16 %v3506, %v3506
      %v3539 = vpack.c.bf16 %v3507, %v3507
      %v3540 = vpack.c.bf16 %v3508, %v3508
      %v3541 = vpack.c.bf16 %v3509, %v3509
      %v3542 = vpack.c.bf16 %v3510, %v3510
      %v3543 = vpack.c.bf16 %v3511, %v3511
      %v3544 = vpack.c.bf16 %v3512, %v3512
      %v3545 = vpack.c.bf16 %v3513, %v3513
      %v3546 = vpack.c.bf16 %v3514, %v3514
      %v3547 = vpack.c.bf16 %v3515, %v3515
      %v3548 = vpack.c.bf16 %v3516, %v3516
      %v3549 = vpack.c.bf16 %v3517, %v3517
      %v3550 = vpack.c.bf16 %v3518, %v3518
      %v3551 = vpack.c.bf16 %v3519, %v3519
      %v3552 = vpack.c.bf16 %v3520, %v3520
      %v3553 = vpack.c.bf16 %v3521, %v3521
      %v3554 = vpack.c.bf16 %v3522, %v3522
      %v3555 = vpack.c.bf16 %v3523, %v3523
      %v3556 = vpack.c.bf16 %v3524, %v3524
      %v3557 = vpack.c.bf16 %v3525, %v3525
      %v3558 = vpack.c.bf16 %v3526, %v3526
      %v3559 = vpack.c.bf16 %v3527, %v3527
      %v3560 = vpack.c.bf16 %v3528, %v3528
      %v3561 = vpack.c.bf16 %v3529, %v3529
      %v3562 = vpack.c.bf16 %v3530, %v3530
      %v3563 = vpack.c.bf16 %v3531, %v3531
      %v3564 = vpack.c.bf16 %v3532, %v3532
      %v3565 = vpack.c.bf16 %v3533, %v3533
      %v3566 = vpack.c.bf16 %v3534, %v3534
      %v3567 = vpack.c.bf16 %v3535, %v3535
      %v3568 = vpack.c.bf16 %v3536, %v3536
      %v3569 = vpack.c.bf16 %v3537, %v3537
      %3570 = vst.msk [vmem:[%s259] sm:$0xf] %vm1898, %v3538
      %3571 = vst.msk [vmem:[%s259 + $0x4] sm:$0xf] %vm1898, %v3539
      %3572 = vst.msk [vmem:[%s259 + $0x8] sm:$0xf] %vm1898, %v3540
      %3573 = vst.msk [vmem:[%s259 + $0xc] sm:$0xf] %vm1898, %v3541
      %3574 = vst.msk [vmem:[%s259 + $0x10] sm:$0xf] %vm1898, %v3542
      %3575 = vst.msk [vmem:[%s259 + $0x14] sm:$0xf] %vm1898, %v3543
      %3576 = vst.msk [vmem:[%s259 + $0x18] sm:$0xf] %vm1898, %v3544
      %3577 = vst.msk [vmem:[%s259 + $0x1c] sm:$0xf] %vm1898, %v3545
      %3578 = vst.msk [vmem:[%s259 + $0x20] sm:$0xf] %vm1898, %v3546
      %3579 = vst.msk [vmem:[%s259 + $0x24] sm:$0xf] %vm1898, %v3547
      %3580 = vst.msk [vmem:[%s259 + $0x28] sm:$0xf] %vm1898, %v3548
      %3581 = vst.msk [vmem:[%s259 + $0x2c] sm:$0xf] %vm1898, %v3549
      %3582 = vst.msk [vmem:[%s259 + $0x30] sm:$0xf] %vm1898, %v3550
      %3583 = vst.msk [vmem:[%s259 + $0x34] sm:$0xf] %vm1898, %v3551
      %3584 = vst.msk [vmem:[%s259 + $0x38] sm:$0xf] %vm1898, %v3552
      %3585 = vst.msk [vmem:[%s259 + $0x3c] sm:$0xf] %vm1898, %v3553
      %3586 = vst.msk [vmem:[%s259 + $0x40] sm:$0xf] %vm1898, %v3554
      %3587 = vst.msk [vmem:[%s259 + $0x44] sm:$0xf] %vm1898, %v3555
      %3588 = vst.msk [vmem:[%s259 + $0x48] sm:$0xf] %vm1898, %v3556
      %3589 = vst.msk [vmem:[%s259 + $0x4c] sm:$0xf] %vm1898, %v3557
      %3590 = vst.msk [vmem:[%s259 + $0x50] sm:$0xf] %vm1898, %v3558
      %3591 = vst.msk [vmem:[%s259 + $0x54] sm:$0xf] %vm1898, %v3559
      %3592 = vst.msk [vmem:[%s259 + $0x58] sm:$0xf] %vm1898, %v3560
      %3593 = vst.msk [vmem:[%s259 + $0x5c] sm:$0xf] %vm1898, %v3561
      %3594 = vst.msk [vmem:[%s259 + $0x60] sm:$0xf] %vm1898, %v3562
      %3595 = vst.msk [vmem:[%s259 + $0x64] sm:$0xf] %vm1898, %v3563
      %3596 = vst.msk [vmem:[%s259 + $0x68] sm:$0xf] %vm1898, %v3564
      %3597 = vst.msk [vmem:[%s259 + $0x6c] sm:$0xf] %vm1898, %v3565
      %3598 = vst.msk [vmem:[%s259 + $0x70] sm:$0xf] %vm1898, %v3566
      %3599 = vst.msk [vmem:[%s259 + $0x74] sm:$0xf] %vm1898, %v3567
      %3600 = vst.msk [vmem:[%s259 + $0x78] sm:$0xf] %vm1898, %v3568
      %3601 = vst.msk [vmem:[%s259 + $0x7c] sm:$0xf] %vm1898, %v3569
      %v3602 = vmax.f32 %v3506, %v3508
      %v3603 = vmax.f32 %v3507, %v3509
      %v3604 = vmax.f32 %v3510, %v3512
      %v3605 = vmax.f32 %v3511, %v3513
      %v3606 = vmax.f32 %v3514, %v3516
      %v3607 = vmax.f32 %v3515, %v3517
      %v3608 = vmax.f32 %v3518, %v3520
      %v3609 = vmax.f32 %v3519, %v3521
      %v3610 = vmax.f32 %v3522, %v3524
      %v3611 = vmax.f32 %v3523, %v3525
      %v3612 = vmax.f32 %v3526, %v3528
      %v3613 = vmax.f32 %v3527, %v3529
      %v3614 = vmax.f32 %v3530, %v3532
      %v3615 = vmax.f32 %v3531, %v3533
      %v3616 = vmax.f32 %v3534, %v3536
      %v3617 = vmax.f32 %v3535, %v3537
      %3618 = vst.msk [vmem:[#allocation4] sm:$0xff] %vm1366, %v3602
      %3619 = vst.msk [vmem:[#allocation4 + $0x8] sm:$0xff] %vm1366, %v3603
      %3620 = vst.msk [vmem:[#allocation4 + $0x10] sm:$0xff] %vm1366, %v3604
      %3621 = vst.msk [vmem:[#allocation4 + $0x18] sm:$0xff] %vm1366, %v3605
      %3622 = vst.msk [vmem:[#allocation4 + $0x20] sm:$0xff] %vm1366, %v3606
      %3623 = vst.msk [vmem:[#allocation4 + $0x28] sm:$0xff] %vm1366, %v3607
      %3624 = vst.msk [vmem:[#allocation4 + $0x30] sm:$0xff] %vm1366, %v3608
      %3625 = vst.msk [vmem:[#allocation4 + $0x38] sm:$0xff] %vm1366, %v3609
      %3626 = vst.msk [vmem:[#allocation4 + $0x40] sm:$0xff] %vm1366, %v3610
      %3627 = vst.msk [vmem:[#allocation4 + $0x48] sm:$0xff] %vm1366, %v3611
      %3628 = vst.msk [vmem:[#allocation4 + $0x50] sm:$0xff] %vm1366, %v3612
      %3629 = vst.msk [vmem:[#allocation4 + $0x58] sm:$0xff] %vm1366, %v3613
      %3630 = vst.msk [vmem:[#allocation4 + $0x60] sm:$0xff] %vm1366, %v3614
      %3631 = vst.msk [vmem:[#allocation4 + $0x68] sm:$0xff] %vm1366, %v3615
      %3632 = vst.msk [vmem:[#allocation4 + $0x70] sm:$0xff] %vm1366, %v3616
      %3633 = vst.msk [vmem:[#allocation4 + $0x78] sm:$0xff] %vm1366, %v3617
      %v3634 = vld [vmem:[#allocation4] ss:$2 sm:$0xff]
      %s3635 = scalar_lea.vmem [#allocation4], 16
      %v3636 = vld [vmem:[%s3635] ss:$2 sm:$0xff]
      %s3637 = scalar_lea.vmem [#allocation4], 32
      %v3638 = vld [vmem:[%s3637] ss:$2 sm:$0xff]
      %s3639 = scalar_lea.vmem [#allocation4], 48
      %v3640 = vld [vmem:[%s3639] ss:$2 sm:$0xff]
      %s3641 = scalar_lea.vmem [#allocation4], 64
      %v3642 = vld [vmem:[%s3641] ss:$2 sm:$0xff]
      %s3643 = scalar_lea.vmem [#allocation4], 80
      %v3644 = vld [vmem:[%s3643] ss:$2 sm:$0xff]
      %s3645 = scalar_lea.vmem [#allocation4], 96
      %v3646 = vld [vmem:[%s3645] ss:$2 sm:$0xff]
      %s3647 = scalar_lea.vmem [#allocation4], 112
      %v3648 = vld [vmem:[%s3647] ss:$2 sm:$0xff]
      %s3649 = scalar_lea.vmem [#allocation4], 1
      %v3650 = vld [vmem:[%s3649] ss:$2 sm:$0xff]
      %s3651 = scalar_lea.vmem [#allocation4], 17
      %v3652 = vld [vmem:[%s3651] ss:$2 sm:$0xff]
      %s3653 = scalar_lea.vmem [#allocation4], 33
      %v3654 = vld [vmem:[%s3653] ss:$2 sm:$0xff]
      %s3655 = scalar_lea.vmem [#allocation4], 49
      %v3656 = vld [vmem:[%s3655] ss:$2 sm:$0xff]
      %s3657 = scalar_lea.vmem [#allocation4], 65
      %v3658 = vld [vmem:[%s3657] ss:$2 sm:$0xff]
      %s3659 = scalar_lea.vmem [#allocation4], 81
      %v3660 = vld [vmem:[%s3659] ss:$2 sm:$0xff]
      %s3661 = scalar_lea.vmem [#allocation4], 97
      %v3662 = vld [vmem:[%s3661] ss:$2 sm:$0xff]
      %s3663 = scalar_lea.vmem [#allocation4], 113
      %v3664 = vld [vmem:[%s3663] ss:$2 sm:$0xff]
      %v3665 = vmax.f32 %v3634, %v3650
      %v3666 = vmax.f32 %v3636, %v3652
      %v3667 = vmax.f32 %v3638, %v3654
      %v3668 = vmax.f32 %v3640, %v3656
      %v3669 = vmax.f32 %v3642, %v3658
      %v3670 = vmax.f32 %v3644, %v3660
      %v3671 = vmax.f32 %v3646, %v3662
      %v3672 = vmax.f32 %v3648, %v3664
      %v3673 = vpack.c.bf16 %v3665, %v3665
      %v3674 = vpack.c.bf16 %v3666, %v3666
      %v3675 = vpack.c.bf16 %v3667, %v3667
      %v3676 = vpack.c.bf16 %v3668, %v3668
      %v3677 = vpack.c.bf16 %v3669, %v3669
      %v3678 = vpack.c.bf16 %v3670, %v3670
      %v3679 = vpack.c.bf16 %v3671, %v3671
      %v3680 = vpack.c.bf16 %v3672, %v3672
      %3681 = vst.msk [vmem:[%s264] sm:$0xf] %vm1898, %v3673
      %3682 = vst.msk [vmem:[%s264 + $0x4] sm:$0xf] %vm1898, %v3674
      %3683 = vst.msk [vmem:[%s264 + $0x8] sm:$0xf] %vm1898, %v3675
      %3684 = vst.msk [vmem:[%s264 + $0xc] sm:$0xf] %vm1898, %v3676
      %3685 = vst.msk [vmem:[%s264 + $0x10] sm:$0xf] %vm1898, %v3677
      %3686 = vst.msk [vmem:[%s264 + $0x14] sm:$0xf] %vm1898, %v3678
      %3687 = vst.msk [vmem:[%s264 + $0x18] sm:$0xf] %vm1898, %v3679
      %3688 = vst.msk [vmem:[%s264 + $0x1c] sm:$0xf] %vm1898, %v3680
      %p3689 = scmp.lt.s32.totalorder %s18, 1
      %s3690 = scalar_select %p3689, %s18, 1
      %s3691 = smul.addr %s3690, 32
      %s3692 = smul.addr %s3691, 4
      %s3693 = scalar_lea.vmem %s5, %s3692
      %p3694 = scmp.lt.s32.totalorder %s18, 1
      %s3695 = scalar_select %p3694, %s18, 1
      %s3696 = smul.addr %s3695, 8
      %s3697 = smul.addr %s3696, 4
      %s3698 = scalar_lea.vmem %s6, %s3697
      // Predicated region
      $region41: #{score_residue_forward.4} parent=39 // pred_check
        %p3699 = pneg %p146
      $region42: #{score_residue_forward.4} parent=39 // pred_check_branch
        %3701 = sbr.rel (%p3699) target = $region44
      $region43: #{score_residue_forward.4} parent=39 // pred_region
        _
      $region44: #{score_residue_forward.4} parent=39 // pred_fallthru
        _
      // Predicated region
      $region45: #{score_residue_forward.4} parent=39 // pred_check
        %p3702 = pneg %p172
      $region46: #{score_residue_forward.4} parent=39 // pred_check_branch
        %3704 = sbr.rel (%p3702) target = $region48
      $region47: #{score_residue_forward.4} parent=39 // pred_region
        _
      $region48: #{score_residue_forward.4} parent=39 // pred_fallthru
        _
    $region40: #{score_residue_forward.4} parent=5 // pred_fallthru
      _
    %p3705 = scmp.le.s32.totalorder 2, %s13
    // Predicated region
    $region49: #{score_residue_forward.4} parent=5 // pred_check
      %p3706 = pneg %p3705
    $region50: #{score_residue_forward.4} parent=5 // pred_check_branch
      %3708 = sbr.rel (%p3706) target = $region52
    $region51: #{score_residue_forward.4} parent=5 // pred_region
      %s3709 = ssub.s32 %s13, 2
      // Predicated region
      $region53: #{score_residue_forward.4} parent=51 // pred_check
        %p3710 = pneg %p152
      $region54: #{score_residue_forward.4} parent=51 // pred_check_branch
        %3712 = sbr.rel (%p3710) target = $region56
      $region55: #{score_residue_forward.4} parent=51 // pred_region
        %p3713 = scmp.lt.s32.totalorder %s19, 1
        %s3714 = scalar_select %p3713, %s19, 1
        %s3715 = smul.addr %s3714, 32
        %s3716 = smul.addr %s3715, 4
        %s3717 = scalar_lea.vmem %s5, %s3716
      $region56: #{score_residue_forward.4} parent=51 // pred_fallthru
        _
      // Predicated region
      $region57: #{score_residue_forward.4} parent=51 // pred_check
        %p3718 = pneg %p178
      $region58: #{score_residue_forward.4} parent=51 // pred_check_branch
        %3720 = sbr.rel (%p3718) target = $region60
      $region59: #{score_residue_forward.4} parent=51 // pred_region
        %p3721 = scmp.lt.s32.totalorder %s19, 1
        %s3722 = scalar_select %p3721, %s19, 1
        %s3723 = smul.addr %s3722, 8
        %s3724 = smul.addr %s3723, 4
        %s3725 = scalar_lea.vmem %s6, %s3724
      $region60: #{score_residue_forward.4} parent=51 // pred_fallthru
        _
    $region52: #{score_residue_forward.4} parent=5 // pred_fallthru
      _
  $region6: #{score_residue_forward.4} parent=0 // loop_footer
    %s17 = sadd.s32 1, %s13
  $region7: #{score_residue_forward.4} parent=0 // loop_footer_branch
    %12 = sbr.rel target = $region3
  $region8: #{score_residue_forward.4} parent=0 // loop_exit
    _

// kernel: score_residue_forward.7
$region0: #{score_residue_forward.7}
  #allocation0 [shape = 'u32[]', space=smem, size = 0x4, offset = 0x4, fixed_abs, tag = 'smem constant byte address 0x4 - core index']
  #allocation1 [shape = 'u32[72,128]{1,0:T(1,128)}', space=vmem, size = 0x9000, scoped, tag = 'internal scratch']
  #allocation2 [shape = 'bf16[18,18,8]{2,1,0:T(8,128)(2,1)}', space=vmem, size = 0x1b000, scoped, tag = 'scratch operand']
  #allocation3 [shape = 'bf16[18,18,8]{2,1,0:T(8,128)(2,1)}', space=vmem, size = 0x1b000, scoped, tag = 'scratch operand']
  #allocation4 [shape = 'bf16[18,18,8]{2,1,0:T(8,128)(2,1)}', space=vmem, size = 0x1b000, scoped, tag = 'scratch operand']
  %s0 = inlined_call_operand.vmem [shape: bf16[2,16,16,8], index: 0, kind: input, shape index: {}]
  %s1 = inlined_call_operand.vmem [shape: bf16[2,16,16,8], index: 1, kind: input, shape index: {}]
  %s2 = inlined_call_operand.vmem [shape: bf16[3,24,8], index: 2, kind: input, shape index: {}]
  %s3 = inlined_call_operand.vmem [shape: bf16[3,24,8], index: 3, kind: input, shape index: {}]
  %s4 = inlined_call_operand.vmem [shape: f32[1,8], index: 4, kind: input, shape index: {}]
  %s5 = inlined_call_operand.vmem [shape: bf16[3,24,8], index: 5, kind: input, shape index: {}]
  %s6 = inlined_call_operand.vmem [shape: f32[1,8], index: 6, kind: input, shape index: {}]
  %s7 = inlined_call_operand.vmem [shape: bf16[8,3], index: 7, kind: input, shape index: {}]
  %s8 = inlined_call_operand.vmem [shape: f32[1,3], index: 8, kind: input, shape index: {}]
  %s9 = inlined_call_operand.vmem [shape: f32[2,16,16,3], index: 9, kind: input, shape index: {}, may-alias: {9,10}]
  %s10 = inlined_call_operand.vmem [shape: f32[2,16,16,3], index: 10, kind: output, shape index: {}, may-alias: {9,10}]
  %s11 = sld [smem:[#allocation0]]
  $region73: #{score_residue_forward.7} parent=0
    _
  %s13 = ssub.s32 1, %s11
  %s14 = scalar_select 0, %s13, %s11
  loop: start=0, step=1, limit=4
  $region2: #{score_residue_forward.7} parent=0 // loop_pre_header
    _
  $region3: #{score_residue_forward.7} parent=0 // loop_header
    %s16 = sphi 0, %s20
    %p17 = scmp.ge.s32.totalorder %s16, 4
    %s26 = sphi 0, %s28
    %s29 = sphi 0, %s26
    %s30 = sphi 0, %s29
    %s46 = sphi 0, %s30
    %s52 = sphi 0, %s54
    %s55 = sphi 0, %s52
    %s56 = sphi 0, %s55
    %s72 = sphi 0, %s56
    %s76 = sphi 0, %s76
    %s78 = sphi 0, %s76
    %s79 = sphi 0, %s78
    %s93 = sphi 0, %s79
    %s97 = sphi 0, %s97
    %s99 = sphi 0, %s97
    %s100 = sphi 0, %s99
    %s114 = sphi 0, %s100
    %s118 = sphi 0, %s118
    %s120 = sphi 0, %s118
    %s121 = sphi 0, %s120
    %s135 = sphi 0, %s121
    %s139 = sphi 0, %s139
    %s141 = sphi 0, %s139
    %s142 = sphi 0, %s141
    %s156 = sphi 0, %s142
    %s160 = sphi 0, %s160
    %s162 = sphi 0, %s160
    %s163 = sphi 0, %s162
    %s177 = sphi 0, %s163
    %s181 = sphi 0, %s181
    %s183 = sphi 0, %s181
    %s184 = sphi 0, %s183
    %s198 = sphi 0, %s184
    %s202 = sphi 0, %s202
    %s204 = sphi 0, %s202
    %s205 = sphi 0, %s204
    %s219 = sphi 0, %s205
    %s225 = sphi 0, %s227
    %s228 = sphi 0, %s225
    %s229 = sphi 0, %s228
    %s245 = sphi 0, %s229
    %s251 = sphi 0, %s253
    %s254 = sphi 0, %s251
    %s255 = sphi 0, %s254
    %s271 = sphi 0, %s255
  $region4: #{score_residue_forward.7} parent=0 // loop_header_branch
    %19 = sbr.rel (%p17) target = $region8
  $region5: #{score_residue_forward.7} parent=0 // loop_body
    %s21 = ssub.s32 %s16, 1
    %s22 = ssub.s32 %s16, 2
    %s23 = sadd.s32 %s16, 1
    %s24 = ssub.s32 %s16, %s23
    %p25 = scmp.eq.s32.totalorder %s24, 0
    %s27 = sadd.s32 %s26, 1
    %s28 = scalar_select %p25, %s26, %s27
    %p31 = pneg %p25
    %p32 = scmp.eq.s32.totalorder %s16, 1
    %p33 = por %p31, %p32
    %p34 = scmp.ne.s32.totalorder %s26, %s29
    %p35 = scmp.eq.s32.totalorder %s16, 0
    %p36 = por %p34, %p35
    %p37 = scmp.ne.s32.totalorder %s26, %s29
    %p38 = scmp.eq.s32.totalorder %s21, 1
    %p39 = por %p37, %p38
    %p40 = scmp.ne.s32.totalorder %s29, %s30
    %p41 = scmp.eq.s32.totalorder %s21, 0
    %p42 = por %p40, %p41
    %p43 = scmp.ne.s32.totalorder %s29, %s30
    %p44 = scmp.eq.s32.totalorder %s22, 1
    %p45 = por %p43, %p44
    %p47 = scmp.ne.s32.totalorder %s30, %s46
    %p48 = scmp.eq.s32.totalorder %s22, 0
    %p49 = por %p47, %p48
    %s50 = ssub.s32 %s16, %s23
    %p51 = scmp.eq.s32.totalorder %s50, 0
    %s53 = sadd.s32 %s52, 1
    %s54 = scalar_select %p51, %s52, %s53
    %p57 = pneg %p51
    %p58 = scmp.eq.s32.totalorder %s16, 1
    %p59 = por %p57, %p58
    %p60 = scmp.ne.s32.totalorder %s52, %s55
    %p61 = scmp.eq.s32.totalorder %s16, 0
    %p62 = por %p60, %p61
    %p63 = scmp.ne.s32.totalorder %s52, %s55
    %p64 = scmp.eq.s32.totalorder %s21, 1
    %p65 = por %p63, %p64
    %p66 = scmp.ne.s32.totalorder %s55, %s56
    %p67 = scmp.eq.s32.totalorder %s21, 0
    %p68 = por %p66, %p67
    %p69 = scmp.ne.s32.totalorder %s55, %s56
    %p70 = scmp.eq.s32.totalorder %s22, 1
    %p71 = por %p69, %p70
    %p73 = scmp.ne.s32.totalorder %s56, %s72
    %p74 = scmp.eq.s32.totalorder %s22, 0
    %p75 = por %p73, %p74
    %s77 = sadd.s32 %s76, 1
    %p80 = scmp.eq.s32.totalorder %s16, 1
    %p81 = scmp.ne.s32.totalorder %s76, %s78
    %p82 = scmp.eq.s32.totalorder %s16, 0
    %p83 = por %p81, %p82
    %p84 = scmp.ne.s32.totalorder %s76, %s78
    %p85 = scmp.eq.s32.totalorder %s21, 1
    %p86 = por %p84, %p85
    %p87 = scmp.ne.s32.totalorder %s78, %s79
    %p88 = scmp.eq.s32.totalorder %s21, 0
    %p89 = por %p87, %p88
    %p90 = scmp.ne.s32.totalorder %s78, %s79
    %p91 = scmp.eq.s32.totalorder %s22, 1
    %p92 = por %p90, %p91
    %p94 = scmp.ne.s32.totalorder %s79, %s93
    %p95 = scmp.eq.s32.totalorder %s22, 0
    %p96 = por %p94, %p95
    %s98 = sadd.s32 %s97, 1
    %p101 = scmp.eq.s32.totalorder %s16, 1
    %p102 = scmp.ne.s32.totalorder %s97, %s99
    %p103 = scmp.eq.s32.totalorder %s16, 0
    %p104 = por %p102, %p103
    %p105 = scmp.ne.s32.totalorder %s97, %s99
    %p106 = scmp.eq.s32.totalorder %s21, 1
    %p107 = por %p105, %p106
    %p108 = scmp.ne.s32.totalorder %s99, %s100
    %p109 = scmp.eq.s32.totalorder %s21, 0
    %p110 = por %p108, %p109
    %p111 = scmp.ne.s32.totalorder %s99, %s100
    %p112 = scmp.eq.s32.totalorder %s22, 1
    %p113 = por %p111, %p112
    %p115 = scmp.ne.s32.totalorder %s100, %s114
    %p116 = scmp.eq.s32.totalorder %s22, 0
    %p117 = por %p115, %p116
    %s119 = sadd.s32 %s118, 1
    %p122 = scmp.eq.s32.totalorder %s16, 1
    %p123 = scmp.ne.s32.totalorder %s118, %s120
    %p124 = scmp.eq.s32.totalorder %s16, 0
    %p125 = por %p123, %p124
    %p126 = scmp.ne.s32.totalorder %s118, %s120
    %p127 = scmp.eq.s32.totalorder %s21, 1
    %p128 = por %p126, %p127
    %p129 = scmp.ne.s32.totalorder %s120, %s121
    %p130 = scmp.eq.s32.totalorder %s21, 0
    %p131 = por %p129, %p130
    %p132 = scmp.ne.s32.totalorder %s120, %s121
    %p133 = scmp.eq.s32.totalorder %s22, 1
    %p134 = por %p132, %p133
    %p136 = scmp.ne.s32.totalorder %s121, %s135
    %p137 = scmp.eq.s32.totalorder %s22, 0
    %p138 = por %p136, %p137
    %s140 = sadd.s32 %s139, 1
    %p143 = scmp.eq.s32.totalorder %s16, 1
    %p144 = scmp.ne.s32.totalorder %s139, %s141
    %p145 = scmp.eq.s32.totalorder %s16, 0
    %p146 = por %p144, %p145
    %p147 = scmp.ne.s32.totalorder %s139, %s141
    %p148 = scmp.eq.s32.totalorder %s21, 1
    %p149 = por %p147, %p148
    %p150 = scmp.ne.s32.totalorder %s141, %s142
    %p151 = scmp.eq.s32.totalorder %s21, 0
    %p152 = por %p150, %p151
    %p153 = scmp.ne.s32.totalorder %s141, %s142
    %p154 = scmp.eq.s32.totalorder %s22, 1
    %p155 = por %p153, %p154
    %p157 = scmp.ne.s32.totalorder %s142, %s156
    %p158 = scmp.eq.s32.totalorder %s22, 0
    %p159 = por %p157, %p158
    %s161 = sadd.s32 %s160, 1
    %p164 = scmp.eq.s32.totalorder %s16, 1
    %p165 = scmp.ne.s32.totalorder %s160, %s162
    %p166 = scmp.eq.s32.totalorder %s16, 0
    %p167 = por %p165, %p166
    %p168 = scmp.ne.s32.totalorder %s160, %s162
    %p169 = scmp.eq.s32.totalorder %s21, 1
    %p170 = por %p168, %p169
    %p171 = scmp.ne.s32.totalorder %s162, %s163
    %p172 = scmp.eq.s32.totalorder %s21, 0
    %p173 = por %p171, %p172
    %p174 = scmp.ne.s32.totalorder %s162, %s163
    %p175 = scmp.eq.s32.totalorder %s22, 1
    %p176 = por %p174, %p175
    %p178 = scmp.ne.s32.totalorder %s163, %s177
    %p179 = scmp.eq.s32.totalorder %s22, 0
    %p180 = por %p178, %p179
    %s182 = sadd.s32 %s181, 1
    %p185 = scmp.eq.s32.totalorder %s16, 1
    %p186 = scmp.ne.s32.totalorder %s181, %s183
    %p187 = scmp.eq.s32.totalorder %s16, 0
    %p188 = por %p186, %p187
    %p189 = scmp.ne.s32.totalorder %s181, %s183
    %p190 = scmp.eq.s32.totalorder %s21, 1
    %p191 = por %p189, %p190
    %p192 = scmp.ne.s32.totalorder %s183, %s184
    %p193 = scmp.eq.s32.totalorder %s21, 0
    %p194 = por %p192, %p193
    %p195 = scmp.ne.s32.totalorder %s183, %s184
    %p196 = scmp.eq.s32.totalorder %s22, 1
    %p197 = por %p195, %p196
    %p199 = scmp.ne.s32.totalorder %s184, %s198
    %p200 = scmp.eq.s32.totalorder %s22, 0
    %p201 = por %p199, %p200
    %s203 = sadd.s32 %s202, 1
    %p206 = scmp.eq.s32.totalorder %s16, 1
    %p207 = scmp.ne.s32.totalorder %s202, %s204
    %p208 = scmp.eq.s32.totalorder %s16, 0
    %p209 = por %p207, %p208
    %p210 = scmp.ne.s32.totalorder %s202, %s204
    %p211 = scmp.eq.s32.totalorder %s21, 1
    %p212 = por %p210, %p211
    %p213 = scmp.ne.s32.totalorder %s204, %s205
    %p214 = scmp.eq.s32.totalorder %s21, 0
    %p215 = por %p213, %p214
    %p216 = scmp.ne.s32.totalorder %s204, %s205
    %p217 = scmp.eq.s32.totalorder %s22, 1
    %p218 = por %p216, %p217
    %p220 = scmp.ne.s32.totalorder %s205, %s219
    %p221 = scmp.eq.s32.totalorder %s22, 0
    %p222 = por %p220, %p221
    %s223 = ssub.s32 %s16, %s23
    %p224 = scmp.eq.s32.totalorder %s223, 0
    %s226 = sadd.s32 %s225, 1
    %s227 = scalar_select %p224, %s225, %s226
    %p230 = pneg %p224
    %p231 = scmp.eq.s32.totalorder %s16, 1
    %p232 = por %p230, %p231
    %p233 = scmp.ne.s32.totalorder %s225, %s228
    %p234 = scmp.eq.s32.totalorder %s16, 0
    %p235 = por %p233, %p234
    %p236 = scmp.ne.s32.totalorder %s225, %s228
    %p237 = scmp.eq.s32.totalorder %s21, 1
    %p238 = por %p236, %p237
    %p239 = scmp.ne.s32.totalorder %s228, %s229
    %p240 = scmp.eq.s32.totalorder %s21, 0
    %p241 = por %p239, %p240
    %p242 = scmp.ne.s32.totalorder %s228, %s229
    %p243 = scmp.eq.s32.totalorder %s22, 1
    %p244 = por %p242, %p243
    %p246 = scmp.ne.s32.totalorder %s229, %s245
    %p247 = scmp.eq.s32.totalorder %s22, 0
    %p248 = por %p246, %p247
    %s249 = ssub.s32 %s16, %s23
    %p250 = scmp.eq.s32.totalorder %s249, 0
    %s252 = sadd.s32 %s251, 1
    %s253 = scalar_select %p250, %s251, %s252
    %p256 = pneg %p250
    %p257 = scmp.eq.s32.totalorder %s16, 1
    %p258 = por %p256, %p257
    %p259 = scmp.ne.s32.totalorder %s251, %s254
    %p260 = scmp.eq.s32.totalorder %s16, 0
    %p261 = por %p259, %p260
    %p262 = scmp.ne.s32.totalorder %s251, %s254
    %p263 = scmp.eq.s32.totalorder %s21, 1
    %p264 = por %p262, %p263
    %p265 = scmp.ne.s32.totalorder %s254, %s255
    %p266 = scmp.eq.s32.totalorder %s21, 0
    %p267 = por %p265, %p266
    %p268 = scmp.ne.s32.totalorder %s254, %s255
    %p269 = scmp.eq.s32.totalorder %s22, 1
    %p270 = por %p268, %p269
    %p272 = scmp.ne.s32.totalorder %s255, %s271
    %p273 = scmp.eq.s32.totalorder %s22, 0
    %p274 = por %p272, %p273
    %p275 = scmp.le.s32.totalorder 1, %s16
    %p276 = scmp.lt.s32.totalorder %s16, 3
    %p277 = pnand %p275, %p276
    %p278 = pneg %p277
    // Predicated region
    $region9: #{score_residue_forward.7} parent=5 // pred_check
      _
    $region10: #{score_residue_forward.7} parent=5 // pred_check_branch
      %280 = sbr.rel (%p277) target = $region12
    $region11: #{score_residue_forward.7} parent=5 // pred_region
      %s281 = ssub.s32 %s16, 1
      // Predicated region
      $region13: #{score_residue_forward.7} parent=11 // pred_check
        %p282 = pneg %p89
      $region14: #{score_residue_forward.7} parent=11 // pred_check_branch
        %284 = sbr.rel (%p282) target = $region16
      $region15: #{score_residue_forward.7} parent=11 // pred_region
        _
      $region16: #{score_residue_forward.7} parent=11 // pred_fallthru
        _
      // Predicated region
      $region17: #{score_residue_forward.7} parent=11 // pred_check
        %p285 = pneg %p110
      $region18: #{score_residue_forward.7} parent=11 // pred_check_branch
        %287 = sbr.rel (%p285) target = $region20
      $region19: #{score_residue_forward.7} parent=11 // pred_region
        _
      $region20: #{score_residue_forward.7} parent=11 // pred_fallthru
        _
      // Predicated region
      $region21: #{score_residue_forward.7} parent=11 // pred_check
        %p288 = pneg %p131
      $region22: #{score_residue_forward.7} parent=11 // pred_check_branch
        %290 = sbr.rel (%p288) target = $region24
      $region23: #{score_residue_forward.7} parent=11 // pred_region
        _
      $region24: #{score_residue_forward.7} parent=11 // pred_fallthru
        _
      // Predicated region
      $region25: #{score_residue_forward.7} parent=11 // pred_check
        %p291 = pneg %p152
      $region26: #{score_residue_forward.7} parent=11 // pred_check_branch
        %293 = sbr.rel (%p291) target = $region28
      $region27: #{score_residue_forward.7} parent=11 // pred_region
        _
      $region28: #{score_residue_forward.7} parent=11 // pred_fallthru
        _
      // Predicated region
      $region29: #{score_residue_forward.7} parent=11 // pred_check
        %p294 = pneg %p173
      $region30: #{score_residue_forward.7} parent=11 // pred_check_branch
        %296 = sbr.rel (%p294) target = $region32
      $region31: #{score_residue_forward.7} parent=11 // pred_region
        _
      $region32: #{score_residue_forward.7} parent=11 // pred_fallthru
        _
      // Predicated region
      $region33: #{score_residue_forward.7} parent=11 // pred_check
        %p297 = pneg %p194
      $region34: #{score_residue_forward.7} parent=11 // pred_check_branch
        %299 = sbr.rel (%p297) target = $region36
      $region35: #{score_residue_forward.7} parent=11 // pred_region
        _
      $region36: #{score_residue_forward.7} parent=11 // pred_fallthru
        _
      // Predicated region
      $region37: #{score_residue_forward.7} parent=11 // pred_check
        %p300 = pneg %p215
      $region38: #{score_residue_forward.7} parent=11 // pred_check_branch
        %302 = sbr.rel (%p300) target = $region40
      $region39: #{score_residue_forward.7} parent=11 // pred_region
        _
      $region40: #{score_residue_forward.7} parent=11 // pred_fallthru
        _
    $region12: #{score_residue_forward.7} parent=5 // pred_fallthru
      _
    %p303 = scmp.lt.s32.totalorder %s16, 2
    // Predicated region
    $region41: #{score_residue_forward.7} parent=5 // pred_check
      %p304 = pneg %p303
    $region42: #{score_residue_forward.7} parent=5 // pred_check_branch
      %306 = sbr.rel (%p304) target = $region44
    $region43: #{score_residue_forward.7} parent=5 // pred_region
      // Predicated region
      $region45: #{score_residue_forward.7} parent=43 // pred_check
        %p307 = pneg %p36
      $region46: #{score_residue_forward.7} parent=43 // pred_check_branch
        %309 = sbr.rel (%p307) target = $region48
      $region47: #{score_residue_forward.7} parent=43 // pred_region
        %p310 = scmp.lt.s32.totalorder %s16, 1
        %s311 = scalar_select %p310, %s16, 1
        %s312 = smul.addr %s311, 32
        %s313 = smul.addr %s312, 4
        %s314 = scalar_lea.vmem %s0, %s313
      $region48: #{score_residue_forward.7} parent=43 // pred_fallthru
        _
      // Predicated region
      $region49: #{score_residue_forward.7} parent=43 // pred_check
        %p315 = pneg %p62
      $region50: #{score_residue_forward.7} parent=43 // pred_check_branch
        %317 = sbr.rel (%p315) target = $region52
      $region51: #{score_residue_forward.7} parent=43 // pred_region
        %p318 = scmp.lt.s32.totalorder %s16, 1
        %s319 = scalar_select %p318, %s16, 1
        %s320 = smul.addr %s319, 32
        %s321 = smul.addr %s320, 4
        %s322 = scalar_lea.vmem %s1, %s321
      $region52: #{score_residue_forward.7} parent=43 // pred_fallthru
        _
      // Predicated region
      $region53: #{score_residue_forward.7} parent=43 // pred_check
        %p323 = pneg %p235
      $region54: #{score_residue_forward.7} parent=43 // pred_check_branch
        %325 = sbr.rel (%p323) target = $region56
      $region55: #{score_residue_forward.7} parent=43 // pred_region
        %p326 = scmp.lt.s32.totalorder %s16, 1
        %s327 = scalar_select %p326, %s16, 1
        %s328 = smul.addr %s327, 32
        %s329 = smul.addr %s328, 8
        %s330 = scalar_lea.vmem %s9, %s329
      $region56: #{score_residue_forward.7} parent=43 // pred_fallthru
        _
    $region44: #{score_residue_forward.7} parent=5 // pred_fallthru
      _
    %p331 = scmp.le.s32.totalorder 1, %s16
    %p332 = scmp.lt.s32.totalorder %s16, 3
    %p333 = pnand %p331, %p332
    %p334 = pneg %p333
    // Predicated region
    $region57: #{score_residue_forward.7} parent=5 // pred_check
      _
    $region58: #{score_residue_forward.7} parent=5 // pred_check_branch
      %336 = sbr.rel (%p333) target = $region60
    $region59: #{score_residue_forward.7} parent=5 // pred_region
      %s337 = ssub.s32 %s16, 1
      %p338 = scmp.lt.s32.totalorder %s21, 1
      %s339 = scalar_select %p338, %s21, 1
      %s340 = smul.addr %s339, 32
      %s341 = smul.addr %s340, 4
      %s342 = scalar_lea.vmem %s0, %s341
      %p343 = pneg %p42
      %p344 = pneg %p39
      %p345 = scmp.lt.s32.totalorder %s21, 1
      %s346 = scalar_select %p345, %s21, 1
      %s347 = smul.addr %s346, 32
      %s348 = smul.addr %s347, 4
      %s349 = scalar_lea.vmem %s1, %s348
      %p350 = pneg %p68
      %p351 = pneg %p65
      %p352 = pneg %p89
      %p353 = pneg %p86
      %p354 = pneg %p110
      %p355 = pneg %p107
      %p356 = pneg %p131
      %p357 = pneg %p128
      %p358 = pneg %p152
      %p359 = pneg %p149
      %p360 = pneg %p173
      %p361 = pneg %p170
      %p362 = pneg %p194
      %p363 = pneg %p191
      %p364 = pneg %p215
      %p365 = pneg %p212
      %p366 = scmp.lt.s32.totalorder %s21, 1
      %s367 = scalar_select %p366, %s21, 1
      %s368 = smul.addr %s367, 32
      %s369 = smul.addr %s368, 8
      %s370 = scalar_lea.vmem %s9, %s369
      %p371 = pneg %p241
      %p372 = pneg %p238
      %p373 = pneg %p267
      %p374 = pneg %p264
      %p375 = scmp.lt.s32.totalorder %s21, 1
      %s376 = scalar_select %p375, %s21, 1
      %s377 = smul.addr %s376, 32
      %s378 = smul.addr %s377, 8
      %s379 = scalar_lea.vmem %s10, %s378
      %p380 = scmp.lt.s32.totalorder %s21, 1
      %s381 = scalar_select %p380, %s21, 1
      %s382 = smul.addr %s381, 32
      %s383 = smul.addr %s382, 4
      %s384 = scalar_lea.vmem %s0, %s383
      %p385 = scmp.lt.s32.totalorder %s21, 1
      %s386 = scalar_select %p385, %s21, 1
      %s387 = smul.addr %s386, 32
      %s388 = smul.addr %s387, 4
      %s389 = scalar_lea.vmem %s1, %s388
      %p390 = scmp.lt.s32.totalorder %s21, 1
      %s391 = scalar_select %p390, %s21, 1
      %s392 = smul.addr %s391, 32
      %s393 = smul.addr %s392, 8
      %s394 = scalar_lea.vmem %s9, %s393
      %p395 = scmp.lt.s32.totalorder %s21, 1
      %s396 = scalar_select %p395, %s21, 1
      %s397 = smul.addr %s396, 32
      %s398 = smul.addr %s397, 8
      %s399 = scalar_lea.vmem %s10, %s398
      %v401 = vld [vmem:[%s384] sm:$0xf]
      %v402 = vld [vmem:[%s384 + $0x4] sm:$0xf]
      %v403 = vld [vmem:[%s384 + $0x8] sm:$0xf]
      %v404 = vld [vmem:[%s384 + $0xc] sm:$0xf]
      %v405 = vld [vmem:[%s384 + $0x10] sm:$0xf]
      %v406 = vld [vmem:[%s384 + $0x14] sm:$0xf]
      %v407 = vld [vmem:[%s384 + $0x18] sm:$0xf]
      %v408 = vld [vmem:[%s384 + $0x1c] sm:$0xf]
      %v409 = vld [vmem:[%s384 + $0x20] sm:$0xf]
      %v410 = vld [vmem:[%s384 + $0x24] sm:$0xf]
      %v411 = vld [vmem:[%s384 + $0x28] sm:$0xf]
      %v412 = vld [vmem:[%s384 + $0x2c] sm:$0xf]
      %v413 = vld [vmem:[%s384 + $0x30] sm:$0xf]
      %v414 = vld [vmem:[%s384 + $0x34] sm:$0xf]
      %v415 = vld [vmem:[%s384 + $0x38] sm:$0xf]
      %v416 = vld [vmem:[%s384 + $0x3c] sm:$0xf]
      %v417 = vld [vmem:[%s384 + $0x40] sm:$0xf]
      %v418 = vld [vmem:[%s384 + $0x44] sm:$0xf]
      %v419 = vld [vmem:[%s384 + $0x48] sm:$0xf]
      %v420 = vld [vmem:[%s384 + $0x4c] sm:$0xf]
      %v421 = vld [vmem:[%s384 + $0x50] sm:$0xf]
      %v422 = vld [vmem:[%s384 + $0x54] sm:$0xf]
      %v423 = vld [vmem:[%s384 + $0x58] sm:$0xf]
      %v424 = vld [vmem:[%s384 + $0x5c] sm:$0xf]
      %v425 = vld [vmem:[%s384 + $0x60] sm:$0xf]
      %v426 = vld [vmem:[%s384 + $0x64] sm:$0xf]
      %v427 = vld [vmem:[%s384 + $0x68] sm:$0xf]
      %v428 = vld [vmem:[%s384 + $0x6c] sm:$0xf]
      %v429 = vld [vmem:[%s384 + $0x70] sm:$0xf]
      %v430 = vld [vmem:[%s384 + $0x74] sm:$0xf]
      %v431 = vld [vmem:[%s384 + $0x78] sm:$0xf]
      %v432 = vld [vmem:[%s384 + $0x7c] sm:$0xf]
      %vm433 = vcmask 60416
      %434 = vst.msk [vmem:[#allocation2] sm:$0xf] %vm433, 0
      %435 = vst.msk [vmem:[#allocation2 + $0x4] sm:$0xf] %vm433, 0
      %vm436 = vcmask 57344
      %437 = vst.msk [vmem:[#allocation2 + $0x8] sm:$0x1] %vm436, 0
      %s438 = scalar_lea.vmem [#allocation2], 204
      %439 = vst.msk [vmem:[%s438] sm:$0xf] %vm433, 0
      %440 = vst.msk [vmem:[%s438 + $0x4] sm:$0xf] %vm433, 0
      %441 = vst.msk [vmem:[%s438 + $0x8] sm:$0x1] %vm436, 0
      %s442 = scalar_lea.vmem [#allocation2], 12
      %vm443 = vcmask 57344
      %vm444 = vsmask.f32 256
      %vm445 = vmand %vm443, %vm444
      %v446 = vld [vmem:[%s442] sm:$0x1]
      %v447 = vsel %vm445, 0, %v446
      %448 = vst [vmem:[%s442] sm:$0x1] %v447
      %v449 = vld [vmem:[%s442 + $0xc] sm:$0x1]
      %v450 = vsel %vm445, 0, %v449
      %451 = vst [vmem:[%s442 + $0xc] sm:$0x1] %v450
      %v452 = vld [vmem:[%s442 + $0x18] sm:$0x1]
      %v453 = vsel %vm445, 0, %v452
      %454 = vst [vmem:[%s442 + $0x18] sm:$0x1] %v453
      %v455 = vld [vmem:[%s442 + $0x24] sm:$0x1]
      %v456 = vsel %vm445, 0, %v455
      %457 = vst [vmem:[%s442 + $0x24] sm:$0x1] %v456
      %v458 = vld [vmem:[%s442 + $0x30] sm:$0x1]
      %v459 = vsel %vm445, 0, %v458
      %460 = vst [vmem:[%s442 + $0x30] sm:$0x1] %v459
      %v461 = vld [vmem:[%s442 + $0x3c] sm:$0x1]
      %v462 = vsel %vm445, 0, %v461
      %463 = vst [vmem:[%s442 + $0x3c] sm:$0x1] %v462
      %v464 = vld [vmem:[%s442 + $0x48] sm:$0x1]
      %v465 = vsel %vm445, 0, %v464
      %466 = vst [vmem:[%s442 + $0x48] sm:$0x1] %v465
      %v467 = vld [vmem:[%s442 + $0x54] sm:$0x1]
      %v468 = vsel %vm445, 0, %v467
      %469 = vst [vmem:[%s442 + $0x54] sm:$0x1] %v468
      %v470 = vld [vmem:[%s442 + $0x60] sm:$0x1]
      %v471 = vsel %vm445, 0, %v470
      %472 = vst [vmem:[%s442 + $0x60] sm:$0x1] %v471
      %v473 = vld [vmem:[%s442 + $0x6c] sm:$0x1]
      %v474 = vsel %vm445, 0, %v473
      %475 = vst [vmem:[%s442 + $0x6c] sm:$0x1] %v474
      %v476 = vld [vmem:[%s442 + $0x78] sm:$0x1]
      %v477 = vsel %vm445, 0, %v476
      %478 = vst [vmem:[%s442 + $0x78] sm:$0x1] %v477
      %v479 = vld [vmem:[%s442 + $0x84] sm:$0x1]
      %v480 = vsel %vm445, 0, %v479
      %481 = vst [vmem:[%s442 + $0x84] sm:$0x1] %v480
      %v482 = vld [vmem:[%s442 + $0x90] sm:$0x1]
      %v483 = vsel %vm445, 0, %v482
      %484 = vst [vmem:[%s442 + $0x90] sm:$0x1] %v483
      %v485 = vld [vmem:[%s442 + $0x9c] sm:$0x1]
      %v486 = vsel %vm445, 0, %v485
      %487 = vst [vmem:[%s442 + $0x9c] sm:$0x1] %v486
      %v488 = vld [vmem:[%s442 + $0xa8] sm:$0x1]
      %v489 = vsel %vm445, 0, %v488
      %490 = vst [vmem:[%s442 + $0xa8] sm:$0x1] %v489
      %v491 = vld [vmem:[%s442 + $0xb4] sm:$0x1]
      %v492 = vsel %vm445, 0, %v491
      %493 = vst [vmem:[%s442 + $0xb4] sm:$0x1] %v492
      %vm494 = vsmask.f32 7938
      %vm495 = vmand %vm443, %vm494
      %v496 = vld [vmem:[%s442 + $0x8] sm:$0x1]
      %v497 = vsel %vm495, 0, %v496
      %498 = vst [vmem:[%s442 + $0x8] sm:$0x1] %v497
      %v499 = vld [vmem:[%s442 + $0x14] sm:$0x1]
      %v500 = vsel %vm495, 0, %v499
      %501 = vst [vmem:[%s442 + $0x14] sm:$0x1] %v500
      %v502 = vld [vmem:[%s442 + $0x20] sm:$0x1]
      %v503 = vsel %vm495, 0, %v502
      %504 = vst [vmem:[%s442 + $0x20] sm:$0x1] %v503
      %v505 = vld [vmem:[%s442 + $0x2c] sm:$0x1]
      %v506 = vsel %vm495, 0, %v505
      %507 = vst [vmem:[%s442 + $0x2c] sm:$0x1] %v506
      %v508 = vld [vmem:[%s442 + $0x38] sm:$0x1]
      %v509 = vsel %vm495, 0, %v508
      %510 = vst [vmem:[%s442 + $0x38] sm:$0x1] %v509
      %v511 = vld [vmem:[%s442 + $0x44] sm:$0x1]
      %v512 = vsel %vm495, 0, %v511
      %513 = vst [vmem:[%s442 + $0x44] sm:$0x1] %v512
      %v514 = vld [vmem:[%s442 + $0x50] sm:$0x1]
      %v515 = vsel %vm495, 0, %v514
      %516 = vst [vmem:[%s442 + $0x50] sm:$0x1] %v515
      %v517 = vld [vmem:[%s442 + $0x5c] sm:$0x1]
      %v518 = vsel %vm495, 0, %v517
      %519 = vst [vmem:[%s442 + $0x5c] sm:$0x1] %v518
      %v520 = vld [vmem:[%s442 + $0x68] sm:$0x1]
      %v521 = vsel %vm495, 0, %v520
      %522 = vst [vmem:[%s442 + $0x68] sm:$0x1] %v521
      %v523 = vld [vmem:[%s442 + $0x74] sm:$0x1]
      %v524 = vsel %vm495, 0, %v523
      %525 = vst [vmem:[%s442 + $0x74] sm:$0x1] %v524
      %v526 = vld [vmem:[%s442 + $0x80] sm:$0x1]
      %v527 = vsel %vm495, 0, %v526
      %528 = vst [vmem:[%s442 + $0x80] sm:$0x1] %v527
      %v529 = vld [vmem:[%s442 + $0x8c] sm:$0x1]
      %v530 = vsel %vm495, 0, %v529
      %531 = vst [vmem:[%s442 + $0x8c] sm:$0x1] %v530
      %v532 = vld [vmem:[%s442 + $0x98] sm:$0x1]
      %v533 = vsel %vm495, 0, %v532
      %534 = vst [vmem:[%s442 + $0x98] sm:$0x1] %v533
      %v535 = vld [vmem:[%s442 + $0xa4] sm:$0x1]
      %v536 = vsel %vm495, 0, %v535
      %537 = vst [vmem:[%s442 + $0xa4] sm:$0x1] %v536
      %v538 = vld [vmem:[%s442 + $0xb0] sm:$0x1]
      %v539 = vsel %vm495, 0, %v538
      %540 = vst [vmem:[%s442 + $0xb0] sm:$0x1] %v539
      %v541 = vld [vmem:[%s442 + $0xbc] sm:$0x1]
      %v542 = vsel %vm495, 0, %v541
      %543 = vst [vmem:[%s442 + $0xbc] sm:$0x1] %v542
      %vm544 = vsmask.f32 4368
      %vm545 = vmor %vm444, %vm544
      %v547 = vshrl.u32 %v401, 16
      %v549 = vrot.slane %v547, 7
      %v550 = vshll.u32 %v401, 16
      %v552 = vor.u32 %v549, %v550
      %v553 = vrot.slane %v549, 4
      %v555 = vshrl.u32 %v402, 16
      %v557 = vrot.slane %v555, 7
      %v558 = vshll.u32 %v402, 16
      %v560 = vor.u32 %v557, %v558
      %v561 = vsel %vm545, %v553, %v560
      %v562 = vrot.slane %v557, 4
      %v564 = vshrl.u32 %v403, 16
      %v566 = vrot.slane %v564, 7
      %v567 = vshll.u32 %v403, 16
      %v569 = vor.u32 %v566, %v567
      %v570 = vrot.slane %v566, 4
      %v572 = vshrl.u32 %v404, 16
      %v574 = vrot.slane %v572, 7
      %v575 = vshll.u32 %v404, 16
      %v577 = vor.u32 %v574, %v575
      %v578 = vsel %vm545, %v570, %v577
      %v579 = vrot.slane %v574, 4
      %v581 = vshrl.u32 %v405, 16
      %v583 = vrot.slane %v581, 7
      %v584 = vshll.u32 %v405, 16
      %v586 = vor.u32 %v583, %v584
      %v587 = vrot.slane %v583, 4
      %v589 = vshrl.u32 %v406, 16
      %v591 = vrot.slane %v589, 7
      %v592 = vshll.u32 %v406, 16
      %v594 = vor.u32 %v591, %v592
      %v595 = vsel %vm545, %v587, %v594
      %v596 = vrot.slane %v591, 4
      %v598 = vshrl.u32 %v407, 16
      %v600 = vrot.slane %v598, 7
      %v601 = vshll.u32 %v407, 16
      %v603 = vor.u32 %v600, %v601
      %v604 = vrot.slane %v600, 4
      %v606 = vshrl.u32 %v408, 16
      %v608 = vrot.slane %v606, 7
      %v609 = vshll.u32 %v408, 16
      %v611 = vor.u32 %v608, %v609
      %v612 = vsel %vm545, %v604, %v611
      %v613 = vrot.slane %v608, 4
      %v615 = vshrl.u32 %v409, 16
      %v617 = vrot.slane %v615, 7
      %v618 = vshll.u32 %v409, 16
      %v620 = vor.u32 %v617, %v618
      %v621 = vrot.slane %v617, 4
      %v623 = vshrl.u32 %v410, 16
      %v625 = vrot.slane %v623, 7
      %v626 = vshll.u32 %v410, 16
      %v628 = vor.u32 %v625, %v626
      %v629 = vsel %vm545, %v621, %v628
      %v630 = vrot.slane %v625, 4
      %v632 = vshrl.u32 %v411, 16
      %v634 = vrot.slane %v632, 7
      %v635 = vshll.u32 %v411, 16
      %v637 = vor.u32 %v634, %v635
      %v638 = vrot.slane %v634, 4
      %v640 = vshrl.u32 %v412, 16
      %v642 = vrot.slane %v640, 7
      %v643 = vshll.u32 %v412, 16
      %v645 = vor.u32 %v642, %v643
      %v646 = vsel %vm545, %v638, %v645
      %v647 = vrot.slane %v642, 4
      %v649 = vshrl.u32 %v413, 16
      %v651 = vrot.slane %v649, 7
      %v652 = vshll.u32 %v413, 16
      %v654 = vor.u32 %v651, %v652
      %v655 = vrot.slane %v651, 4
      %v657 = vshrl.u32 %v414, 16
      %v659 = vrot.slane %v657, 7
      %v660 = vshll.u32 %v414, 16
      %v662 = vor.u32 %v659, %v660
      %v663 = vsel %vm545, %v655, %v662
      %v664 = vrot.slane %v659, 4
      %v666 = vshrl.u32 %v415, 16
      %v668 = vrot.slane %v666, 7
      %v669 = vshll.u32 %v415, 16
      %v671 = vor.u32 %v668, %v669
      %v672 = vrot.slane %v668, 4
      %v674 = vshrl.u32 %v416, 16
      %v676 = vrot.slane %v674, 7
      %v677 = vshll.u32 %v416, 16
      %v679 = vor.u32 %v676, %v677
      %v680 = vsel %vm545, %v672, %v679
      %v681 = vrot.slane %v676, 4
      %v683 = vshrl.u32 %v417, 16
      %v685 = vrot.slane %v683, 7
      %v686 = vshll.u32 %v417, 16
      %v688 = vor.u32 %v685, %v686
      %v689 = vrot.slane %v685, 4
      %v691 = vshrl.u32 %v418, 16
      %v693 = vrot.slane %v691, 7
      %v694 = vshll.u32 %v418, 16
      %v696 = vor.u32 %v693, %v694
      %v697 = vsel %vm545, %v689, %v696
      %v698 = vrot.slane %v693, 4
      %v700 = vshrl.u32 %v419, 16
      %v702 = vrot.slane %v700, 7
      %v703 = vshll.u32 %v419, 16
      %v705 = vor.u32 %v702, %v703
      %v706 = vrot.slane %v702, 4
      %v708 = vshrl.u32 %v420, 16
      %v710 = vrot.slane %v708, 7
      %v711 = vshll.u32 %v420, 16
      %v713 = vor.u32 %v710, %v711
      %v714 = vsel %vm545, %v706, %v713
      %v715 = vrot.slane %v710, 4
      %v717 = vshrl.u32 %v421, 16
      %v719 = vrot.slane %v717, 7
      %v720 = vshll.u32 %v421, 16
      %v722 = vor.u32 %v719, %v720
      %v723 = vrot.slane %v719, 4
      %v725 = vshrl.u32 %v422, 16
      %v727 = vrot.slane %v725, 7
      %v728 = vshll.u32 %v422, 16
      %v730 = vor.u32 %v727, %v728
      %v731 = vsel %vm545, %v723, %v730
      %v732 = vrot.slane %v727, 4
      %v734 = vshrl.u32 %v423, 16
      %v736 = vrot.slane %v734, 7
      %v737 = vshll.u32 %v423, 16
      %v739 = vor.u32 %v736, %v737
      %v740 = vrot.slane %v736, 4
      %v742 = vshrl.u32 %v424, 16
      %v744 = vrot.slane %v742, 7
      %v745 = vshll.u32 %v424, 16
      %v747 = vor.u32 %v744, %v745
      %v748 = vsel %vm545, %v740, %v747
      %v749 = vrot.slane %v744, 4
      %v751 = vshrl.u32 %v425, 16
      %v753 = vrot.slane %v751, 7
      %v754 = vshll.u32 %v425, 16
      %v756 = vor.u32 %v753, %v754
      %v757 = vrot.slane %v753, 4
      %v759 = vshrl.u32 %v426, 16
      %v761 = vrot.slane %v759, 7
      %v762 = vshll.u32 %v426, 16
      %v764 = vor.u32 %v761, %v762
      %v765 = vsel %vm545, %v757, %v764
      %v766 = vrot.slane %v761, 4
      %v768 = vshrl.u32 %v427, 16
      %v770 = vrot.slane %v768, 7
      %v771 = vshll.u32 %v427, 16
      %v773 = vor.u32 %v770, %v771
      %v774 = vrot.slane %v770, 4
      %v776 = vshrl.u32 %v428, 16
      %v778 = vrot.slane %v776, 7
      %v779 = vshll.u32 %v428, 16
      %v781 = vor.u32 %v778, %v779
      %v782 = vsel %vm545, %v774, %v781
      %v783 = vrot.slane %v778, 4
      %v785 = vshrl.u32 %v429, 16
      %v787 = vrot.slane %v785, 7
      %v788 = vshll.u32 %v429, 16
      %v790 = vor.u32 %v787, %v788
      %v791 = vrot.slane %v787, 4
      %v793 = vshrl.u32 %v430, 16
      %v795 = vrot.slane %v793, 7
      %v796 = vshll.u32 %v430, 16
      %v798 = vor.u32 %v795, %v796
      %v799 = vsel %vm545, %v791, %v798
      %v800 = vrot.slane %v795, 4
      %v802 = vshrl.u32 %v431, 16
      %v804 = vrot.slane %v802, 7
      %v805 = vshll.u32 %v431, 16
      %v807 = vor.u32 %v804, %v805
      %v808 = vrot.slane %v804, 4
      %v810 = vshrl.u32 %v432, 16
      %v812 = vrot.slane %v810, 7
      %v813 = vshll.u32 %v432, 16
      %v815 = vor.u32 %v812, %v813
      %v816 = vsel %vm545, %v808, %v815
      %v817 = vrot.slane %v812, 4
      %vm866 = vcmask 60416
      %vm867 = vmand %vm866, %vm494
      %v868 = vld [vmem:[%s442] sm:$0xf]
      %v869 = vsel %vm867, %v552, %v868
      %870 = vst [vmem:[%s442] sm:$0xf] %v869
      %871 = vst.msk [vmem:[%s442 + $0x4] sm:$0xf] %vm433, %v561
      %v872 = vld [vmem:[%s442 + $0x8] sm:$0x1]
      %v873 = vsel %vm445, %v562, %v872
      %874 = vst [vmem:[%s442 + $0x8] sm:$0x1] %v873
      %v875 = vld [vmem:[%s442 + $0xc] sm:$0xf]
      %v876 = vsel %vm867, %v569, %v875
      %877 = vst [vmem:[%s442 + $0xc] sm:$0xf] %v876
      %878 = vst.msk [vmem:[%s442 + $0x10] sm:$0xf] %vm433, %v578
      %v879 = vld [vmem:[%s442 + $0x14] sm:$0x1]
      %v880 = vsel %vm445, %v579, %v879
      %881 = vst [vmem:[%s442 + $0x14] sm:$0x1] %v880
      %v882 = vld [vmem:[%s442 + $0x18] sm:$0xf]
      %v883 = vsel %vm867, %v586, %v882
      %884 = vst [vmem:[%s442 + $0x18] sm:$0xf] %v883
      %885 = vst.msk [vmem:[%s442 + $0x1c] sm:$0xf] %vm433, %v595
      %v886 = vld [vmem:[%s442 + $0x20] sm:$0x1]
      %v887 = vsel %vm445, %v596, %v886
      %888 = vst [vmem:[%s442 + $0x20] sm:$0x1] %v887
      %v889 = vld [vmem:[%s442 + $0x24] sm:$0xf]
      %v890 = vsel %vm867, %v603, %v889
      %891 = vst [vmem:[%s442 + $0x24] sm:$0xf] %v890
      %892 = vst.msk [vmem:[%s442 + $0x28] sm:$0xf] %vm433, %v612
      %v893 = vld [vmem:[%s442 + $0x2c] sm:$0x1]
      %v894 = vsel %vm445, %v613, %v893
      %895 = vst [vmem:[%s442 + $0x2c] sm:$0x1] %v894
      %v896 = vld [vmem:[%s442 + $0x30] sm:$0xf]
      %v897 = vsel %vm867, %v620, %v896
      %898 = vst [vmem:[%s442 + $0x30] sm:$0xf] %v897
      %899 = vst.msk [vmem:[%s442 + $0x34] sm:$0xf] %vm433, %v629
      %v900 = vld [vmem:[%s442 + $0x38] sm:$0x1]
      %v901 = vsel %vm445, %v630, %v900
      %902 = vst [vmem:[%s442 + $0x38] sm:$0x1] %v901
      %v903 = vld [vmem:[%s442 + $0x3c] sm:$0xf]
      %v904 = vsel %vm867, %v637, %v903
      %905 = vst [vmem:[%s442 + $0x3c] sm:$0xf] %v904
      %906 = vst.msk [vmem:[%s442 + $0x40] sm:$0xf] %vm433, %v646
      %v907 = vld [vmem:[%s442 + $0x44] sm:$0x1]
      %v908 = vsel %vm445, %v647, %v907
      %909 = vst [vmem:[%s442 + $0x44] sm:$0x1] %v908
      %v910 = vld [vmem:[%s442 + $0x48] sm:$0xf]
      %v911 = vsel %vm867, %v654, %v910
      %912 = vst [vmem:[%s442 + $0x48] sm:$0xf] %v911
      %913 = vst.msk [vmem:[%s442 + $0x4c] sm:$0xf] %vm433, %v663
      %v914 = vld [vmem:[%s442 + $0x50] sm:$0x1]
      %v915 = vsel %vm445, %v664, %v914
      %916 = vst [vmem:[%s442 + $0x50] sm:$0x1] %v915
      %v917 = vld [vmem:[%s442 + $0x54] sm:$0xf]
      %v918 = vsel %vm867, %v671, %v917
      %919 = vst [vmem:[%s442 + $0x54] sm:$0xf] %v918
      %920 = vst.msk [vmem:[%s442 + $0x58] sm:$0xf] %vm433, %v680
      %v921 = vld [vmem:[%s442 + $0x5c] sm:$0x1]
      %v922 = vsel %vm445, %v681, %v921
      %923 = vst [vmem:[%s442 + $0x5c] sm:$0x1] %v922
      %v924 = vld [vmem:[%s442 + $0x60] sm:$0xf]
      %v925 = vsel %vm867, %v688, %v924
      %926 = vst [vmem:[%s442 + $0x60] sm:$0xf] %v925
      %927 = vst.msk [vmem:[%s442 + $0x64] sm:$0xf] %vm433, %v697
      %v928 = vld [vmem:[%s442 + $0x68] sm:$0x1]
      %v929 = vsel %vm445, %v698, %v928
      %930 = vst [vmem:[%s442 + $0x68] sm:$0x1] %v929
      %v931 = vld [vmem:[%s442 + $0x6c] sm:$0xf]
      %v932 = vsel %vm867, %v705, %v931
      %933 = vst [vmem:[%s442 + $0x6c] sm:$0xf] %v932
      %934 = vst.msk [vmem:[%s442 + $0x70] sm:$0xf] %vm433, %v714
      %v935 = vld [vmem:[%s442 + $0x74] sm:$0x1]
      %v936 = vsel %vm445, %v715, %v935
      %937 = vst [vmem:[%s442 + $0x74] sm:$0x1] %v936
      %v938 = vld [vmem:[%s442 + $0x78] sm:$0xf]
      %v939 = vsel %vm867, %v722, %v938
      %940 = vst [vmem:[%s442 + $0x78] sm:$0xf] %v939
      %941 = vst.msk [vmem:[%s442 + $0x7c] sm:$0xf] %vm433, %v731
      %v942 = vld [vmem:[%s442 + $0x80] sm:$0x1]
      %v943 = vsel %vm445, %v732, %v942
      %944 = vst [vmem:[%s442 + $0x80] sm:$0x1] %v943
      %v945 = vld [vmem:[%s442 + $0x84] sm:$0xf]
      %v946 = vsel %vm867, %v739, %v945
      %947 = vst [vmem:[%s442 + $0x84] sm:$0xf] %v946
      %948 = vst.msk [vmem:[%s442 + $0x88] sm:$0xf] %vm433, %v748
      %v949 = vld [vmem:[%s442 + $0x8c] sm:$0x1]
      %v950 = vsel %vm445, %v749, %v949
      %951 = vst [vmem:[%s442 + $0x8c] sm:$0x1] %v950
      %v952 = vld [vmem:[%s442 + $0x90] sm:$0xf]
      %v953 = vsel %vm867, %v756, %v952
      %954 = vst [vmem:[%s442 + $0x90] sm:$0xf] %v953
      %955 = vst.msk [vmem:[%s442 + $0x94] sm:$0xf] %vm433, %v765
      %v956 = vld [vmem:[%s442 + $0x98] sm:$0x1]
      %v957 = vsel %vm445, %v766, %v956
      %958 = vst [vmem:[%s442 + $0x98] sm:$0x1] %v957
      %v959 = vld [vmem:[%s442 + $0x9c] sm:$0xf]
      %v960 = vsel %vm867, %v773, %v959
      %961 = vst [vmem:[%s442 + $0x9c] sm:$0xf] %v960
      %962 = vst.msk [vmem:[%s442 + $0xa0] sm:$0xf] %vm433, %v782
      %v963 = vld [vmem:[%s442 + $0xa4] sm:$0x1]
      %v964 = vsel %vm445, %v783, %v963
      %965 = vst [vmem:[%s442 + $0xa4] sm:$0x1] %v964
      %v966 = vld [vmem:[%s442 + $0xa8] sm:$0xf]
      %v967 = vsel %vm867, %v790, %v966
      %968 = vst [vmem:[%s442 + $0xa8] sm:$0xf] %v967
      %969 = vst.msk [vmem:[%s442 + $0xac] sm:$0xf] %vm433, %v799
      %v970 = vld [vmem:[%s442 + $0xb0] sm:$0x1]
      %v971 = vsel %vm445, %v800, %v970
      %972 = vst [vmem:[%s442 + $0xb0] sm:$0x1] %v971
      %v973 = vld [vmem:[%s442 + $0xb4] sm:$0xf]
      %v974 = vsel %vm867, %v807, %v973
      %975 = vst [vmem:[%s442 + $0xb4] sm:$0xf] %v974
      %976 = vst.msk [vmem:[%s442 + $0xb8] sm:$0xf] %vm433, %v816
      %v977 = vld [vmem:[%s442 + $0xbc] sm:$0x1]
      %v978 = vsel %vm445, %v817, %v977
      %979 = vst [vmem:[%s442 + $0xbc] sm:$0x1] %v978
      %v980 = vld [vmem:[%s389] sm:$0xf]
      %v981 = vld [vmem:[%s389 + $0x4] sm:$0xf]
      %v982 = vld [vmem:[%s389 + $0x8] sm:$0xf]
      %v983 = vld [vmem:[%s389 + $0xc] sm:$0xf]
      %v984 = vld [vmem:[%s389 + $0x10] sm:$0xf]
      %v985 = vld [vmem:[%s389 + $0x14] sm:$0xf]
      %v986 = vld [vmem:[%s389 + $0x18] sm:$0xf]
      %v987 = vld [vmem:[%s389 + $0x1c] sm:$0xf]
      %v988 = vld [vmem:[%s389 + $0x20] sm:$0xf]
      %v989 = vld [vmem:[%s389 + $0x24] sm:$0xf]
      %v990 = vld [vmem:[%s389 + $0x28] sm:$0xf]
      %v991 = vld [vmem:[%s389 + $0x2c] sm:$0xf]
      %v992 = vld [vmem:[%s389 + $0x30] sm:$0xf]
      %v993 = vld [vmem:[%s389 + $0x34] sm:$0xf]
      %v994 = vld [vmem:[%s389 + $0x38] sm:$0xf]
      %v995 = vld [vmem:[%s389 + $0x3c] sm:$0xf]
      %v996 = vld [vmem:[%s389 + $0x40] sm:$0xf]
      %v997 = vld [vmem:[%s389 + $0x44] sm:$0xf]
      %v998 = vld [vmem:[%s389 + $0x48] sm:$0xf]
      %v999 = vld [vmem:[%s389 + $0x4c] sm:$0xf]
      %v1000 = vld [vmem:[%s389 + $0x50] sm:$0xf]
      %v1001 = vld [vmem:[%s389 + $0x54] sm:$0xf]
      %v1002 = vld [vmem:[%s389 + $0x58] sm:$0xf]
      %v1003 = vld [vmem:[%s389 + $0x5c] sm:$0xf]
      %v1004 = vld [vmem:[%s389 + $0x60] sm:$0xf]
      %v1005 = vld [vmem:[%s389 + $0x64] sm:$0xf]
      %v1006 = vld [vmem:[%s389 + $0x68] sm:$0xf]
      %v1007 = vld [vmem:[%s389 + $0x6c] sm:$0xf]
      %v1008 = vld [vmem:[%s389 + $0x70] sm:$0xf]
      %v1009 = vld [vmem:[%s389 + $0x74] sm:$0xf]
      %v1010 = vld [vmem:[%s389 + $0x78] sm:$0xf]
      %v1011 = vld [vmem:[%s389 + $0x7c] sm:$0xf]
      %1012 = vst.msk [vmem:[#allocation3] sm:$0xf] %vm433, 0
      %1013 = vst.msk [vmem:[#allocation3 + $0x4] sm:$0xf] %vm433, 0
      %1014 = vst.msk [vmem:[#allocation3 + $0x8] sm:$0x1] %vm436, 0
      %s1015 = scalar_lea.vmem [#allocation3], 204
      %1016 = vst.msk [vmem:[%s1015] sm:$0xf] %vm433, 0
      %1017 = vst.msk [vmem:[%s1015 + $0x4] sm:$0xf] %vm433, 0
      %1018 = vst.msk [vmem:[%s1015 + $0x8] sm:$0x1] %vm436, 0
      %s1019 = scalar_lea.vmem [#allocation3], 12
      %v1020 = vld [vmem:[%s1019] sm:$0x1]
      %v1021 = vsel %vm445, 0, %v1020
      %1022 = vst [vmem:[%s1019] sm:$0x1] %v1021
      %v1023 = vld [vmem:[%s1019 + $0xc] sm:$0x1]
      %v1024 = vsel %vm445, 0, %v1023
      %1025 = vst [vmem:[%s1019 + $0xc] sm:$0x1] %v1024
      %v1026 = vld [vmem:[%s1019 + $0x18] sm:$0x1]
      %v1027 = vsel %vm445, 0, %v1026
      %1028 = vst [vmem:[%s1019 + $0x18] sm:$0x1] %v1027
      %v1029 = vld [vmem:[%s1019 + $0x24] sm:$0x1]
      %v1030 = vsel %vm445, 0, %v1029
      %1031 = vst [vmem:[%s1019 + $0x24] sm:$0x1] %v1030
      %v1032 = vld [vmem:[%s1019 + $0x30] sm:$0x1]
      %v1033 = vsel %vm445, 0, %v1032
      %1034 = vst [vmem:[%s1019 + $0x30] sm:$0x1] %v1033
      %v1035 = vld [vmem:[%s1019 + $0x3c] sm:$0x1]
      %v1036 = vsel %vm445, 0, %v1035
      %1037 = vst [vmem:[%s1019 + $0x3c] sm:$0x1] %v1036
      %v1038 = vld [vmem:[%s1019 + $0x48] sm:$0x1]
      %v1039 = vsel %vm445, 0, %v1038
      %1040 = vst [vmem:[%s1019 + $0x48] sm:$0x1] %v1039
      %v1041 = vld [vmem:[%s1019 + $0x54] sm:$0x1]
      %v1042 = vsel %vm445, 0, %v1041
      %1043 = vst [vmem:[%s1019 + $0x54] sm:$0x1] %v1042
      %v1044 = vld [vmem:[%s1019 + $0x60] sm:$0x1]
      %v1045 = vsel %vm445, 0, %v1044
      %1046 = vst [vmem:[%s1019 + $0x60] sm:$0x1] %v1045
      %v1047 = vld [vmem:[%s1019 + $0x6c] sm:$0x1]
      %v1048 = vsel %vm445, 0, %v1047
      %1049 = vst [vmem:[%s1019 + $0x6c] sm:$0x1] %v1048
      %v1050 = vld [vmem:[%s1019 + $0x78] sm:$0x1]
      %v1051 = vsel %vm445, 0, %v1050
      %1052 = vst [vmem:[%s1019 + $0x78] sm:$0x1] %v1051
      %v1053 = vld [vmem:[%s1019 + $0x84] sm:$0x1]
      %v1054 = vsel %vm445, 0, %v1053
      %1055 = vst [vmem:[%s1019 + $0x84] sm:$0x1] %v1054
      %v1056 = vld [vmem:[%s1019 + $0x90] sm:$0x1]
      %v1057 = vsel %vm445, 0, %v1056
      %1058 = vst [vmem:[%s1019 + $0x90] sm:$0x1] %v1057
      %v1059 = vld [vmem:[%s1019 + $0x9c] sm:$0x1]
      %v1060 = vsel %vm445, 0, %v1059
      %1061 = vst [vmem:[%s1019 + $0x9c] sm:$0x1] %v1060
      %v1062 = vld [vmem:[%s1019 + $0xa8] sm:$0x1]
      %v1063 = vsel %vm445, 0, %v1062
      %1064 = vst [vmem:[%s1019 + $0xa8] sm:$0x1] %v1063
      %v1065 = vld [vmem:[%s1019 + $0xb4] sm:$0x1]
      %v1066 = vsel %vm445, 0, %v1065
      %1067 = vst [vmem:[%s1019 + $0xb4] sm:$0x1] %v1066
      %v1068 = vld [vmem:[%s1019 + $0x8] sm:$0x1]
      %v1069 = vsel %vm495, 0, %v1068
      %1070 = vst [vmem:[%s1019 + $0x8] sm:$0x1] %v1069
      %v1071 = vld [vmem:[%s1019 + $0x14] sm:$0x1]
      %v1072 = vsel %vm495, 0, %v1071
      %1073 = vst [vmem:[%s1019 + $0x14] sm:$0x1] %v1072
      %v1074 = vld [vmem:[%s1019 + $0x20] sm:$0x1]
      %v1075 = vsel %vm495, 0, %v1074
      %1076 = vst [vmem:[%s1019 + $0x20] sm:$0x1] %v1075
      %v1077 = vld [vmem:[%s1019 + $0x2c] sm:$0x1]
      %v1078 = vsel %vm495, 0, %v1077
      %1079 = vst [vmem:[%s1019 + $0x2c] sm:$0x1] %v1078
      %v1080 = vld [vmem:[%s1019 + $0x38] sm:$0x1]
      %v1081 = vsel %vm495, 0, %v1080
      %1082 = vst [vmem:[%s1019 + $0x38] sm:$0x1] %v1081
      %v1083 = vld [vmem:[%s1019 + $0x44] sm:$0x1]
      %v1084 = vsel %vm495, 0, %v1083
      %1085 = vst [vmem:[%s1019 + $0x44] sm:$0x1] %v1084
      %v1086 = vld [vmem:[%s1019 + $0x50] sm:$0x1]
      %v1087 = vsel %vm495, 0, %v1086
      %1088 = vst [vmem:[%s1019 + $0x50] sm:$0x1] %v1087
      %v1089 = vld [vmem:[%s1019 + $0x5c] sm:$0x1]
      %v1090 = vsel %vm495, 0, %v1089
      %1091 = vst [vmem:[%s1019 + $0x5c] sm:$0x1] %v1090
      %v1092 = vld [vmem:[%s1019 + $0x68] sm:$0x1]
      %v1093 = vsel %vm495, 0, %v1092
      %1094 = vst [vmem:[%s1019 + $0x68] sm:$0x1] %v1093
      %v1095 = vld [vmem:[%s1019 + $0x74] sm:$0x1]
      %v1096 = vsel %vm495, 0, %v1095
      %1097 = vst [vmem:[%s1019 + $0x74] sm:$0x1] %v1096
      %v1098 = vld [vmem:[%s1019 + $0x80] sm:$0x1]
      %v1099 = vsel %vm495, 0, %v1098
      %1100 = vst [vmem:[%s1019 + $0x80] sm:$0x1] %v1099
      %v1101 = vld [vmem:[%s1019 + $0x8c] sm:$0x1]
      %v1102 = vsel %vm495, 0, %v1101
      %1103 = vst [vmem:[%s1019 + $0x8c] sm:$0x1] %v1102
      %v1104 = vld [vmem:[%s1019 + $0x98] sm:$0x1]
      %v1105 = vsel %vm495, 0, %v1104
      %1106 = vst [vmem:[%s1019 + $0x98] sm:$0x1] %v1105
      %v1107 = vld [vmem:[%s1019 + $0xa4] sm:$0x1]
      %v1108 = vsel %vm495, 0, %v1107
      %1109 = vst [vmem:[%s1019 + $0xa4] sm:$0x1] %v1108
      %v1110 = vld [vmem:[%s1019 + $0xb0] sm:$0x1]
      %v1111 = vsel %vm495, 0, %v1110
      %1112 = vst [vmem:[%s1019 + $0xb0] sm:$0x1] %v1111
      %v1113 = vld [vmem:[%s1019 + $0xbc] sm:$0x1]
      %v1114 = vsel %vm495, 0, %v1113
      %1115 = vst [vmem:[%s1019 + $0xbc] sm:$0x1] %v1114
      %v1117 = vshrl.u32 %v980, 16
      %v1119 = vrot.slane %v1117, 7
      %v1120 = vshll.u32 %v980, 16
      %v1122 = vor.u32 %v1119, %v1120
      %v1123 = vrot.slane %v1119, 4
      %v1125 = vshrl.u32 %v981, 16
      %v1127 = vrot.slane %v1125, 7
      %v1128 = vshll.u32 %v981, 16
      %v1130 = vor.u32 %v1127, %v1128
      %v1131 = vsel %vm545, %v1123, %v1130
      %v1132 = vrot.slane %v1127, 4
      %v1134 = vshrl.u32 %v982, 16
      %v1136 = vrot.slane %v1134, 7
      %v1137 = vshll.u32 %v982, 16
      %v1139 = vor.u32 %v1136, %v1137
      %v1140 = vrot.slane %v1136, 4
      %v1142 = vshrl.u32 %v983, 16
      %v1144 = vrot.slane %v1142, 7
      %v1145 = vshll.u32 %v983, 16
      %v1147 = vor.u32 %v1144, %v1145
      %v1148 = vsel %vm545, %v1140, %v1147
      %v1149 = vrot.slane %v1144, 4
      %v1151 = vshrl.u32 %v984, 16
      %v1153 = vrot.slane %v1151, 7
      %v1154 = vshll.u32 %v984, 16
      %v1156 = vor.u32 %v1153, %v1154
      %v1157 = vrot.slane %v1153, 4
      %v1159 = vshrl.u32 %v985, 16
      %v1161 = vrot.slane %v1159, 7
      %v1162 = vshll.u32 %v985, 16
      %v1164 = vor.u32 %v1161, %v1162
      %v1165 = vsel %vm545, %v1157, %v1164
      %v1166 = vrot.slane %v1161, 4
      %v1168 = vshrl.u32 %v986, 16
      %v1170 = vrot.slane %v1168, 7
      %v1171 = vshll.u32 %v986, 16
      %v1173 = vor.u32 %v1170, %v1171
      %v1174 = vrot.slane %v1170, 4
      %v1176 = vshrl.u32 %v987, 16
      %v1178 = vrot.slane %v1176, 7
      %v1179 = vshll.u32 %v987, 16
      %v1181 = vor.u32 %v1178, %v1179
      %v1182 = vsel %vm545, %v1174, %v1181
      %v1183 = vrot.slane %v1178, 4
      %v1185 = vshrl.u32 %v988, 16
      %v1187 = vrot.slane %v1185, 7
      %v1188 = vshll.u32 %v988, 16
      %v1190 = vor.u32 %v1187, %v1188
      %v1191 = vrot.slane %v1187, 4
      %v1193 = vshrl.u32 %v989, 16
      %v1195 = vrot.slane %v1193, 7
      %v1196 = vshll.u32 %v989, 16
      %v1198 = vor.u32 %v1195, %v1196
      %v1199 = vsel %vm545, %v1191, %v1198
      %v1200 = vrot.slane %v1195, 4
      %v1202 = vshrl.u32 %v990, 16
      %v1204 = vrot.slane %v1202, 7
      %v1205 = vshll.u32 %v990, 16
      %v1207 = vor.u32 %v1204, %v1205
      %v1208 = vrot.slane %v1204, 4
      %v1210 = vshrl.u32 %v991, 16
      %v1212 = vrot.slane %v1210, 7
      %v1213 = vshll.u32 %v991, 16
      %v1215 = vor.u32 %v1212, %v1213
      %v1216 = vsel %vm545, %v1208, %v1215
      %v1217 = vrot.slane %v1212, 4
      %v1219 = vshrl.u32 %v992, 16
      %v1221 = vrot.slane %v1219, 7
      %v1222 = vshll.u32 %v992, 16
      %v1224 = vor.u32 %v1221, %v1222
      %v1225 = vrot.slane %v1221, 4
      %v1227 = vshrl.u32 %v993, 16
      %v1229 = vrot.slane %v1227, 7
      %v1230 = vshll.u32 %v993, 16
      %v1232 = vor.u32 %v1229, %v1230
      %v1233 = vsel %vm545, %v1225, %v1232
      %v1234 = vrot.slane %v1229, 4
      %v1236 = vshrl.u32 %v994, 16
      %v1238 = vrot.slane %v1236, 7
      %v1239 = vshll.u32 %v994, 16
      %v1241 = vor.u32 %v1238, %v1239
      %v1242 = vrot.slane %v1238, 4
      %v1244 = vshrl.u32 %v995, 16
      %v1246 = vrot.slane %v1244, 7
      %v1247 = vshll.u32 %v995, 16
      %v1249 = vor.u32 %v1246, %v1247
      %v1250 = vsel %vm545, %v1242, %v1249
      %v1251 = vrot.slane %v1246, 4
      %v1253 = vshrl.u32 %v996, 16
      %v1255 = vrot.slane %v1253, 7
      %v1256 = vshll.u32 %v996, 16
      %v1258 = vor.u32 %v1255, %v1256
      %v1259 = vrot.slane %v1255, 4
      %v1261 = vshrl.u32 %v997, 16
      %v1263 = vrot.slane %v1261, 7
      %v1264 = vshll.u32 %v997, 16
      %v1266 = vor.u32 %v1263, %v1264
      %v1267 = vsel %vm545, %v1259, %v1266
      %v1268 = vrot.slane %v1263, 4
      %v1270 = vshrl.u32 %v998, 16
      %v1272 = vrot.slane %v1270, 7
      %v1273 = vshll.u32 %v998, 16
      %v1275 = vor.u32 %v1272, %v1273
      %v1276 = vrot.slane %v1272, 4
      %v1278 = vshrl.u32 %v999, 16
      %v1280 = vrot.slane %v1278, 7
      %v1281 = vshll.u32 %v999, 16
      %v1283 = vor.u32 %v1280, %v1281
      %v1284 = vsel %vm545, %v1276, %v1283
      %v1285 = vrot.slane %v1280, 4
      %v1287 = vshrl.u32 %v1000, 16
      %v1289 = vrot.slane %v1287, 7
      %v1290 = vshll.u32 %v1000, 16
      %v1292 = vor.u32 %v1289, %v1290
      %v1293 = vrot.slane %v1289, 4
      %v1295 = vshrl.u32 %v1001, 16
      %v1297 = vrot.slane %v1295, 7
      %v1298 = vshll.u32 %v1001, 16
      %v1300 = vor.u32 %v1297, %v1298
      %v1301 = vsel %vm545, %v1293, %v1300
      %v1302 = vrot.slane %v1297, 4
      %v1304 = vshrl.u32 %v1002, 16
      %v1306 = vrot.slane %v1304, 7
      %v1307 = vshll.u32 %v1002, 16
      %v1309 = vor.u32 %v1306, %v1307
      %v1310 = vrot.slane %v1306, 4
      %v1312 = vshrl.u32 %v1003, 16
      %v1314 = vrot.slane %v1312, 7
      %v1315 = vshll.u32 %v1003, 16
      %v1317 = vor.u32 %v1314, %v1315
      %v1318 = vsel %vm545, %v1310, %v1317
      %v1319 = vrot.slane %v1314, 4
      %v1321 = vshrl.u32 %v1004, 16
      %v1323 = vrot.slane %v1321, 7
      %v1324 = vshll.u32 %v1004, 16
      %v1326 = vor.u32 %v1323, %v1324
      %v1327 = vrot.slane %v1323, 4
      %v1329 = vshrl.u32 %v1005, 16
      %v1331 = vrot.slane %v1329, 7
      %v1332 = vshll.u32 %v1005, 16
      %v1334 = vor.u32 %v1331, %v1332
      %v1335 = vsel %vm545, %v1327, %v1334
      %v1336 = vrot.slane %v1331, 4
      %v1338 = vshrl.u32 %v1006, 16
      %v1340 = vrot.slane %v1338, 7
      %v1341 = vshll.u32 %v1006, 16
      %v1343 = vor.u32 %v1340, %v1341
      %v1344 = vrot.slane %v1340, 4
      %v1346 = vshrl.u32 %v1007, 16
      %v1348 = vrot.slane %v1346, 7
      %v1349 = vshll.u32 %v1007, 16
      %v1351 = vor.u32 %v1348, %v1349
      %v1352 = vsel %vm545, %v1344, %v1351
      %v1353 = vrot.slane %v1348, 4
      %v1355 = vshrl.u32 %v1008, 16
      %v1357 = vrot.slane %v1355, 7
      %v1358 = vshll.u32 %v1008, 16
      %v1360 = vor.u32 %v1357, %v1358
      %v1361 = vrot.slane %v1357, 4
      %v1363 = vshrl.u32 %v1009, 16
      %v1365 = vrot.slane %v1363, 7
      %v1366 = vshll.u32 %v1009, 16
      %v1368 = vor.u32 %v1365, %v1366
      %v1369 = vsel %vm545, %v1361, %v1368
      %v1370 = vrot.slane %v1365, 4
      %v1372 = vshrl.u32 %v1010, 16
      %v1374 = vrot.slane %v1372, 7
      %v1375 = vshll.u32 %v1010, 16
      %v1377 = vor.u32 %v1374, %v1375
      %v1378 = vrot.slane %v1374, 4
      %v1380 = vshrl.u32 %v1011, 16
      %v1382 = vrot.slane %v1380, 7
      %v1383 = vshll.u32 %v1011, 16
      %v1385 = vor.u32 %v1382, %v1383
      %v1386 = vsel %vm545, %v1378, %v1385
      %v1387 = vrot.slane %v1382, 4
      %v1436 = vld [vmem:[%s1019] sm:$0xf]
      %v1437 = vsel %vm867, %v1122, %v1436
      %1438 = vst [vmem:[%s1019] sm:$0xf] %v1437
      %1439 = vst.msk [vmem:[%s1019 + $0x4] sm:$0xf] %vm433, %v1131
      %v1440 = vld [vmem:[%s1019 + $0x8] sm:$0x1]
      %v1441 = vsel %vm445, %v1132, %v1440
      %1442 = vst [vmem:[%s1019 + $0x8] sm:$0x1] %v1441
      %v1443 = vld [vmem:[%s1019 + $0xc] sm:$0xf]
      %v1444 = vsel %vm867, %v1139, %v1443
      %1445 = vst [vmem:[%s1019 + $0xc] sm:$0xf] %v1444
      %1446 = vst.msk [vmem:[%s1019 + $0x10] sm:$0xf] %vm433, %v1148
      %v1447 = vld [vmem:[%s1019 + $0x14] sm:$0x1]
      %v1448 = vsel %vm445, %v1149, %v1447
      %1449 = vst [vmem:[%s1019 + $0x14] sm:$0x1] %v1448
      %v1450 = vld [vmem:[%s1019 + $0x18] sm:$0xf]
      %v1451 = vsel %vm867, %v1156, %v1450
      %1452 = vst [vmem:[%s1019 + $0x18] sm:$0xf] %v1451
      %1453 = vst.msk [vmem:[%s1019 + $0x1c] sm:$0xf] %vm433, %v1165
      %v1454 = vld [vmem:[%s1019 + $0x20] sm:$0x1]
      %v1455 = vsel %vm445, %v1166, %v1454
      %1456 = vst [vmem:[%s1019 + $0x20] sm:$0x1] %v1455
      %v1457 = vld [vmem:[%s1019 + $0x24] sm:$0xf]
      %v1458 = vsel %vm867, %v1173, %v1457
      %1459 = vst [vmem:[%s1019 + $0x24] sm:$0xf] %v1458
      %1460 = vst.msk [vmem:[%s1019 + $0x28] sm:$0xf] %vm433, %v1182
      %v1461 = vld [vmem:[%s1019 + $0x2c] sm:$0x1]
      %v1462 = vsel %vm445, %v1183, %v1461
      %1463 = vst [vmem:[%s1019 + $0x2c] sm:$0x1] %v1462
      %v1464 = vld [vmem:[%s1019 + $0x30] sm:$0xf]
      %v1465 = vsel %vm867, %v1190, %v1464
      %1466 = vst [vmem:[%s1019 + $0x30] sm:$0xf] %v1465
      %1467 = vst.msk [vmem:[%s1019 + $0x34] sm:$0xf] %vm433, %v1199
      %v1468 = vld [vmem:[%s1019 + $0x38] sm:$0x1]
      %v1469 = vsel %vm445, %v1200, %v1468
      %1470 = vst [vmem:[%s1019 + $0x38] sm:$0x1] %v1469
      %v1471 = vld [vmem:[%s1019 + $0x3c] sm:$0xf]
      %v1472 = vsel %vm867, %v1207, %v1471
      %1473 = vst [vmem:[%s1019 + $0x3c] sm:$0xf] %v1472
      %1474 = vst.msk [vmem:[%s1019 + $0x40] sm:$0xf] %vm433, %v1216
      %v1475 = vld [vmem:[%s1019 + $0x44] sm:$0x1]
      %v1476 = vsel %vm445, %v1217, %v1475
      %1477 = vst [vmem:[%s1019 + $0x44] sm:$0x1] %v1476
      %v1478 = vld [vmem:[%s1019 + $0x48] sm:$0xf]
      %v1479 = vsel %vm867, %v1224, %v1478
      %1480 = vst [vmem:[%s1019 + $0x48] sm:$0xf] %v1479
      %1481 = vst.msk [vmem:[%s1019 + $0x4c] sm:$0xf] %vm433, %v1233
      %v1482 = vld [vmem:[%s1019 + $0x50] sm:$0x1]
      %v1483 = vsel %vm445, %v1234, %v1482
      %1484 = vst [vmem:[%s1019 + $0x50] sm:$0x1] %v1483
      %v1485 = vld [vmem:[%s1019 + $0x54] sm:$0xf]
      %v1486 = vsel %vm867, %v1241, %v1485
      %1487 = vst [vmem:[%s1019 + $0x54] sm:$0xf] %v1486
      %1488 = vst.msk [vmem:[%s1019 + $0x58] sm:$0xf] %vm433, %v1250
      %v1489 = vld [vmem:[%s1019 + $0x5c] sm:$0x1]
      %v1490 = vsel %vm445, %v1251, %v1489
      %1491 = vst [vmem:[%s1019 + $0x5c] sm:$0x1] %v1490
      %v1492 = vld [vmem:[%s1019 + $0x60] sm:$0xf]
      %v1493 = vsel %vm867, %v1258, %v1492
      %1494 = vst [vmem:[%s1019 + $0x60] sm:$0xf] %v1493
      %1495 = vst.msk [vmem:[%s1019 + $0x64] sm:$0xf] %vm433, %v1267
      %v1496 = vld [vmem:[%s1019 + $0x68] sm:$0x1]
      %v1497 = vsel %vm445, %v1268, %v1496
      %1498 = vst [vmem:[%s1019 + $0x68] sm:$0x1] %v1497
      %v1499 = vld [vmem:[%s1019 + $0x6c] sm:$0xf]
      %v1500 = vsel %vm867, %v1275, %v1499
      %1501 = vst [vmem:[%s1019 + $0x6c] sm:$0xf] %v1500
      %1502 = vst.msk [vmem:[%s1019 + $0x70] sm:$0xf] %vm433, %v1284
      %v1503 = vld [vmem:[%s1019 + $0x74] sm:$0x1]
      %v1504 = vsel %vm445, %v1285, %v1503
      %1505 = vst [vmem:[%s1019 + $0x74] sm:$0x1] %v1504
      %v1506 = vld [vmem:[%s1019 + $0x78] sm:$0xf]
      %v1507 = vsel %vm867, %v1292, %v1506
      %1508 = vst [vmem:[%s1019 + $0x78] sm:$0xf] %v1507
      %1509 = vst.msk [vmem:[%s1019 + $0x7c] sm:$0xf] %vm433, %v1301
      %v1510 = vld [vmem:[%s1019 + $0x80] sm:$0x1]
      %v1511 = vsel %vm445, %v1302, %v1510
      %1512 = vst [vmem:[%s1019 + $0x80] sm:$0x1] %v1511
      %v1513 = vld [vmem:[%s1019 + $0x84] sm:$0xf]
      %v1514 = vsel %vm867, %v1309, %v1513
      %1515 = vst [vmem:[%s1019 + $0x84] sm:$0xf] %v1514
      %1516 = vst.msk [vmem:[%s1019 + $0x88] sm:$0xf] %vm433, %v1318
      %v1517 = vld [vmem:[%s1019 + $0x8c] sm:$0x1]
      %v1518 = vsel %vm445, %v1319, %v1517
      %1519 = vst [vmem:[%s1019 + $0x8c] sm:$0x1] %v1518
      %v1520 = vld [vmem:[%s1019 + $0x90] sm:$0xf]
      %v1521 = vsel %vm867, %v1326, %v1520
      %1522 = vst [vmem:[%s1019 + $0x90] sm:$0xf] %v1521
      %1523 = vst.msk [vmem:[%s1019 + $0x94] sm:$0xf] %vm433, %v1335
      %v1524 = vld [vmem:[%s1019 + $0x98] sm:$0x1]
      %v1525 = vsel %vm445, %v1336, %v1524
      %1526 = vst [vmem:[%s1019 + $0x98] sm:$0x1] %v1525
      %v1527 = vld [vmem:[%s1019 + $0x9c] sm:$0xf]
      %v1528 = vsel %vm867, %v1343, %v1527
      %1529 = vst [vmem:[%s1019 + $0x9c] sm:$0xf] %v1528
      %1530 = vst.msk [vmem:[%s1019 + $0xa0] sm:$0xf] %vm433, %v1352
      %v1531 = vld [vmem:[%s1019 + $0xa4] sm:$0x1]
      %v1532 = vsel %vm445, %v1353, %v1531
      %1533 = vst [vmem:[%s1019 + $0xa4] sm:$0x1] %v1532
      %v1534 = vld [vmem:[%s1019 + $0xa8] sm:$0xf]
      %v1535 = vsel %vm867, %v1360, %v1534
      %1536 = vst [vmem:[%s1019 + $0xa8] sm:$0xf] %v1535
      %1537 = vst.msk [vmem:[%s1019 + $0xac] sm:$0xf] %vm433, %v1369
      %v1538 = vld [vmem:[%s1019 + $0xb0] sm:$0x1]
      %v1539 = vsel %vm445, %v1370, %v1538
      %1540 = vst [vmem:[%s1019 + $0xb0] sm:$0x1] %v1539
      %v1541 = vld [vmem:[%s1019 + $0xb4] sm:$0xf]
      %v1542 = vsel %vm867, %v1377, %v1541
      %1543 = vst [vmem:[%s1019 + $0xb4] sm:$0xf] %v1542
      %1544 = vst.msk [vmem:[%s1019 + $0xb8] sm:$0xf] %vm433, %v1386
      %v1545 = vld [vmem:[%s1019 + $0xbc] sm:$0x1]
      %v1546 = vsel %vm445, %v1387, %v1545
      %1547 = vst [vmem:[%s1019 + $0xbc] sm:$0x1] %v1546
      %v1548 = vld [vmem:[#allocation2] sm:$0xf]
      %v1549 = vld [vmem:[#allocation2 + $0x4] sm:$0xf]
      %v1550 = vld [vmem:[#allocation2 + $0x8] sm:$0x1]
      %v1551 = vld [vmem:[#allocation2 + $0xc] sm:$0xf]
      %v1552 = vld [vmem:[#allocation2 + $0x10] sm:$0xf]
      %v1553 = vld [vmem:[#allocation2 + $0x14] sm:$0x1]
      %v1554 = vld [vmem:[#allocation2 + $0x18] sm:$0xf]
      %v1555 = vld [vmem:[#allocation2 + $0x1c] sm:$0xf]
      %v1556 = vld [vmem:[#allocation2 + $0x20] sm:$0x1]
      %v1557 = vld [vmem:[#allocation2 + $0x24] sm:$0xf]
      %v1558 = vld [vmem:[#allocation2 + $0x28] sm:$0xf]
      %v1559 = vld [vmem:[#allocation2 + $0x2c] sm:$0x1]
      %v1560 = vld [vmem:[#allocation2 + $0x30] sm:$0xf]
      %v1561 = vld [vmem:[#allocation2 + $0x34] sm:$0xf]
      %v1562 = vld [vmem:[#allocation2 + $0x38] sm:$0x1]
      %v1563 = vld [vmem:[#allocation2 + $0x3c] sm:$0xf]
      %v1564 = vld [vmem:[#allocation2 + $0x40] sm:$0xf]
      %v1565 = vld [vmem:[#allocation2 + $0x44] sm:$0x1]
      %v1566 = vld [vmem:[#allocation2 + $0x48] sm:$0xf]
      %v1567 = vld [vmem:[#allocation2 + $0x4c] sm:$0xf]
      %v1568 = vld [vmem:[#allocation2 + $0x50] sm:$0x1]
      %v1569 = vld [vmem:[#allocation2 + $0x54] sm:$0xf]
      %v1570 = vld [vmem:[#allocation2 + $0x58] sm:$0xf]
      %v1571 = vld [vmem:[#allocation2 + $0x5c] sm:$0x1]
      %v1572 = vld [vmem:[#allocation2 + $0x60] sm:$0xf]
      %v1573 = vld [vmem:[#allocation2 + $0x64] sm:$0xf]
      %v1574 = vld [vmem:[#allocation2 + $0x68] sm:$0x1]
      %v1575 = vld [vmem:[#allocation2 + $0x6c] sm:$0xf]
      %v1576 = vld [vmem:[#allocation2 + $0x70] sm:$0xf]
      %v1577 = vld [vmem:[#allocation2 + $0x74] sm:$0x1]
      %v1578 = vld [vmem:[#allocation2 + $0x78] sm:$0xf]
      %v1579 = vld [vmem:[#allocation2 + $0x7c] sm:$0xf]
      %v1580 = vld [vmem:[#allocation2 + $0x80] sm:$0x1]
      %v1581 = vld [vmem:[#allocation2 + $0x84] sm:$0xf]
      %v1582 = vld [vmem:[#allocation2 + $0x88] sm:$0xf]
      %v1583 = vld [vmem:[#allocation2 + $0x8c] sm:$0x1]
      %v1584 = vld [vmem:[#allocation2 + $0x90] sm:$0xf]
      %v1585 = vld [vmem:[#allocation2 + $0x94] sm:$0xf]
      %v1586 = vld [vmem:[#allocation2 + $0x98] sm:$0x1]
      %v1587 = vld [vmem:[#allocation2 + $0x9c] sm:$0xf]
      %v1588 = vld [vmem:[#allocation2 + $0xa0] sm:$0xf]
      %v1589 = vld [vmem:[#allocation2 + $0xa4] sm:$0x1]
      %v1590 = vld [vmem:[#allocation2 + $0xa8] sm:$0xf]
      %v1591 = vld [vmem:[#allocation2 + $0xac] sm:$0xf]
      %v1592 = vld [vmem:[#allocation2 + $0xb0] sm:$0x1]
      %v1593 = vld [vmem:[#allocation2 + $0xb4] sm:$0xf]
      %v1594 = vld [vmem:[#allocation2 + $0xb8] sm:$0xf]
      %v1595 = vld [vmem:[#allocation2 + $0xbc] sm:$0x1]
      %v1596 = vld [vmem:[#allocation2 + $0xc0] sm:$0xf]
      %v1597 = vld [vmem:[#allocation2 + $0xc4] sm:$0xf]
      %v1598 = vld [vmem:[#allocation2 + $0xc8] sm:$0x1]
      %v1599 = vld [vmem:[#allocation2 + $0xcc] sm:$0xf]
      %v1600 = vld [vmem:[#allocation2 + $0xd0] sm:$0xf]
      %v1601 = vld [vmem:[#allocation2 + $0xd4] sm:$0x1]
      %v1602 = vld [vmem:[#allocation3] sm:$0xf]
      %v1603 = vld [vmem:[#allocation3 + $0x4] sm:$0xf]
      %v1604 = vld [vmem:[#allocation3 + $0x8] sm:$0x1]
      %v1605 = vld [vmem:[#allocation3 + $0xc] sm:$0xf]
      %v1606 = vld [vmem:[#allocation3 + $0x10] sm:$0xf]
      %v1607 = vld [vmem:[#allocation3 + $0x14] sm:$0x1]
      %v1608 = vld [vmem:[#allocation3 + $0x18] sm:$0xf]
      %v1609 = vld [vmem:[#allocation3 + $0x1c] sm:$0xf]
      %v1610 = vld [vmem:[#allocation3 + $0x20] sm:$0x1]
      %v1611 = vld [vmem:[#allocation3 + $0x24] sm:$0xf]
      %v1612 = vld [vmem:[#allocation3 + $0x28] sm:$0xf]
      %v1613 = vld [vmem:[#allocation3 + $0x2c] sm:$0x1]
      %v1614 = vld [vmem:[#allocation3 + $0x30] sm:$0xf]
      %v1615 = vld [vmem:[#allocation3 + $0x34] sm:$0xf]
      %v1616 = vld [vmem:[#allocation3 + $0x38] sm:$0x1]
      %v1617 = vld [vmem:[#allocation3 + $0x3c] sm:$0xf]
      %v1618 = vld [vmem:[#allocation3 + $0x40] sm:$0xf]
      %v1619 = vld [vmem:[#allocation3 + $0x44] sm:$0x1]
      %v1620 = vld [vmem:[#allocation3 + $0x48] sm:$0xf]
      %v1621 = vld [vmem:[#allocation3 + $0x4c] sm:$0xf]
      %v1622 = vld [vmem:[#allocation3 + $0x50] sm:$0x1]
      %v1623 = vld [vmem:[#allocation3 + $0x54] sm:$0xf]
      %v1624 = vld [vmem:[#allocation3 + $0x58] sm:$0xf]
      %v1625 = vld [vmem:[#allocation3 + $0x5c] sm:$0x1]
      %v1626 = vld [vmem:[#allocation3 + $0x60] sm:$0xf]
      %v1627 = vld [vmem:[#allocation3 + $0x64] sm:$0xf]
      %v1628 = vld [vmem:[#allocation3 + $0x68] sm:$0x1]
      %v1629 = vld [vmem:[#allocation3 + $0x6c] sm:$0xf]
      %v1630 = vld [vmem:[#allocation3 + $0x70] sm:$0xf]
      %v1631 = vld [vmem:[#allocation3 + $0x74] sm:$0x1]
      %v1632 = vld [vmem:[#allocation3 + $0x78] sm:$0xf]
      %v1633 = vld [vmem:[#allocation3 + $0x7c] sm:$0xf]
      %v1634 = vld [vmem:[#allocation3 + $0x80] sm:$0x1]
      %v1635 = vld [vmem:[#allocation3 + $0x84] sm:$0xf]
      %v1636 = vld [vmem:[#allocation3 + $0x88] sm:$0xf]
      %v1637 = vld [vmem:[#allocation3 + $0x8c] sm:$0x1]
      %v1638 = vld [vmem:[#allocation3 + $0x90] sm:$0xf]
      %v1639 = vld [vmem:[#allocation3 + $0x94] sm:$0xf]
      %v1640 = vld [vmem:[#allocation3 + $0x98] sm:$0x1]
      %v1641 = vld [vmem:[#allocation3 + $0x9c] sm:$0xf]
      %v1642 = vld [vmem:[#allocation3 + $0xa0] sm:$0xf]
      %v1643 = vld [vmem:[#allocation3 + $0xa4] sm:$0x1]
      %v1644 = vld [vmem:[#allocation3 + $0xa8] sm:$0xf]
      %v1645 = vld [vmem:[#allocation3 + $0xac] sm:$0xf]
      %v1646 = vld [vmem:[#allocation3 + $0xb0] sm:$0x1]
      %v1647 = vld [vmem:[#allocation3 + $0xb4] sm:$0xf]
      %v1648 = vld [vmem:[#allocation3 + $0xb8] sm:$0xf]
      %v1649 = vld [vmem:[#allocation3 + $0xbc] sm:$0x1]
      %v1650 = vld [vmem:[#allocation3 + $0xc0] sm:$0xf]
      %v1651 = vld [vmem:[#allocation3 + $0xc4] sm:$0xf]
      %v1652 = vld [vmem:[#allocation3 + $0xc8] sm:$0x1]
      %v1653 = vld [vmem:[#allocation3 + $0xcc] sm:$0xf]
      %v1654 = vld [vmem:[#allocation3 + $0xd0] sm:$0xf]
      %v1655 = vld [vmem:[#allocation3 + $0xd4] sm:$0x1]
      %v1688 = vunpack.c.l.b16 %v1548
      %v1689 = vunpack.c.l.b16 %v1549
      %v1690 = vunpack.c.l.b16 %v1551
      %v1691 = vunpack.c.l.b16 %v1552
      %v1692 = vunpack.c.l.b16 %v1554
      %v1693 = vunpack.c.l.b16 %v1555
      %v1694 = vunpack.c.l.b16 %v1557
      %v1695 = vunpack.c.l.b16 %v1558
      %v1696 = vunpack.c.l.b16 %v1560
      %v1697 = vunpack.c.l.b16 %v1561
      %v1698 = vunpack.c.l.b16 %v1563
      %v1699 = vunpack.c.l.b16 %v1564
      %v1700 = vunpack.c.l.b16 %v1566
      %v1701 = vunpack.c.l.b16 %v1567
      %v1702 = vunpack.c.l.b16 %v1569
      %v1703 = vunpack.c.l.b16 %v1570
      %v1704 = vunpack.c.l.b16 %v1572
      %v1705 = vunpack.c.l.b16 %v1573
      %v1706 = vunpack.c.l.b16 %v1575
      %v1707 = vunpack.c.l.b16 %v1576
      %v1708 = vunpack.c.l.b16 %v1578
      %v1709 = vunpack.c.l.b16 %v1579
      %v1710 = vunpack.c.l.b16 %v1581
      %v1711 = vunpack.c.l.b16 %v1582
      %v1712 = vunpack.c.l.b16 %v1584
      %v1713 = vunpack.c.l.b16 %v1585
      %v1714 = vunpack.c.l.b16 %v1587
      %v1715 = vunpack.c.l.b16 %v1588
      %v1716 = vunpack.c.l.b16 %v1590
      %v1717 = vunpack.c.l.b16 %v1591
      %v1718 = vunpack.c.l.b16 %v1593
      %v1719 = vunpack.c.l.b16 %v1594
      %v1720 = vpack.c.b16 %v1689, %v1688
      %v1721 = vpack.c.b16 %v1691, %v1690
      %v1722 = vpack.c.b16 %v1693, %v1692
      %v1723 = vpack.c.b16 %v1695, %v1694
      %v1724 = vpack.c.b16 %v1697, %v1696
      %v1725 = vpack.c.b16 %v1699, %v1698
      %v1726 = vpack.c.b16 %v1701, %v1700
      %v1727 = vpack.c.b16 %v1703, %v1702
      %v1728 = vpack.c.b16 %v1705, %v1704
      %v1729 = vpack.c.b16 %v1707, %v1706
      %v1730 = vpack.c.b16 %v1709, %v1708
      %v1731 = vpack.c.b16 %v1711, %v1710
      %v1732 = vpack.c.b16 %v1713, %v1712
      %v1733 = vpack.c.b16 %v1715, %v1714
      %v1734 = vpack.c.b16 %v1717, %v1716
      %v1735 = vpack.c.b16 %v1719, %v1718
      %v1752 = vunpack.c.l.b16 %v1550
      %v1753 = vunpack.c.l.b16 %v1553
      %v1754 = vunpack.c.l.b16 %v1556
      %v1755 = vunpack.c.l.b16 %v1559
      %v1756 = vunpack.c.l.b16 %v1562
      %v1757 = vunpack.c.l.b16 %v1565
      %v1758 = vunpack.c.l.b16 %v1568
      %v1759 = vunpack.c.l.b16 %v1571
      %v1760 = vunpack.c.l.b16 %v1574
      %v1761 = vunpack.c.l.b16 %v1577
      %v1762 = vunpack.c.l.b16 %v1580
      %v1763 = vunpack.c.l.b16 %v1583
      %v1764 = vunpack.c.l.b16 %v1586
      %v1765 = vunpack.c.l.b16 %v1589
      %v1766 = vunpack.c.l.b16 %v1592
      %v1767 = vunpack.c.l.b16 %v1595
      %v1768 = vpack.c.b16 %v1752, %v1752
      %v1769 = vpack.c.b16 %v1753, %v1753
      %v1770 = vpack.c.b16 %v1754, %v1754
      %v1771 = vpack.c.b16 %v1755, %v1755
      %v1772 = vpack.c.b16 %v1756, %v1756
      %v1773 = vpack.c.b16 %v1757, %v1757
      %v1774 = vpack.c.b16 %v1758, %v1758
      %v1775 = vpack.c.b16 %v1759, %v1759
      %v1776 = vpack.c.b16 %v1760, %v1760
      %v1777 = vpack.c.b16 %v1761, %v1761
      %v1778 = vpack.c.b16 %v1762, %v1762
      %v1779 = vpack.c.b16 %v1763, %v1763
      %v1780 = vpack.c.b16 %v1764, %v1764
      %v1781 = vpack.c.b16 %v1765, %v1765
      %v1782 = vpack.c.b16 %v1766, %v1766
      %v1783 = vpack.c.b16 %v1767, %v1767
      %vm1784 = vsmask.f32 7424
      %v1786 = vshrl.u32 %v1720, 16
      %v1788 = vshll.u32 %v1720, 16
      %v1790 = vrot.slane %v1788, 1
      %v1791 = vor.u32 %v1786, %v1790
      %v1793 = vshll.u32 %v1768, 16
      %v1795 = vrot.slane %v1793, 1
      %v1796 = vsel %vm1784, %v1791, %v1795
      %v1798 = vshrl.u32 %v1721, 16
      %v1800 = vshll.u32 %v1721, 16
      %v1802 = vrot.slane %v1800, 1
      %v1803 = vor.u32 %v1798, %v1802
      %v1805 = vshll.u32 %v1769, 16
      %v1807 = vrot.slane %v1805, 1
      %v1808 = vsel %vm1784, %v1803, %v1807
      %v1810 = vshrl.u32 %v1722, 16
      %v1812 = vshll.u32 %v1722, 16
      %v1814 = vrot.slane %v1812, 1
      %v1815 = vor.u32 %v1810, %v1814
      %v1817 = vshll.u32 %v1770, 16
      %v1819 = vrot.slane %v1817, 1
      %v1820 = vsel %vm1784, %v1815, %v1819
      %v1822 = vshrl.u32 %v1723, 16
      %v1824 = vshll.u32 %v1723, 16
      %v1826 = vrot.slane %v1824, 1
      %v1827 = vor.u32 %v1822, %v1826
      %v1829 = vshll.u32 %v1771, 16
      %v1831 = vrot.slane %v1829, 1
      %v1832 = vsel %vm1784, %v1827, %v1831
      %v1834 = vshrl.u32 %v1724, 16
      %v1836 = vshll.u32 %v1724, 16
      %v1838 = vrot.slane %v1836, 1
      %v1839 = vor.u32 %v1834, %v1838
      %v1841 = vshll.u32 %v1772, 16
      %v1843 = vrot.slane %v1841, 1
      %v1844 = vsel %vm1784, %v1839, %v1843
      %v1846 = vshrl.u32 %v1725, 16
      %v1848 = vshll.u32 %v1725, 16
      %v1850 = vrot.slane %v1848, 1
      %v1851 = vor.u32 %v1846, %v1850
      %v1853 = vshll.u32 %v1773, 16
      %v1855 = vrot.slane %v1853, 1
      %v1856 = vsel %vm1784, %v1851, %v1855
      %v1858 = vshrl.u32 %v1726, 16
      %v1860 = vshll.u32 %v1726, 16
      %v1862 = vrot.slane %v1860, 1
      %v1863 = vor.u32 %v1858, %v1862
      %v1865 = vshll.u32 %v1774, 16
      %v1867 = vrot.slane %v1865, 1
      %v1868 = vsel %vm1784, %v1863, %v1867
      %v1870 = vshrl.u32 %v1727, 16
      %v1872 = vshll.u32 %v1727, 16
      %v1874 = vrot.slane %v1872, 1
      %v1875 = vor.u32 %v1870, %v1874
      %v1877 = vshll.u32 %v1775, 16
      %v1879 = vrot.slane %v1877, 1
      %v1880 = vsel %vm1784, %v1875, %v1879
      %v1882 = vshrl.u32 %v1728, 16
      %v1884 = vshll.u32 %v1728, 16
      %v1886 = vrot.slane %v1884, 1
      %v1887 = vor.u32 %v1882, %v1886
      %v1889 = vshll.u32 %v1776, 16
      %v1891 = vrot.slane %v1889, 1
      %v1892 = vsel %vm1784, %v1887, %v1891
      %v1894 = vshrl.u32 %v1729, 16
      %v1896 = vshll.u32 %v1729, 16
      %v1898 = vrot.slane %v1896, 1
      %v1899 = vor.u32 %v1894, %v1898
      %v1901 = vshll.u32 %v1777, 16
      %v1903 = vrot.slane %v1901, 1
      %v1904 = vsel %vm1784, %v1899, %v1903
      %v1906 = vshrl.u32 %v1730, 16
      %v1908 = vshll.u32 %v1730, 16
      %v1910 = vrot.slane %v1908, 1
      %v1911 = vor.u32 %v1906, %v1910
      %v1913 = vshll.u32 %v1778, 16
      %v1915 = vrot.slane %v1913, 1
      %v1916 = vsel %vm1784, %v1911, %v1915
      %v1918 = vshrl.u32 %v1731, 16
      %v1920 = vshll.u32 %v1731, 16
      %v1922 = vrot.slane %v1920, 1
      %v1923 = vor.u32 %v1918, %v1922
      %v1925 = vshll.u32 %v1779, 16
      %v1927 = vrot.slane %v1925, 1
      %v1928 = vsel %vm1784, %v1923, %v1927
      %v1930 = vshrl.u32 %v1732, 16
      %v1932 = vshll.u32 %v1732, 16
      %v1934 = vrot.slane %v1932, 1
      %v1935 = vor.u32 %v1930, %v1934
      %v1937 = vshll.u32 %v1780, 16
      %v1939 = vrot.slane %v1937, 1
      %v1940 = vsel %vm1784, %v1935, %v1939
      %v1942 = vshrl.u32 %v1733, 16
      %v1944 = vshll.u32 %v1733, 16
      %v1946 = vrot.slane %v1944, 1
      %v1947 = vor.u32 %v1942, %v1946
      %v1949 = vshll.u32 %v1781, 16
      %v1951 = vrot.slane %v1949, 1
      %v1952 = vsel %vm1784, %v1947, %v1951
      %v1954 = vshrl.u32 %v1734, 16
      %v1956 = vshll.u32 %v1734, 16
      %v1958 = vrot.slane %v1956, 1
      %v1959 = vor.u32 %v1954, %v1958
      %v1961 = vshll.u32 %v1782, 16
      %v1963 = vrot.slane %v1961, 1
      %v1964 = vsel %vm1784, %v1959, %v1963
      %v1966 = vshrl.u32 %v1735, 16
      %v1968 = vshll.u32 %v1735, 16
      %v1970 = vrot.slane %v1968, 1
      %v1971 = vor.u32 %v1966, %v1970
      %v1973 = vshll.u32 %v1783, 16
      %v1975 = vrot.slane %v1973, 1
      %v1976 = vsel %vm1784, %v1971, %v1975
      %1977 = vrot.lane.b32.xlu0 %v1796, 8
      %v1978 = vpop.permute.xlu0 %1977
      %1979 = vrot.lane.b32.xlu0 %v1808, 8
      %v1980 = vpop.permute.xlu0 %1979
      %1981 = vrot.lane.b32.xlu0 %v1820, 8
      %v1982 = vpop.permute.xlu0 %1981
      %1983 = vrot.lane.b32.xlu0 %v1832, 8
      %v1984 = vpop.permute.xlu0 %1983
      %1985 = vrot.lane.b32.xlu0 %v1844, 8
      %v1986 = vpop.permute.xlu0 %1985
      %1987 = vrot.lane.b32.xlu0 %v1856, 8
      %v1988 = vpop.permute.xlu0 %1987
      %1989 = vrot.lane.b32.xlu0 %v1868, 8
      %v1990 = vpop.permute.xlu0 %1989
      %1991 = vrot.lane.b32.xlu0 %v1880, 8
      %v1992 = vpop.permute.xlu0 %1991
      %1993 = vrot.lane.b32.xlu0 %v1892, 8
      %v1994 = vpop.permute.xlu0 %1993
      %1995 = vrot.lane.b32.xlu0 %v1904, 8
      %v1996 = vpop.permute.xlu0 %1995
      %1997 = vrot.lane.b32.xlu0 %v1916, 8
      %v1998 = vpop.permute.xlu0 %1997
      %1999 = vrot.lane.b32.xlu0 %v1928, 8
      %v2000 = vpop.permute.xlu0 %1999
      %2001 = vrot.lane.b32.xlu0 %v1940, 8
      %v2002 = vpop.permute.xlu0 %2001
      %2003 = vrot.lane.b32.xlu0 %v1952, 8
      %v2004 = vpop.permute.xlu0 %2003
      %2005 = vrot.lane.b32.xlu0 %v1964, 8
      %v2006 = vpop.permute.xlu0 %2005
      %2007 = vrot.lane.b32.xlu0 %v1976, 8
      %v2008 = vpop.permute.xlu0 %2007
      %vm2009 = vcmask 1046528
      %v2010 = vrot.slane %v1720, 1
      %v2011 = vrot.slane %v1768, 1
      %v2012 = vsel %vm2009, %v2010, %v2011
      %v2013 = vrot.slane %v1721, 1
      %v2014 = vrot.slane %v1769, 1
      %v2015 = vsel %vm2009, %v2013, %v2014
      %v2016 = vrot.slane %v1722, 1
      %v2017 = vrot.slane %v1770, 1
      %v2018 = vsel %vm2009, %v2016, %v2017
      %v2019 = vrot.slane %v1723, 1
      %v2020 = vrot.slane %v1771, 1
      %v2021 = vsel %vm2009, %v2019, %v2020
      %v2022 = vrot.slane %v1724, 1
      %v2023 = vrot.slane %v1772, 1
      %v2024 = vsel %vm2009, %v2022, %v2023
      %v2025 = vrot.slane %v1725, 1
      %v2026 = vrot.slane %v1773, 1
      %v2027 = vsel %vm2009, %v2025, %v2026
      %v2028 = vrot.slane %v1726, 1
      %v2029 = vrot.slane %v1774, 1
      %v2030 = vsel %vm2009, %v2028, %v2029
      %v2031 = vrot.slane %v1727, 1
      %v2032 = vrot.slane %v1775, 1
      %v2033 = vsel %vm2009, %v2031, %v2032
      %v2034 = vrot.slane %v1728, 1
      %v2035 = vrot.slane %v1776, 1
      %v2036 = vsel %vm2009, %v2034, %v2035
      %v2037 = vrot.slane %v1729, 1
      %v2038 = vrot.slane %v1777, 1
      %v2039 = vsel %vm2009, %v2037, %v2038
      %v2040 = vrot.slane %v1730, 1
      %v2041 = vrot.slane %v1778, 1
      %v2042 = vsel %vm2009, %v2040, %v2041
      %v2043 = vrot.slane %v1731, 1
      %v2044 = vrot.slane %v1779, 1
      %v2045 = vsel %vm2009, %v2043, %v2044
      %v2046 = vrot.slane %v1732, 1
      %v2047 = vrot.slane %v1780, 1
      %v2048 = vsel %vm2009, %v2046, %v2047
      %v2049 = vrot.slane %v1733, 1
      %v2050 = vrot.slane %v1781, 1
      %v2051 = vsel %vm2009, %v2049, %v2050
      %v2052 = vrot.slane %v1734, 1
      %v2053 = vrot.slane %v1782, 1
      %v2054 = vsel %vm2009, %v2052, %v2053
      %v2055 = vrot.slane %v1735, 1
      %v2056 = vrot.slane %v1783, 1
      %v2057 = vsel %vm2009, %v2055, %v2056
      %2058 = vrot.lane.b32.xlu0 %v2012, 16
      %v2059 = vpop.permute.xlu0 %2058
      %2060 = vrot.lane.b32.xlu0 %v2015, 16
      %v2061 = vpop.permute.xlu0 %2060
      %2062 = vrot.lane.b32.xlu0 %v2018, 16
      %v2063 = vpop.permute.xlu0 %2062
      %2064 = vrot.lane.b32.xlu0 %v2021, 16
      %v2065 = vpop.permute.xlu0 %2064
      %2066 = vrot.lane.b32.xlu0 %v2024, 16
      %v2067 = vpop.permute.xlu0 %2066
      %2068 = vrot.lane.b32.xlu0 %v2027, 16
      %v2069 = vpop.permute.xlu0 %2068
      %2070 = vrot.lane.b32.xlu0 %v2030, 16
      %v2071 = vpop.permute.xlu0 %2070
      %2072 = vrot.lane.b32.xlu0 %v2033, 16
      %v2073 = vpop.permute.xlu0 %2072
      %2074 = vrot.lane.b32.xlu0 %v2036, 16
      %v2075 = vpop.permute.xlu0 %2074
      %2076 = vrot.lane.b32.xlu0 %v2039, 16
      %v2077 = vpop.permute.xlu0 %2076
      %2078 = vrot.lane.b32.xlu0 %v2042, 16
      %v2079 = vpop.permute.xlu0 %2078
      %2080 = vrot.lane.b32.xlu0 %v2045, 16
      %v2081 = vpop.permute.xlu0 %2080
      %2082 = vrot.lane.b32.xlu0 %v2048, 16
      %v2083 = vpop.permute.xlu0 %2082
      %2084 = vrot.lane.b32.xlu0 %v2051, 16
      %v2085 = vpop.permute.xlu0 %2084
      %2086 = vrot.lane.b32.xlu0 %v2054, 16
      %v2087 = vpop.permute.xlu0 %2086
      %2088 = vrot.lane.b32.xlu0 %v2057, 16
      %v2089 = vpop.permute.xlu0 %2088
      %vm2090 = vcmask 64512
      %v2092 = vsel %vm2090, %v1720, %v1978
      %v2094 = vsel %vm2090, %v1721, %v1980
      %v2096 = vsel %vm2090, %v1722, %v1982
      %v2098 = vsel %vm2090, %v1723, %v1984
      %v2100 = vsel %vm2090, %v1724, %v1986
      %v2102 = vsel %vm2090, %v1725, %v1988
      %v2104 = vsel %vm2090, %v1726, %v1990
      %v2106 = vsel %vm2090, %v1727, %v1992
      %v2108 = vsel %vm2090, %v1728, %v1994
      %v2110 = vsel %vm2090, %v1729, %v1996
      %v2112 = vsel %vm2090, %v1730, %v1998
      %v2114 = vsel %vm2090, %v1731, %v2000
      %v2116 = vsel %vm2090, %v1732, %v2002
      %v2118 = vsel %vm2090, %v1733, %v2004
      %v2120 = vsel %vm2090, %v1734, %v2006
      %v2122 = vsel %vm2090, %v1735, %v2008
      %vm2123 = vcmask 130048
      %v2125 = vsel %vm2123, %v2092, %v2059
      %v2127 = vsel %vm2123, %v2094, %v2061
      %v2129 = vsel %vm2123, %v2096, %v2063
      %v2131 = vsel %vm2123, %v2098, %v2065
      %v2133 = vsel %vm2123, %v2100, %v2067
      %v2135 = vsel %vm2123, %v2102, %v2069
      %v2137 = vsel %vm2123, %v2104, %v2071
      %v2139 = vsel %vm2123, %v2106, %v2073
      %v2141 = vsel %vm2123, %v2108, %v2075
      %v2143 = vsel %vm2123, %v2110, %v2077
      %v2145 = vsel %vm2123, %v2112, %v2079
      %v2147 = vsel %vm2123, %v2114, %v2081
      %v2149 = vsel %vm2123, %v2116, %v2083
      %v2151 = vsel %vm2123, %v2118, %v2085
      %v2153 = vsel %vm2123, %v2120, %v2087
      %v2155 = vsel %vm2123, %v2122, %v2089
      %v2156 = vld [vmem:[%s2] sm:$0xf]
      %v2157 = vld [vmem:[%s2 + $0x4] sm:$0xf]
      %v2158 = vld [vmem:[%s2 + $0x8] sm:$0xf]
      %v2161 = vunpack.c.l.b16 %v1596
      %v2162 = vunpack.c.l.b16 %v1597
      %v2163 = vpack.c.b16 %v2162, %v2161
      %v2165 = vunpack.c.l.b16 %v1598
      %v2166 = vpack.c.b16 %v2165, %v2165
      %v2168 = vshrl.u32 %v2163, 16
      %v2170 = vshll.u32 %v2163, 16
      %v2172 = vrot.slane %v2170, 1
      %v2173 = vor.u32 %v2168, %v2172
      %v2175 = vshll.u32 %v2166, 16
      %v2177 = vrot.slane %v2175, 1
      %v2178 = vsel %vm1784, %v2173, %v2177
      %2179 = vrot.lane.b32.xlu0 %v2178, 8
      %v2180 = vpop.permute.xlu0 %2179
      %v2181 = vrot.slane %v2163, 1
      %v2182 = vrot.slane %v2166, 1
      %v2183 = vsel %vm2009, %v2181, %v2182
      %2184 = vrot.lane.b32.xlu0 %v2183, 16
      %v2185 = vpop.permute.xlu0 %2184
      %v2187 = vsel %vm2090, %v2163, %v2180
      %v2189 = vsel %vm2123, %v2187, %v2185
      %s2190 = scalar_lea.vmem %s2, 12
      %v2191 = vld [vmem:[%s2190] sm:$0xf]
      %v2192 = vld [vmem:[%s2190 + $0x4] sm:$0xf]
      %v2193 = vld [vmem:[%s2190 + $0x8] sm:$0xf]
      %v2197 = vunpack.c.l.b16 %v2191
      %v2198 = vunpack.c.l.b16 %v2192
      %v2199 = vunpack.c.l.b16 %v2193
      %v2200 = vpack.c.b16 %v2198, %v2197
      %v2201 = vpack.c.b16 %v2199, %v2199
      %vm2203 = vcmask 195584
      %v2204 = vsel %vm2203, %v2127, 0
      %v2206 = vsel %vm2203, %v2129, 0
      %v2208 = vsel %vm2203, %v2131, 0
      %v2210 = vsel %vm2203, %v2133, 0
      %v2212 = vsel %vm2203, %v2135, 0
      %v2214 = vsel %vm2203, %v2137, 0
      %v2216 = vsel %vm2203, %v2139, 0
      %v2218 = vsel %vm2203, %v2141, 0
      %v2220 = vsel %vm2203, %v2143, 0
      %v2222 = vsel %vm2203, %v2145, 0
      %v2224 = vsel %vm2203, %v2147, 0
      %v2226 = vsel %vm2203, %v2149, 0
      %v2228 = vsel %vm2203, %v2151, 0
      %v2230 = vsel %vm2203, %v2153, 0
      %v2232 = vsel %vm2203, %v2155, 0
      %v2234 = vsel %vm2203, %v2189, 0
      %vm2236 = vcmask 1043456
      %v2238 = vsel %vm2236, %v2201, 0
      %2240 = vmatpush.bf16.msra.mxu0 0
      %2241 = vmatpush.bf16.msra.mxu0 0
      %2242 = vmatpush.bf16.msra.mxu0 0
      %2243 = vmatpush.bf16.msra.mxu0 0
      %2244 = vmatpush.bf16.msra.mxu0 0
      %2245 = vmatpush.bf16.msra.mxu0 0
      %2246 = vmatpush.bf16.msra.mxu0 %v2238
      %2247 = vmatpush.bf16.msra.mxu0 %v2200
      %2248 = vmatmul.bf16.gmra.mxu0 %v2204
      %v2249 = vpop.f32.mrf.mxu0
      %v2250 = vadd.f32 0.0, %v2249
      %v2251 = vpop.f32.mrf.mxu0
      %v2252 = vadd.f32 0.0, %v2251
      %2253 = vmatmul.bf16.gmra.mxu0 %v2206
      %v2254 = vpop.f32.mrf.mxu0
      %v2255 = vadd.f32 0.0, %v2254
      %v2256 = vpop.f32.mrf.mxu0
      %v2257 = vadd.f32 0.0, %v2256
      %2258 = vmatmul.bf16.gmra.mxu0 %v2208
      %v2259 = vpop.f32.mrf.mxu0
      %v2260 = vadd.f32 0.0, %v2259
      %v2261 = vpop.f32.mrf.mxu0
      %v2262 = vadd.f32 0.0, %v2261
      %2263 = vmatmul.bf16.gmra.mxu0 %v2210
      %v2264 = vpop.f32.mrf.mxu0
      %v2265 = vadd.f32 0.0, %v2264
      %v2266 = vpop.f32.mrf.mxu0
      %v2267 = vadd.f32 0.0, %v2266
      %2268 = vmatmul.bf16.gmra.mxu0 %v2212
      %v2269 = vpop.f32.mrf.mxu0
      %v2270 = vadd.f32 0.0, %v2269
      %v2271 = vpop.f32.mrf.mxu0
      %v2272 = vadd.f32 0.0, %v2271
      %2273 = vmatmul.bf16.gmra.mxu0 %v2214
      %v2274 = vpop.f32.mrf.mxu0
      %v2275 = vadd.f32 0.0, %v2274
      %v2276 = vpop.f32.mrf.mxu0
      %v2277 = vadd.f32 0.0, %v2276
      %2278 = vmatmul.bf16.gmra.mxu0 %v2216
      %v2279 = vpop.f32.mrf.mxu0
      %v2280 = vadd.f32 0.0, %v2279
      %v2281 = vpop.f32.mrf.mxu0
      %v2282 = vadd.f32 0.0, %v2281
      %2283 = vmatmul.bf16.gmra.mxu0 %v2218
      %v2284 = vpop.f32.mrf.mxu0
      %v2285 = vadd.f32 0.0, %v2284
      %v2286 = vpop.f32.mrf.mxu0
      %v2287 = vadd.f32 0.0, %v2286
      %2288 = vmatmul.bf16.gmra.mxu0 %v2220
      %v2289 = vpop.f32.mrf.mxu0
      %v2290 = vadd.f32 0.0, %v2289
      %v2291 = vpop.f32.mrf.mxu0
      %v2292 = vadd.f32 0.0, %v2291
      %2293 = vmatmul.bf16.gmra.mxu0 %v2222
      %v2294 = vpop.f32.mrf.mxu0
      %v2295 = vadd.f32 0.0, %v2294
      %v2296 = vpop.f32.mrf.mxu0
      %v2297 = vadd.f32 0.0, %v2296
      %2298 = vmatmul.bf16.gmra.mxu0 %v2224
      %v2299 = vpop.f32.mrf.mxu0
      %v2300 = vadd.f32 0.0, %v2299
      %v2301 = vpop.f32.mrf.mxu0
      %v2302 = vadd.f32 0.0, %v2301
      %2303 = vmatmul.bf16.gmra.mxu0 %v2226
      %v2304 = vpop.f32.mrf.mxu0
      %v2305 = vadd.f32 0.0, %v2304
      %v2306 = vpop.f32.mrf.mxu0
      %v2307 = vadd.f32 0.0, %v2306
      %2308 = vmatmul.bf16.gmra.mxu0 %v2228
      %v2309 = vpop.f32.mrf.mxu0
      %v2310 = vadd.f32 0.0, %v2309
      %v2311 = vpop.f32.mrf.mxu0
      %v2312 = vadd.f32 0.0, %v2311
      %2313 = vmatmul.bf16.gmra.mxu0 %v2230
      %v2314 = vpop.f32.mrf.mxu0
      %v2315 = vadd.f32 0.0, %v2314
      %v2316 = vpop.f32.mrf.mxu0
      %v2317 = vadd.f32 0.0, %v2316
      %2318 = vmatmul.bf16.gmra.mxu0 %v2232
      %v2319 = vpop.f32.mrf.mxu0
      %v2320 = vadd.f32 0.0, %v2319
      %v2321 = vpop.f32.mrf.mxu0
      %v2322 = vadd.f32 0.0, %v2321
      %2323 = vmatmul.bf16.gmra.mxu0 %v2234
      %v2324 = vpop.f32.mrf.mxu0
      %v2325 = vadd.f32 0.0, %v2324
      %v2326 = vpop.f32.mrf.mxu0
      %v2327 = vadd.f32 0.0, %v2326
      %2328 = vdwg.mxu0
      %v2332 = vunpack.c.l.b16 %v2156
      %v2333 = vunpack.c.l.b16 %v2157
      %v2334 = vunpack.c.l.b16 %v2158
      %v2335 = vpack.c.b16 %v2333, %v2332
      %v2336 = vpack.c.b16 %v2334, %v2334
      %v2338 = vsel %vm2203, %v2125, 0
      %v2341 = vsel %vm2236, %v2336, 0
      %2343 = vmatpush.bf16.msra.mxu0 0
      %2344 = vmatpush.bf16.msra.mxu0 0
      %2345 = vmatpush.bf16.msra.mxu0 0
      %2346 = vmatpush.bf16.msra.mxu0 0
      %2347 = vmatpush.bf16.msra.mxu0 0
      %2348 = vmatpush.bf16.msra.mxu0 0
      %2349 = vmatpush.bf16.msra.mxu0 %v2341
      %2350 = vmatpush.bf16.msra.mxu0 %v2335
      %2351 = vmatmul.bf16.gmra.mxu0 %v2338
      %v2352 = vpop.f32.mrf.mxu0
      %v2353 = vadd.f32 %v2250, %v2352
      %v2354 = vpop.f32.mrf.mxu0
      %v2355 = vadd.f32 %v2252, %v2354
      %2356 = vmatmul.bf16.gmra.mxu0 %v2204
      %v2357 = vpop.f32.mrf.mxu0
      %v2358 = vadd.f32 %v2255, %v2357
      %v2359 = vpop.f32.mrf.mxu0
      %v2360 = vadd.f32 %v2257, %v2359
      %2361 = vmatmul.bf16.gmra.mxu0 %v2206
      %v2362 = vpop.f32.mrf.mxu0
      %v2363 = vadd.f32 %v2260, %v2362
      %v2364 = vpop.f32.mrf.mxu0
      %v2365 = vadd.f32 %v2262, %v2364
      %2366 = vmatmul.bf16.gmra.mxu0 %v2208
      %v2367 = vpop.f32.mrf.mxu0
      %v2368 = vadd.f32 %v2265, %v2367
      %v2369 = vpop.f32.mrf.mxu0
      %v2370 = vadd.f32 %v2267, %v2369
      %2371 = vmatmul.bf16.gmra.mxu0 %v2210
      %v2372 = vpop.f32.mrf.mxu0
      %v2373 = vadd.f32 %v2270, %v2372
      %v2374 = vpop.f32.mrf.mxu0
      %v2375 = vadd.f32 %v2272, %v2374
      %2376 = vmatmul.bf16.gmra.mxu0 %v2212
      %v2377 = vpop.f32.mrf.mxu0
      %v2378 = vadd.f32 %v2275, %v2377
      %v2379 = vpop.f32.mrf.mxu0
      %v2380 = vadd.f32 %v2277, %v2379
      %2381 = vmatmul.bf16.gmra.mxu0 %v2214
      %v2382 = vpop.f32.mrf.mxu0
      %v2383 = vadd.f32 %v2280, %v2382
      %v2384 = vpop.f32.mrf.mxu0
      %v2385 = vadd.f32 %v2282, %v2384
      %2386 = vmatmul.bf16.gmra.mxu0 %v2216
      %v2387 = vpop.f32.mrf.mxu0
      %v2388 = vadd.f32 %v2285, %v2387
      %v2389 = vpop.f32.mrf.mxu0
      %v2390 = vadd.f32 %v2287, %v2389
      %2391 = vmatmul.bf16.gmra.mxu0 %v2218
      %v2392 = vpop.f32.mrf.mxu0
      %v2393 = vadd.f32 %v2290, %v2392
      %v2394 = vpop.f32.mrf.mxu0
      %v2395 = vadd.f32 %v2292, %v2394
      %2396 = vmatmul.bf16.gmra.mxu0 %v2220
      %v2397 = vpop.f32.mrf.mxu0
      %v2398 = vadd.f32 %v2295, %v2397
      %v2399 = vpop.f32.mrf.mxu0
      %v2400 = vadd.f32 %v2297, %v2399
      %2401 = vmatmul.bf16.gmra.mxu0 %v2222
      %v2402 = vpop.f32.mrf.mxu0
      %v2403 = vadd.f32 %v2300, %v2402
      %v2404 = vpop.f32.mrf.mxu0
      %v2405 = vadd.f32 %v2302, %v2404
      %2406 = vmatmul.bf16.gmra.mxu0 %v2224
      %v2407 = vpop.f32.mrf.mxu0
      %v2408 = vadd.f32 %v2305, %v2407
      %v2409 = vpop.f32.mrf.mxu0
      %v2410 = vadd.f32 %v2307, %v2409
      %2411 = vmatmul.bf16.gmra.mxu0 %v2226
      %v2412 = vpop.f32.mrf.mxu0
      %v2413 = vadd.f32 %v2310, %v2412
      %v2414 = vpop.f32.mrf.mxu0
      %v2415 = vadd.f32 %v2312, %v2414
      %2416 = vmatmul.bf16.gmra.mxu0 %v2228
      %v2417 = vpop.f32.mrf.mxu0
      %v2418 = vadd.f32 %v2315, %v2417
      %v2419 = vpop.f32.mrf.mxu0
      %v2420 = vadd.f32 %v2317, %v2419
      %2421 = vmatmul.bf16.gmra.mxu0 %v2230
      %v2422 = vpop.f32.mrf.mxu0
      %v2423 = vadd.f32 %v2320, %v2422
      %v2424 = vpop.f32.mrf.mxu0
      %v2425 = vadd.f32 %v2322, %v2424
      %2426 = vmatmul.bf16.gmra.mxu0 %v2232
      %v2427 = vpop.f32.mrf.mxu0
      %v2428 = vadd.f32 %v2325, %v2427
      %v2429 = vpop.f32.mrf.mxu0
      %v2430 = vadd.f32 %v2327, %v2429
      %2431 = vdwg.mxu0
      %v2434 = vunpack.c.l.b16 %v1599
      %v2435 = vunpack.c.l.b16 %v1600
      %v2436 = vpack.c.b16 %v2435, %v2434
      %v2438 = vunpack.c.l.b16 %v1601
      %v2439 = vpack.c.b16 %v2438, %v2438
      %v2441 = vshrl.u32 %v2436, 16
      %v2443 = vshll.u32 %v2436, 16
      %v2445 = vrot.slane %v2443, 1
      %v2446 = vor.u32 %v2441, %v2445
      %v2448 = vshll.u32 %v2439, 16
      %v2450 = vrot.slane %v2448, 1
      %v2451 = vsel %vm1784, %v2446, %v2450
      %2452 = vrot.lane.b32.xlu0 %v2451, 8
      %v2453 = vpop.permute.xlu0 %2452
      %v2454 = vrot.slane %v2436, 1
      %v2455 = vrot.slane %v2439, 1
      %v2456 = vsel %vm2009, %v2454, %v2455
      %2457 = vrot.lane.b32.xlu0 %v2456, 16
      %v2458 = vpop.permute.xlu0 %2457
      %v2460 = vsel %vm2090, %v2436, %v2453
      %v2462 = vsel %vm2123, %v2460, %v2458
      %s2463 = scalar_lea.vmem %s2, 24
      %v2464 = vld [vmem:[%s2463] sm:$0xf]
      %v2465 = vld [vmem:[%s2463 + $0x4] sm:$0xf]
      %v2466 = vld [vmem:[%s2463 + $0x8] sm:$0xf]
      %v2470 = vunpack.c.l.b16 %v2464
      %v2471 = vunpack.c.l.b16 %v2465
      %v2472 = vunpack.c.l.b16 %v2466
      %v2473 = vpack.c.b16 %v2471, %v2470
      %v2474 = vpack.c.b16 %v2472, %v2472
      %v2476 = vsel %vm2203, %v2462, 0
      %v2479 = vsel %vm2236, %v2474, 0
      %2481 = vmatpush.bf16.msra.mxu0 0
      %2482 = vmatpush.bf16.msra.mxu0 0
      %2483 = vmatpush.bf16.msra.mxu0 0
      %2484 = vmatpush.bf16.msra.mxu0 0
      %2485 = vmatpush.bf16.msra.mxu0 0
      %2486 = vmatpush.bf16.msra.mxu0 0
      %2487 = vmatpush.bf16.msra.mxu0 %v2479
      %2488 = vmatpush.bf16.msra.mxu0 %v2473
      %2489 = vmatmul.bf16.gmra.mxu0 %v2206
      %v2490 = vpop.f32.mrf.mxu0
      %v2491 = vadd.f32 0.0, %v2490
      %v2492 = vpop.f32.mrf.mxu0
      %v2493 = vadd.f32 0.0, %v2492
      %2494 = vmatmul.bf16.gmra.mxu0 %v2208
      %v2495 = vpop.f32.mrf.mxu0
      %v2496 = vadd.f32 0.0, %v2495
      %v2497 = vpop.f32.mrf.mxu0
      %v2498 = vadd.f32 0.0, %v2497
      %2499 = vmatmul.bf16.gmra.mxu0 %v2210
      %v2500 = vpop.f32.mrf.mxu0
      %v2501 = vadd.f32 0.0, %v2500
      %v2502 = vpop.f32.mrf.mxu0
      %v2503 = vadd.f32 0.0, %v2502
      %2504 = vmatmul.bf16.gmra.mxu0 %v2212
      %v2505 = vpop.f32.mrf.mxu0
      %v2506 = vadd.f32 0.0, %v2505
      %v2507 = vpop.f32.mrf.mxu0
      %v2508 = vadd.f32 0.0, %v2507
      %2509 = vmatmul.bf16.gmra.mxu0 %v2214
      %v2510 = vpop.f32.mrf.mxu0
      %v2511 = vadd.f32 0.0, %v2510
      %v2512 = vpop.f32.mrf.mxu0
      %v2513 = vadd.f32 0.0, %v2512
      %2514 = vmatmul.bf16.gmra.mxu0 %v2216
      %v2515 = vpop.f32.mrf.mxu0
      %v2516 = vadd.f32 0.0, %v2515
      %v2517 = vpop.f32.mrf.mxu0
      %v2518 = vadd.f32 0.0, %v2517
      %2519 = vmatmul.bf16.gmra.mxu0 %v2218
      %v2520 = vpop.f32.mrf.mxu0
      %v2521 = vadd.f32 0.0, %v2520
      %v2522 = vpop.f32.mrf.mxu0
      %v2523 = vadd.f32 0.0, %v2522
      %2524 = vmatmul.bf16.gmra.mxu0 %v2220
      %v2525 = vpop.f32.mrf.mxu0
      %v2526 = vadd.f32 0.0, %v2525
      %v2527 = vpop.f32.mrf.mxu0
      %v2528 = vadd.f32 0.0, %v2527
      %2529 = vmatmul.bf16.gmra.mxu0 %v2222
      %v2530 = vpop.f32.mrf.mxu0
      %v2531 = vadd.f32 0.0, %v2530
      %v2532 = vpop.f32.mrf.mxu0
      %v2533 = vadd.f32 0.0, %v2532
      %2534 = vmatmul.bf16.gmra.mxu0 %v2224
      %v2535 = vpop.f32.mrf.mxu0
      %v2536 = vadd.f32 0.0, %v2535
      %v2537 = vpop.f32.mrf.mxu0
      %v2538 = vadd.f32 0.0, %v2537
      %2539 = vmatmul.bf16.gmra.mxu0 %v2226
      %v2540 = vpop.f32.mrf.mxu0
      %v2541 = vadd.f32 0.0, %v2540
      %v2542 = vpop.f32.mrf.mxu0
      %v2543 = vadd.f32 0.0, %v2542
      %2544 = vmatmul.bf16.gmra.mxu0 %v2228
      %v2545 = vpop.f32.mrf.mxu0
      %v2546 = vadd.f32 0.0, %v2545
      %v2547 = vpop.f32.mrf.mxu0
      %v2548 = vadd.f32 0.0, %v2547
      %2549 = vmatmul.bf16.gmra.mxu0 %v2230
      %v2550 = vpop.f32.mrf.mxu0
      %v2551 = vadd.f32 0.0, %v2550
      %v2552 = vpop.f32.mrf.mxu0
      %v2553 = vadd.f32 0.0, %v2552
      %2554 = vmatmul.bf16.gmra.mxu0 %v2232
      %v2555 = vpop.f32.mrf.mxu0
      %v2556 = vadd.f32 0.0, %v2555
      %v2557 = vpop.f32.mrf.mxu0
      %v2558 = vadd.f32 0.0, %v2557
      %2559 = vmatmul.bf16.gmra.mxu0 %v2234
      %v2560 = vpop.f32.mrf.mxu0
      %v2561 = vadd.f32 0.0, %v2560
      %v2562 = vpop.f32.mrf.mxu0
      %v2563 = vadd.f32 0.0, %v2562
      %2564 = vmatmul.bf16.gmra.mxu0 %v2476
      %v2565 = vpop.f32.mrf.mxu0
      %v2566 = vadd.f32 0.0, %v2565
      %v2567 = vpop.f32.mrf.mxu0
      %v2568 = vadd.f32 0.0, %v2567
      %2569 = vdwg.mxu0
      %v2570 = vadd.f32 %v2353, %v2491
      %v2571 = vadd.f32 %v2355, %v2493
      %v2572 = vadd.f32 %v2358, %v2496
      %v2573 = vadd.f32 %v2360, %v2498
      %v2574 = vadd.f32 %v2363, %v2501
      %v2575 = vadd.f32 %v2365, %v2503
      %v2576 = vadd.f32 %v2368, %v2506
      %v2577 = vadd.f32 %v2370, %v2508
      %v2578 = vadd.f32 %v2373, %v2511
      %v2579 = vadd.f32 %v2375, %v2513
      %v2580 = vadd.f32 %v2378, %v2516
      %v2581 = vadd.f32 %v2380, %v2518
      %v2582 = vadd.f32 %v2383, %v2521
      %v2583 = vadd.f32 %v2385, %v2523
      %v2584 = vadd.f32 %v2388, %v2526
      %v2585 = vadd.f32 %v2390, %v2528
      %v2586 = vadd.f32 %v2393, %v2531
      %v2587 = vadd.f32 %v2395, %v2533
      %v2588 = vadd.f32 %v2398, %v2536
      %v2589 = vadd.f32 %v2400, %v2538
      %v2590 = vadd.f32 %v2403, %v2541
      %v2591 = vadd.f32 %v2405, %v2543
      %v2592 = vadd.f32 %v2408, %v2546
      %v2593 = vadd.f32 %v2410, %v2548
      %v2594 = vadd.f32 %v2413, %v2551
      %v2595 = vadd.f32 %v2415, %v2553
      %v2596 = vadd.f32 %v2418, %v2556
      %v2597 = vadd.f32 %v2420, %v2558
      %v2598 = vadd.f32 %v2423, %v2561
      %v2599 = vadd.f32 %v2425, %v2563
      %v2600 = vadd.f32 %v2428, %v2566
      %v2601 = vadd.f32 %v2430, %v2568
      %v2634 = vunpack.c.l.b16 %v1602
      %v2635 = vunpack.c.l.b16 %v1603
      %v2636 = vunpack.c.l.b16 %v1605
      %v2637 = vunpack.c.l.b16 %v1606
      %v2638 = vunpack.c.l.b16 %v1608
      %v2639 = vunpack.c.l.b16 %v1609
      %v2640 = vunpack.c.l.b16 %v1611
      %v2641 = vunpack.c.l.b16 %v1612
      %v2642 = vunpack.c.l.b16 %v1614
      %v2643 = vunpack.c.l.b16 %v1615
      %v2644 = vunpack.c.l.b16 %v1617
      %v2645 = vunpack.c.l.b16 %v1618
      %v2646 = vunpack.c.l.b16 %v1620
      %v2647 = vunpack.c.l.b16 %v1621
      %v2648 = vunpack.c.l.b16 %v1623
      %v2649 = vunpack.c.l.b16 %v1624
      %v2650 = vunpack.c.l.b16 %v1626
      %v2651 = vunpack.c.l.b16 %v1627
      %v2652 = vunpack.c.l.b16 %v1629
      %v2653 = vunpack.c.l.b16 %v1630
      %v2654 = vunpack.c.l.b16 %v1632
      %v2655 = vunpack.c.l.b16 %v1633
      %v2656 = vunpack.c.l.b16 %v1635
      %v2657 = vunpack.c.l.b16 %v1636
      %v2658 = vunpack.c.l.b16 %v1638
      %v2659 = vunpack.c.l.b16 %v1639
      %v2660 = vunpack.c.l.b16 %v1641
      %v2661 = vunpack.c.l.b16 %v1642
      %v2662 = vunpack.c.l.b16 %v1644
      %v2663 = vunpack.c.l.b16 %v1645
      %v2664 = vunpack.c.l.b16 %v1647
      %v2665 = vunpack.c.l.b16 %v1648
      %v2666 = vpack.c.b16 %v2635, %v2634
      %v2667 = vpack.c.b16 %v2637, %v2636
      %v2668 = vpack.c.b16 %v2639, %v2638
      %v2669 = vpack.c.b16 %v2641, %v2640
      %v2670 = vpack.c.b16 %v2643, %v2642
      %v2671 = vpack.c.b16 %v2645, %v2644
      %v2672 = vpack.c.b16 %v2647, %v2646
      %v2673 = vpack.c.b16 %v2649, %v2648
      %v2674 = vpack.c.b16 %v2651, %v2650
      %v2675 = vpack.c.b16 %v2653, %v2652
      %v2676 = vpack.c.b16 %v2655, %v2654
      %v2677 = vpack.c.b16 %v2657, %v2656
      %v2678 = vpack.c.b16 %v2659, %v2658
      %v2679 = vpack.c.b16 %v2661, %v2660
      %v2680 = vpack.c.b16 %v2663, %v2662
      %v2681 = vpack.c.b16 %v2665, %v2664
      %v2698 = vunpack.c.l.b16 %v1604
      %v2699 = vunpack.c.l.b16 %v1607
      %v2700 = vunpack.c.l.b16 %v1610
      %v2701 = vunpack.c.l.b16 %v1613
      %v2702 = vunpack.c.l.b16 %v1616
      %v2703 = vunpack.c.l.b16 %v1619
      %v2704 = vunpack.c.l.b16 %v1622
      %v2705 = vunpack.c.l.b16 %v1625
      %v2706 = vunpack.c.l.b16 %v1628
      %v2707 = vunpack.c.l.b16 %v1631
      %v2708 = vunpack.c.l.b16 %v1634
      %v2709 = vunpack.c.l.b16 %v1637
      %v2710 = vunpack.c.l.b16 %v1640
      %v2711 = vunpack.c.l.b16 %v1643
      %v2712 = vunpack.c.l.b16 %v1646
      %v2713 = vunpack.c.l.b16 %v1649
      %v2714 = vpack.c.b16 %v2698, %v2698
      %v2715 = vpack.c.b16 %v2699, %v2699
      %v2716 = vpack.c.b16 %v2700, %v2700
      %v2717 = vpack.c.b16 %v2701, %v2701
      %v2718 = vpack.c.b16 %v2702, %v2702
      %v2719 = vpack.c.b16 %v2703, %v2703
      %v2720 = vpack.c.b16 %v2704, %v2704
      %v2721 = vpack.c.b16 %v2705, %v2705
      %v2722 = vpack.c.b16 %v2706, %v2706
      %v2723 = vpack.c.b16 %v2707, %v2707
      %v2724 = vpack.c.b16 %v2708, %v2708
      %v2725 = vpack.c.b16 %v2709, %v2709
      %v2726 = vpack.c.b16 %v2710, %v2710
      %v2727 = vpack.c.b16 %v2711, %v2711
      %v2728 = vpack.c.b16 %v2712, %v2712
      %v2729 = vpack.c.b16 %v2713, %v2713
      %v2731 = vshrl.u32 %v2666, 16
      %v2733 = vshll.u32 %v2666, 16
      %v2735 = vrot.slane %v2733, 1
      %v2736 = vor.u32 %v2731, %v2735
      %v2738 = vshll.u32 %v2714, 16
      %v2740 = vrot.slane %v2738, 1
      %v2741 = vsel %vm1784, %v2736, %v2740
      %v2743 = vshrl.u32 %v2667, 16
      %v2745 = vshll.u32 %v2667, 16
      %v2747 = vrot.slane %v2745, 1
      %v2748 = vor.u32 %v2743, %v2747
      %v2750 = vshll.u32 %v2715, 16
      %v2752 = vrot.slane %v2750, 1
      %v2753 = vsel %vm1784, %v2748, %v2752
      %v2755 = vshrl.u32 %v2668, 16
      %v2757 = vshll.u32 %v2668, 16
      %v2759 = vrot.slane %v2757, 1
      %v2760 = vor.u32 %v2755, %v2759
      %v2762 = vshll.u32 %v2716, 16
      %v2764 = vrot.slane %v2762, 1
      %v2765 = vsel %vm1784, %v2760, %v2764
      %v2767 = vshrl.u32 %v2669, 16
      %v2769 = vshll.u32 %v2669, 16
      %v2771 = vrot.slane %v2769, 1
      %v2772 = vor.u32 %v2767, %v2771
      %v2774 = vshll.u32 %v2717, 16
      %v2776 = vrot.slane %v2774, 1
      %v2777 = vsel %vm1784, %v2772, %v2776
      %v2779 = vshrl.u32 %v2670, 16
      %v2781 = vshll.u32 %v2670, 16
      %v2783 = vrot.slane %v2781, 1
      %v2784 = vor.u32 %v2779, %v2783
      %v2786 = vshll.u32 %v2718, 16
      %v2788 = vrot.slane %v2786, 1
      %v2789 = vsel %vm1784, %v2784, %v2788
      %v2791 = vshrl.u32 %v2671, 16
      %v2793 = vshll.u32 %v2671, 16
      %v2795 = vrot.slane %v2793, 1
      %v2796 = vor.u32 %v2791, %v2795
      %v2798 = vshll.u32 %v2719, 16
      %v2800 = vrot.slane %v2798, 1
      %v2801 = vsel %vm1784, %v2796, %v2800
      %v2803 = vshrl.u32 %v2672, 16
      %v2805 = vshll.u32 %v2672, 16
      %v2807 = vrot.slane %v2805, 1
      %v2808 = vor.u32 %v2803, %v2807
      %v2810 = vshll.u32 %v2720, 16
      %v2812 = vrot.slane %v2810, 1
      %v2813 = vsel %vm1784, %v2808, %v2812
      %v2815 = vshrl.u32 %v2673, 16
      %v2817 = vshll.u32 %v2673, 16
      %v2819 = vrot.slane %v2817, 1
      %v2820 = vor.u32 %v2815, %v2819
      %v2822 = vshll.u32 %v2721, 16
      %v2824 = vrot.slane %v2822, 1
      %v2825 = vsel %vm1784, %v2820, %v2824
      %v2827 = vshrl.u32 %v2674, 16
      %v2829 = vshll.u32 %v2674, 16
      %v2831 = vrot.slane %v2829, 1
      %v2832 = vor.u32 %v2827, %v2831
      %v2834 = vshll.u32 %v2722, 16
      %v2836 = vrot.slane %v2834, 1
      %v2837 = vsel %vm1784, %v2832, %v2836
      %v2839 = vshrl.u32 %v2675, 16
      %v2841 = vshll.u32 %v2675, 16
      %v2843 = vrot.slane %v2841, 1
      %v2844 = vor.u32 %v2839, %v2843
      %v2846 = vshll.u32 %v2723, 16
      %v2848 = vrot.slane %v2846, 1
      %v2849 = vsel %vm1784, %v2844, %v2848
      %v2851 = vshrl.u32 %v2676, 16
      %v2853 = vshll.u32 %v2676, 16
      %v2855 = vrot.slane %v2853, 1
      %v2856 = vor.u32 %v2851, %v2855
      %v2858 = vshll.u32 %v2724, 16
      %v2860 = vrot.slane %v2858, 1
      %v2861 = vsel %vm1784, %v2856, %v2860
      %v2863 = vshrl.u32 %v2677, 16
      %v2865 = vshll.u32 %v2677, 16
      %v2867 = vrot.slane %v2865, 1
      %v2868 = vor.u32 %v2863, %v2867
      %v2870 = vshll.u32 %v2725, 16
      %v2872 = vrot.slane %v2870, 1
      %v2873 = vsel %vm1784, %v2868, %v2872
      %v2875 = vshrl.u32 %v2678, 16
      %v2877 = vshll.u32 %v2678, 16
      %v2879 = vrot.slane %v2877, 1
      %v2880 = vor.u32 %v2875, %v2879
      %v2882 = vshll.u32 %v2726, 16
      %v2884 = vrot.slane %v2882, 1
      %v2885 = vsel %vm1784, %v2880, %v2884
      %v2887 = vshrl.u32 %v2679, 16
      %v2889 = vshll.u32 %v2679, 16
      %v2891 = vrot.slane %v2889, 1
      %v2892 = vor.u32 %v2887, %v2891
      %v2894 = vshll.u32 %v2727, 16
      %v2896 = vrot.slane %v2894, 1
      %v2897 = vsel %vm1784, %v2892, %v2896
      %v2899 = vshrl.u32 %v2680, 16
      %v2901 = vshll.u32 %v2680, 16
      %v2903 = vrot.slane %v2901, 1
      %v2904 = vor.u32 %v2899, %v2903
      %v2906 = vshll.u32 %v2728, 16
      %v2908 = vrot.slane %v2906, 1
      %v2909 = vsel %vm1784, %v2904, %v2908
      %v2911 = vshrl.u32 %v2681, 16
      %v2913 = vshll.u32 %v2681, 16
      %v2915 = vrot.slane %v2913, 1
      %v2916 = vor.u32 %v2911, %v2915
      %v2918 = vshll.u32 %v2729, 16
      %v2920 = vrot.slane %v2918, 1
      %v2921 = vsel %vm1784, %v2916, %v2920
      %2922 = vrot.lane.b32.xlu0 %v2741, 8
      %v2923 = vpop.permute.xlu0 %2922
      %2924 = vrot.lane.b32.xlu0 %v2753, 8
      %v2925 = vpop.permute.xlu0 %2924
      %2926 = vrot.lane.b32.xlu0 %v2765, 8
      %v2927 = vpop.permute.xlu0 %2926
      %2928 = vrot.lane.b32.xlu0 %v2777, 8
      %v2929 = vpop.permute.xlu0 %2928
      %2930 = vrot.lane.b32.xlu0 %v2789, 8
      %v2931 = vpop.permute.xlu0 %2930
      %2932 = vrot.lane.b32.xlu0 %v2801, 8
      %v2933 = vpop.permute.xlu0 %2932
      %2934 = vrot.lane.b32.xlu0 %v2813, 8
      %v2935 = vpop.permute.xlu0 %2934
      %2936 = vrot.lane.b32.xlu0 %v2825, 8
      %v2937 = vpop.permute.xlu0 %2936
      %2938 = vrot.lane.b32.xlu0 %v2837, 8
      %v2939 = vpop.permute.xlu0 %2938
      %2940 = vrot.lane.b32.xlu0 %v2849, 8
      %v2941 = vpop.permute.xlu0 %2940
      %2942 = vrot.lane.b32.xlu0 %v2861, 8
      %v2943 = vpop.permute.xlu0 %2942
      %2944 = vrot.lane.b32.xlu0 %v2873, 8
      %v2945 = vpop.permute.xlu0 %2944
      %2946 = vrot.lane.b32.xlu0 %v2885, 8
      %v2947 = vpop.permute.xlu0 %2946
      %2948 = vrot.lane.b32.xlu0 %v2897, 8
      %v2949 = vpop.permute.xlu0 %2948
      %2950 = vrot.lane.b32.xlu0 %v2909, 8
      %v2951 = vpop.permute.xlu0 %2950
      %2952 = vrot.lane.b32.xlu0 %v2921, 8
      %v2953 = vpop.permute.xlu0 %2952
      %v2954 = vrot.slane %v2666, 1
      %v2955 = vrot.slane %v2714, 1
      %v2956 = vsel %vm2009, %v2954, %v2955
      %v2957 = vrot.slane %v2667, 1
      %v2958 = vrot.slane %v2715, 1
      %v2959 = vsel %vm2009, %v2957, %v2958
      %v2960 = vrot.slane %v2668, 1
      %v2961 = vrot.slane %v2716, 1
      %v2962 = vsel %vm2009, %v2960, %v2961
      %v2963 = vrot.slane %v2669, 1
      %v2964 = vrot.slane %v2717, 1
      %v2965 = vsel %vm2009, %v2963, %v2964
      %v2966 = vrot.slane %v2670, 1
      %v2967 = vrot.slane %v2718, 1
      %v2968 = vsel %vm2009, %v2966, %v2967
      %v2969 = vrot.slane %v2671, 1
      %v2970 = vrot.slane %v2719, 1
      %v2971 = vsel %vm2009, %v2969, %v2970
      %v2972 = vrot.slane %v2672, 1
      %v2973 = vrot.slane %v2720, 1
      %v2974 = vsel %vm2009, %v2972, %v2973
      %v2975 = vrot.slane %v2673, 1
      %v2976 = vrot.slane %v2721, 1
      %v2977 = vsel %vm2009, %v2975, %v2976
      %v2978 = vrot.slane %v2674, 1
      %v2979 = vrot.slane %v2722, 1
      %v2980 = vsel %vm2009, %v2978, %v2979
      %v2981 = vrot.slane %v2675, 1
      %v2982 = vrot.slane %v2723, 1
      %v2983 = vsel %vm2009, %v2981, %v2982
      %v2984 = vrot.slane %v2676, 1
      %v2985 = vrot.slane %v2724, 1
      %v2986 = vsel %vm2009, %v2984, %v2985
      %v2987 = vrot.slane %v2677, 1
      %v2988 = vrot.slane %v2725, 1
      %v2989 = vsel %vm2009, %v2987, %v2988
      %v2990 = vrot.slane %v2678, 1
      %v2991 = vrot.slane %v2726, 1
      %v2992 = vsel %vm2009, %v2990, %v2991
      %v2993 = vrot.slane %v2679, 1
      %v2994 = vrot.slane %v2727, 1
      %v2995 = vsel %vm2009, %v2993, %v2994
      %v2996 = vrot.slane %v2680, 1
      %v2997 = vrot.slane %v2728, 1
      %v2998 = vsel %vm2009, %v2996, %v2997
      %v2999 = vrot.slane %v2681, 1
      %v3000 = vrot.slane %v2729, 1
      %v3001 = vsel %vm2009, %v2999, %v3000
      %3002 = vrot.lane.b32.xlu0 %v2956, 16
      %v3003 = vpop.permute.xlu0 %3002
      %3004 = vrot.lane.b32.xlu0 %v2959, 16
      %v3005 = vpop.permute.xlu0 %3004
      %3006 = vrot.lane.b32.xlu0 %v2962, 16
      %v3007 = vpop.permute.xlu0 %3006
      %3008 = vrot.lane.b32.xlu0 %v2965, 16
      %v3009 = vpop.permute.xlu0 %3008
      %3010 = vrot.lane.b32.xlu0 %v2968, 16
      %v3011 = vpop.permute.xlu0 %3010
      %3012 = vrot.lane.b32.xlu0 %v2971, 16
      %v3013 = vpop.permute.xlu0 %3012
      %3014 = vrot.lane.b32.xlu0 %v2974, 16
      %v3015 = vpop.permute.xlu0 %3014
      %3016 = vrot.lane.b32.xlu0 %v2977, 16
      %v3017 = vpop.permute.xlu0 %3016
      %3018 = vrot.lane.b32.xlu0 %v2980, 16
      %v3019 = vpop.permute.xlu0 %3018
      %3020 = vrot.lane.b32.xlu0 %v2983, 16
      %v3021 = vpop.permute.xlu0 %3020
      %3022 = vrot.lane.b32.xlu0 %v2986, 16
      %v3023 = vpop.permute.xlu0 %3022
      %3024 = vrot.lane.b32.xlu0 %v2989, 16
      %v3025 = vpop.permute.xlu0 %3024
      %3026 = vrot.lane.b32.xlu0 %v2992, 16
      %v3027 = vpop.permute.xlu0 %3026
      %3028 = vrot.lane.b32.xlu0 %v2995, 16
      %v3029 = vpop.permute.xlu0 %3028
      %3030 = vrot.lane.b32.xlu0 %v2998, 16
      %v3031 = vpop.permute.xlu0 %3030
      %3032 = vrot.lane.b32.xlu0 %v3001, 16
      %v3033 = vpop.permute.xlu0 %3032
      %v3035 = vsel %vm2090, %v2666, %v2923
      %v3037 = vsel %vm2090, %v2667, %v2925
      %v3039 = vsel %vm2090, %v2668, %v2927
      %v3041 = vsel %vm2090, %v2669, %v2929
      %v3043 = vsel %vm2090, %v2670, %v2931
      %v3045 = vsel %vm2090, %v2671, %v2933
      %v3047 = vsel %vm2090, %v2672, %v2935
      %v3049 = vsel %vm2090, %v2673, %v2937
      %v3051 = vsel %vm2090, %v2674, %v2939
      %v3053 = vsel %vm2090, %v2675, %v2941
      %v3055 = vsel %vm2090, %v2676, %v2943
      %v3057 = vsel %vm2090, %v2677, %v2945
      %v3059 = vsel %vm2090, %v2678, %v2947
      %v3061 = vsel %vm2090, %v2679, %v2949
      %v3063 = vsel %vm2090, %v2680, %v2951
      %v3065 = vsel %vm2090, %v2681, %v2953
      %v3067 = vsel %vm2123, %v3035, %v3003
      %v3069 = vsel %vm2123, %v3037, %v3005
      %v3071 = vsel %vm2123, %v3039, %v3007
      %v3073 = vsel %vm2123, %v3041, %v3009
      %v3075 = vsel %vm2123, %v3043, %v3011
      %v3077 = vsel %vm2123, %v3045, %v3013
      %v3079 = vsel %vm2123, %v3047, %v3015
      %v3081 = vsel %vm2123, %v3049, %v3017
      %v3083 = vsel %vm2123, %v3051, %v3019
      %v3085 = vsel %vm2123, %v3053, %v3021
      %v3087 = vsel %vm2123, %v3055, %v3023
      %v3089 = vsel %vm2123, %v3057, %v3025
      %v3091 = vsel %vm2123, %v3059, %v3027
      %v3093 = vsel %vm2123, %v3061, %v3029
      %v3095 = vsel %vm2123, %v3063, %v3031
      %v3097 = vsel %vm2123, %v3065, %v3033
      %v3098 = vld [vmem:[%s3] sm:$0xf]
      %v3099 = vld [vmem:[%s3 + $0x4] sm:$0xf]
      %v3100 = vld [vmem:[%s3 + $0x8] sm:$0xf]
      %v3104 = vunpack.c.l.b16 %v3098
      %v3105 = vunpack.c.l.b16 %v3099
      %v3106 = vunpack.c.l.b16 %v3100
      %v3107 = vpack.c.b16 %v3105, %v3104
      %v3108 = vpack.c.b16 %v3106, %v3106
      %v3110 = vsel %vm2203, %v3067, 0
      %v3112 = vsel %vm2203, %v3069, 0
      %v3114 = vsel %vm2203, %v3071, 0
      %v3116 = vsel %vm2203, %v3073, 0
      %v3118 = vsel %vm2203, %v3075, 0
      %v3120 = vsel %vm2203, %v3077, 0
      %v3122 = vsel %vm2203, %v3079, 0
      %v3124 = vsel %vm2203, %v3081, 0
      %v3126 = vsel %vm2203, %v3083, 0
      %v3128 = vsel %vm2203, %v3085, 0
      %v3130 = vsel %vm2203, %v3087, 0
      %v3132 = vsel %vm2203, %v3089, 0
      %v3134 = vsel %vm2203, %v3091, 0
      %v3136 = vsel %vm2203, %v3093, 0
      %v3138 = vsel %vm2203, %v3095, 0
      %v3140 = vsel %vm2203, %v3097, 0
      %v3143 = vsel %vm2236, %v3108, 0
      %3145 = vmatpush.bf16.msra.mxu0 0
      %3146 = vmatpush.bf16.msra.mxu0 0
      %3147 = vmatpush.bf16.msra.mxu0 0
      %3148 = vmatpush.bf16.msra.mxu0 0
      %3149 = vmatpush.bf16.msra.mxu0 0
      %3150 = vmatpush.bf16.msra.mxu0 0
      %3151 = vmatpush.bf16.msra.mxu0 %v3143
      %3152 = vmatpush.bf16.msra.mxu0 %v3107
      %3153 = vmatmul.bf16.gmra.mxu0 %v3110
      %v3154 = vpop.f32.mrf.mxu0
      %v3155 = vadd.f32 0.0, %v3154
      %v3156 = vpop.f32.mrf.mxu0
      %v3157 = vadd.f32 0.0, %v3156
      %3158 = vmatmul.bf16.gmra.mxu0 %v3112
      %v3159 = vpop.f32.mrf.mxu0
      %v3160 = vadd.f32 0.0, %v3159
      %v3161 = vpop.f32.mrf.mxu0
      %v3162 = vadd.f32 0.0, %v3161
      %3163 = vmatmul.bf16.gmra.mxu0 %v3114
      %v3164 = vpop.f32.mrf.mxu0
      %v3165 = vadd.f32 0.0, %v3164
      %v3166 = vpop.f32.mrf.mxu0
      %v3167 = vadd.f32 0.0, %v3166
      %3168 = vmatmul.bf16.gmra.mxu0 %v3116
      %v3169 = vpop.f32.mrf.mxu0
      %v3170 = vadd.f32 0.0, %v3169
      %v3171 = vpop.f32.mrf.mxu0
      %v3172 = vadd.f32 0.0, %v3171
      %3173 = vmatmul.bf16.gmra.mxu0 %v3118
      %v3174 = vpop.f32.mrf.mxu0
      %v3175 = vadd.f32 0.0, %v3174
      %v3176 = vpop.f32.mrf.mxu0
      %v3177 = vadd.f32 0.0, %v3176
      %3178 = vmatmul.bf16.gmra.mxu0 %v3120
      %v3179 = vpop.f32.mrf.mxu0
      %v3180 = vadd.f32 0.0, %v3179
      %v3181 = vpop.f32.mrf.mxu0
      %v3182 = vadd.f32 0.0, %v3181
      %3183 = vmatmul.bf16.gmra.mxu0 %v3122
      %v3184 = vpop.f32.mrf.mxu0
      %v3185 = vadd.f32 0.0, %v3184
      %v3186 = vpop.f32.mrf.mxu0
      %v3187 = vadd.f32 0.0, %v3186
      %3188 = vmatmul.bf16.gmra.mxu0 %v3124
      %v3189 = vpop.f32.mrf.mxu0
      %v3190 = vadd.f32 0.0, %v3189
      %v3191 = vpop.f32.mrf.mxu0
      %v3192 = vadd.f32 0.0, %v3191
      %3193 = vmatmul.bf16.gmra.mxu0 %v3126
      %v3194 = vpop.f32.mrf.mxu0
      %v3195 = vadd.f32 0.0, %v3194
      %v3196 = vpop.f32.mrf.mxu0
      %v3197 = vadd.f32 0.0, %v3196
      %3198 = vmatmul.bf16.gmra.mxu0 %v3128
      %v3199 = vpop.f32.mrf.mxu0
      %v3200 = vadd.f32 0.0, %v3199
      %v3201 = vpop.f32.mrf.mxu0
      %v3202 = vadd.f32 0.0, %v3201
      %3203 = vmatmul.bf16.gmra.mxu0 %v3130
      %v3204 = vpop.f32.mrf.mxu0
      %v3205 = vadd.f32 0.0, %v3204
      %v3206 = vpop.f32.mrf.mxu0
      %v3207 = vadd.f32 0.0, %v3206
      %3208 = vmatmul.bf16.gmra.mxu0 %v3132
      %v3209 = vpop.f32.mrf.mxu0
      %v3210 = vadd.f32 0.0, %v3209
      %v3211 = vpop.f32.mrf.mxu0
      %v3212 = vadd.f32 0.0, %v3211
      %3213 = vmatmul.bf16.gmra.mxu0 %v3134
      %v3214 = vpop.f32.mrf.mxu0
      %v3215 = vadd.f32 0.0, %v3214
      %v3216 = vpop.f32.mrf.mxu0
      %v3217 = vadd.f32 0.0, %v3216
      %3218 = vmatmul.bf16.gmra.mxu0 %v3136
      %v3219 = vpop.f32.mrf.mxu0
      %v3220 = vadd.f32 0.0, %v3219
      %v3221 = vpop.f32.mrf.mxu0
      %v3222 = vadd.f32 0.0, %v3221
      %3223 = vmatmul.bf16.gmra.mxu0 %v3138
      %v3224 = vpop.f32.mrf.mxu0
      %v3225 = vadd.f32 0.0, %v3224
      %v3226 = vpop.f32.mrf.mxu0
      %v3227 = vadd.f32 0.0, %v3226
      %3228 = vmatmul.bf16.gmra.mxu0 %v3140
      %v3229 = vpop.f32.mrf.mxu0
      %v3230 = vadd.f32 0.0, %v3229
      %v3231 = vpop.f32.mrf.mxu0
      %v3232 = vadd.f32 0.0, %v3231
      %3233 = vdwg.mxu0
      %v3234 = vadd.f32 %v2570, %v3155
      %v3235 = vadd.f32 %v2571, %v3157
      %v3236 = vadd.f32 %v2572, %v3160
      %v3237 = vadd.f32 %v2573, %v3162
      %v3238 = vadd.f32 %v2574, %v3165
      %v3239 = vadd.f32 %v2575, %v3167
      %v3240 = vadd.f32 %v2576, %v3170
      %v3241 = vadd.f32 %v2577, %v3172
      %v3242 = vadd.f32 %v2578, %v3175
      %v3243 = vadd.f32 %v2579, %v3177
      %v3244 = vadd.f32 %v2580, %v3180
      %v3245 = vadd.f32 %v2581, %v3182
      %v3246 = vadd.f32 %v2582, %v3185
      %v3247 = vadd.f32 %v2583, %v3187
      %v3248 = vadd.f32 %v2584, %v3190
      %v3249 = vadd.f32 %v2585, %v3192
      %v3250 = vadd.f32 %v2586, %v3195
      %v3251 = vadd.f32 %v2587, %v3197
      %v3252 = vadd.f32 %v2588, %v3200
      %v3253 = vadd.f32 %v2589, %v3202
      %v3254 = vadd.f32 %v2590, %v3205
      %v3255 = vadd.f32 %v2591, %v3207
      %v3256 = vadd.f32 %v2592, %v3210
      %v3257 = vadd.f32 %v2593, %v3212
      %v3258 = vadd.f32 %v2594, %v3215
      %v3259 = vadd.f32 %v2595, %v3217
      %v3260 = vadd.f32 %v2596, %v3220
      %v3261 = vadd.f32 %v2597, %v3222
      %v3262 = vadd.f32 %v2598, %v3225
      %v3263 = vadd.f32 %v2599, %v3227
      %v3264 = vadd.f32 %v2600, %v3230
      %v3265 = vadd.f32 %v2601, %v3232
      %v3268 = vunpack.c.l.b16 %v1650
      %v3269 = vunpack.c.l.b16 %v1651
      %v3270 = vpack.c.b16 %v3269, %v3268
      %v3272 = vunpack.c.l.b16 %v1652
      %v3273 = vpack.c.b16 %v3272, %v3272
      %v3275 = vshrl.u32 %v3270, 16
      %v3277 = vshll.u32 %v3270, 16
      %v3279 = vrot.slane %v3277, 1
      %v3280 = vor.u32 %v3275, %v3279
      %v3282 = vshll.u32 %v3273, 16
      %v3284 = vrot.slane %v3282, 1
      %v3285 = vsel %vm1784, %v3280, %v3284
      %3286 = vrot.lane.b32.xlu0 %v3285, 8
      %v3287 = vpop.permute.xlu0 %3286
      %v3288 = vrot.slane %v3270, 1
      %v3289 = vrot.slane %v3273, 1
      %v3290 = vsel %vm2009, %v3288, %v3289
      %3291 = vrot.lane.b32.xlu0 %v3290, 16
      %v3292 = vpop.permute.xlu0 %3291
      %v3294 = vsel %vm2090, %v3270, %v3287
      %v3296 = vsel %vm2123, %v3294, %v3292
      %s3297 = scalar_lea.vmem %s3, 12
      %v3298 = vld [vmem:[%s3297] sm:$0xf]
      %v3299 = vld [vmem:[%s3297 + $0x4] sm:$0xf]
      %v3300 = vld [vmem:[%s3297 + $0x8] sm:$0xf]
      %v3304 = vunpack.c.l.b16 %v3298
      %v3305 = vunpack.c.l.b16 %v3299
      %v3306 = vunpack.c.l.b16 %v3300
      %v3307 = vpack.c.b16 %v3305, %v3304
      %v3308 = vpack.c.b16 %v3306, %v3306
      %v3310 = vsel %vm2203, %v3296, 0
      %v3313 = vsel %vm2236, %v3308, 0
      %3315 = vmatpush.bf16.msra.mxu0 0
      %3316 = vmatpush.bf16.msra.mxu0 0
      %3317 = vmatpush.bf16.msra.mxu0 0
      %3318 = vmatpush.bf16.msra.mxu0 0
      %3319 = vmatpush.bf16.msra.mxu0 0
      %3320 = vmatpush.bf16.msra.mxu0 0
      %3321 = vmatpush.bf16.msra.mxu0 %v3313
      %3322 = vmatpush.bf16.msra.mxu0 %v3307
      %3323 = vmatmul.bf16.gmra.mxu0 %v3112
      %v3324 = vpop.f32.mrf.mxu0
      %v3325 = vadd.f32 0.0, %v3324
      %v3326 = vpop.f32.mrf.mxu0
      %v3327 = vadd.f32 0.0, %v3326
      %3328 = vmatmul.bf16.gmra.mxu0 %v3114
      %v3329 = vpop.f32.mrf.mxu0
      %v3330 = vadd.f32 0.0, %v3329
      %v3331 = vpop.f32.mrf.mxu0
      %v3332 = vadd.f32 0.0, %v3331
      %3333 = vmatmul.bf16.gmra.mxu0 %v3116
      %v3334 = vpop.f32.mrf.mxu0
      %v3335 = vadd.f32 0.0, %v3334
      %v3336 = vpop.f32.mrf.mxu0
      %v3337 = vadd.f32 0.0, %v3336
      %3338 = vmatmul.bf16.gmra.mxu0 %v3118
      %v3339 = vpop.f32.mrf.mxu0
      %v3340 = vadd.f32 0.0, %v3339
      %v3341 = vpop.f32.mrf.mxu0
      %v3342 = vadd.f32 0.0, %v3341
      %3343 = vmatmul.bf16.gmra.mxu0 %v3120
      %v3344 = vpop.f32.mrf.mxu0
      %v3345 = vadd.f32 0.0, %v3344
      %v3346 = vpop.f32.mrf.mxu0
      %v3347 = vadd.f32 0.0, %v3346
      %3348 = vmatmul.bf16.gmra.mxu0 %v3122
      %v3349 = vpop.f32.mrf.mxu0
      %v3350 = vadd.f32 0.0, %v3349
      %v3351 = vpop.f32.mrf.mxu0
      %v3352 = vadd.f32 0.0, %v3351
      %3353 = vmatmul.bf16.gmra.mxu0 %v3124
      %v3354 = vpop.f32.mrf.mxu0
      %v3355 = vadd.f32 0.0, %v3354
      %v3356 = vpop.f32.mrf.mxu0
      %v3357 = vadd.f32 0.0, %v3356
      %3358 = vmatmul.bf16.gmra.mxu0 %v3126
      %v3359 = vpop.f32.mrf.mxu0
      %v3360 = vadd.f32 0.0, %v3359
      %v3361 = vpop.f32.mrf.mxu0
      %v3362 = vadd.f32 0.0, %v3361
      %3363 = vmatmul.bf16.gmra.mxu0 %v3128
      %v3364 = vpop.f32.mrf.mxu0
      %v3365 = vadd.f32 0.0, %v3364
      %v3366 = vpop.f32.mrf.mxu0
      %v3367 = vadd.f32 0.0, %v3366
      %3368 = vmatmul.bf16.gmra.mxu0 %v3130
      %v3369 = vpop.f32.mrf.mxu0
      %v3370 = vadd.f32 0.0, %v3369
      %v3371 = vpop.f32.mrf.mxu0
      %v3372 = vadd.f32 0.0, %v3371
      %3373 = vmatmul.bf16.gmra.mxu0 %v3132
      %v3374 = vpop.f32.mrf.mxu0
      %v3375 = vadd.f32 0.0, %v3374
      %v3376 = vpop.f32.mrf.mxu0
      %v3377 = vadd.f32 0.0, %v3376
      %3378 = vmatmul.bf16.gmra.mxu0 %v3134
      %v3379 = vpop.f32.mrf.mxu0
      %v3380 = vadd.f32 0.0, %v3379
      %v3381 = vpop.f32.mrf.mxu0
      %v3382 = vadd.f32 0.0, %v3381
      %3383 = vmatmul.bf16.gmra.mxu0 %v3136
      %v3384 = vpop.f32.mrf.mxu0
      %v3385 = vadd.f32 0.0, %v3384
      %v3386 = vpop.f32.mrf.mxu0
      %v3387 = vadd.f32 0.0, %v3386
      %3388 = vmatmul.bf16.gmra.mxu0 %v3138
      %v3389 = vpop.f32.mrf.mxu0
      %v3390 = vadd.f32 0.0, %v3389
      %v3391 = vpop.f32.mrf.mxu0
      %v3392 = vadd.f32 0.0, %v3391
      %3393 = vmatmul.bf16.gmra.mxu0 %v3140
      %v3394 = vpop.f32.mrf.mxu0
      %v3395 = vadd.f32 0.0, %v3394
      %v3396 = vpop.f32.mrf.mxu0
      %v3397 = vadd.f32 0.0, %v3396
      %3398 = vmatmul.bf16.gmra.mxu0 %v3310
      %v3399 = vpop.f32.mrf.mxu0
      %v3400 = vadd.f32 0.0, %v3399
      %v3401 = vpop.f32.mrf.mxu0
      %v3402 = vadd.f32 0.0, %v3401
      %3403 = vdwg.mxu0
      %v3404 = vadd.f32 %v3234, %v3325
      %v3405 = vadd.f32 %v3235, %v3327
      %v3406 = vadd.f32 %v3236, %v3330
      %v3407 = vadd.f32 %v3237, %v3332
      %v3408 = vadd.f32 %v3238, %v3335
      %v3409 = vadd.f32 %v3239, %v3337
      %v3410 = vadd.f32 %v3240, %v3340
      %v3411 = vadd.f32 %v3241, %v3342
      %v3412 = vadd.f32 %v3242, %v3345
      %v3413 = vadd.f32 %v3243, %v3347
      %v3414 = vadd.f32 %v3244, %v3350
      %v3415 = vadd.f32 %v3245, %v3352
      %v3416 = vadd.f32 %v3246, %v3355
      %v3417 = vadd.f32 %v3247, %v3357
      %v3418 = vadd.f32 %v3248, %v3360
      %v3419 = vadd.f32 %v3249, %v3362
      %v3420 = vadd.f32 %v3250, %v3365
      %v3421 = vadd.f32 %v3251, %v3367
      %v3422 = vadd.f32 %v3252, %v3370
      %v3423 = vadd.f32 %v3253, %v3372
      %v3424 = vadd.f32 %v3254, %v3375
      %v3425 = vadd.f32 %v3255, %v3377
      %v3426 = vadd.f32 %v3256, %v3380
      %v3427 = vadd.f32 %v3257, %v3382
      %v3428 = vadd.f32 %v3258, %v3385
      %v3429 = vadd.f32 %v3259, %v3387
      %v3430 = vadd.f32 %v3260, %v3390
      %v3431 = vadd.f32 %v3261, %v3392
      %v3432 = vadd.f32 %v3262, %v3395
      %v3433 = vadd.f32 %v3263, %v3397
      %v3434 = vadd.f32 %v3264, %v3400
      %v3435 = vadd.f32 %v3265, %v3402
      %v3438 = vunpack.c.l.b16 %v1653
      %v3439 = vunpack.c.l.b16 %v1654
      %v3440 = vpack.c.b16 %v3439, %v3438
      %v3442 = vunpack.c.l.b16 %v1655
      %v3443 = vpack.c.b16 %v3442, %v3442
      %v3445 = vshrl.u32 %v3440, 16
      %v3447 = vshll.u32 %v3440, 16
      %v3449 = vrot.slane %v3447, 1
      %v3450 = vor.u32 %v3445, %v3449
      %v3452 = vshll.u32 %v3443, 16
      %v3454 = vrot.slane %v3452, 1
      %v3455 = vsel %vm1784, %v3450, %v3454
      %3456 = vrot.lane.b32.xlu0 %v3455, 8
      %v3457 = vpop.permute.xlu0 %3456
      %v3458 = vrot.slane %v3440, 1
      %v3459 = vrot.slane %v3443, 1
      %v3460 = vsel %vm2009, %v3458, %v3459
      %3461 = vrot.lane.b32.xlu0 %v3460, 16
      %v3462 = vpop.permute.xlu0 %3461
      %v3464 = vsel %vm2090, %v3440, %v3457
      %v3466 = vsel %vm2123, %v3464, %v3462
      %s3467 = scalar_lea.vmem %s3, 24
      %v3468 = vld [vmem:[%s3467] sm:$0xf]
      %v3469 = vld [vmem:[%s3467 + $0x4] sm:$0xf]
      %v3470 = vld [vmem:[%s3467 + $0x8] sm:$0xf]
      %v3474 = vunpack.c.l.b16 %v3468
      %v3475 = vunpack.c.l.b16 %v3469
      %v3476 = vunpack.c.l.b16 %v3470
      %v3477 = vpack.c.b16 %v3475, %v3474
      %v3478 = vpack.c.b16 %v3476, %v3476
      %v3480 = vsel %vm2203, %v3466, 0
      %v3483 = vsel %vm2236, %v3478, 0
      %3485 = vmatpush.bf16.msra.mxu0 0
      %3486 = vmatpush.bf16.msra.mxu0 0
      %3487 = vmatpush.bf16.msra.mxu0 0
      %3488 = vmatpush.bf16.msra.mxu0 0
      %3489 = vmatpush.bf16.msra.mxu0 0
      %3490 = vmatpush.bf16.msra.mxu0 0
      %3491 = vmatpush.bf16.msra.mxu0 %v3483
      %3492 = vmatpush.bf16.msra.mxu0 %v3477
      %3493 = vmatmul.bf16.gmra.mxu0 %v3114
      %v3494 = vpop.f32.mrf.mxu0
      %v3495 = vadd.f32 0.0, %v3494
      %v3496 = vpop.f32.mrf.mxu0
      %v3497 = vadd.f32 0.0, %v3496
      %3498 = vmatmul.bf16.gmra.mxu0 %v3116
      %v3499 = vpop.f32.mrf.mxu0
      %v3500 = vadd.f32 0.0, %v3499
      %v3501 = vpop.f32.mrf.mxu0
      %v3502 = vadd.f32 0.0, %v3501
      %3503 = vmatmul.bf16.gmra.mxu0 %v3118
      %v3504 = vpop.f32.mrf.mxu0
      %v3505 = vadd.f32 0.0, %v3504
      %v3506 = vpop.f32.mrf.mxu0
      %v3507 = vadd.f32 0.0, %v3506
      %3508 = vmatmul.bf16.gmra.mxu0 %v3120
      %v3509 = vpop.f32.mrf.mxu0
      %v3510 = vadd.f32 0.0, %v3509
      %v3511 = vpop.f32.mrf.mxu0
      %v3512 = vadd.f32 0.0, %v3511
      %3513 = vmatmul.bf16.gmra.mxu0 %v3122
      %v3514 = vpop.f32.mrf.mxu0
      %v3515 = vadd.f32 0.0, %v3514
      %v3516 = vpop.f32.mrf.mxu0
      %v3517 = vadd.f32 0.0, %v3516
      %3518 = vmatmul.bf16.gmra.mxu0 %v3124
      %v3519 = vpop.f32.mrf.mxu0
      %v3520 = vadd.f32 0.0, %v3519
      %v3521 = vpop.f32.mrf.mxu0
      %v3522 = vadd.f32 0.0, %v3521
      %3523 = vmatmul.bf16.gmra.mxu0 %v3126
      %v3524 = vpop.f32.mrf.mxu0
      %v3525 = vadd.f32 0.0, %v3524
      %v3526 = vpop.f32.mrf.mxu0
      %v3527 = vadd.f32 0.0, %v3526
      %3528 = vmatmul.bf16.gmra.mxu0 %v3128
      %v3529 = vpop.f32.mrf.mxu0
      %v3530 = vadd.f32 0.0, %v3529
      %v3531 = vpop.f32.mrf.mxu0
      %v3532 = vadd.f32 0.0, %v3531
      %3533 = vmatmul.bf16.gmra.mxu0 %v3130
      %v3534 = vpop.f32.mrf.mxu0
      %v3535 = vadd.f32 0.0, %v3534
      %v3536 = vpop.f32.mrf.mxu0
      %v3537 = vadd.f32 0.0, %v3536
      %3538 = vmatmul.bf16.gmra.mxu0 %v3132
      %v3539 = vpop.f32.mrf.mxu0
      %v3540 = vadd.f32 0.0, %v3539
      %v3541 = vpop.f32.mrf.mxu0
      %v3542 = vadd.f32 0.0, %v3541
      %3543 = vmatmul.bf16.gmra.mxu0 %v3134
      %v3544 = vpop.f32.mrf.mxu0
      %v3545 = vadd.f32 0.0, %v3544
      %v3546 = vpop.f32.mrf.mxu0
      %v3547 = vadd.f32 0.0, %v3546
      %3548 = vmatmul.bf16.gmra.mxu0 %v3136
      %v3549 = vpop.f32.mrf.mxu0
      %v3550 = vadd.f32 0.0, %v3549
      %v3551 = vpop.f32.mrf.mxu0
      %v3552 = vadd.f32 0.0, %v3551
      %3553 = vmatmul.bf16.gmra.mxu0 %v3138
      %v3554 = vpop.f32.mrf.mxu0
      %v3555 = vadd.f32 0.0, %v3554
      %v3556 = vpop.f32.mrf.mxu0
      %v3557 = vadd.f32 0.0, %v3556
      %3558 = vmatmul.bf16.gmra.mxu0 %v3140
      %v3559 = vpop.f32.mrf.mxu0
      %v3560 = vadd.f32 0.0, %v3559
      %v3561 = vpop.f32.mrf.mxu0
      %v3562 = vadd.f32 0.0, %v3561
      %3563 = vmatmul.bf16.gmra.mxu0 %v3310
      %v3564 = vpop.f32.mrf.mxu0
      %v3565 = vadd.f32 0.0, %v3564
      %v3566 = vpop.f32.mrf.mxu0
      %v3567 = vadd.f32 0.0, %v3566
      %3568 = vmatmul.bf16.gmra.mxu0 %v3480
      %v3569 = vpop.f32.mrf.mxu0
      %v3570 = vadd.f32 0.0, %v3569
      %v3571 = vpop.f32.mrf.mxu0
      %v3572 = vadd.f32 0.0, %v3571
      %3573 = vdwg.mxu0
      %v3574 = vadd.f32 %v3404, %v3495
      %v3575 = vadd.f32 %v3405, %v3497
      %v3576 = vadd.f32 %v3406, %v3500
      %v3577 = vadd.f32 %v3407, %v3502
      %v3578 = vadd.f32 %v3408, %v3505
      %v3579 = vadd.f32 %v3409, %v3507
      %v3580 = vadd.f32 %v3410, %v3510
      %v3581 = vadd.f32 %v3411, %v3512
      %v3582 = vadd.f32 %v3412, %v3515
      %v3583 = vadd.f32 %v3413, %v3517
      %v3584 = vadd.f32 %v3414, %v3520
      %v3585 = vadd.f32 %v3415, %v3522
      %v3586 = vadd.f32 %v3416, %v3525
      %v3587 = vadd.f32 %v3417, %v3527
      %v3588 = vadd.f32 %v3418, %v3530
      %v3589 = vadd.f32 %v3419, %v3532
      %v3590 = vadd.f32 %v3420, %v3535
      %v3591 = vadd.f32 %v3421, %v3537
      %v3592 = vadd.f32 %v3422, %v3540
      %v3593 = vadd.f32 %v3423, %v3542
      %v3594 = vadd.f32 %v3424, %v3545
      %v3595 = vadd.f32 %v3425, %v3547
      %v3596 = vadd.f32 %v3426, %v3550
      %v3597 = vadd.f32 %v3427, %v3552
      %v3598 = vadd.f32 %v3428, %v3555
      %v3599 = vadd.f32 %v3429, %v3557
      %v3600 = vadd.f32 %v3430, %v3560
      %v3601 = vadd.f32 %v3431, %v3562
      %v3602 = vadd.f32 %v3432, %v3565
      %v3603 = vadd.f32 %v3433, %v3567
      %v3604 = vadd.f32 %v3434, %v3570
      %v3605 = vadd.f32 %v3435, %v3572
      %v3606 = vld [vmem:[%s4] sm:$0x1]
      %v3608 = vperm.slane %v3606, 0
      %v3610 = vadd.f32 %v3574, %v3608
      %v3611 = vadd.f32 %v3575, %v3608
      %v3612 = vadd.f32 %v3576, %v3608
      %v3613 = vadd.f32 %v3577, %v3608
      %v3614 = vadd.f32 %v3578, %v3608
      %v3615 = vadd.f32 %v3579, %v3608
      %v3616 = vadd.f32 %v3580, %v3608
      %v3617 = vadd.f32 %v3581, %v3608
      %v3618 = vadd.f32 %v3582, %v3608
      %v3619 = vadd.f32 %v3583, %v3608
      %v3620 = vadd.f32 %v3584, %v3608
      %v3621 = vadd.f32 %v3585, %v3608
      %v3622 = vadd.f32 %v3586, %v3608
      %v3623 = vadd.f32 %v3587, %v3608
      %v3624 = vadd.f32 %v3588, %v3608
      %v3625 = vadd.f32 %v3589, %v3608
      %v3626 = vadd.f32 %v3590, %v3608
      %v3627 = vadd.f32 %v3591, %v3608
      %v3628 = vadd.f32 %v3592, %v3608
      %v3629 = vadd.f32 %v3593, %v3608
      %v3630 = vadd.f32 %v3594, %v3608
      %v3631 = vadd.f32 %v3595, %v3608
      %v3632 = vadd.f32 %v3596, %v3608
      %v3633 = vadd.f32 %v3597, %v3608
      %v3634 = vadd.f32 %v3598, %v3608
      %v3635 = vadd.f32 %v3599, %v3608
      %v3636 = vadd.f32 %v3600, %v3608
      %v3637 = vadd.f32 %v3601, %v3608
      %v3638 = vadd.f32 %v3602, %v3608
      %v3639 = vadd.f32 %v3603, %v3608
      %v3640 = vadd.f32 %v3604, %v3608
      %v3641 = vadd.f32 %v3605, %v3608
      %v3642 = vmax.f32 %v3610, 0.0
      %v3643 = vmax.f32 %v3611, 0.0
      %v3644 = vmax.f32 %v3612, 0.0
      %v3645 = vmax.f32 %v3613, 0.0
      %v3646 = vmax.f32 %v3614, 0.0
      %v3647 = vmax.f32 %v3615, 0.0
      %v3648 = vmax.f32 %v3616, 0.0
      %v3649 = vmax.f32 %v3617, 0.0
      %v3650 = vmax.f32 %v3618, 0.0
      %v3651 = vmax.f32 %v3619, 0.0
      %v3652 = vmax.f32 %v3620, 0.0
      %v3653 = vmax.f32 %v3621, 0.0
      %v3654 = vmax.f32 %v3622, 0.0
      %v3655 = vmax.f32 %v3623, 0.0
      %v3656 = vmax.f32 %v3624, 0.0
      %v3657 = vmax.f32 %v3625, 0.0
      %v3658 = vmax.f32 %v3626, 0.0
      %v3659 = vmax.f32 %v3627, 0.0
      %v3660 = vmax.f32 %v3628, 0.0
      %v3661 = vmax.f32 %v3629, 0.0
      %v3662 = vmax.f32 %v3630, 0.0
      %v3663 = vmax.f32 %v3631, 0.0
      %v3664 = vmax.f32 %v3632, 0.0
      %v3665 = vmax.f32 %v3633, 0.0
      %v3666 = vmax.f32 %v3634, 0.0
      %v3667 = vmax.f32 %v3635, 0.0
      %v3668 = vmax.f32 %v3636, 0.0
      %v3669 = vmax.f32 %v3637, 0.0
      %v3670 = vmax.f32 %v3638, 0.0
      %v3671 = vmax.f32 %v3639, 0.0
      %v3672 = vmax.f32 %v3640, 0.0
      %v3673 = vmax.f32 %v3641, 0.0
      %3674 = vst.msk [vmem:[#allocation4] sm:$0xf] %vm433, 0
      %3675 = vst.msk [vmem:[#allocation4 + $0x4] sm:$0xf] %vm433, 0
      %3676 = vst.msk [vmem:[#allocation4 + $0x8] sm:$0x1] %vm436, 0
      %s3677 = scalar_lea.vmem [#allocation4], 204
      %3678 = vst.msk [vmem:[%s3677] sm:$0xf] %vm433, 0
      %3679 = vst.msk [vmem:[%s3677 + $0x4] sm:$0xf] %vm433, 0
      %3680 = vst.msk [vmem:[%s3677 + $0x8] sm:$0x1] %vm436, 0
      %s3681 = scalar_lea.vmem [#allocation4], 12
      %v3682 = vld [vmem:[%s3681] sm:$0x1]
      %v3683 = vsel %vm445, 0, %v3682
      %3684 = vst [vmem:[%s3681] sm:$0x1] %v3683
      %v3685 = vld [vmem:[%s3681 + $0xc] sm:$0x1]
      %v3686 = vsel %vm445, 0, %v3685
      %3687 = vst [vmem:[%s3681 + $0xc] sm:$0x1] %v3686
      %v3688 = vld [vmem:[%s3681 + $0x18] sm:$0x1]
      %v3689 = vsel %vm445, 0, %v3688
      %3690 = vst [vmem:[%s3681 + $0x18] sm:$0x1] %v3689
      %v3691 = vld [vmem:[%s3681 + $0x24] sm:$0x1]
      %v3692 = vsel %vm445, 0, %v3691
      %3693 = vst [vmem:[%s3681 + $0x24] sm:$0x1] %v3692
      %v3694 = vld [vmem:[%s3681 + $0x30] sm:$0x1]
      %v3695 = vsel %vm445, 0, %v3694
      %3696 = vst [vmem:[%s3681 + $0x30] sm:$0x1] %v3695
      %v3697 = vld [vmem:[%s3681 + $0x3c] sm:$0x1]
      %v3698 = vsel %vm445, 0, %v3697
      %3699 = vst [vmem:[%s3681 + $0x3c] sm:$0x1] %v3698
      %v3700 = vld [vmem:[%s3681 + $0x48] sm:$0x1]
      %v3701 = vsel %vm445, 0, %v3700
      %3702 = vst [vmem:[%s3681 + $0x48] sm:$0x1] %v3701
      %v3703 = vld [vmem:[%s3681 + $0x54] sm:$0x1]
      %v3704 = vsel %vm445, 0, %v3703
      %3705 = vst [vmem:[%s3681 + $0x54] sm:$0x1] %v3704
      %v3706 = vld [vmem:[%s3681 + $0x60] sm:$0x1]
      %v3707 = vsel %vm445, 0, %v3706
      %3708 = vst [vmem:[%s3681 + $0x60] sm:$0x1] %v3707
      %v3709 = vld [vmem:[%s3681 + $0x6c] sm:$0x1]
      %v3710 = vsel %vm445, 0, %v3709
      %3711 = vst [vmem:[%s3681 + $0x6c] sm:$0x1] %v3710
      %v3712 = vld [vmem:[%s3681 + $0x78] sm:$0x1]
      %v3713 = vsel %vm445, 0, %v3712
      %3714 = vst [vmem:[%s3681 + $0x78] sm:$0x1] %v3713
      %v3715 = vld [vmem:[%s3681 + $0x84] sm:$0x1]
      %v3716 = vsel %vm445, 0, %v3715
      %3717 = vst [vmem:[%s3681 + $0x84] sm:$0x1] %v3716
      %v3718 = vld [vmem:[%s3681 + $0x90] sm:$0x1]
      %v3719 = vsel %vm445, 0, %v3718
      %3720 = vst [vmem:[%s3681 + $0x90] sm:$0x1] %v3719
      %v3721 = vld [vmem:[%s3681 + $0x9c] sm:$0x1]
      %v3722 = vsel %vm445, 0, %v3721
      %3723 = vst [vmem:[%s3681 + $0x9c] sm:$0x1] %v3722
      %v3724 = vld [vmem:[%s3681 + $0xa8] sm:$0x1]
      %v3725 = vsel %vm445, 0, %v3724
      %3726 = vst [vmem:[%s3681 + $0xa8] sm:$0x1] %v3725
      %v3727 = vld [vmem:[%s3681 + $0xb4] sm:$0x1]
      %v3728 = vsel %vm445, 0, %v3727
      %3729 = vst [vmem:[%s3681 + $0xb4] sm:$0x1] %v3728
      %v3730 = vld [vmem:[%s3681 + $0x8] sm:$0x1]
      %v3731 = vsel %vm495, 0, %v3730
      %3732 = vst [vmem:[%s3681 + $0x8] sm:$0x1] %v3731
      %v3733 = vld [vmem:[%s3681 + $0x14] sm:$0x1]
      %v3734 = vsel %vm495, 0, %v3733
      %3735 = vst [vmem:[%s3681 + $0x14] sm:$0x1] %v3734
      %v3736 = vld [vmem:[%s3681 + $0x20] sm:$0x1]
      %v3737 = vsel %vm495, 0, %v3736
      %3738 = vst [vmem:[%s3681 + $0x20] sm:$0x1] %v3737
      %v3739 = vld [vmem:[%s3681 + $0x2c] sm:$0x1]
      %v3740 = vsel %vm495, 0, %v3739
      %3741 = vst [vmem:[%s3681 + $0x2c] sm:$0x1] %v3740
      %v3742 = vld [vmem:[%s3681 + $0x38] sm:$0x1]
      %v3743 = vsel %vm495, 0, %v3742
      %3744 = vst [vmem:[%s3681 + $0x38] sm:$0x1] %v3743
      %v3745 = vld [vmem:[%s3681 + $0x44] sm:$0x1]
      %v3746 = vsel %vm495, 0, %v3745
      %3747 = vst [vmem:[%s3681 + $0x44] sm:$0x1] %v3746
      %v3748 = vld [vmem:[%s3681 + $0x50] sm:$0x1]
      %v3749 = vsel %vm495, 0, %v3748
      %3750 = vst [vmem:[%s3681 + $0x50] sm:$0x1] %v3749
      %v3751 = vld [vmem:[%s3681 + $0x5c] sm:$0x1]
      %v3752 = vsel %vm495, 0, %v3751
      %3753 = vst [vmem:[%s3681 + $0x5c] sm:$0x1] %v3752
      %v3754 = vld [vmem:[%s3681 + $0x68] sm:$0x1]
      %v3755 = vsel %vm495, 0, %v3754
      %3756 = vst [vmem:[%s3681 + $0x68] sm:$0x1] %v3755
      %v3757 = vld [vmem:[%s3681 + $0x74] sm:$0x1]
      %v3758 = vsel %vm495, 0, %v3757
      %3759 = vst [vmem:[%s3681 + $0x74] sm:$0x1] %v3758
      %v3760 = vld [vmem:[%s3681 + $0x80] sm:$0x1]
      %v3761 = vsel %vm495, 0, %v3760
      %3762 = vst [vmem:[%s3681 + $0x80] sm:$0x1] %v3761
      %v3763 = vld [vmem:[%s3681 + $0x8c] sm:$0x1]
      %v3764 = vsel %vm495, 0, %v3763
      %3765 = vst [vmem:[%s3681 + $0x8c] sm:$0x1] %v3764
      %v3766 = vld [vmem:[%s3681 + $0x98] sm:$0x1]
      %v3767 = vsel %vm495, 0, %v3766
      %3768 = vst [vmem:[%s3681 + $0x98] sm:$0x1] %v3767
      %v3769 = vld [vmem:[%s3681 + $0xa4] sm:$0x1]
      %v3770 = vsel %vm495, 0, %v3769
      %3771 = vst [vmem:[%s3681 + $0xa4] sm:$0x1] %v3770
      %v3772 = vld [vmem:[%s3681 + $0xb0] sm:$0x1]
      %v3773 = vsel %vm495, 0, %v3772
      %3774 = vst [vmem:[%s3681 + $0xb0] sm:$0x1] %v3773
      %v3775 = vld [vmem:[%s3681 + $0xbc] sm:$0x1]
      %v3776 = vsel %vm495, 0, %v3775
      %3777 = vst [vmem:[%s3681 + $0xbc] sm:$0x1] %v3776
      %v3778 = vpack.c.bf16 %v3642, %v3642
      %v3779 = vpack.c.bf16 %v3643, %v3643
      %v3780 = vpack.c.bf16 %v3644, %v3644
      %v3781 = vpack.c.bf16 %v3645, %v3645
      %v3782 = vpack.c.bf16 %v3646, %v3646
      %v3783 = vpack.c.bf16 %v3647, %v3647
      %v3784 = vpack.c.bf16 %v3648, %v3648
      %v3785 = vpack.c.bf16 %v3649, %v3649
      %v3786 = vpack.c.bf16 %v3650, %v3650
      %v3787 = vpack.c.bf16 %v3651, %v3651
      %v3788 = vpack.c.bf16 %v3652, %v3652
      %v3789 = vpack.c.bf16 %v3653, %v3653
      %v3790 = vpack.c.bf16 %v3654, %v3654
      %v3791 = vpack.c.bf16 %v3655, %v3655
      %v3792 = vpack.c.bf16 %v3656, %v3656
      %v3793 = vpack.c.bf16 %v3657, %v3657
      %v3794 = vpack.c.bf16 %v3658, %v3658
      %v3795 = vpack.c.bf16 %v3659, %v3659
      %v3796 = vpack.c.bf16 %v3660, %v3660
      %v3797 = vpack.c.bf16 %v3661, %v3661
      %v3798 = vpack.c.bf16 %v3662, %v3662
      %v3799 = vpack.c.bf16 %v3663, %v3663
      %v3800 = vpack.c.bf16 %v3664, %v3664
      %v3801 = vpack.c.bf16 %v3665, %v3665
      %v3802 = vpack.c.bf16 %v3666, %v3666
      %v3803 = vpack.c.bf16 %v3667, %v3667
      %v3804 = vpack.c.bf16 %v3668, %v3668
      %v3805 = vpack.c.bf16 %v3669, %v3669
      %v3806 = vpack.c.bf16 %v3670, %v3670
      %v3807 = vpack.c.bf16 %v3671, %v3671
      %v3808 = vpack.c.bf16 %v3672, %v3672
      %v3809 = vpack.c.bf16 %v3673, %v3673
      %v3811 = vshrl.u32 %v3778, 16
      %v3813 = vrot.slane %v3811, 7
      %v3814 = vshll.u32 %v3778, 16
      %v3816 = vor.u32 %v3813, %v3814
      %v3817 = vrot.slane %v3813, 4
      %v3819 = vshrl.u32 %v3779, 16
      %v3821 = vrot.slane %v3819, 7
      %v3822 = vshll.u32 %v3779, 16
      %v3824 = vor.u32 %v3821, %v3822
      %v3825 = vsel %vm545, %v3817, %v3824
      %v3826 = vrot.slane %v3821, 4
      %v3828 = vshrl.u32 %v3780, 16
      %v3830 = vrot.slane %v3828, 7
      %v3831 = vshll.u32 %v3780, 16
      %v3833 = vor.u32 %v3830, %v3831
      %v3834 = vrot.slane %v3830, 4
      %v3836 = vshrl.u32 %v3781, 16
      %v3838 = vrot.slane %v3836, 7
      %v3839 = vshll.u32 %v3781, 16
      %v3841 = vor.u32 %v3838, %v3839
      %v3842 = vsel %vm545, %v3834, %v3841
      %v3843 = vrot.slane %v3838, 4
      %v3845 = vshrl.u32 %v3782, 16
      %v3847 = vrot.slane %v3845, 7
      %v3848 = vshll.u32 %v3782, 16
      %v3850 = vor.u32 %v3847, %v3848
      %v3851 = vrot.slane %v3847, 4
      %v3853 = vshrl.u32 %v3783, 16
      %v3855 = vrot.slane %v3853, 7
      %v3856 = vshll.u32 %v3783, 16
      %v3858 = vor.u32 %v3855, %v3856
      %v3859 = vsel %vm545, %v3851, %v3858
      %v3860 = vrot.slane %v3855, 4
      %v3862 = vshrl.u32 %v3784, 16
      %v3864 = vrot.slane %v3862, 7
      %v3865 = vshll.u32 %v3784, 16
      %v3867 = vor.u32 %v3864, %v3865
      %v3868 = vrot.slane %v3864, 4
      %v3870 = vshrl.u32 %v3785, 16
      %v3872 = vrot.slane %v3870, 7
      %v3873 = vshll.u32 %v3785, 16
      %v3875 = vor.u32 %v3872, %v3873
      %v3876 = vsel %vm545, %v3868, %v3875
      %v3877 = vrot.slane %v3872, 4
      %v3879 = vshrl.u32 %v3786, 16
      %v3881 = vrot.slane %v3879, 7
      %v3882 = vshll.u32 %v3786, 16
      %v3884 = vor.u32 %v3881, %v3882
      %v3885 = vrot.slane %v3881, 4
      %v3887 = vshrl.u32 %v3787, 16
      %v3889 = vrot.slane %v3887, 7
      %v3890 = vshll.u32 %v3787, 16
      %v3892 = vor.u32 %v3889, %v3890
      %v3893 = vsel %vm545, %v3885, %v3892
      %v3894 = vrot.slane %v3889, 4
      %v3896 = vshrl.u32 %v3788, 16
      %v3898 = vrot.slane %v3896, 7
      %v3899 = vshll.u32 %v3788, 16
      %v3901 = vor.u32 %v3898, %v3899
      %v3902 = vrot.slane %v3898, 4
      %v3904 = vshrl.u32 %v3789, 16
      %v3906 = vrot.slane %v3904, 7
      %v3907 = vshll.u32 %v3789, 16
      %v3909 = vor.u32 %v3906, %v3907
      %v3910 = vsel %vm545, %v3902, %v3909
      %v3911 = vrot.slane %v3906, 4
      %v3913 = vshrl.u32 %v3790, 16
      %v3915 = vrot.slane %v3913, 7
      %v3916 = vshll.u32 %v3790, 16
      %v3918 = vor.u32 %v3915, %v3916
      %v3919 = vrot.slane %v3915, 4
      %v3921 = vshrl.u32 %v3791, 16
      %v3923 = vrot.slane %v3921, 7
      %v3924 = vshll.u32 %v3791, 16
      %v3926 = vor.u32 %v3923, %v3924
      %v3927 = vsel %vm545, %v3919, %v3926
      %v3928 = vrot.slane %v3923, 4
      %v3930 = vshrl.u32 %v3792, 16
      %v3932 = vrot.slane %v3930, 7
      %v3933 = vshll.u32 %v3792, 16
      %v3935 = vor.u32 %v3932, %v3933
      %v3936 = vrot.slane %v3932, 4
      %v3938 = vshrl.u32 %v3793, 16
      %v3940 = vrot.slane %v3938, 7
      %v3941 = vshll.u32 %v3793, 16
      %v3943 = vor.u32 %v3940, %v3941
      %v3944 = vsel %vm545, %v3936, %v3943
      %v3945 = vrot.slane %v3940, 4
      %v3947 = vshrl.u32 %v3794, 16
      %v3949 = vrot.slane %v3947, 7
      %v3950 = vshll.u32 %v3794, 16
      %v3952 = vor.u32 %v3949, %v3950
      %v3953 = vrot.slane %v3949, 4
      %v3955 = vshrl.u32 %v3795, 16
      %v3957 = vrot.slane %v3955, 7
      %v3958 = vshll.u32 %v3795, 16
      %v3960 = vor.u32 %v3957, %v3958
      %v3961 = vsel %vm545, %v3953, %v3960
      %v3962 = vrot.slane %v3957, 4
      %v3964 = vshrl.u32 %v3796, 16
      %v3966 = vrot.slane %v3964, 7
      %v3967 = vshll.u32 %v3796, 16
      %v3969 = vor.u32 %v3966, %v3967
      %v3970 = vrot.slane %v3966, 4
      %v3972 = vshrl.u32 %v3797, 16
      %v3974 = vrot.slane %v3972, 7
      %v3975 = vshll.u32 %v3797, 16
      %v3977 = vor.u32 %v3974, %v3975
      %v3978 = vsel %vm545, %v3970, %v3977
      %v3979 = vrot.slane %v3974, 4
      %v3981 = vshrl.u32 %v3798, 16
      %v3983 = vrot.slane %v3981, 7
      %v3984 = vshll.u32 %v3798, 16
      %v3986 = vor.u32 %v3983, %v3984
      %v3987 = vrot.slane %v3983, 4
      %v3989 = vshrl.u32 %v3799, 16
      %v3991 = vrot.slane %v3989, 7
      %v3992 = vshll.u32 %v3799, 16
      %v3994 = vor.u32 %v3991, %v3992
      %v3995 = vsel %vm545, %v3987, %v3994
      %v3996 = vrot.slane %v3991, 4
      %v3998 = vshrl.u32 %v3800, 16
      %v4000 = vrot.slane %v3998, 7
      %v4001 = vshll.u32 %v3800, 16
      %v4003 = vor.u32 %v4000, %v4001
      %v4004 = vrot.slane %v4000, 4
      %v4006 = vshrl.u32 %v3801, 16
      %v4008 = vrot.slane %v4006, 7
      %v4009 = vshll.u32 %v3801, 16
      %v4011 = vor.u32 %v4008, %v4009
      %v4012 = vsel %vm545, %v4004, %v4011
      %v4013 = vrot.slane %v4008, 4
      %v4015 = vshrl.u32 %v3802, 16
      %v4017 = vrot.slane %v4015, 7
      %v4018 = vshll.u32 %v3802, 16
      %v4020 = vor.u32 %v4017, %v4018
      %v4021 = vrot.slane %v4017, 4
      %v4023 = vshrl.u32 %v3803, 16
      %v4025 = vrot.slane %v4023, 7
      %v4026 = vshll.u32 %v3803, 16
      %v4028 = vor.u32 %v4025, %v4026
      %v4029 = vsel %vm545, %v4021, %v4028
      %v4030 = vrot.slane %v4025, 4
      %v4032 = vshrl.u32 %v3804, 16
      %v4034 = vrot.slane %v4032, 7
      %v4035 = vshll.u32 %v3804, 16
      %v4037 = vor.u32 %v4034, %v4035
      %v4038 = vrot.slane %v4034, 4
      %v4040 = vshrl.u32 %v3805, 16
      %v4042 = vrot.slane %v4040, 7
      %v4043 = vshll.u32 %v3805, 16
      %v4045 = vor.u32 %v4042, %v4043
      %v4046 = vsel %vm545, %v4038, %v4045
      %v4047 = vrot.slane %v4042, 4
      %v4049 = vshrl.u32 %v3806, 16
      %v4051 = vrot.slane %v4049, 7
      %v4052 = vshll.u32 %v3806, 16
      %v4054 = vor.u32 %v4051, %v4052
      %v4055 = vrot.slane %v4051, 4
      %v4057 = vshrl.u32 %v3807, 16
      %v4059 = vrot.slane %v4057, 7
      %v4060 = vshll.u32 %v3807, 16
      %v4062 = vor.u32 %v4059, %v4060
      %v4063 = vsel %vm545, %v4055, %v4062
      %v4064 = vrot.slane %v4059, 4
      %v4066 = vshrl.u32 %v3808, 16
      %v4068 = vrot.slane %v4066, 7
      %v4069 = vshll.u32 %v3808, 16
      %v4071 = vor.u32 %v4068, %v4069
      %v4072 = vrot.slane %v4068, 4
      %v4074 = vshrl.u32 %v3809, 16
      %v4076 = vrot.slane %v4074, 7
      %v4077 = vshll.u32 %v3809, 16
      %v4079 = vor.u32 %v4076, %v4077
      %v4080 = vsel %vm545, %v4072, %v4079
      %v4081 = vrot.slane %v4076, 4
      %v4130 = vld [vmem:[%s3681] sm:$0xf]
      %v4131 = vsel %vm867, %v3816, %v4130
      %4132 = vst [vmem:[%s3681] sm:$0xf] %v4131
      %4133 = vst.msk [vmem:[%s3681 + $0x4] sm:$0xf] %vm433, %v3825
      %v4134 = vld [vmem:[%s3681 + $0x8] sm:$0x1]
      %v4135 = vsel %vm445, %v3826, %v4134
      %4136 = vst [vmem:[%s3681 + $0x8] sm:$0x1] %v4135
      %v4137 = vld [vmem:[%s3681 + $0xc] sm:$0xf]
      %v4138 = vsel %vm867, %v3833, %v4137
      %4139 = vst [vmem:[%s3681 + $0xc] sm:$0xf] %v4138
      %4140 = vst.msk [vmem:[%s3681 + $0x10] sm:$0xf] %vm433, %v3842
      %v4141 = vld [vmem:[%s3681 + $0x14] sm:$0x1]
      %v4142 = vsel %vm445, %v3843, %v4141
      %4143 = vst [vmem:[%s3681 + $0x14] sm:$0x1] %v4142
      %v4144 = vld [vmem:[%s3681 + $0x18] sm:$0xf]
      %v4145 = vsel %vm867, %v3850, %v4144
      %4146 = vst [vmem:[%s3681 + $0x18] sm:$0xf] %v4145
      %4147 = vst.msk [vmem:[%s3681 + $0x1c] sm:$0xf] %vm433, %v3859
      %v4148 = vld [vmem:[%s3681 + $0x20] sm:$0x1]
      %v4149 = vsel %vm445, %v3860, %v4148
      %4150 = vst [vmem:[%s3681 + $0x20] sm:$0x1] %v4149
      %v4151 = vld [vmem:[%s3681 + $0x24] sm:$0xf]
      %v4152 = vsel %vm867, %v3867, %v4151
      %4153 = vst [vmem:[%s3681 + $0x24] sm:$0xf] %v4152
      %4154 = vst.msk [vmem:[%s3681 + $0x28] sm:$0xf] %vm433, %v3876
      %v4155 = vld [vmem:[%s3681 + $0x2c] sm:$0x1]
      %v4156 = vsel %vm445, %v3877, %v4155
      %4157 = vst [vmem:[%s3681 + $0x2c] sm:$0x1] %v4156
      %v4158 = vld [vmem:[%s3681 + $0x30] sm:$0xf]
      %v4159 = vsel %vm867, %v3884, %v4158
      %4160 = vst [vmem:[%s3681 + $0x30] sm:$0xf] %v4159
      %4161 = vst.msk [vmem:[%s3681 + $0x34] sm:$0xf] %vm433, %v3893
      %v4162 = vld [vmem:[%s3681 + $0x38] sm:$0x1]
      %v4163 = vsel %vm445, %v3894, %v4162
      %4164 = vst [vmem:[%s3681 + $0x38] sm:$0x1] %v4163
      %v4165 = vld [vmem:[%s3681 + $0x3c] sm:$0xf]
      %v4166 = vsel %vm867, %v3901, %v4165
      %4167 = vst [vmem:[%s3681 + $0x3c] sm:$0xf] %v4166
      %4168 = vst.msk [vmem:[%s3681 + $0x40] sm:$0xf] %vm433, %v3910
      %v4169 = vld [vmem:[%s3681 + $0x44] sm:$0x1]
      %v4170 = vsel %vm445, %v3911, %v4169
      %4171 = vst [vmem:[%s3681 + $0x44] sm:$0x1] %v4170
      %v4172 = vld [vmem:[%s3681 + $0x48] sm:$0xf]
      %v4173 = vsel %vm867, %v3918, %v4172
      %4174 = vst [vmem:[%s3681 + $0x48] sm:$0xf] %v4173
      %4175 = vst.msk [vmem:[%s3681 + $0x4c] sm:$0xf] %vm433, %v3927
      %v4176 = vld [vmem:[%s3681 + $0x50] sm:$0x1]
      %v4177 = vsel %vm445, %v3928, %v4176
      %4178 = vst [vmem:[%s3681 + $0x50] sm:$0x1] %v4177
      %v4179 = vld [vmem:[%s3681 + $0x54] sm:$0xf]
      %v4180 = vsel %vm867, %v3935, %v4179
      %4181 = vst [vmem:[%s3681 + $0x54] sm:$0xf] %v4180
      %4182 = vst.msk [vmem:[%s3681 + $0x58] sm:$0xf] %vm433, %v3944
      %v4183 = vld [vmem:[%s3681 + $0x5c] sm:$0x1]
      %v4184 = vsel %vm445, %v3945, %v4183
      %4185 = vst [vmem:[%s3681 + $0x5c] sm:$0x1] %v4184
      %v4186 = vld [vmem:[%s3681 + $0x60] sm:$0xf]
      %v4187 = vsel %vm867, %v3952, %v4186
      %4188 = vst [vmem:[%s3681 + $0x60] sm:$0xf] %v4187
      %4189 = vst.msk [vmem:[%s3681 + $0x64] sm:$0xf] %vm433, %v3961
      %v4190 = vld [vmem:[%s3681 + $0x68] sm:$0x1]
      %v4191 = vsel %vm445, %v3962, %v4190
      %4192 = vst [vmem:[%s3681 + $0x68] sm:$0x1] %v4191
      %v4193 = vld [vmem:[%s3681 + $0x6c] sm:$0xf]
      %v4194 = vsel %vm867, %v3969, %v4193
      %4195 = vst [vmem:[%s3681 + $0x6c] sm:$0xf] %v4194
      %4196 = vst.msk [vmem:[%s3681 + $0x70] sm:$0xf] %vm433, %v3978
      %v4197 = vld [vmem:[%s3681 + $0x74] sm:$0x1]
      %v4198 = vsel %vm445, %v3979, %v4197
      %4199 = vst [vmem:[%s3681 + $0x74] sm:$0x1] %v4198
      %v4200 = vld [vmem:[%s3681 + $0x78] sm:$0xf]
      %v4201 = vsel %vm867, %v3986, %v4200
      %4202 = vst [vmem:[%s3681 + $0x78] sm:$0xf] %v4201
      %4203 = vst.msk [vmem:[%s3681 + $0x7c] sm:$0xf] %vm433, %v3995
      %v4204 = vld [vmem:[%s3681 + $0x80] sm:$0x1]
      %v4205 = vsel %vm445, %v3996, %v4204
      %4206 = vst [vmem:[%s3681 + $0x80] sm:$0x1] %v4205
      %v4207 = vld [vmem:[%s3681 + $0x84] sm:$0xf]
      %v4208 = vsel %vm867, %v4003, %v4207
      %4209 = vst [vmem:[%s3681 + $0x84] sm:$0xf] %v4208
      %4210 = vst.msk [vmem:[%s3681 + $0x88] sm:$0xf] %vm433, %v4012
      %v4211 = vld [vmem:[%s3681 + $0x8c] sm:$0x1]
      %v4212 = vsel %vm445, %v4013, %v4211
      %4213 = vst [vmem:[%s3681 + $0x8c] sm:$0x1] %v4212
      %v4214 = vld [vmem:[%s3681 + $0x90] sm:$0xf]
      %v4215 = vsel %vm867, %v4020, %v4214
      %4216 = vst [vmem:[%s3681 + $0x90] sm:$0xf] %v4215
      %4217 = vst.msk [vmem:[%s3681 + $0x94] sm:$0xf] %vm433, %v4029
      %v4218 = vld [vmem:[%s3681 + $0x98] sm:$0x1]
      %v4219 = vsel %vm445, %v4030, %v4218
      %4220 = vst [vmem:[%s3681 + $0x98] sm:$0x1] %v4219
      %v4221 = vld [vmem:[%s3681 + $0x9c] sm:$0xf]
      %v4222 = vsel %vm867, %v4037, %v4221
      %4223 = vst [vmem:[%s3681 + $0x9c] sm:$0xf] %v4222
      %4224 = vst.msk [vmem:[%s3681 + $0xa0] sm:$0xf] %vm433, %v4046
      %v4225 = vld [vmem:[%s3681 + $0xa4] sm:$0x1]
      %v4226 = vsel %vm445, %v4047, %v4225
      %4227 = vst [vmem:[%s3681 + $0xa4] sm:$0x1] %v4226
      %v4228 = vld [vmem:[%s3681 + $0xa8] sm:$0xf]
      %v4229 = vsel %vm867, %v4054, %v4228
      %4230 = vst [vmem:[%s3681 + $0xa8] sm:$0xf] %v4229
      %4231 = vst.msk [vmem:[%s3681 + $0xac] sm:$0xf] %vm433, %v4063
      %v4232 = vld [vmem:[%s3681 + $0xb0] sm:$0x1]
      %v4233 = vsel %vm445, %v4064, %v4232
      %4234 = vst [vmem:[%s3681 + $0xb0] sm:$0x1] %v4233
      %v4235 = vld [vmem:[%s3681 + $0xb4] sm:$0xf]
      %v4236 = vsel %vm867, %v4071, %v4235
      %4237 = vst [vmem:[%s3681 + $0xb4] sm:$0xf] %v4236
      %4238 = vst.msk [vmem:[%s3681 + $0xb8] sm:$0xf] %vm433, %v4080
      %v4239 = vld [vmem:[%s3681 + $0xbc] sm:$0x1]
      %v4240 = vsel %vm445, %v4081, %v4239
      %4241 = vst [vmem:[%s3681 + $0xbc] sm:$0x1] %v4240
      %v4242 = vld [vmem:[#allocation4] sm:$0xf]
      %v4243 = vld [vmem:[#allocation4 + $0x4] sm:$0xf]
      %v4244 = vld [vmem:[#allocation4 + $0x8] sm:$0x1]
      %v4245 = vld [vmem:[#allocation4 + $0xc] sm:$0xf]
      %v4246 = vld [vmem:[#allocation4 + $0x10] sm:$0xf]
      %v4247 = vld [vmem:[#allocation4 + $0x14] sm:$0x1]
      %v4248 = vld [vmem:[#allocation4 + $0x18] sm:$0xf]
      %v4249 = vld [vmem:[#allocation4 + $0x1c] sm:$0xf]
      %v4250 = vld [vmem:[#allocation4 + $0x20] sm:$0x1]
      %v4251 = vld [vmem:[#allocation4 + $0x24] sm:$0xf]
      %v4252 = vld [vmem:[#allocation4 + $0x28] sm:$0xf]
      %v4253 = vld [vmem:[#allocation4 + $0x2c] sm:$0x1]
      %v4254 = vld [vmem:[#allocation4 + $0x30] sm:$0xf]
      %v4255 = vld [vmem:[#allocation4 + $0x34] sm:$0xf]
      %v4256 = vld [vmem:[#allocation4 + $0x38] sm:$0x1]
      %v4257 = vld [vmem:[#allocation4 + $0x3c] sm:$0xf]
      %v4258 = vld [vmem:[#allocation4 + $0x40] sm:$0xf]
      %v4259 = vld [vmem:[#allocation4 + $0x44] sm:$0x1]
      %v4260 = vld [vmem:[#allocation4 + $0x48] sm:$0xf]
      %v4261 = vld [vmem:[#allocation4 + $0x4c] sm:$0xf]
      %v4262 = vld [vmem:[#allocation4 + $0x50] sm:$0x1]
      %v4263 = vld [vmem:[#allocation4 + $0x54] sm:$0xf]
      %v4264 = vld [vmem:[#allocation4 + $0x58] sm:$0xf]
      %v4265 = vld [vmem:[#allocation4 + $0x5c] sm:$0x1]
      %v4266 = vld [vmem:[#allocation4 + $0x60] sm:$0xf]
      %v4267 = vld [vmem:[#allocation4 + $0x64] sm:$0xf]
      %v4268 = vld [vmem:[#allocation4 + $0x68] sm:$0x1]
      %v4269 = vld [vmem:[#allocation4 + $0x6c] sm:$0xf]
      %v4270 = vld [vmem:[#allocation4 + $0x70] sm:$0xf]
      %v4271 = vld [vmem:[#allocation4 + $0x74] sm:$0x1]
      %v4272 = vld [vmem:[#allocation4 + $0x78] sm:$0xf]
      %v4273 = vld [vmem:[#allocation4 + $0x7c] sm:$0xf]
      %v4274 = vld [vmem:[#allocation4 + $0x80] sm:$0x1]
      %v4275 = vld [vmem:[#allocation4 + $0x84] sm:$0xf]
      %v4276 = vld [vmem:[#allocation4 + $0x88] sm:$0xf]
      %v4277 = vld [vmem:[#allocation4 + $0x8c] sm:$0x1]
      %v4278 = vld [vmem:[#allocation4 + $0x90] sm:$0xf]
      %v4279 = vld [vmem:[#allocation4 + $0x94] sm:$0xf]
      %v4280 = vld [vmem:[#allocation4 + $0x98] sm:$0x1]
      %v4281 = vld [vmem:[#allocation4 + $0x9c] sm:$0xf]
      %v4282 = vld [vmem:[#allocation4 + $0xa0] sm:$0xf]
      %v4283 = vld [vmem:[#allocation4 + $0xa4] sm:$0x1]
      %v4284 = vld [vmem:[#allocation4 + $0xa8] sm:$0xf]
      %v4285 = vld [vmem:[#allocation4 + $0xac] sm:$0xf]
      %v4286 = vld [vmem:[#allocation4 + $0xb0] sm:$0x1]
      %v4287 = vld [vmem:[#allocation4 + $0xb4] sm:$0xf]
      %v4288 = vld [vmem:[#allocation4 + $0xb8] sm:$0xf]
      %v4289 = vld [vmem:[#allocation4 + $0xbc] sm:$0x1]
      %v4290 = vld [vmem:[#allocation4 + $0xc0] sm:$0xf]
      %v4291 = vld [vmem:[#allocation4 + $0xc4] sm:$0xf]
      %v4292 = vld [vmem:[#allocation4 + $0xc8] sm:$0x1]
      %v4293 = vld [vmem:[#allocation4 + $0xcc] sm:$0xf]
      %v4294 = vld [vmem:[#allocation4 + $0xd0] sm:$0xf]
      %v4295 = vld [vmem:[#allocation4 + $0xd4] sm:$0x1]
      %v4328 = vunpack.c.l.b16 %v4242
      %v4329 = vunpack.c.l.b16 %v4243
      %v4330 = vunpack.c.l.b16 %v4245
      %v4331 = vunpack.c.l.b16 %v4246
      %v4332 = vunpack.c.l.b16 %v4248
      %v4333 = vunpack.c.l.b16 %v4249
      %v4334 = vunpack.c.l.b16 %v4251
      %v4335 = vunpack.c.l.b16 %v4252
      %v4336 = vunpack.c.l.b16 %v4254
      %v4337 = vunpack.c.l.b16 %v4255
      %v4338 = vunpack.c.l.b16 %v4257
      %v4339 = vunpack.c.l.b16 %v4258
      %v4340 = vunpack.c.l.b16 %v4260
      %v4341 = vunpack.c.l.b16 %v4261
      %v4342 = vunpack.c.l.b16 %v4263
      %v4343 = vunpack.c.l.b16 %v4264
      %v4344 = vunpack.c.l.b16 %v4266
      %v4345 = vunpack.c.l.b16 %v4267
      %v4346 = vunpack.c.l.b16 %v4269
      %v4347 = vunpack.c.l.b16 %v4270
      %v4348 = vunpack.c.l.b16 %v4272
      %v4349 = vunpack.c.l.b16 %v4273
      %v4350 = vunpack.c.l.b16 %v4275
      %v4351 = vunpack.c.l.b16 %v4276
      %v4352 = vunpack.c.l.b16 %v4278
      %v4353 = vunpack.c.l.b16 %v4279
      %v4354 = vunpack.c.l.b16 %v4281
      %v4355 = vunpack.c.l.b16 %v4282
      %v4356 = vunpack.c.l.b16 %v4284
      %v4357 = vunpack.c.l.b16 %v4285
      %v4358 = vunpack.c.l.b16 %v4287
      %v4359 = vunpack.c.l.b16 %v4288
      %v4360 = vpack.c.b16 %v4329, %v4328
      %v4361 = vpack.c.b16 %v4331, %v4330
      %v4362 = vpack.c.b16 %v4333, %v4332
      %v4363 = vpack.c.b16 %v4335, %v4334
      %v4364 = vpack.c.b16 %v4337, %v4336
      %v4365 = vpack.c.b16 %v4339, %v4338
      %v4366 = vpack.c.b16 %v4341, %v4340
      %v4367 = vpack.c.b16 %v4343, %v4342
      %v4368 = vpack.c.b16 %v4345, %v4344
      %v4369 = vpack.c.b16 %v4347, %v4346
      %v4370 = vpack.c.b16 %v4349, %v4348
      %v4371 = vpack.c.b16 %v4351, %v4350
      %v4372 = vpack.c.b16 %v4353, %v4352
      %v4373 = vpack.c.b16 %v4355, %v4354
      %v4374 = vpack.c.b16 %v4357, %v4356
      %v4375 = vpack.c.b16 %v4359, %v4358
      %v4392 = vunpack.c.l.b16 %v4244
      %v4393 = vunpack.c.l.b16 %v4247
      %v4394 = vunpack.c.l.b16 %v4250
      %v4395 = vunpack.c.l.b16 %v4253
      %v4396 = vunpack.c.l.b16 %v4256
      %v4397 = vunpack.c.l.b16 %v4259
      %v4398 = vunpack.c.l.b16 %v4262
      %v4399 = vunpack.c.l.b16 %v4265
      %v4400 = vunpack.c.l.b16 %v4268
      %v4401 = vunpack.c.l.b16 %v4271
      %v4402 = vunpack.c.l.b16 %v4274
      %v4403 = vunpack.c.l.b16 %v4277
      %v4404 = vunpack.c.l.b16 %v4280
      %v4405 = vunpack.c.l.b16 %v4283
      %v4406 = vunpack.c.l.b16 %v4286
      %v4407 = vunpack.c.l.b16 %v4289
      %v4408 = vpack.c.b16 %v4392, %v4392
      %v4409 = vpack.c.b16 %v4393, %v4393
      %v4410 = vpack.c.b16 %v4394, %v4394
      %v4411 = vpack.c.b16 %v4395, %v4395
      %v4412 = vpack.c.b16 %v4396, %v4396
      %v4413 = vpack.c.b16 %v4397, %v4397
      %v4414 = vpack.c.b16 %v4398, %v4398
      %v4415 = vpack.c.b16 %v4399, %v4399
      %v4416 = vpack.c.b16 %v4400, %v4400
      %v4417 = vpack.c.b16 %v4401, %v4401
      %v4418 = vpack.c.b16 %v4402, %v4402
      %v4419 = vpack.c.b16 %v4403, %v4403
      %v4420 = vpack.c.b16 %v4404, %v4404
      %v4421 = vpack.c.b16 %v4405, %v4405
      %v4422 = vpack.c.b16 %v4406, %v4406
      %v4423 = vpack.c.b16 %v4407, %v4407
      %v4425 = vshrl.u32 %v4360, 16
      %v4427 = vshll.u32 %v4360, 16
      %v4429 = vrot.slane %v4427, 1
      %v4430 = vor.u32 %v4425, %v4429
      %v4432 = vshll.u32 %v4408, 16
      %v4434 = vrot.slane %v4432, 1
      %v4435 = vsel %vm1784, %v4430, %v4434
      %v4437 = vshrl.u32 %v4361, 16
      %v4439 = vshll.u32 %v4361, 16
      %v4441 = vrot.slane %v4439, 1
      %v4442 = vor.u32 %v4437, %v4441
      %v4444 = vshll.u32 %v4409, 16
      %v4446 = vrot.slane %v4444, 1
      %v4447 = vsel %vm1784, %v4442, %v4446
      %v4449 = vshrl.u32 %v4362, 16
      %v4451 = vshll.u32 %v4362, 16
      %v4453 = vrot.slane %v4451, 1
      %v4454 = vor.u32 %v4449, %v4453
      %v4456 = vshll.u32 %v4410, 16
      %v4458 = vrot.slane %v4456, 1
      %v4459 = vsel %vm1784, %v4454, %v4458
      %v4461 = vshrl.u32 %v4363, 16
      %v4463 = vshll.u32 %v4363, 16
      %v4465 = vrot.slane %v4463, 1
      %v4466 = vor.u32 %v4461, %v4465
      %v4468 = vshll.u32 %v4411, 16
      %v4470 = vrot.slane %v4468, 1
      %v4471 = vsel %vm1784, %v4466, %v4470
      %v4473 = vshrl.u32 %v4364, 16
      %v4475 = vshll.u32 %v4364, 16
      %v4477 = vrot.slane %v4475, 1
      %v4478 = vor.u32 %v4473, %v4477
      %v4480 = vshll.u32 %v4412, 16
      %v4482 = vrot.slane %v4480, 1
      %v4483 = vsel %vm1784, %v4478, %v4482
      %v4485 = vshrl.u32 %v4365, 16
      %v4487 = vshll.u32 %v4365, 16
      %v4489 = vrot.slane %v4487, 1
      %v4490 = vor.u32 %v4485, %v4489
      %v4492 = vshll.u32 %v4413, 16
      %v4494 = vrot.slane %v4492, 1
      %v4495 = vsel %vm1784, %v4490, %v4494
      %v4497 = vshrl.u32 %v4366, 16
      %v4499 = vshll.u32 %v4366, 16
      %v4501 = vrot.slane %v4499, 1
      %v4502 = vor.u32 %v4497, %v4501
      %v4504 = vshll.u32 %v4414, 16
      %v4506 = vrot.slane %v4504, 1
      %v4507 = vsel %vm1784, %v4502, %v4506
      %v4509 = vshrl.u32 %v4367, 16
      %v4511 = vshll.u32 %v4367, 16
      %v4513 = vrot.slane %v4511, 1
      %v4514 = vor.u32 %v4509, %v4513
      %v4516 = vshll.u32 %v4415, 16
      %v4518 = vrot.slane %v4516, 1
      %v4519 = vsel %vm1784, %v4514, %v4518
      %v4521 = vshrl.u32 %v4368, 16
      %v4523 = vshll.u32 %v4368, 16
      %v4525 = vrot.slane %v4523, 1
      %v4526 = vor.u32 %v4521, %v4525
      %v4528 = vshll.u32 %v4416, 16
      %v4530 = vrot.slane %v4528, 1
      %v4531 = vsel %vm1784, %v4526, %v4530
      %v4533 = vshrl.u32 %v4369, 16
      %v4535 = vshll.u32 %v4369, 16
      %v4537 = vrot.slane %v4535, 1
      %v4538 = vor.u32 %v4533, %v4537
      %v4540 = vshll.u32 %v4417, 16
      %v4542 = vrot.slane %v4540, 1
      %v4543 = vsel %vm1784, %v4538, %v4542
      %v4545 = vshrl.u32 %v4370, 16
      %v4547 = vshll.u32 %v4370, 16
      %v4549 = vrot.slane %v4547, 1
      %v4550 = vor.u32 %v4545, %v4549
      %v4552 = vshll.u32 %v4418, 16
      %v4554 = vrot.slane %v4552, 1
      %v4555 = vsel %vm1784, %v4550, %v4554
      %v4557 = vshrl.u32 %v4371, 16
      %v4559 = vshll.u32 %v4371, 16
      %v4561 = vrot.slane %v4559, 1
      %v4562 = vor.u32 %v4557, %v4561
      %v4564 = vshll.u32 %v4419, 16
      %v4566 = vrot.slane %v4564, 1
      %v4567 = vsel %vm1784, %v4562, %v4566
      %v4569 = vshrl.u32 %v4372, 16
      %v4571 = vshll.u32 %v4372, 16
      %v4573 = vrot.slane %v4571, 1
      %v4574 = vor.u32 %v4569, %v4573
      %v4576 = vshll.u32 %v4420, 16
      %v4578 = vrot.slane %v4576, 1
      %v4579 = vsel %vm1784, %v4574, %v4578
      %v4581 = vshrl.u32 %v4373, 16
      %v4583 = vshll.u32 %v4373, 16
      %v4585 = vrot.slane %v4583, 1
      %v4586 = vor.u32 %v4581, %v4585
      %v4588 = vshll.u32 %v4421, 16
      %v4590 = vrot.slane %v4588, 1
      %v4591 = vsel %vm1784, %v4586, %v4590
      %v4593 = vshrl.u32 %v4374, 16
      %v4595 = vshll.u32 %v4374, 16
      %v4597 = vrot.slane %v4595, 1
      %v4598 = vor.u32 %v4593, %v4597
      %v4600 = vshll.u32 %v4422, 16
      %v4602 = vrot.slane %v4600, 1
      %v4603 = vsel %vm1784, %v4598, %v4602
      %v4605 = vshrl.u32 %v4375, 16
      %v4607 = vshll.u32 %v4375, 16
      %v4609 = vrot.slane %v4607, 1
      %v4610 = vor.u32 %v4605, %v4609
      %v4612 = vshll.u32 %v4423, 16
      %v4614 = vrot.slane %v4612, 1
      %v4615 = vsel %vm1784, %v4610, %v4614
      %4616 = vrot.lane.b32.xlu0 %v4435, 8
      %v4617 = vpop.permute.xlu0 %4616
      %4618 = vrot.lane.b32.xlu0 %v4447, 8
      %v4619 = vpop.permute.xlu0 %4618
      %4620 = vrot.lane.b32.xlu0 %v4459, 8
      %v4621 = vpop.permute.xlu0 %4620
      %4622 = vrot.lane.b32.xlu0 %v4471, 8
      %v4623 = vpop.permute.xlu0 %4622
      %4624 = vrot.lane.b32.xlu0 %v4483, 8
      %v4625 = vpop.permute.xlu0 %4624
      %4626 = vrot.lane.b32.xlu0 %v4495, 8
      %v4627 = vpop.permute.xlu0 %4626
      %4628 = vrot.lane.b32.xlu0 %v4507, 8
      %v4629 = vpop.permute.xlu0 %4628
      %4630 = vrot.lane.b32.xlu0 %v4519, 8
      %v4631 = vpop.permute.xlu0 %4630
      %4632 = vrot.lane.b32.xlu0 %v4531, 8
      %v4633 = vpop.permute.xlu0 %4632
      %4634 = vrot.lane.b32.xlu0 %v4543, 8
      %v4635 = vpop.permute.xlu0 %4634
      %4636 = vrot.lane.b32.xlu0 %v4555, 8
      %v4637 = vpop.permute.xlu0 %4636
      %4638 = vrot.lane.b32.xlu0 %v4567, 8
      %v4639 = vpop.permute.xlu0 %4638
      %4640 = vrot.lane.b32.xlu0 %v4579, 8
      %v4641 = vpop.permute.xlu0 %4640
      %4642 = vrot.lane.b32.xlu0 %v4591, 8
      %v4643 = vpop.permute.xlu0 %4642
      %4644 = vrot.lane.b32.xlu0 %v4603, 8
      %v4645 = vpop.permute.xlu0 %4644
      %4646 = vrot.lane.b32.xlu0 %v4615, 8
      %v4647 = vpop.permute.xlu0 %4646
      %v4648 = vrot.slane %v4360, 1
      %v4649 = vrot.slane %v4408, 1
      %v4650 = vsel %vm2009, %v4648, %v4649
      %v4651 = vrot.slane %v4361, 1
      %v4652 = vrot.slane %v4409, 1
      %v4653 = vsel %vm2009, %v4651, %v4652
      %v4654 = vrot.slane %v4362, 1
      %v4655 = vrot.slane %v4410, 1
      %v4656 = vsel %vm2009, %v4654, %v4655
      %v4657 = vrot.slane %v4363, 1
      %v4658 = vrot.slane %v4411, 1
      %v4659 = vsel %vm2009, %v4657, %v4658
      %v4660 = vrot.slane %v4364, 1
      %v4661 = vrot.slane %v4412, 1
      %v4662 = vsel %vm2009, %v4660, %v4661
      %v4663 = vrot.slane %v4365, 1
      %v4664 = vrot.slane %v4413, 1
      %v4665 = vsel %vm2009, %v4663, %v4664
      %v4666 = vrot.slane %v4366, 1
      %v4667 = vrot.slane %v4414, 1
      %v4668 = vsel %vm2009, %v4666, %v4667
      %v4669 = vrot.slane %v4367, 1
      %v4670 = vrot.slane %v4415, 1
      %v4671 = vsel %vm2009, %v4669, %v4670
      %v4672 = vrot.slane %v4368, 1
      %v4673 = vrot.slane %v4416, 1
      %v4674 = vsel %vm2009, %v4672, %v4673
      %v4675 = vrot.slane %v4369, 1
      %v4676 = vrot.slane %v4417, 1
      %v4677 = vsel %vm2009, %v4675, %v4676
      %v4678 = vrot.slane %v4370, 1
      %v4679 = vrot.slane %v4418, 1
      %v4680 = vsel %vm2009, %v4678, %v4679
      %v4681 = vrot.slane %v4371, 1
      %v4682 = vrot.slane %v4419, 1
      %v4683 = vsel %vm2009, %v4681, %v4682
      %v4684 = vrot.slane %v4372, 1
      %v4685 = vrot.slane %v4420, 1
      %v4686 = vsel %vm2009, %v4684, %v4685
      %v4687 = vrot.slane %v4373, 1
      %v4688 = vrot.slane %v4421, 1
      %v4689 = vsel %vm2009, %v4687, %v4688
      %v4690 = vrot.slane %v4374, 1
      %v4691 = vrot.slane %v4422, 1
      %v4692 = vsel %vm2009, %v4690, %v4691
      %v4693 = vrot.slane %v4375, 1
      %v4694 = vrot.slane %v4423, 1
      %v4695 = vsel %vm2009, %v4693, %v4694
      %4696 = vrot.lane.b32.xlu0 %v4650, 16
      %v4697 = vpop.permute.xlu0 %4696
      %4698 = vrot.lane.b32.xlu0 %v4653, 16
      %v4699 = vpop.permute.xlu0 %4698
      %4700 = vrot.lane.b32.xlu0 %v4656, 16
      %v4701 = vpop.permute.xlu0 %4700
      %4702 = vrot.lane.b32.xlu0 %v4659, 16
      %v4703 = vpop.permute.xlu0 %4702
      %4704 = vrot.lane.b32.xlu0 %v4662, 16
      %v4705 = vpop.permute.xlu0 %4704
      %4706 = vrot.lane.b32.xlu0 %v4665, 16
      %v4707 = vpop.permute.xlu0 %4706
      %4708 = vrot.lane.b32.xlu0 %v4668, 16
      %v4709 = vpop.permute.xlu0 %4708
      %4710 = vrot.lane.b32.xlu0 %v4671, 16
      %v4711 = vpop.permute.xlu0 %4710
      %4712 = vrot.lane.b32.xlu0 %v4674, 16
      %v4713 = vpop.permute.xlu0 %4712
      %4714 = vrot.lane.b32.xlu0 %v4677, 16
      %v4715 = vpop.permute.xlu0 %4714
      %4716 = vrot.lane.b32.xlu0 %v4680, 16
      %v4717 = vpop.permute.xlu0 %4716
      %4718 = vrot.lane.b32.xlu0 %v4683, 16
      %v4719 = vpop.permute.xlu0 %4718
      %4720 = vrot.lane.b32.xlu0 %v4686, 16
      %v4721 = vpop.permute.xlu0 %4720
      %4722 = vrot.lane.b32.xlu0 %v4689, 16
      %v4723 = vpop.permute.xlu0 %4722
      %4724 = vrot.lane.b32.xlu0 %v4692, 16
      %v4725 = vpop.permute.xlu0 %4724
      %4726 = vrot.lane.b32.xlu0 %v4695, 16
      %v4727 = vpop.permute.xlu0 %4726
      %v4729 = vsel %vm2090, %v4360, %v4617
      %v4731 = vsel %vm2090, %v4361, %v4619
      %v4733 = vsel %vm2090, %v4362, %v4621
      %v4735 = vsel %vm2090, %v4363, %v4623
      %v4737 = vsel %vm2090, %v4364, %v4625
      %v4739 = vsel %vm2090, %v4365, %v4627
      %v4741 = vsel %vm2090, %v4366, %v4629
      %v4743 = vsel %vm2090, %v4367, %v4631
      %v4745 = vsel %vm2090, %v4368, %v4633
      %v4747 = vsel %vm2090, %v4369, %v4635
      %v4749 = vsel %vm2090, %v4370, %v4637
      %v4751 = vsel %vm2090, %v4371, %v4639
      %v4753 = vsel %vm2090, %v4372, %v4641
      %v4755 = vsel %vm2090, %v4373, %v4643
      %v4757 = vsel %vm2090, %v4374, %v4645
      %v4759 = vsel %vm2090, %v4375, %v4647
      %v4761 = vsel %vm2123, %v4729, %v4697
      %v4763 = vsel %vm2123, %v4731, %v4699
      %v4765 = vsel %vm2123, %v4733, %v4701
      %v4767 = vsel %vm2123, %v4735, %v4703
      %v4769 = vsel %vm2123, %v4737, %v4705
      %v4771 = vsel %vm2123, %v4739, %v4707
      %v4773 = vsel %vm2123, %v4741, %v4709
      %v4775 = vsel %vm2123, %v4743, %v4711
      %v4777 = vsel %vm2123, %v4745, %v4713
      %v4779 = vsel %vm2123, %v4747, %v4715
      %v4781 = vsel %vm2123, %v4749, %v4717
      %v4783 = vsel %vm2123, %v4751, %v4719
      %v4785 = vsel %vm2123, %v4753, %v4721
      %v4787 = vsel %vm2123, %v4755, %v4723
      %v4789 = vsel %vm2123, %v4757, %v4725
      %v4791 = vsel %vm2123, %v4759, %v4727
      %v4792 = vld [vmem:[%s5] sm:$0xf]
      %v4793 = vld [vmem:[%s5 + $0x4] sm:$0xf]
      %v4794 = vld [vmem:[%s5 + $0x8] sm:$0xf]
      %v4797 = vunpack.c.l.b16 %v4290
      %v4798 = vunpack.c.l.b16 %v4291
      %v4799 = vpack.c.b16 %v4798, %v4797
      %v4801 = vunpack.c.l.b16 %v4292
      %v4802 = vpack.c.b16 %v4801, %v4801
      %v4804 = vshrl.u32 %v4799, 16
      %v4806 = vshll.u32 %v4799, 16
      %v4808 = vrot.slane %v4806, 1
      %v4809 = vor.u32 %v4804, %v4808
      %v4811 = vshll.u32 %v4802, 16
      %v4813 = vrot.slane %v4811, 1
      %v4814 = vsel %vm1784, %v4809, %v4813
      %4815 = vrot.lane.b32.xlu0 %v4814, 8
      %v4816 = vpop.permute.xlu0 %4815
      %v4817 = vrot.slane %v4799, 1
      %v4818 = vrot.slane %v4802, 1
      %v4819 = vsel %vm2009, %v4817, %v4818
      %4820 = vrot.lane.b32.xlu0 %v4819, 16
      %v4821 = vpop.permute.xlu0 %4820
      %v4823 = vsel %vm2090, %v4799, %v4816
      %v4825 = vsel %vm2123, %v4823, %v4821
      %s4826 = scalar_lea.vmem %s5, 12
      %v4827 = vld [vmem:[%s4826] sm:$0xf]
      %v4828 = vld [vmem:[%s4826 + $0x4] sm:$0xf]
      %v4829 = vld [vmem:[%s4826 + $0x8] sm:$0xf]
      %v4833 = vunpack.c.l.b16 %v4827
      %v4834 = vunpack.c.l.b16 %v4828
      %v4835 = vunpack.c.l.b16 %v4829
      %v4836 = vpack.c.b16 %v4834, %v4833
      %v4837 = vpack.c.b16 %v4835, %v4835
      %v4839 = vsel %vm2203, %v4763, 0
      %v4841 = vsel %vm2203, %v4765, 0
      %v4843 = vsel %vm2203, %v4767, 0
      %v4845 = vsel %vm2203, %v4769, 0
      %v4847 = vsel %vm2203, %v4771, 0
      %v4849 = vsel %vm2203, %v4773, 0
      %v4851 = vsel %vm2203, %v4775, 0
      %v4853 = vsel %vm2203, %v4777, 0
      %v4855 = vsel %vm2203, %v4779, 0
      %v4857 = vsel %vm2203, %v4781, 0
      %v4859 = vsel %vm2203, %v4783, 0
      %v4861 = vsel %vm2203, %v4785, 0
      %v4863 = vsel %vm2203, %v4787, 0
      %v4865 = vsel %vm2203, %v4789, 0
      %v4867 = vsel %vm2203, %v4791, 0
      %v4869 = vsel %vm2203, %v4825, 0
      %v4872 = vsel %vm2236, %v4837, 0
      %4874 = vmatpush.bf16.msra.mxu0 0
      %4875 = vmatpush.bf16.msra.mxu0 0
      %4876 = vmatpush.bf16.msra.mxu0 0
      %4877 = vmatpush.bf16.msra.mxu0 0
      %4878 = vmatpush.bf16.msra.mxu0 0
      %4879 = vmatpush.bf16.msra.mxu0 0
      %4880 = vmatpush.bf16.msra.mxu0 %v4872
      %4881 = vmatpush.bf16.msra.mxu0 %v4836
      %4882 = vmatmul.bf16.gmra.mxu0 %v4839
      %v4883 = vpop.f32.mrf.mxu0
      %v4884 = vadd.f32 0.0, %v4883
      %v4885 = vpop.f32.mrf.mxu0
      %v4886 = vadd.f32 0.0, %v4885
      %4887 = vmatmul.bf16.gmra.mxu0 %v4841
      %v4888 = vpop.f32.mrf.mxu0
      %v4889 = vadd.f32 0.0, %v4888
      %v4890 = vpop.f32.mrf.mxu0
      %v4891 = vadd.f32 0.0, %v4890
      %4892 = vmatmul.bf16.gmra.mxu0 %v4843
      %v4893 = vpop.f32.mrf.mxu0
      %v4894 = vadd.f32 0.0, %v4893
      %v4895 = vpop.f32.mrf.mxu0
      %v4896 = vadd.f32 0.0, %v4895
      %4897 = vmatmul.bf16.gmra.mxu0 %v4845
      %v4898 = vpop.f32.mrf.mxu0
      %v4899 = vadd.f32 0.0, %v4898
      %v4900 = vpop.f32.mrf.mxu0
      %v4901 = vadd.f32 0.0, %v4900
      %4902 = vmatmul.bf16.gmra.mxu0 %v4847
      %v4903 = vpop.f32.mrf.mxu0
      %v4904 = vadd.f32 0.0, %v4903
      %v4905 = vpop.f32.mrf.mxu0
      %v4906 = vadd.f32 0.0, %v4905
      %4907 = vmatmul.bf16.gmra.mxu0 %v4849
      %v4908 = vpop.f32.mrf.mxu0
      %v4909 = vadd.f32 0.0, %v4908
      %v4910 = vpop.f32.mrf.mxu0
      %v4911 = vadd.f32 0.0, %v4910
      %4912 = vmatmul.bf16.gmra.mxu0 %v4851
      %v4913 = vpop.f32.mrf.mxu0
      %v4914 = vadd.f32 0.0, %v4913
      %v4915 = vpop.f32.mrf.mxu0
      %v4916 = vadd.f32 0.0, %v4915
      %4917 = vmatmul.bf16.gmra.mxu0 %v4853
      %v4918 = vpop.f32.mrf.mxu0
      %v4919 = vadd.f32 0.0, %v4918
      %v4920 = vpop.f32.mrf.mxu0
      %v4921 = vadd.f32 0.0, %v4920
      %4922 = vmatmul.bf16.gmra.mxu0 %v4855
      %v4923 = vpop.f32.mrf.mxu0
      %v4924 = vadd.f32 0.0, %v4923
      %v4925 = vpop.f32.mrf.mxu0
      %v4926 = vadd.f32 0.0, %v4925
      %4927 = vmatmul.bf16.gmra.mxu0 %v4857
      %v4928 = vpop.f32.mrf.mxu0
      %v4929 = vadd.f32 0.0, %v4928
      %v4930 = vpop.f32.mrf.mxu0
      %v4931 = vadd.f32 0.0, %v4930
      %4932 = vmatmul.bf16.gmra.mxu0 %v4859
      %v4933 = vpop.f32.mrf.mxu0
      %v4934 = vadd.f32 0.0, %v4933
      %v4935 = vpop.f32.mrf.mxu0
      %v4936 = vadd.f32 0.0, %v4935
      %4937 = vmatmul.bf16.gmra.mxu0 %v4861
      %v4938 = vpop.f32.mrf.mxu0
      %v4939 = vadd.f32 0.0, %v4938
      %v4940 = vpop.f32.mrf.mxu0
      %v4941 = vadd.f32 0.0, %v4940
      %4942 = vmatmul.bf16.gmra.mxu0 %v4863
      %v4943 = vpop.f32.mrf.mxu0
      %v4944 = vadd.f32 0.0, %v4943
      %v4945 = vpop.f32.mrf.mxu0
      %v4946 = vadd.f32 0.0, %v4945
      %4947 = vmatmul.bf16.gmra.mxu0 %v4865
      %v4948 = vpop.f32.mrf.mxu0
      %v4949 = vadd.f32 0.0, %v4948
      %v4950 = vpop.f32.mrf.mxu0
      %v4951 = vadd.f32 0.0, %v4950
      %4952 = vmatmul.bf16.gmra.mxu0 %v4867
      %v4953 = vpop.f32.mrf.mxu0
      %v4954 = vadd.f32 0.0, %v4953
      %v4955 = vpop.f32.mrf.mxu0
      %v4956 = vadd.f32 0.0, %v4955
      %4957 = vmatmul.bf16.gmra.mxu0 %v4869
      %v4958 = vpop.f32.mrf.mxu0
      %v4959 = vadd.f32 0.0, %v4958
      %v4960 = vpop.f32.mrf.mxu0
      %v4961 = vadd.f32 0.0, %v4960
      %4962 = vdwg.mxu0
      %v4966 = vunpack.c.l.b16 %v4792
      %v4967 = vunpack.c.l.b16 %v4793
      %v4968 = vunpack.c.l.b16 %v4794
      %v4969 = vpack.c.b16 %v4967, %v4966
      %v4970 = vpack.c.b16 %v4968, %v4968
      %v4972 = vsel %vm2203, %v4761, 0
      %v4975 = vsel %vm2236, %v4970, 0
      %4977 = vmatpush.bf16.msra.mxu0 0
      %4978 = vmatpush.bf16.msra.mxu0 0
      %4979 = vmatpush.bf16.msra.mxu0 0
      %4980 = vmatpush.bf16.msra.mxu0 0
      %4981 = vmatpush.bf16.msra.mxu0 0
      %4982 = vmatpush.bf16.msra.mxu0 0
      %4983 = vmatpush.bf16.msra.mxu0 %v4975
      %4984 = vmatpush.bf16.msra.mxu0 %v4969
      %4985 = vmatmul.bf16.gmra.mxu0 %v4972
      %v4986 = vpop.f32.mrf.mxu0
      %v4987 = vadd.f32 %v4884, %v4986
      %v4988 = vpop.f32.mrf.mxu0
      %v4989 = vadd.f32 %v4886, %v4988
      %4990 = vmatmul.bf16.gmra.mxu0 %v4839
      %v4991 = vpop.f32.mrf.mxu0
      %v4992 = vadd.f32 %v4889, %v4991
      %v4993 = vpop.f32.mrf.mxu0
      %v4994 = vadd.f32 %v4891, %v4993
      %4995 = vmatmul.bf16.gmra.mxu0 %v4841
      %v4996 = vpop.f32.mrf.mxu0
      %v4997 = vadd.f32 %v4894, %v4996
      %v4998 = vpop.f32.mrf.mxu0
      %v4999 = vadd.f32 %v4896, %v4998
      %5000 = vmatmul.bf16.gmra.mxu0 %v4843
      %v5001 = vpop.f32.mrf.mxu0
      %v5002 = vadd.f32 %v4899, %v5001
      %v5003 = vpop.f32.mrf.mxu0
      %v5004 = vadd.f32 %v4901, %v5003
      %5005 = vmatmul.bf16.gmra.mxu0 %v4845
      %v5006 = vpop.f32.mrf.mxu0
      %v5007 = vadd.f32 %v4904, %v5006
      %v5008 = vpop.f32.mrf.mxu0
      %v5009 = vadd.f32 %v4906, %v5008
      %5010 = vmatmul.bf16.gmra.mxu0 %v4847
      %v5011 = vpop.f32.mrf.mxu0
      %v5012 = vadd.f32 %v4909, %v5011
      %v5013 = vpop.f32.mrf.mxu0
      %v5014 = vadd.f32 %v4911, %v5013
      %5015 = vmatmul.bf16.gmra.mxu0 %v4849
      %v5016 = vpop.f32.mrf.mxu0
      %v5017 = vadd.f32 %v4914, %v5016
      %v5018 = vpop.f32.mrf.mxu0
      %v5019 = vadd.f32 %v4916, %v5018
      %5020 = vmatmul.bf16.gmra.mxu0 %v4851
      %v5021 = vpop.f32.mrf.mxu0
      %v5022 = vadd.f32 %v4919, %v5021
      %v5023 = vpop.f32.mrf.mxu0
      %v5024 = vadd.f32 %v4921, %v5023
      %5025 = vmatmul.bf16.gmra.mxu0 %v4853
      %v5026 = vpop.f32.mrf.mxu0
      %v5027 = vadd.f32 %v4924, %v5026
      %v5028 = vpop.f32.mrf.mxu0
      %v5029 = vadd.f32 %v4926, %v5028
      %5030 = vmatmul.bf16.gmra.mxu0 %v4855
      %v5031 = vpop.f32.mrf.mxu0
      %v5032 = vadd.f32 %v4929, %v5031
      %v5033 = vpop.f32.mrf.mxu0
      %v5034 = vadd.f32 %v4931, %v5033
      %5035 = vmatmul.bf16.gmra.mxu0 %v4857
      %v5036 = vpop.f32.mrf.mxu0
      %v5037 = vadd.f32 %v4934, %v5036
      %v5038 = vpop.f32.mrf.mxu0
      %v5039 = vadd.f32 %v4936, %v5038
      %5040 = vmatmul.bf16.gmra.mxu0 %v4859
      %v5041 = vpop.f32.mrf.mxu0
      %v5042 = vadd.f32 %v4939, %v5041
      %v5043 = vpop.f32.mrf.mxu0
      %v5044 = vadd.f32 %v4941, %v5043
      %5045 = vmatmul.bf16.gmra.mxu0 %v4861
      %v5046 = vpop.f32.mrf.mxu0
      %v5047 = vadd.f32 %v4944, %v5046
      %v5048 = vpop.f32.mrf.mxu0
      %v5049 = vadd.f32 %v4946, %v5048
      %5050 = vmatmul.bf16.gmra.mxu0 %v4863
      %v5051 = vpop.f32.mrf.mxu0
      %v5052 = vadd.f32 %v4949, %v5051
      %v5053 = vpop.f32.mrf.mxu0
      %v5054 = vadd.f32 %v4951, %v5053
      %5055 = vmatmul.bf16.gmra.mxu0 %v4865
      %v5056 = vpop.f32.mrf.mxu0
      %v5057 = vadd.f32 %v4954, %v5056
      %v5058 = vpop.f32.mrf.mxu0
      %v5059 = vadd.f32 %v4956, %v5058
      %5060 = vmatmul.bf16.gmra.mxu0 %v4867
      %v5061 = vpop.f32.mrf.mxu0
      %v5062 = vadd.f32 %v4959, %v5061
      %v5063 = vpop.f32.mrf.mxu0
      %v5064 = vadd.f32 %v4961, %v5063
      %5065 = vdwg.mxu0
      %v5068 = vunpack.c.l.b16 %v4293
      %v5069 = vunpack.c.l.b16 %v4294
      %v5070 = vpack.c.b16 %v5069, %v5068
      %v5072 = vunpack.c.l.b16 %v4295
      %v5073 = vpack.c.b16 %v5072, %v5072
      %v5075 = vshrl.u32 %v5070, 16
      %v5077 = vshll.u32 %v5070, 16
      %v5079 = vrot.slane %v5077, 1
      %v5080 = vor.u32 %v5075, %v5079
      %v5082 = vshll.u32 %v5073, 16
      %v5084 = vrot.slane %v5082, 1
      %v5085 = vsel %vm1784, %v5080, %v5084
      %5086 = vrot.lane.b32.xlu0 %v5085, 8
      %v5087 = vpop.permute.xlu0 %5086
      %v5088 = vrot.slane %v5070, 1
      %v5089 = vrot.slane %v5073, 1
      %v5090 = vsel %vm2009, %v5088, %v5089
      %5091 = vrot.lane.b32.xlu0 %v5090, 16
      %v5092 = vpop.permute.xlu0 %5091
      %v5094 = vsel %vm2090, %v5070, %v5087
      %v5096 = vsel %vm2123, %v5094, %v5092
      %s5097 = scalar_lea.vmem %s5, 24
      %v5098 = vld [vmem:[%s5097] sm:$0xf]
      %v5099 = vld [vmem:[%s5097 + $0x4] sm:$0xf]
      %v5100 = vld [vmem:[%s5097 + $0x8] sm:$0xf]
      %v5104 = vunpack.c.l.b16 %v5098
      %v5105 = vunpack.c.l.b16 %v5099
      %v5106 = vunpack.c.l.b16 %v5100
      %v5107 = vpack.c.b16 %v5105, %v5104
      %v5108 = vpack.c.b16 %v5106, %v5106
      %v5110 = vsel %vm2203, %v5096, 0
      %v5113 = vsel %vm2236, %v5108, 0
      %5115 = vmatpush.bf16.msra.mxu0 0
      %5116 = vmatpush.bf16.msra.mxu0 0
      %5117 = vmatpush.bf16.msra.mxu0 0
      %5118 = vmatpush.bf16.msra.mxu0 0
      %5119 = vmatpush.bf16.msra.mxu0 0
      %5120 = vmatpush.bf16.msra.mxu0 0
      %5121 = vmatpush.bf16.msra.mxu0 %v5113
      %5122 = vmatpush.bf16.msra.mxu0 %v5107
      %5123 = vmatmul.bf16.gmra.mxu0 %v4841
      %v5124 = vpop.f32.mrf.mxu0
      %v5125 = vadd.f32 0.0, %v5124
      %v5126 = vpop.f32.mrf.mxu0
      %v5127 = vadd.f32 0.0, %v5126
      %5128 = vmatmul.bf16.gmra.mxu0 %v4843
      %v5129 = vpop.f32.mrf.mxu0
      %v5130 = vadd.f32 0.0, %v5129
      %v5131 = vpop.f32.mrf.mxu0
      %v5132 = vadd.f32 0.0, %v5131
      %5133 = vmatmul.bf16.gmra.mxu0 %v4845
      %v5134 = vpop.f32.mrf.mxu0
      %v5135 = vadd.f32 0.0, %v5134
      %v5136 = vpop.f32.mrf.mxu0
      %v5137 = vadd.f32 0.0, %v5136
      %5138 = vmatmul.bf16.gmra.mxu0 %v4847
      %v5139 = vpop.f32.mrf.mxu0
      %v5140 = vadd.f32 0.0, %v5139
      %v5141 = vpop.f32.mrf.mxu0
      %v5142 = vadd.f32 0.0, %v5141
      %5143 = vmatmul.bf16.gmra.mxu0 %v4849
      %v5144 = vpop.f32.mrf.mxu0
      %v5145 = vadd.f32 0.0, %v5144
      %v5146 = vpop.f32.mrf.mxu0
      %v5147 = vadd.f32 0.0, %v5146
      %5148 = vmatmul.bf16.gmra.mxu0 %v4851
      %v5149 = vpop.f32.mrf.mxu0
      %v5150 = vadd.f32 0.0, %v5149
      %v5151 = vpop.f32.mrf.mxu0
      %v5152 = vadd.f32 0.0, %v5151
      %5153 = vmatmul.bf16.gmra.mxu0 %v4853
      %v5154 = vpop.f32.mrf.mxu0
      %v5155 = vadd.f32 0.0, %v5154
      %v5156 = vpop.f32.mrf.mxu0
      %v5157 = vadd.f32 0.0, %v5156
      %5158 = vmatmul.bf16.gmra.mxu0 %v4855
      %v5159 = vpop.f32.mrf.mxu0
      %v5160 = vadd.f32 0.0, %v5159
      %v5161 = vpop.f32.mrf.mxu0
      %v5162 = vadd.f32 0.0, %v5161
      %5163 = vmatmul.bf16.gmra.mxu0 %v4857
      %v5164 = vpop.f32.mrf.mxu0
      %v5165 = vadd.f32 0.0, %v5164
      %v5166 = vpop.f32.mrf.mxu0
      %v5167 = vadd.f32 0.0, %v5166
      %5168 = vmatmul.bf16.gmra.mxu0 %v4859
      %v5169 = vpop.f32.mrf.mxu0
      %v5170 = vadd.f32 0.0, %v5169
      %v5171 = vpop.f32.mrf.mxu0
      %v5172 = vadd.f32 0.0, %v5171
      %5173 = vmatmul.bf16.gmra.mxu0 %v4861
      %v5174 = vpop.f32.mrf.mxu0
      %v5175 = vadd.f32 0.0, %v5174
      %v5176 = vpop.f32.mrf.mxu0
      %v5177 = vadd.f32 0.0, %v5176
      %5178 = vmatmul.bf16.gmra.mxu0 %v4863
      %v5179 = vpop.f32.mrf.mxu0
      %v5180 = vadd.f32 0.0, %v5179
      %v5181 = vpop.f32.mrf.mxu0
      %v5182 = vadd.f32 0.0, %v5181
      %5183 = vmatmul.bf16.gmra.mxu0 %v4865
      %v5184 = vpop.f32.mrf.mxu0
      %v5185 = vadd.f32 0.0, %v5184
      %v5186 = vpop.f32.mrf.mxu0
      %v5187 = vadd.f32 0.0, %v5186
      %5188 = vmatmul.bf16.gmra.mxu0 %v4867
      %v5189 = vpop.f32.mrf.mxu0
      %v5190 = vadd.f32 0.0, %v5189
      %v5191 = vpop.f32.mrf.mxu0
      %v5192 = vadd.f32 0.0, %v5191
      %5193 = vmatmul.bf16.gmra.mxu0 %v4869
      %v5194 = vpop.f32.mrf.mxu0
      %v5195 = vadd.f32 0.0, %v5194
      %v5196 = vpop.f32.mrf.mxu0
      %v5197 = vadd.f32 0.0, %v5196
      %5198 = vmatmul.bf16.gmra.mxu0 %v5110
      %v5199 = vpop.f32.mrf.mxu0
      %v5200 = vadd.f32 0.0, %v5199
      %v5201 = vpop.f32.mrf.mxu0
      %v5202 = vadd.f32 0.0, %v5201
      %5203 = vdwg.mxu0
      %v5204 = vadd.f32 %v4987, %v5125
      %v5205 = vadd.f32 %v4989, %v5127
      %v5206 = vadd.f32 %v4992, %v5130
      %v5207 = vadd.f32 %v4994, %v5132
      %v5208 = vadd.f32 %v4997, %v5135
      %v5209 = vadd.f32 %v4999, %v5137
      %v5210 = vadd.f32 %v5002, %v5140
      %v5211 = vadd.f32 %v5004, %v5142
      %v5212 = vadd.f32 %v5007, %v5145
      %v5213 = vadd.f32 %v5009, %v5147
      %v5214 = vadd.f32 %v5012, %v5150
      %v5215 = vadd.f32 %v5014, %v5152
      %v5216 = vadd.f32 %v5017, %v5155
      %v5217 = vadd.f32 %v5019, %v5157
      %v5218 = vadd.f32 %v5022, %v5160
      %v5219 = vadd.f32 %v5024, %v5162
      %v5220 = vadd.f32 %v5027, %v5165
      %v5221 = vadd.f32 %v5029, %v5167
      %v5222 = vadd.f32 %v5032, %v5170
      %v5223 = vadd.f32 %v5034, %v5172
      %v5224 = vadd.f32 %v5037, %v5175
      %v5225 = vadd.f32 %v5039, %v5177
      %v5226 = vadd.f32 %v5042, %v5180
      %v5227 = vadd.f32 %v5044, %v5182
      %v5228 = vadd.f32 %v5047, %v5185
      %v5229 = vadd.f32 %v5049, %v5187
      %v5230 = vadd.f32 %v5052, %v5190
      %v5231 = vadd.f32 %v5054, %v5192
      %v5232 = vadd.f32 %v5057, %v5195
      %v5233 = vadd.f32 %v5059, %v5197
      %v5234 = vadd.f32 %v5062, %v5200
      %v5235 = vadd.f32 %v5064, %v5202
      %v5236 = vld [vmem:[%s6] sm:$0x1]
      %v5238 = vperm.slane %v5236, 0
      %v5240 = vadd.f32 %v5204, %v5238
      %v5241 = vadd.f32 %v5205, %v5238
      %v5242 = vadd.f32 %v5206, %v5238
      %v5243 = vadd.f32 %v5207, %v5238
      %v5244 = vadd.f32 %v5208, %v5238
      %v5245 = vadd.f32 %v5209, %v5238
      %v5246 = vadd.f32 %v5210, %v5238
      %v5247 = vadd.f32 %v5211, %v5238
      %v5248 = vadd.f32 %v5212, %v5238
      %v5249 = vadd.f32 %v5213, %v5238
      %v5250 = vadd.f32 %v5214, %v5238
      %v5251 = vadd.f32 %v5215, %v5238
      %v5252 = vadd.f32 %v5216, %v5238
      %v5253 = vadd.f32 %v5217, %v5238
      %v5254 = vadd.f32 %v5218, %v5238
      %v5255 = vadd.f32 %v5219, %v5238
      %v5256 = vadd.f32 %v5220, %v5238
      %v5257 = vadd.f32 %v5221, %v5238
      %v5258 = vadd.f32 %v5222, %v5238
      %v5259 = vadd.f32 %v5223, %v5238
      %v5260 = vadd.f32 %v5224, %v5238
      %v5261 = vadd.f32 %v5225, %v5238
      %v5262 = vadd.f32 %v5226, %v5238
      %v5263 = vadd.f32 %v5227, %v5238
      %v5264 = vadd.f32 %v5228, %v5238
      %v5265 = vadd.f32 %v5229, %v5238
      %v5266 = vadd.f32 %v5230, %v5238
      %v5267 = vadd.f32 %v5231, %v5238
      %v5268 = vadd.f32 %v5232, %v5238
      %v5269 = vadd.f32 %v5233, %v5238
      %v5270 = vadd.f32 %v5234, %v5238
      %v5271 = vadd.f32 %v5235, %v5238
      %v5272 = vmax.f32 %v5240, 0.0
      %v5273 = vmax.f32 %v5241, 0.0
      %v5274 = vmax.f32 %v5242, 0.0
      %v5275 = vmax.f32 %v5243, 0.0
      %v5276 = vmax.f32 %v5244, 0.0
      %v5277 = vmax.f32 %v5245, 0.0
      %v5278 = vmax.f32 %v5246, 0.0
      %v5279 = vmax.f32 %v5247, 0.0
      %v5280 = vmax.f32 %v5248, 0.0
      %v5281 = vmax.f32 %v5249, 0.0
      %v5282 = vmax.f32 %v5250, 0.0
      %v5283 = vmax.f32 %v5251, 0.0
      %v5284 = vmax.f32 %v5252, 0.0
      %v5285 = vmax.f32 %v5253, 0.0
      %v5286 = vmax.f32 %v5254, 0.0
      %v5287 = vmax.f32 %v5255, 0.0
      %v5288 = vmax.f32 %v5256, 0.0
      %v5289 = vmax.f32 %v5257, 0.0
      %v5290 = vmax.f32 %v5258, 0.0
      %v5291 = vmax.f32 %v5259, 0.0
      %v5292 = vmax.f32 %v5260, 0.0
      %v5293 = vmax.f32 %v5261, 0.0
      %v5294 = vmax.f32 %v5262, 0.0
      %v5295 = vmax.f32 %v5263, 0.0
      %v5296 = vmax.f32 %v5264, 0.0
      %v5297 = vmax.f32 %v5265, 0.0
      %v5298 = vmax.f32 %v5266, 0.0
      %v5299 = vmax.f32 %v5267, 0.0
      %v5300 = vmax.f32 %v5268, 0.0
      %v5301 = vmax.f32 %v5269, 0.0
      %v5302 = vmax.f32 %v5270, 0.0
      %v5303 = vmax.f32 %v5271, 0.0
      %v5304 = vpack.c.bf16 %v5273, %v5272
      %v5305 = vpack.c.bf16 %v5275, %v5274
      %v5306 = vpack.c.bf16 %v5277, %v5276
      %v5307 = vpack.c.bf16 %v5279, %v5278
      %v5308 = vpack.c.bf16 %v5281, %v5280
      %v5309 = vpack.c.bf16 %v5283, %v5282
      %v5310 = vpack.c.bf16 %v5285, %v5284
      %v5311 = vpack.c.bf16 %v5287, %v5286
      %v5312 = vpack.c.bf16 %v5289, %v5288
      %v5313 = vpack.c.bf16 %v5291, %v5290
      %v5314 = vpack.c.bf16 %v5293, %v5292
      %v5315 = vpack.c.bf16 %v5295, %v5294
      %v5316 = vpack.c.bf16 %v5297, %v5296
      %v5317 = vpack.c.bf16 %v5299, %v5298
      %v5318 = vpack.c.bf16 %v5301, %v5300
      %v5319 = vpack.c.bf16 %v5303, %v5302
      %v5320 = vld [vmem:[%s7] sm:$0xf]
      %v5321 = vld [vmem:[%s8] sm:$0x1]
      %v5323 = vperm.slane %v5321, 0
      %v5326 = vsel %vm2090, %v5304, 0
      %v5329 = vsel %vm2090, %v5305, 0
      %v5332 = vsel %vm2090, %v5306, 0
      %v5335 = vsel %vm2090, %v5307, 0
      %v5338 = vsel %vm2090, %v5308, 0
      %v5341 = vsel %vm2090, %v5309, 0
      %v5344 = vsel %vm2090, %v5310, 0
      %v5347 = vsel %vm2090, %v5311, 0
      %v5350 = vsel %vm2090, %v5312, 0
      %v5353 = vsel %vm2090, %v5313, 0
      %v5356 = vsel %vm2090, %v5314, 0
      %v5359 = vsel %vm2090, %v5315, 0
      %v5362 = vsel %vm2090, %v5316, 0
      %v5365 = vsel %vm2090, %v5317, 0
      %v5368 = vsel %vm2090, %v5318, 0
      %v5371 = vsel %vm2090, %v5319, 0
      %v5374 = vsel %vm2236, %v5320, 0
      %5376 = vmatpush.bf16.msra.mxu0 0
      %5377 = vmatpush.bf16.msra.mxu0 0
      %5378 = vmatpush.bf16.msra.mxu0 0
      %5379 = vmatpush.bf16.msra.mxu0 0
      %5380 = vmatpush.bf16.msra.mxu0 0
      %5381 = vmatpush.bf16.msra.mxu0 0
      %5382 = vmatpush.bf16.msra.mxu0 0
      %5383 = vmatpush.bf16.msra.mxu0 %v5374
      %5384 = vmatmul.bf16.gmra.mxu0 %v5326
      %v5385 = vpop.f32.mrf.mxu0
      %v5386 = vadd.f32 %v5323, %v5385
      %v5387 = vpop.f32.mrf.mxu0
      %v5388 = vadd.f32 %v5323, %v5387
      %5389 = vmatmul.bf16.gmra.mxu0 %v5329
      %v5390 = vpop.f32.mrf.mxu0
      %v5391 = vadd.f32 %v5323, %v5390
      %v5392 = vpop.f32.mrf.mxu0
      %v5393 = vadd.f32 %v5323, %v5392
      %5394 = vmatmul.bf16.gmra.mxu0 %v5332
      %v5395 = vpop.f32.mrf.mxu0
      %v5396 = vadd.f32 %v5323, %v5395
      %v5397 = vpop.f32.mrf.mxu0
      %v5398 = vadd.f32 %v5323, %v5397
      %5399 = vmatmul.bf16.gmra.mxu0 %v5335
      %v5400 = vpop.f32.mrf.mxu0
      %v5401 = vadd.f32 %v5323, %v5400
      %v5402 = vpop.f32.mrf.mxu0
      %v5403 = vadd.f32 %v5323, %v5402
      %5404 = vmatmul.bf16.gmra.mxu0 %v5338
      %v5405 = vpop.f32.mrf.mxu0
      %v5406 = vadd.f32 %v5323, %v5405
      %v5407 = vpop.f32.mrf.mxu0
      %v5408 = vadd.f32 %v5323, %v5407
      %5409 = vmatmul.bf16.gmra.mxu0 %v5341
      %v5410 = vpop.f32.mrf.mxu0
      %v5411 = vadd.f32 %v5323, %v5410
      %v5412 = vpop.f32.mrf.mxu0
      %v5413 = vadd.f32 %v5323, %v5412
      %5414 = vmatmul.bf16.gmra.mxu0 %v5344
      %v5415 = vpop.f32.mrf.mxu0
      %v5416 = vadd.f32 %v5323, %v5415
      %v5417 = vpop.f32.mrf.mxu0
      %v5418 = vadd.f32 %v5323, %v5417
      %5419 = vmatmul.bf16.gmra.mxu0 %v5347
      %v5420 = vpop.f32.mrf.mxu0
      %v5421 = vadd.f32 %v5323, %v5420
      %v5422 = vpop.f32.mrf.mxu0
      %v5423 = vadd.f32 %v5323, %v5422
      %5424 = vmatmul.bf16.gmra.mxu0 %v5350
      %v5425 = vpop.f32.mrf.mxu0
      %v5426 = vadd.f32 %v5323, %v5425
      %v5427 = vpop.f32.mrf.mxu0
      %v5428 = vadd.f32 %v5323, %v5427
      %5429 = vmatmul.bf16.gmra.mxu0 %v5353
      %v5430 = vpop.f32.mrf.mxu0
      %v5431 = vadd.f32 %v5323, %v5430
      %v5432 = vpop.f32.mrf.mxu0
      %v5433 = vadd.f32 %v5323, %v5432
      %5434 = vmatmul.bf16.gmra.mxu0 %v5356
      %v5435 = vpop.f32.mrf.mxu0
      %v5436 = vadd.f32 %v5323, %v5435
      %v5437 = vpop.f32.mrf.mxu0
      %v5438 = vadd.f32 %v5323, %v5437
      %5439 = vmatmul.bf16.gmra.mxu0 %v5359
      %v5440 = vpop.f32.mrf.mxu0
      %v5441 = vadd.f32 %v5323, %v5440
      %v5442 = vpop.f32.mrf.mxu0
      %v5443 = vadd.f32 %v5323, %v5442
      %5444 = vmatmul.bf16.gmra.mxu0 %v5362
      %v5445 = vpop.f32.mrf.mxu0
      %v5446 = vadd.f32 %v5323, %v5445
      %v5447 = vpop.f32.mrf.mxu0
      %v5448 = vadd.f32 %v5323, %v5447
      %5449 = vmatmul.bf16.gmra.mxu0 %v5365
      %v5450 = vpop.f32.mrf.mxu0
      %v5451 = vadd.f32 %v5323, %v5450
      %v5452 = vpop.f32.mrf.mxu0
      %v5453 = vadd.f32 %v5323, %v5452
      %5454 = vmatmul.bf16.gmra.mxu0 %v5368
      %v5455 = vpop.f32.mrf.mxu0
      %v5456 = vadd.f32 %v5323, %v5455
      %v5457 = vpop.f32.mrf.mxu0
      %v5458 = vadd.f32 %v5323, %v5457
      %5459 = vmatmul.bf16.gmra.mxu0 %v5371
      %v5460 = vpop.f32.mrf.mxu0
      %v5461 = vadd.f32 %v5323, %v5460
      %v5462 = vpop.f32.mrf.mxu0
      %v5463 = vadd.f32 %v5323, %v5462
      %5464 = vdwg.mxu0
      %v5465 = vld [vmem:[%s394] sm:$0xff]
      %v5466 = vld [vmem:[%s394 + $0x8] sm:$0xff]
      %v5467 = vld [vmem:[%s394 + $0x10] sm:$0xff]
      %v5468 = vld [vmem:[%s394 + $0x18] sm:$0xff]
      %v5469 = vld [vmem:[%s394 + $0x20] sm:$0xff]
      %v5470 = vld [vmem:[%s394 + $0x28] sm:$0xff]
      %v5471 = vld [vmem:[%s394 + $0x30] sm:$0xff]
      %v5472 = vld [vmem:[%s394 + $0x38] sm:$0xff]
      %v5473 = vld [vmem:[%s394 + $0x40] sm:$0xff]
      %v5474 = vld [vmem:[%s394 + $0x48] sm:$0xff]
      %v5475 = vld [vmem:[%s394 + $0x50] sm:$0xff]
      %v5476 = vld [vmem:[%s394 + $0x58] sm:$0xff]
      %v5477 = vld [vmem:[%s394 + $0x60] sm:$0xff]
      %v5478 = vld [vmem:[%s394 + $0x68] sm:$0xff]
      %v5479 = vld [vmem:[%s394 + $0x70] sm:$0xff]
      %v5480 = vld [vmem:[%s394 + $0x78] sm:$0xff]
      %v5481 = vld [vmem:[%s394 + $0x80] sm:$0xff]
      %v5482 = vld [vmem:[%s394 + $0x88] sm:$0xff]
      %v5483 = vld [vmem:[%s394 + $0x90] sm:$0xff]
      %v5484 = vld [vmem:[%s394 + $0x98] sm:$0xff]
      %v5485 = vld [vmem:[%s394 + $0xa0] sm:$0xff]
      %v5486 = vld [vmem:[%s394 + $0xa8] sm:$0xff]
      %v5487 = vld [vmem:[%s394 + $0xb0] sm:$0xff]
      %v5488 = vld [vmem:[%s394 + $0xb8] sm:$0xff]
      %v5489 = vld [vmem:[%s394 + $0xc0] sm:$0xff]
      %v5490 = vld [vmem:[%s394 + $0xc8] sm:$0xff]
      %v5491 = vld [vmem:[%s394 + $0xd0] sm:$0xff]
      %v5492 = vld [vmem:[%s394 + $0xd8] sm:$0xff]
      %v5493 = vld [vmem:[%s394 + $0xe0] sm:$0xff]
      %v5494 = vld [vmem:[%s394 + $0xe8] sm:$0xff]
      %v5495 = vld [vmem:[%s394 + $0xf0] sm:$0xff]
      %v5496 = vld [vmem:[%s394 + $0xf8] sm:$0xff]
      %v5497 = vadd.f32 %v5465, %v5386
      %v5498 = vadd.f32 %v5466, %v5388
      %v5499 = vadd.f32 %v5467, %v5391
      %v5500 = vadd.f32 %v5468, %v5393
      %v5501 = vadd.f32 %v5469, %v5396
      %v5502 = vadd.f32 %v5470, %v5398
      %v5503 = vadd.f32 %v5471, %v5401
      %v5504 = vadd.f32 %v5472, %v5403
      %v5505 = vadd.f32 %v5473, %v5406
      %v5506 = vadd.f32 %v5474, %v5408
      %v5507 = vadd.f32 %v5475, %v5411
      %v5508 = vadd.f32 %v5476, %v5413
      %v5509 = vadd.f32 %v5477, %v5416
      %v5510 = vadd.f32 %v5478, %v5418
      %v5511 = vadd.f32 %v5479, %v5421
      %v5512 = vadd.f32 %v5480, %v5423
      %v5513 = vadd.f32 %v5481, %v5426
      %v5514 = vadd.f32 %v5482, %v5428
      %v5515 = vadd.f32 %v5483, %v5431
      %v5516 = vadd.f32 %v5484, %v5433
      %v5517 = vadd.f32 %v5485, %v5436
      %v5518 = vadd.f32 %v5486, %v5438
      %v5519 = vadd.f32 %v5487, %v5441
      %v5520 = vadd.f32 %v5488, %v5443
      %v5521 = vadd.f32 %v5489, %v5446
      %v5522 = vadd.f32 %v5490, %v5448
      %v5523 = vadd.f32 %v5491, %v5451
      %v5524 = vadd.f32 %v5492, %v5453
      %v5525 = vadd.f32 %v5493, %v5456
      %v5526 = vadd.f32 %v5494, %v5458
      %v5527 = vadd.f32 %v5495, %v5461
      %v5528 = vadd.f32 %v5496, %v5463
      %vm5529 = vcmask 23552
      %5530 = vst.msk [vmem:[%s399] sm:$0xff] %vm5529, %v5497
      %5531 = vst.msk [vmem:[%s399 + $0x8] sm:$0xff] %vm5529, %v5498
      %5532 = vst.msk [vmem:[%s399 + $0x10] sm:$0xff] %vm5529, %v5499
      %5533 = vst.msk [vmem:[%s399 + $0x18] sm:$0xff] %vm5529, %v5500
      %5534 = vst.msk [vmem:[%s399 + $0x20] sm:$0xff] %vm5529, %v5501
      %5535 = vst.msk [vmem:[%s399 + $0x28] sm:$0xff] %vm5529, %v5502
      %5536 = vst.msk [vmem:[%s399 + $0x30] sm:$0xff] %vm5529, %v5503
      %5537 = vst.msk [vmem:[%s399 + $0x38] sm:$0xff] %vm5529, %v5504
      %5538 = vst.msk [vmem:[%s399 + $0x40] sm:$0xff] %vm5529, %v5505
      %5539 = vst.msk [vmem:[%s399 + $0x48] sm:$0xff] %vm5529, %v5506
      %5540 = vst.msk [vmem:[%s399 + $0x50] sm:$0xff] %vm5529, %v5507
      %5541 = vst.msk [vmem:[%s399 + $0x58] sm:$0xff] %vm5529, %v5508
      %5542 = vst.msk [vmem:[%s399 + $0x60] sm:$0xff] %vm5529, %v5509
      %5543 = vst.msk [vmem:[%s399 + $0x68] sm:$0xff] %vm5529, %v5510
      %5544 = vst.msk [vmem:[%s399 + $0x70] sm:$0xff] %vm5529, %v5511
      %5545 = vst.msk [vmem:[%s399 + $0x78] sm:$0xff] %vm5529, %v5512
      %5546 = vst.msk [vmem:[%s399 + $0x80] sm:$0xff] %vm5529, %v5513
      %5547 = vst.msk [vmem:[%s399 + $0x88] sm:$0xff] %vm5529, %v5514
      %5548 = vst.msk [vmem:[%s399 + $0x90] sm:$0xff] %vm5529, %v5515
      %5549 = vst.msk [vmem:[%s399 + $0x98] sm:$0xff] %vm5529, %v5516
      %5550 = vst.msk [vmem:[%s399 + $0xa0] sm:$0xff] %vm5529, %v5517
      %5551 = vst.msk [vmem:[%s399 + $0xa8] sm:$0xff] %vm5529, %v5518
      %5552 = vst.msk [vmem:[%s399 + $0xb0] sm:$0xff] %vm5529, %v5519
      %5553 = vst.msk [vmem:[%s399 + $0xb8] sm:$0xff] %vm5529, %v5520
      %5554 = vst.msk [vmem:[%s399 + $0xc0] sm:$0xff] %vm5529, %v5521
      %5555 = vst.msk [vmem:[%s399 + $0xc8] sm:$0xff] %vm5529, %v5522
      %5556 = vst.msk [vmem:[%s399 + $0xd0] sm:$0xff] %vm5529, %v5523
      %5557 = vst.msk [vmem:[%s399 + $0xd8] sm:$0xff] %vm5529, %v5524
      %5558 = vst.msk [vmem:[%s399 + $0xe0] sm:$0xff] %vm5529, %v5525
      %5559 = vst.msk [vmem:[%s399 + $0xe8] sm:$0xff] %vm5529, %v5526
      %5560 = vst.msk [vmem:[%s399 + $0xf0] sm:$0xff] %vm5529, %v5527
      %5561 = vst.msk [vmem:[%s399 + $0xf8] sm:$0xff] %vm5529, %v5528
      %p5562 = scmp.lt.s32.totalorder %s21, 1
      %s5563 = scalar_select %p5562, %s21, 1
      %s5564 = smul.addr %s5563, 32
      %s5565 = smul.addr %s5564, 8
      %s5566 = scalar_lea.vmem %s10, %s5565
      // Predicated region
      $region61: #{score_residue_forward.7} parent=59 // pred_check
        %p5567 = pneg %p264
      $region62: #{score_residue_forward.7} parent=59 // pred_check_branch
        %5569 = sbr.rel (%p5567) target = $region64
      $region63: #{score_residue_forward.7} parent=59 // pred_region
        _
      $region64: #{score_residue_forward.7} parent=59 // pred_fallthru
        _
    $region60: #{score_residue_forward.7} parent=5 // pred_fallthru
      _
    %p5570 = scmp.le.s32.totalorder 2, %s16
    // Predicated region
    $region65: #{score_residue_forward.7} parent=5 // pred_check
      %p5571 = pneg %p5570
    $region66: #{score_residue_forward.7} parent=5 // pred_check_branch
      %5573 = sbr.rel (%p5571) target = $region68
    $region67: #{score_residue_forward.7} parent=5 // pred_region
      %s5574 = ssub.s32 %s16, 2
      // Predicated region
      $region69: #{score_residue_forward.7} parent=67 // pred_check
        %p5575 = pneg %p270
      $region70: #{score_residue_forward.7} parent=67 // pred_check_branch
        %5577 = sbr.rel (%p5575) target = $region72
      $region71: #{score_residue_forward.7} parent=67 // pred_region
        %p5578 = scmp.lt.s32.totalorder %s22, 1
        %s5579 = scalar_select %p5578, %s22, 1
        %s5580 = smul.addr %s5579, 32
        %s5581 = smul.addr %s5580, 8
        %s5582 = scalar_lea.vmem %s10, %s5581
      $region72: #{score_residue_forward.7} parent=67 // pred_fallthru
        _
    $region68: #{score_residue_forward.7} parent=5 // pred_fallthru
      _
  $region6: #{score_residue_forward.7} parent=0 // loop_footer
    %s20 = sadd.s32 1, %s16
  $region7: #{score_residue_forward.7} parent=0 // loop_footer_branch
    %15 = sbr.rel target = $region3
  $region8: #{score_residue_forward.7} parent=0 // loop_exit
    _

</llo_original>
